<compile_context>
chip_gen: v7x
topology: tpu7x:2x2x1
jax: 0.10.0
libtpu: 0.0.40
codegen_flags: <defaults>
</compile_context>

<pallas_src>
import jax
import jax.numpy as jnp
import numpy as np
from jax.experimental import pallas as pl
from jax.experimental.pallas import tpu as pltpu

# ---------------- static model dims (small, consistent with the module) ----------------
B = 2                     # batch
T = 4                     # timesteps
H_IN, W_IN = 42, 48       # per-frame spatial size; (H-16)*(W-16) = 26*32 = 832 = cnn_output_dim
RNN = 128                 # rnn_dim (args-configurable; module default is 512)
CNN_OUT = (H_IN - 16) * (W_IN - 16)     # 832, hardcoded in the module
BN_EPS = 1e-5
CHANS = [(1, 6), (6, 6), (6, 6), (6, 1)]   # (c_in, c_out) of the 4 MyConvBlock stages


def _stage_dims():
    """Static bookkeeping of the channel-packed ('stored') layout per conv stage.

    Stage features are stored per batch as a 2-D (rows, lanes) array with
    lanes = c_out * wo (channel segments of stride wo).  After the packed W-maxpool only
    the first wo-2 columns of each segment are valid; the trailing garbage columns are
    killed by zero rows in the next stage's banded weight matrix.
    """
    dims = []
    h_in, w_valid, stride_in, k_in = H_IN, W_IN, W_IN, W_IN
    for (c_in, c_out) in CHANS:
        ho, wo = h_in - 2, w_valid - 2
        n_out = c_out * wo
        dims.append(dict(c_in=c_in, c_out=c_out, h_in=h_in, k_in=k_in,
                         stride_in=stride_in, wo=wo, n_out=n_out,
                         hp=ho - 2, l_pool=n_out - 2))
        h_in, w_valid, stride_in, k_in = ho - 2, wo - 2, wo, n_out - 2
    return dims


# =========================================================================================
# Kernel 1: MyConvBlock x4 for one timestep -> flattened 832-wide features.
#           Conv = 3 MXU matmuls per stage (banded weights), pool/BN/ReLU lane-dense on VPU.
# =========================================================================================
def _conv_stage(plane, wb_ref, bn_ref):
    """One MyConvBlock stage (3x3 valid conv -> 3x3/1 maxpool -> BN(eval) -> ReLU).

    plane  : (h_in, k_in) f32    channel-packed input rows (may contain garbage lanes)
    wb_ref : VMEM (3, k_in, c_out*wo)  banded conv weights, one matrix per kh; zero rows
             absorb garbage input lanes; conv bias is folded into the BN shift.
    bn_ref : VMEM (2, c_out*wo - 2)    lane-replicated BN scale / (shift + scale*bias)
    returns (h_in - 4, c_out*wo - 2) f32
    """
    h_in = plane.shape[0]
    n_out = wb_ref.shape[2]
    ho = h_in - 2

    # 3x3 valid conv == 3 MXU matmuls (contraction over (ci, kw) per kh), f32 accumulate.
    acc = jnp.dot(plane[0:ho, :], wb_ref[0], preferred_element_type=jnp.float32)
    acc = acc + jnp.dot(plane[1:ho + 1, :], wb_ref[1], preferred_element_type=jnp.float32)
    acc = acc + jnp.dot(plane[2:ho + 2, :], wb_ref[2], preferred_element_type=jnp.float32)

    # Separable 3x3 / stride-1 maxpool directly on the packed lane axis (cross-channel
    # columns become garbage; zero rows of the next stage's weights kill them).
    lw = n_out - 2
    mw = jnp.maximum(jnp.maximum(acc[:, 0:lw], acc[:, 1:lw + 1]), acc[:, 2:lw + 2])
    hp = ho - 2
    mh = jnp.maximum(jnp.maximum(mw[0:hp, :], mw[1:hp + 1, :]), mw[2:hp + 2, :])

    # BatchNorm (eval, folded scale/shift+bias, lane-replicated per channel) + ReLU.
    return jnp.maximum(mh * bn_ref[0:1, :] + bn_ref[1:2, :], 0.0)


def conv_feats_kernel(x_ref, wb1, wb2, wb3, wb4, bn1, bn2, bn3, bn4, out_ref):
    # x_ref block: (B, 1, H, W) -- one timestep (== x[:, t].unsqueeze(1) in the module).
    # out_ref block: (1, B, 832) -- flattened conv features for this timestep (lane-dense).
    for b in range(B):
        plane = x_ref[b, 0]                        # (42, 48) f32, 1 input channel
        plane = _conv_stage(plane, wb1, bn1)       # (38, 274)
        plane = _conv_stage(plane, wb2, bn2)       # (34, 250)
        plane = _conv_stage(plane, wb3, bn3)       # (30, 226)
        plane = _conv_stage(plane, wb4, bn4)       # (26, 32)  -- fully valid, c_out = 1
        # flatten (== conv_t.view(batch, -1)): explicit row stores into the lane-dense
        # output block.  Dropout on the features is identity in eval mode.
        # TODO(synk): a single value reshape (26,32)->(832,) would avoid the 26 narrow
        # row stores, but the explicit store loop is kept for lowering robustness.
        hf, wf = plane.shape
        for r in range(hf):
            out_ref[0, b:b + 1, r * wf:(r + 1) * wf] = plane[r:r + 1, :]


# =========================================================================================
# Kernel 2: MyRNNBlock (LSTMCell) recurrence + final classifier, single invocation.
# =========================================================================================
def lstm_head_kernel(feat_ref, wg_ref, bgx_ref, whh_ref, wc_ref, bc_ref, logits_ref):
    # One batched GEMM for every timestep's (folded projection + input-gate) contribution.
    feats = feat_ref[...].astype(jnp.bfloat16)                          # (T*B, 832)
    gates_x = jnp.dot(feats, wg_ref[...],
                      preferred_element_type=jnp.float32) + bgx_ref[...]  # (T*B, 4*RNN)

    h = jnp.zeros((B, RNN), jnp.float32)
    c = jnp.zeros((B, RNN), jnp.float32)
    # Statically unrolled recurrence; h/c are loop-carried values (no VMEM round trips).
    # nn.LSTMCell gate order is [i | f | g | o]; Dropout on x_t / prev_c / output is
    # identity in eval mode.
    for t in range(T):
        g = gates_x[t * B:(t + 1) * B, :] + jnp.dot(
            h.astype(jnp.bfloat16), whh_ref[...], preferred_element_type=jnp.float32)
        i = jax.nn.sigmoid(g[:, 0 * RNN:1 * RNN])
        f = jax.nn.sigmoid(g[:, 1 * RNN:2 * RNN])
        gg = jnp.tanh(g[:, 2 * RNN:3 * RNN])
        o = jax.nn.sigmoid(g[:, 3 * RNN:4 * RNN])
        c = f * c + i * gg
        h = o * jnp.tanh(c)

    logits_ref[...] = jnp.dot(h.astype(jnp.bfloat16), wc_ref[...],
                              preferred_element_type=jnp.float32) + bc_ref[...]


# =========================================================================================
# Wrapper
# =========================================================================================
def conv_rnn_forward(x, p):
    """x: (B, T, H, W) float32  ->  (logits,) with logits (B, 2). Matches ConvRNNModel.forward(x)."""
    bsz, nt, h, w = x.shape
    n4 = 4 * RNN
    hi = jax.lax.Precision.HIGHEST
    dims = _stage_dims()
    assert dims[-1]["hp"] * (dims[-1]["wo"] - 2) == CNN_OUT

    # ---- parameter prep (runs in the wrapper, outside the kernels) ----
    wb_args, bn_args = [], []
    for s, d in enumerate(dims, start=1):
        wconv = p[f"w{s}"]                                   # (c_out, c_in, 3, 3)
        c_in, c_out = d["c_in"], d["c_out"]
        stride_in, k_in, wo, n_out = d["stride_in"], d["k_in"], d["wo"], d["n_out"]
        # Banded conv-as-matmul weights:
        #   Wb[kh][ci*stride_in + j + kw, co*wo + j] = w[co, ci, kh, kw];  all other rows
        #   (including rows hit only by garbage pool lanes) are zero.
        ci_i, kw_i, j_i = np.meshgrid(np.arange(c_in), np.arange(3), np.arange(wo),
                                      indexing="ij")
        rows = np.broadcast_to((ci_i * stride_in + j_i + kw_i)[None],
                               (c_out, c_in, 3, wo))
        cols = np.broadcast_to(np.arange(c_out)[:, None, None, None] * wo + j_i[None],
                               (c_out, c_in, 3, wo))
        wbs = []
        for kh in range(3):
            vals = jnp.broadcast_to(wconv[:, :, kh, :, None], (c_out, c_in, 3, wo))
            wbs.append(jnp.zeros((k_in, n_out), jnp.float32).at[rows, cols].set(vals))
        wb_args.append(jnp.stack(wbs, axis=0))               # (3, k_in, n_out)

        # Eval-mode BN folded to per-channel scale/shift; the conv bias commutes with the
        # maxpool, so it is folded into the shift.  Replicate per lane of the packed layout.
        scale = p[f"bn{s}_gamma"] * jax.lax.rsqrt(p[f"bn{s}_var"] + BN_EPS)
        shift = p[f"bn{s}_beta"] - p[f"bn{s}_mean"] * scale + scale * p[f"b{s}"]
        lane_ch = np.minimum(np.arange(d["l_pool"]) // wo, c_out - 1)
        bn_args.append(jnp.stack([scale[lane_ch], shift[lane_ch]], axis=0))   # (2, l_pool)

    # Fold linear_projection into the LSTM input-gate weights (time-independent GEMMs
    # hoisted out of the recurrence):  gates_x = feat @ (Wp @ Wih) + (bp @ Wih + b_gates)
    wg = jnp.dot(p["wp"], p["wih"], precision=hi).astype(jnp.bfloat16)        # (832, 4*RNN)
    bgx = jnp.dot(p["bp"], p["wih"], precision=hi) + p["bg"]                  # (1, 4*RNN) f32
    whh = p["whh"].astype(jnp.bfloat16)
    wc = p["wc"].astype(jnp.bfloat16)

    def const_spec(a):
        nd, shp = a.ndim, a.shape
        return pl.BlockSpec(shp, lambda t, _nd=nd: (0,) * _nd)

    # --- per-timestep conv block -> flattened features (parallel grid over timesteps;
    #     the T axis shards across both v7x TensorCores) ---
    feats = pl.pallas_call(
        conv_feats_kernel,
        out_shape=jax.ShapeDtypeStruct((nt, bsz, CNN_OUT), jnp.float32),
        grid=(nt,),
        in_specs=[pl.BlockSpec((bsz, 1, h, w), lambda t: (0, t, 0, 0))]
                 + [const_spec(a) for a in wb_args]
                 + [const_spec(a) for a in bn_args],
        out_specs=pl.BlockSpec((1, bsz, CNN_OUT), lambda t: (t, 0, 0)),
        compiler_params=pltpu.CompilerParams(dimension_semantics=("parallel",)),
    )(x, *wb_args, *bn_args)

    # Free, layout-preserving metadata reshape in the wrapper (row-major merge of leading dims).
    feats2 = feats.reshape(nt * bsz, CNN_OUT)

    # --- batched gate GEMM + LSTM recurrence + classifier (single tiny invocation) ---
    logits = pl.pallas_call(
        lstm_head_kernel,
        out_shape=jax.ShapeDtypeStruct((bsz, 2), jnp.float32),
    )(feats2, wg, bgx, whh, wc, p["bc"])

    return (logits,)


# =========================================================================================
# Deterministic parameter init (synthetic; shapes follow the module's __init__)
# =========================================================================================
def init_params(key):
    p = {}
    keys = iter(jax.random.split(key, 32))
    for s, (cin, cout) in enumerate(CHANS, start=1):
        p[f"w{s}"] = 0.2 * jax.random.normal(next(keys), (cout, cin, 3, 3), jnp.float32)
        p[f"b{s}"] = 0.1 * jax.random.normal(next(keys), (cout,), jnp.float32)
        p[f"bn{s}_gamma"] = 1.0 + 0.1 * jax.random.normal(next(keys), (cout,), jnp.float32)
        p[f"bn{s}_beta"] = 0.1 * jax.random.normal(next(keys), (cout,), jnp.float32)
        p[f"bn{s}_mean"] = 0.1 * jax.random.normal(next(keys), (cout,), jnp.float32)
        p[f"bn{s}_var"] = 0.5 + jax.random.uniform(next(keys), (cout,), jnp.float32)
    # linear_projection: Linear(832, RNN) stored transposed for x @ W
    p["wp"] = 0.03 * jax.random.normal(next(keys), (CNN_OUT, RNN), jnp.float32)
    p["bp"] = 0.1 * jax.random.normal(next(keys), (1, RNN), jnp.float32)
    # LSTMCell(RNN, RNN): weight_ih/hh stored transposed; biases combined (exact)
    p["wih"] = 0.08 * jax.random.normal(next(keys), (RNN, 4 * RNN), jnp.float32)
    p["whh"] = 0.08 * jax.random.normal(next(keys), (RNN, 4 * RNN), jnp.float32)
    b_ih = 0.05 * jax.random.normal(next(keys), (4 * RNN,), jnp.float32)
    b_hh = 0.05 * jax.random.normal(next(keys), (4 * RNN,), jnp.float32)
    p["bg"] = (b_ih + b_hh).reshape(1, 4 * RNN)
    # clf: Linear(RNN, 2)
    p["wc"] = 0.1 * jax.random.normal(next(keys), (RNN, 2), jnp.float32)
    p["bc"] = 0.05 * jax.random.normal(next(keys), (1, 2), jnp.float32)
    return p


# =========================================================================================
# Pure-JAX reference (for correctness checking only; f32 'highest' precision)
# =========================================================================================
def ref_forward(x, p):
    bsz, nt = x.shape[0], x.shape[1]
    hi = jax.lax.Precision.HIGHEST

    def stage(inp, s):
        w, b = p[f"w{s}"], p[f"b{s}"]
        y = jax.lax.conv_general_dilated(inp, w, (1, 1), "VALID",
                                         dimension_numbers=("NCHW", "OIHW", "NCHW"),
                                         precision=hi)
        y = y + b[None, :, None, None]
        hh, ww = y.shape[2] - 2, y.shape[3] - 2
        pool = y[:, :, 0:hh, 0:ww]
        for ph in range(3):
            for pw in range(3):
                pool = jnp.maximum(pool, y[:, :, ph:ph + hh, pw:pw + ww])
        scale = p[f"bn{s}_gamma"] * jax.lax.rsqrt(p[f"bn{s}_var"] + BN_EPS)
        shift = p[f"bn{s}_beta"] - p[f"bn{s}_mean"] * scale
        return jnp.maximum(pool * scale[None, :, None, None] + shift[None, :, None, None], 0.0)

    h = jnp.zeros((bsz, RNN), jnp.float32)
    c = jnp.zeros((bsz, RNN), jnp.float32)
    for t in range(nt):
        xt = x[:, t][:, None, :, :]
        o = stage(stage(stage(stage(xt, 1), 2), 3), 4)
        feat = o.reshape(bsz, -1)
        proj = jnp.dot(feat, p["wp"], precision=hi) + p["bp"][0]
        gates = (jnp.dot(proj, p["wih"], precision=hi)
                 + jnp.dot(h, p["whh"], precision=hi) + p["bg"][0])
        i = jax.nn.sigmoid(gates[:, 0 * RNN:1 * RNN])
        f = jax.nn.sigmoid(gates[:, 1 * RNN:2 * RNN])
        g = jnp.tanh(gates[:, 2 * RNN:3 * RNN])
        og = jax.nn.sigmoid(gates[:, 3 * RNN:4 * RNN])
        c = f * c + i * g
        h = og * jnp.tanh(c)
    return jnp.dot(h, p["wc"], precision=hi) + p["bc"][0]


if __name__ == "__main__":
    key = jax.random.PRNGKey(0)
    kx, kp = jax.random.split(key)
    x = jax.random.normal(kx, (B, T, H_IN, W_IN), jnp.float32)
    params = init_params(kp)

    (logits,) = jax.jit(conv_rnn_forward)(x, params)
    logits = jax.block_until_ready(logits)
    assert logits.shape == (B, 2) and logits.dtype == jnp.float32

    ref = ref_forward(x, params)
    np.testing.assert_allclose(np.asarray(logits), np.asarray(ref), rtol=5e-2, atol=5e-2)

    print("KERNEL_OK")
</pallas_src>

<mosaic_0001>
module attributes {stable_mosaic.version = 11 : i64} {
  func.func @conv_feats_kernel(%arg0: i32, %arg1: memref<2x1x42x48xf32, #tpu.memory_space<vmem>>, %arg2: memref<3x48x276xf32, #tpu.memory_space<vmem>>, %arg3: memref<3x274x252xf32, #tpu.memory_space<vmem>>, %arg4: memref<3x250x228xf32, #tpu.memory_space<vmem>>, %arg5: memref<3x226x34xf32, #tpu.memory_space<vmem>>, %arg6: memref<2x274xf32, #tpu.memory_space<vmem>>, %arg7: memref<2x250xf32, #tpu.memory_space<vmem>>, %arg8: memref<2x226xf32, #tpu.memory_space<vmem>>, %arg9: memref<2x32xf32, #tpu.memory_space<vmem>>, %arg10: memref<1x2x832xf32, #tpu.memory_space<vmem>>) attributes {dimension_semantics = [#tpu.dimension_semantics<parallel>], iteration_bounds = array<i64: 4>, scalar_prefetch = 0 : i64, scratch_operands = 0 : i64, tpu.core_type = #tpu.core_type<tc>, window_params = [{transform_indices = @transform_0, window_bounds = array<i64: 2, 1, 42, 48>}, {pipeline_mode = #tpu.pipeline_mode<synchronous>, transform_indices = @transform_1, window_bounds = array<i64: 3, 48, 276>}, {pipeline_mode = #tpu.pipeline_mode<synchronous>, transform_indices = @transform_2, window_bounds = array<i64: 3, 274, 252>}, {pipeline_mode = #tpu.pipeline_mode<synchronous>, transform_indices = @transform_3, window_bounds = array<i64: 3, 250, 228>}, {pipeline_mode = #tpu.pipeline_mode<synchronous>, transform_indices = @transform_4, window_bounds = array<i64: 3, 226, 34>}, {pipeline_mode = #tpu.pipeline_mode<synchronous>, transform_indices = @transform_5, window_bounds = array<i64: 2, 274>}, {pipeline_mode = #tpu.pipeline_mode<synchronous>, transform_indices = @transform_6, window_bounds = array<i64: 2, 250>}, {pipeline_mode = #tpu.pipeline_mode<synchronous>, transform_indices = @transform_7, window_bounds = array<i64: 2, 226>}, {pipeline_mode = #tpu.pipeline_mode<synchronous>, transform_indices = @transform_8, window_bounds = array<i64: 2, 32>}, {transform_indices = @transform_9, window_bounds = array<i64: 1, 2, 832>}]} {
    %c0 = arith.constant 0 : index
    %c0_0 = arith.constant 0 : index
    %c0_1 = arith.constant 0 : index
    %c0_2 = arith.constant 0 : index
    %0 = vector.load %arg1[%c0, %c0_0, %c0_1, %c0_2] : memref<2x1x42x48xf32, #tpu.memory_space<vmem>>, vector<1x1x42x48xf32>
    %1 = vector.shape_cast %0 : vector<1x1x42x48xf32> to vector<42x48xf32>
    %2 = vector.extract_strided_slice %1 {offsets = [0, 0], sizes = [40, 48], strides = [1, 1]} : vector<42x48xf32> to vector<40x48xf32>
    %c0_3 = arith.constant 0 : index
    %c0_4 = arith.constant 0 : index
    %c0_5 = arith.constant 0 : index
    %3 = vector.load %arg2[%c0_3, %c0_4, %c0_5] : memref<3x48x276xf32, #tpu.memory_space<vmem>>, vector<1x48x276xf32>
    %4 = vector.shape_cast %3 : vector<1x48x276xf32> to vector<48x276xf32>
    %cst = arith.constant dense<0.000000e+00> : vector<40x276xf32>
    %5 = tpu.matmul %2, %4, %cst {dimension_numbers = #tpu.dot_dimension_numbers<[1], [0], [0], [1], [0, 0, 1, 1], [], []>} : vector<40x48xf32>, vector<48x276xf32>, vector<40x276xf32> -> vector<40x276xf32>
    %6 = vector.extract_strided_slice %1 {offsets = [1, 0], sizes = [40, 48], strides = [1, 1]} : vector<42x48xf32> to vector<40x48xf32>
    %c1 = arith.constant 1 : index
    %c0_6 = arith.constant 0 : index
    %c0_7 = arith.constant 0 : index
    %7 = vector.load %arg2[%c1, %c0_6, %c0_7] : memref<3x48x276xf32, #tpu.memory_space<vmem>>, vector<1x48x276xf32>
    %8 = vector.shape_cast %7 : vector<1x48x276xf32> to vector<48x276xf32>
    %cst_8 = arith.constant dense<0.000000e+00> : vector<40x276xf32>
    %9 = tpu.matmul %6, %8, %cst_8 {dimension_numbers = #tpu.dot_dimension_numbers<[1], [0], [0], [1], [0, 0, 1, 1], [], []>} : vector<40x48xf32>, vector<48x276xf32>, vector<40x276xf32> -> vector<40x276xf32>
    %10 = arith.addf %5, %9 : vector<40x276xf32>
    %11 = vector.extract_strided_slice %1 {offsets = [2, 0], sizes = [40, 48], strides = [1, 1]} : vector<42x48xf32> to vector<40x48xf32>
    %c2 = arith.constant 2 : index
    %c0_9 = arith.constant 0 : index
    %c0_10 = arith.constant 0 : index
    %12 = vector.load %arg2[%c2, %c0_9, %c0_10] : memref<3x48x276xf32, #tpu.memory_space<vmem>>, vector<1x48x276xf32>
    %13 = vector.shape_cast %12 : vector<1x48x276xf32> to vector<48x276xf32>
    %cst_11 = arith.constant dense<0.000000e+00> : vector<40x276xf32>
    %14 = tpu.matmul %11, %13, %cst_11 {dimension_numbers = #tpu.dot_dimension_numbers<[1], [0], [0], [1], [0, 0, 1, 1], [], []>} : vector<40x48xf32>, vector<48x276xf32>, vector<40x276xf32> -> vector<40x276xf32>
    %15 = arith.addf %10, %14 : vector<40x276xf32>
    %16 = vector.extract_strided_slice %15 {offsets = [0, 0], sizes = [40, 274], strides = [1, 1]} : vector<40x276xf32> to vector<40x274xf32>
    %17 = vector.extract_strided_slice %15 {offsets = [0, 1], sizes = [40, 274], strides = [1, 1]} : vector<40x276xf32> to vector<40x274xf32>
    %18 = arith.maximumf %16, %17 : vector<40x274xf32>
    %19 = vector.extract_strided_slice %15 {offsets = [0, 2], sizes = [40, 274], strides = [1, 1]} : vector<40x276xf32> to vector<40x274xf32>
    %20 = arith.maximumf %18, %19 : vector<40x274xf32>
    %21 = vector.extract_strided_slice %20 {offsets = [0, 0], sizes = [38, 274], strides = [1, 1]} : vector<40x274xf32> to vector<38x274xf32>
    %22 = vector.extract_strided_slice %20 {offsets = [1, 0], sizes = [38, 274], strides = [1, 1]} : vector<40x274xf32> to vector<38x274xf32>
    %23 = arith.maximumf %21, %22 : vector<38x274xf32>
    %24 = vector.extract_strided_slice %20 {offsets = [2, 0], sizes = [38, 274], strides = [1, 1]} : vector<40x274xf32> to vector<38x274xf32>
    %25 = arith.maximumf %23, %24 : vector<38x274xf32>
    %c0_12 = arith.constant 0 : index
    %c0_13 = arith.constant 0 : index
    %26 = vector.load %arg6[%c0_12, %c0_13] : memref<2x274xf32, #tpu.memory_space<vmem>>, vector<1x274xf32>
    %27 = vector.broadcast %26 : vector<1x274xf32> to vector<38x274xf32>
    %28 = arith.mulf %25, %27 : vector<38x274xf32>
    %c1_14 = arith.constant 1 : index
    %c0_15 = arith.constant 0 : index
    %29 = vector.load %arg6[%c1_14, %c0_15] : memref<2x274xf32, #tpu.memory_space<vmem>>, vector<1x274xf32>
    %30 = vector.broadcast %29 : vector<1x274xf32> to vector<38x274xf32>
    %31 = arith.addf %28, %30 : vector<38x274xf32>
    %cst_16 = arith.constant 0.000000e+00 : f32
    %32 = vector.broadcast %cst_16 : f32 to vector<38x274xf32>
    %33 = arith.maximumf %31, %32 : vector<38x274xf32>
    %34 = vector.extract_strided_slice %33 {offsets = [0, 0], sizes = [36, 274], strides = [1, 1]} : vector<38x274xf32> to vector<36x274xf32>
    %c0_17 = arith.constant 0 : index
    %c0_18 = arith.constant 0 : index
    %c0_19 = arith.constant 0 : index
    %35 = vector.load %arg3[%c0_17, %c0_18, %c0_19] : memref<3x274x252xf32, #tpu.memory_space<vmem>>, vector<1x274x252xf32>
    %36 = vector.shape_cast %35 : vector<1x274x252xf32> to vector<274x252xf32>
    %cst_20 = arith.constant dense<0.000000e+00> : vector<36x252xf32>
    %37 = tpu.matmul %34, %36, %cst_20 {dimension_numbers = #tpu.dot_dimension_numbers<[1], [0], [0], [1], [0, 0, 1, 1], [], []>} : vector<36x274xf32>, vector<274x252xf32>, vector<36x252xf32> -> vector<36x252xf32>
    %38 = vector.extract_strided_slice %33 {offsets = [1, 0], sizes = [36, 274], strides = [1, 1]} : vector<38x274xf32> to vector<36x274xf32>
    %c1_21 = arith.constant 1 : index
    %c0_22 = arith.constant 0 : index
    %c0_23 = arith.constant 0 : index
    %39 = vector.load %arg3[%c1_21, %c0_22, %c0_23] : memref<3x274x252xf32, #tpu.memory_space<vmem>>, vector<1x274x252xf32>
    %40 = vector.shape_cast %39 : vector<1x274x252xf32> to vector<274x252xf32>
    %cst_24 = arith.constant dense<0.000000e+00> : vector<36x252xf32>
    %41 = tpu.matmul %38, %40, %cst_24 {dimension_numbers = #tpu.dot_dimension_numbers<[1], [0], [0], [1], [0, 0, 1, 1], [], []>} : vector<36x274xf32>, vector<274x252xf32>, vector<36x252xf32> -> vector<36x252xf32>
    %42 = arith.addf %37, %41 : vector<36x252xf32>
    %43 = vector.extract_strided_slice %33 {offsets = [2, 0], sizes = [36, 274], strides = [1, 1]} : vector<38x274xf32> to vector<36x274xf32>
    %c2_25 = arith.constant 2 : index
    %c0_26 = arith.constant 0 : index
    %c0_27 = arith.constant 0 : index
    %44 = vector.load %arg3[%c2_25, %c0_26, %c0_27] : memref<3x274x252xf32, #tpu.memory_space<vmem>>, vector<1x274x252xf32>
    %45 = vector.shape_cast %44 : vector<1x274x252xf32> to vector<274x252xf32>
    %cst_28 = arith.constant dense<0.000000e+00> : vector<36x252xf32>
    %46 = tpu.matmul %43, %45, %cst_28 {dimension_numbers = #tpu.dot_dimension_numbers<[1], [0], [0], [1], [0, 0, 1, 1], [], []>} : vector<36x274xf32>, vector<274x252xf32>, vector<36x252xf32> -> vector<36x252xf32>
    %47 = arith.addf %42, %46 : vector<36x252xf32>
    %48 = vector.extract_strided_slice %47 {offsets = [0, 0], sizes = [36, 250], strides = [1, 1]} : vector<36x252xf32> to vector<36x250xf32>
    %49 = vector.extract_strided_slice %47 {offsets = [0, 1], sizes = [36, 250], strides = [1, 1]} : vector<36x252xf32> to vector<36x250xf32>
    %50 = arith.maximumf %48, %49 : vector<36x250xf32>
    %51 = vector.extract_strided_slice %47 {offsets = [0, 2], sizes = [36, 250], strides = [1, 1]} : vector<36x252xf32> to vector<36x250xf32>
    %52 = arith.maximumf %50, %51 : vector<36x250xf32>
    %53 = vector.extract_strided_slice %52 {offsets = [0, 0], sizes = [34, 250], strides = [1, 1]} : vector<36x250xf32> to vector<34x250xf32>
    %54 = vector.extract_strided_slice %52 {offsets = [1, 0], sizes = [34, 250], strides = [1, 1]} : vector<36x250xf32> to vector<34x250xf32>
    %55 = arith.maximumf %53, %54 : vector<34x250xf32>
    %56 = vector.extract_strided_slice %52 {offsets = [2, 0], sizes = [34, 250], strides = [1, 1]} : vector<36x250xf32> to vector<34x250xf32>
    %57 = arith.maximumf %55, %56 : vector<34x250xf32>
    %c0_29 = arith.constant 0 : index
    %c0_30 = arith.constant 0 : index
    %58 = vector.load %arg7[%c0_29, %c0_30] : memref<2x250xf32, #tpu.memory_space<vmem>>, vector<1x250xf32>
    %59 = vector.broadcast %58 : vector<1x250xf32> to vector<34x250xf32>
    %60 = arith.mulf %57, %59 : vector<34x250xf32>
    %c1_31 = arith.constant 1 : index
    %c0_32 = arith.constant 0 : index
    %61 = vector.load %arg7[%c1_31, %c0_32] : memref<2x250xf32, #tpu.memory_space<vmem>>, vector<1x250xf32>
    %62 = vector.broadcast %61 : vector<1x250xf32> to vector<34x250xf32>
    %63 = arith.addf %60, %62 : vector<34x250xf32>
    %cst_33 = arith.constant 0.000000e+00 : f32
    %64 = vector.broadcast %cst_33 : f32 to vector<34x250xf32>
    %65 = arith.maximumf %63, %64 : vector<34x250xf32>
    %66 = vector.extract_strided_slice %65 {offsets = [0, 0], sizes = [32, 250], strides = [1, 1]} : vector<34x250xf32> to vector<32x250xf32>
    %c0_34 = arith.constant 0 : index
    %c0_35 = arith.constant 0 : index
    %c0_36 = arith.constant 0 : index
    %67 = vector.load %arg4[%c0_34, %c0_35, %c0_36] : memref<3x250x228xf32, #tpu.memory_space<vmem>>, vector<1x250x228xf32>
    %68 = vector.shape_cast %67 : vector<1x250x228xf32> to vector<250x228xf32>
    %cst_37 = arith.constant dense<0.000000e+00> : vector<32x228xf32>
    %69 = tpu.matmul %66, %68, %cst_37 {dimension_numbers = #tpu.dot_dimension_numbers<[1], [0], [0], [1], [0, 0, 1, 1], [], []>} : vector<32x250xf32>, vector<250x228xf32>, vector<32x228xf32> -> vector<32x228xf32>
    %70 = vector.extract_strided_slice %65 {offsets = [1, 0], sizes = [32, 250], strides = [1, 1]} : vector<34x250xf32> to vector<32x250xf32>
    %c1_38 = arith.constant 1 : index
    %c0_39 = arith.constant 0 : index
    %c0_40 = arith.constant 0 : index
    %71 = vector.load %arg4[%c1_38, %c0_39, %c0_40] : memref<3x250x228xf32, #tpu.memory_space<vmem>>, vector<1x250x228xf32>
    %72 = vector.shape_cast %71 : vector<1x250x228xf32> to vector<250x228xf32>
    %cst_41 = arith.constant dense<0.000000e+00> : vector<32x228xf32>
    %73 = tpu.matmul %70, %72, %cst_41 {dimension_numbers = #tpu.dot_dimension_numbers<[1], [0], [0], [1], [0, 0, 1, 1], [], []>} : vector<32x250xf32>, vector<250x228xf32>, vector<32x228xf32> -> vector<32x228xf32>
    %74 = arith.addf %69, %73 : vector<32x228xf32>
    %75 = vector.extract_strided_slice %65 {offsets = [2, 0], sizes = [32, 250], strides = [1, 1]} : vector<34x250xf32> to vector<32x250xf32>
    %c2_42 = arith.constant 2 : index
    %c0_43 = arith.constant 0 : index
    %c0_44 = arith.constant 0 : index
    %76 = vector.load %arg4[%c2_42, %c0_43, %c0_44] : memref<3x250x228xf32, #tpu.memory_space<vmem>>, vector<1x250x228xf32>
    %77 = vector.shape_cast %76 : vector<1x250x228xf32> to vector<250x228xf32>
    %cst_45 = arith.constant dense<0.000000e+00> : vector<32x228xf32>
    %78 = tpu.matmul %75, %77, %cst_45 {dimension_numbers = #tpu.dot_dimension_numbers<[1], [0], [0], [1], [0, 0, 1, 1], [], []>} : vector<32x250xf32>, vector<250x228xf32>, vector<32x228xf32> -> vector<32x228xf32>
    %79 = arith.addf %74, %78 : vector<32x228xf32>
    %80 = vector.extract_strided_slice %79 {offsets = [0, 0], sizes = [32, 226], strides = [1, 1]} : vector<32x228xf32> to vector<32x226xf32>
    %81 = vector.extract_strided_slice %79 {offsets = [0, 1], sizes = [32, 226], strides = [1, 1]} : vector<32x228xf32> to vector<32x226xf32>
    %82 = arith.maximumf %80, %81 : vector<32x226xf32>
    %83 = vector.extract_strided_slice %79 {offsets = [0, 2], sizes = [32, 226], strides = [1, 1]} : vector<32x228xf32> to vector<32x226xf32>
    %84 = arith.maximumf %82, %83 : vector<32x226xf32>
    %85 = vector.extract_strided_slice %84 {offsets = [0, 0], sizes = [30, 226], strides = [1, 1]} : vector<32x226xf32> to vector<30x226xf32>
    %86 = vector.extract_strided_slice %84 {offsets = [1, 0], sizes = [30, 226], strides = [1, 1]} : vector<32x226xf32> to vector<30x226xf32>
    %87 = arith.maximumf %85, %86 : vector<30x226xf32>
    %88 = vector.extract_strided_slice %84 {offsets = [2, 0], sizes = [30, 226], strides = [1, 1]} : vector<32x226xf32> to vector<30x226xf32>
    %89 = arith.maximumf %87, %88 : vector<30x226xf32>
    %c0_46 = arith.constant 0 : index
    %c0_47 = arith.constant 0 : index
    %90 = vector.load %arg8[%c0_46, %c0_47] : memref<2x226xf32, #tpu.memory_space<vmem>>, vector<1x226xf32>
    %91 = vector.broadcast %90 : vector<1x226xf32> to vector<30x226xf32>
    %92 = arith.mulf %89, %91 : vector<30x226xf32>
    %c1_48 = arith.constant 1 : index
    %c0_49 = arith.constant 0 : index
    %93 = vector.load %arg8[%c1_48, %c0_49] : memref<2x226xf32, #tpu.memory_space<vmem>>, vector<1x226xf32>
    %94 = vector.broadcast %93 : vector<1x226xf32> to vector<30x226xf32>
    %95 = arith.addf %92, %94 : vector<30x226xf32>
    %cst_50 = arith.constant 0.000000e+00 : f32
    %96 = vector.broadcast %cst_50 : f32 to vector<30x226xf32>
    %97 = arith.maximumf %95, %96 : vector<30x226xf32>
    %98 = vector.extract_strided_slice %97 {offsets = [0, 0], sizes = [28, 226], strides = [1, 1]} : vector<30x226xf32> to vector<28x226xf32>
    %c0_51 = arith.constant 0 : index
    %c0_52 = arith.constant 0 : index
    %c0_53 = arith.constant 0 : index
    %99 = vector.load %arg5[%c0_51, %c0_52, %c0_53] : memref<3x226x34xf32, #tpu.memory_space<vmem>>, vector<1x226x34xf32>
    %100 = vector.shape_cast %99 : vector<1x226x34xf32> to vector<226x34xf32>
    %cst_54 = arith.constant dense<0.000000e+00> : vector<28x34xf32>
    %101 = tpu.matmul %98, %100, %cst_54 {dimension_numbers = #tpu.dot_dimension_numbers<[1], [0], [0], [1], [0, 0, 1, 1], [], []>} : vector<28x226xf32>, vector<226x34xf32>, vector<28x34xf32> -> vector<28x34xf32>
    %102 = vector.extract_strided_slice %97 {offsets = [1, 0], sizes = [28, 226], strides = [1, 1]} : vector<30x226xf32> to vector<28x226xf32>
    %c1_55 = arith.constant 1 : index
    %c0_56 = arith.constant 0 : index
    %c0_57 = arith.constant 0 : index
    %103 = vector.load %arg5[%c1_55, %c0_56, %c0_57] : memref<3x226x34xf32, #tpu.memory_space<vmem>>, vector<1x226x34xf32>
    %104 = vector.shape_cast %103 : vector<1x226x34xf32> to vector<226x34xf32>
    %cst_58 = arith.constant dense<0.000000e+00> : vector<28x34xf32>
    %105 = tpu.matmul %102, %104, %cst_58 {dimension_numbers = #tpu.dot_dimension_numbers<[1], [0], [0], [1], [0, 0, 1, 1], [], []>} : vector<28x226xf32>, vector<226x34xf32>, vector<28x34xf32> -> vector<28x34xf32>
    %106 = arith.addf %101, %105 : vector<28x34xf32>
    %107 = vector.extract_strided_slice %97 {offsets = [2, 0], sizes = [28, 226], strides = [1, 1]} : vector<30x226xf32> to vector<28x226xf32>
    %c2_59 = arith.constant 2 : index
    %c0_60 = arith.constant 0 : index
    %c0_61 = arith.constant 0 : index
    %108 = vector.load %arg5[%c2_59, %c0_60, %c0_61] : memref<3x226x34xf32, #tpu.memory_space<vmem>>, vector<1x226x34xf32>
    %109 = vector.shape_cast %108 : vector<1x226x34xf32> to vector<226x34xf32>
    %cst_62 = arith.constant dense<0.000000e+00> : vector<28x34xf32>
    %110 = tpu.matmul %107, %109, %cst_62 {dimension_numbers = #tpu.dot_dimension_numbers<[1], [0], [0], [1], [0, 0, 1, 1], [], []>} : vector<28x226xf32>, vector<226x34xf32>, vector<28x34xf32> -> vector<28x34xf32>
    %111 = arith.addf %106, %110 : vector<28x34xf32>
    %112 = vector.extract_strided_slice %111 {offsets = [0, 0], sizes = [28, 32], strides = [1, 1]} : vector<28x34xf32> to vector<28x32xf32>
    %113 = vector.extract_strided_slice %111 {offsets = [0, 1], sizes = [28, 32], strides = [1, 1]} : vector<28x34xf32> to vector<28x32xf32>
    %114 = arith.maximumf %112, %113 : vector<28x32xf32>
    %115 = vector.extract_strided_slice %111 {offsets = [0, 2], sizes = [28, 32], strides = [1, 1]} : vector<28x34xf32> to vector<28x32xf32>
    %116 = arith.maximumf %114, %115 : vector<28x32xf32>
    %117 = vector.extract_strided_slice %116 {offsets = [0, 0], sizes = [26, 32], strides = [1, 1]} : vector<28x32xf32> to vector<26x32xf32>
    %118 = vector.extract_strided_slice %116 {offsets = [1, 0], sizes = [26, 32], strides = [1, 1]} : vector<28x32xf32> to vector<26x32xf32>
    %119 = arith.maximumf %117, %118 : vector<26x32xf32>
    %120 = vector.extract_strided_slice %116 {offsets = [2, 0], sizes = [26, 32], strides = [1, 1]} : vector<28x32xf32> to vector<26x32xf32>
    %121 = arith.maximumf %119, %120 : vector<26x32xf32>
    %c0_63 = arith.constant 0 : index
    %c0_64 = arith.constant 0 : index
    %122 = vector.load %arg9[%c0_63, %c0_64] : memref<2x32xf32, #tpu.memory_space<vmem>>, vector<1x32xf32>
    %123 = vector.broadcast %122 : vector<1x32xf32> to vector<26x32xf32>
    %124 = arith.mulf %121, %123 : vector<26x32xf32>
    %c1_65 = arith.constant 1 : index
    %c0_66 = arith.constant 0 : index
    %125 = vector.load %arg9[%c1_65, %c0_66] : memref<2x32xf32, #tpu.memory_space<vmem>>, vector<1x32xf32>
    %126 = vector.broadcast %125 : vector<1x32xf32> to vector<26x32xf32>
    %127 = arith.addf %124, %126 : vector<26x32xf32>
    %cst_67 = arith.constant 0.000000e+00 : f32
    %128 = vector.broadcast %cst_67 : f32 to vector<26x32xf32>
    %129 = arith.maximumf %127, %128 : vector<26x32xf32>
    %130 = vector.extract_strided_slice %129 {offsets = [0, 0], sizes = [1, 32], strides = [1, 1]} : vector<26x32xf32> to vector<1x32xf32>
    %c0_68 = arith.constant 0 : index
    %c0_69 = arith.constant 0 : index
    %c0_70 = arith.constant 0 : index
    %131 = vector.load %arg10[%c0_68, %c0_69, %c0_70] : memref<1x2x832xf32, #tpu.memory_space<vmem>>, vector<1x1x32xf32>
    %132 = vector.shape_cast %131 : vector<1x1x32xf32> to vector<1x32xf32>
    %133 = vector.shape_cast %130 : vector<1x32xf32> to vector<1x1x32xf32>
    tpu.vector_store %arg10[%c0_68, %c0_69, %c0_70], %133 {strides = array<i32>} : memref<1x2x832xf32, #tpu.memory_space<vmem>>, vector<1x1x32xf32>,
    %134 = vector.extract_strided_slice %129 {offsets = [1, 0], sizes = [1, 32], strides = [1, 1]} : vector<26x32xf32> to vector<1x32xf32>
    %c0_71 = arith.constant 0 : index
    %c0_72 = arith.constant 0 : index
    %c32 = arith.constant 32 : index
    %135 = vector.load %arg10[%c0_71, %c0_72, %c32] : memref<1x2x832xf32, #tpu.memory_space<vmem>>, vector<1x1x32xf32>
    %136 = vector.shape_cast %135 : vector<1x1x32xf32> to vector<1x32xf32>
    %137 = vector.shape_cast %134 : vector<1x32xf32> to vector<1x1x32xf32>
    tpu.vector_store %arg10[%c0_71, %c0_72, %c32], %137 {strides = array<i32>} : memref<1x2x832xf32, #tpu.memory_space<vmem>>, vector<1x1x32xf32>,
    %138 = vector.extract_strided_slice %129 {offsets = [2, 0], sizes = [1, 32], strides = [1, 1]} : vector<26x32xf32> to vector<1x32xf32>
    %c0_73 = arith.constant 0 : index
    %c0_74 = arith.constant 0 : index
    %c64 = arith.constant 64 : index
    %139 = vector.load %arg10[%c0_73, %c0_74, %c64] : memref<1x2x832xf32, #tpu.memory_space<vmem>>, vector<1x1x32xf32>
    %140 = vector.shape_cast %139 : vector<1x1x32xf32> to vector<1x32xf32>
    %141 = vector.shape_cast %138 : vector<1x32xf32> to vector<1x1x32xf32>
    tpu.vector_store %arg10[%c0_73, %c0_74, %c64], %141 {strides = array<i32>} : memref<1x2x832xf32, #tpu.memory_space<vmem>>, vector<1x1x32xf32>,
    %142 = vector.extract_strided_slice %129 {offsets = [3, 0], sizes = [1, 32], strides = [1, 1]} : vector<26x32xf32> to vector<1x32xf32>
    %c0_75 = arith.constant 0 : index
    %c0_76 = arith.constant 0 : index
    %c96 = arith.constant 96 : index
    %143 = vector.load %arg10[%c0_75, %c0_76, %c96] : memref<1x2x832xf32, #tpu.memory_space<vmem>>, vector<1x1x32xf32>
    %144 = vector.shape_cast %143 : vector<1x1x32xf32> to vector<1x32xf32>
    %145 = vector.shape_cast %142 : vector<1x32xf32> to vector<1x1x32xf32>
    tpu.vector_store %arg10[%c0_75, %c0_76, %c96], %145 {strides = array<i32>} : memref<1x2x832xf32, #tpu.memory_space<vmem>>, vector<1x1x32xf32>,
    %146 = vector.extract_strided_slice %129 {offsets = [4, 0], sizes = [1, 32], strides = [1, 1]} : vector<26x32xf32> to vector<1x32xf32>
    %c0_77 = arith.constant 0 : index
    %c0_78 = arith.constant 0 : index
    %c128 = arith.constant 128 : index
    %147 = vector.load %arg10[%c0_77, %c0_78, %c128] : memref<1x2x832xf32, #tpu.memory_space<vmem>>, vector<1x1x32xf32>
    %148 = vector.shape_cast %147 : vector<1x1x32xf32> to vector<1x32xf32>
    %149 = vector.shape_cast %146 : vector<1x32xf32> to vector<1x1x32xf32>
    tpu.vector_store %arg10[%c0_77, %c0_78, %c128], %149 {strides = array<i32>} : memref<1x2x832xf32, #tpu.memory_space<vmem>>, vector<1x1x32xf32>,
    %150 = vector.extract_strided_slice %129 {offsets = [5, 0], sizes = [1, 32], strides = [1, 1]} : vector<26x32xf32> to vector<1x32xf32>
    %c0_79 = arith.constant 0 : index
    %c0_80 = arith.constant 0 : index
    %c160 = arith.constant 160 : index
    %151 = vector.load %arg10[%c0_79, %c0_80, %c160] : memref<1x2x832xf32, #tpu.memory_space<vmem>>, vector<1x1x32xf32>
    %152 = vector.shape_cast %151 : vector<1x1x32xf32> to vector<1x32xf32>
    %153 = vector.shape_cast %150 : vector<1x32xf32> to vector<1x1x32xf32>
    tpu.vector_store %arg10[%c0_79, %c0_80, %c160], %153 {strides = array<i32>} : memref<1x2x832xf32, #tpu.memory_space<vmem>>, vector<1x1x32xf32>,
    %154 = vector.extract_strided_slice %129 {offsets = [6, 0], sizes = [1, 32], strides = [1, 1]} : vector<26x32xf32> to vector<1x32xf32>
    %c0_81 = arith.constant 0 : index
    %c0_82 = arith.constant 0 : index
    %c192 = arith.constant 192 : index
    %155 = vector.load %arg10[%c0_81, %c0_82, %c192] : memref<1x2x832xf32, #tpu.memory_space<vmem>>, vector<1x1x32xf32>
    %156 = vector.shape_cast %155 : vector<1x1x32xf32> to vector<1x32xf32>
    %157 = vector.shape_cast %154 : vector<1x32xf32> to vector<1x1x32xf32>
    tpu.vector_store %arg10[%c0_81, %c0_82, %c192], %157 {strides = array<i32>} : memref<1x2x832xf32, #tpu.memory_space<vmem>>, vector<1x1x32xf32>,
    %158 = vector.extract_strided_slice %129 {offsets = [7, 0], sizes = [1, 32], strides = [1, 1]} : vector<26x32xf32> to vector<1x32xf32>
    %c0_83 = arith.constant 0 : index
    %c0_84 = arith.constant 0 : index
    %c224 = arith.constant 224 : index
    %159 = vector.load %arg10[%c0_83, %c0_84, %c224] : memref<1x2x832xf32, #tpu.memory_space<vmem>>, vector<1x1x32xf32>
    %160 = vector.shape_cast %159 : vector<1x1x32xf32> to vector<1x32xf32>
    %161 = vector.shape_cast %158 : vector<1x32xf32> to vector<1x1x32xf32>
    tpu.vector_store %arg10[%c0_83, %c0_84, %c224], %161 {strides = array<i32>} : memref<1x2x832xf32, #tpu.memory_space<vmem>>, vector<1x1x32xf32>,
    %162 = vector.extract_strided_slice %129 {offsets = [8, 0], sizes = [1, 32], strides = [1, 1]} : vector<26x32xf32> to vector<1x32xf32>
    %c0_85 = arith.constant 0 : index
    %c0_86 = arith.constant 0 : index
    %c256 = arith.constant 256 : index
    %163 = vector.load %arg10[%c0_85, %c0_86, %c256] : memref<1x2x832xf32, #tpu.memory_space<vmem>>, vector<1x1x32xf32>
    %164 = vector.shape_cast %163 : vector<1x1x32xf32> to vector<1x32xf32>
    %165 = vector.shape_cast %162 : vector<1x32xf32> to vector<1x1x32xf32>
    tpu.vector_store %arg10[%c0_85, %c0_86, %c256], %165 {strides = array<i32>} : memref<1x2x832xf32, #tpu.memory_space<vmem>>, vector<1x1x32xf32>,
    %166 = vector.extract_strided_slice %129 {offsets = [9, 0], sizes = [1, 32], strides = [1, 1]} : vector<26x32xf32> to vector<1x32xf32>
    %c0_87 = arith.constant 0 : index
    %c0_88 = arith.constant 0 : index
    %c288 = arith.constant 288 : index
    %167 = vector.load %arg10[%c0_87, %c0_88, %c288] : memref<1x2x832xf32, #tpu.memory_space<vmem>>, vector<1x1x32xf32>
    %168 = vector.shape_cast %167 : vector<1x1x32xf32> to vector<1x32xf32>
    %169 = vector.shape_cast %166 : vector<1x32xf32> to vector<1x1x32xf32>
    tpu.vector_store %arg10[%c0_87, %c0_88, %c288], %169 {strides = array<i32>} : memref<1x2x832xf32, #tpu.memory_space<vmem>>, vector<1x1x32xf32>,
    %170 = vector.extract_strided_slice %129 {offsets = [10, 0], sizes = [1, 32], strides = [1, 1]} : vector<26x32xf32> to vector<1x32xf32>
    %c0_89 = arith.constant 0 : index
    %c0_90 = arith.constant 0 : index
    %c320 = arith.constant 320 : index
    %171 = vector.load %arg10[%c0_89, %c0_90, %c320] : memref<1x2x832xf32, #tpu.memory_space<vmem>>, vector<1x1x32xf32>
    %172 = vector.shape_cast %171 : vector<1x1x32xf32> to vector<1x32xf32>
    %173 = vector.shape_cast %170 : vector<1x32xf32> to vector<1x1x32xf32>
    tpu.vector_store %arg10[%c0_89, %c0_90, %c320], %173 {strides = array<i32>} : memref<1x2x832xf32, #tpu.memory_space<vmem>>, vector<1x1x32xf32>,
    %174 = vector.extract_strided_slice %129 {offsets = [11, 0], sizes = [1, 32], strides = [1, 1]} : vector<26x32xf32> to vector<1x32xf32>
    %c0_91 = arith.constant 0 : index
    %c0_92 = arith.constant 0 : index
    %c352 = arith.constant 352 : index
    %175 = vector.load %arg10[%c0_91, %c0_92, %c352] : memref<1x2x832xf32, #tpu.memory_space<vmem>>, vector<1x1x32xf32>
    %176 = vector.shape_cast %175 : vector<1x1x32xf32> to vector<1x32xf32>
    %177 = vector.shape_cast %174 : vector<1x32xf32> to vector<1x1x32xf32>
    tpu.vector_store %arg10[%c0_91, %c0_92, %c352], %177 {strides = array<i32>} : memref<1x2x832xf32, #tpu.memory_space<vmem>>, vector<1x1x32xf32>,
    %178 = vector.extract_strided_slice %129 {offsets = [12, 0], sizes = [1, 32], strides = [1, 1]} : vector<26x32xf32> to vector<1x32xf32>
    %c0_93 = arith.constant 0 : index
    %c0_94 = arith.constant 0 : index
    %c384 = arith.constant 384 : index
    %179 = vector.load %arg10[%c0_93, %c0_94, %c384] : memref<1x2x832xf32, #tpu.memory_space<vmem>>, vector<1x1x32xf32>
    %180 = vector.shape_cast %179 : vector<1x1x32xf32> to vector<1x32xf32>
    %181 = vector.shape_cast %178 : vector<1x32xf32> to vector<1x1x32xf32>
    tpu.vector_store %arg10[%c0_93, %c0_94, %c384], %181 {strides = array<i32>} : memref<1x2x832xf32, #tpu.memory_space<vmem>>, vector<1x1x32xf32>,
    %182 = vector.extract_strided_slice %129 {offsets = [13, 0], sizes = [1, 32], strides = [1, 1]} : vector<26x32xf32> to vector<1x32xf32>
    %c0_95 = arith.constant 0 : index
    %c0_96 = arith.constant 0 : index
    %c416 = arith.constant 416 : index
    %183 = vector.load %arg10[%c0_95, %c0_96, %c416] : memref<1x2x832xf32, #tpu.memory_space<vmem>>, vector<1x1x32xf32>
    %184 = vector.shape_cast %183 : vector<1x1x32xf32> to vector<1x32xf32>
    %185 = vector.shape_cast %182 : vector<1x32xf32> to vector<1x1x32xf32>
    tpu.vector_store %arg10[%c0_95, %c0_96, %c416], %185 {strides = array<i32>} : memref<1x2x832xf32, #tpu.memory_space<vmem>>, vector<1x1x32xf32>,
    %186 = vector.extract_strided_slice %129 {offsets = [14, 0], sizes = [1, 32], strides = [1, 1]} : vector<26x32xf32> to vector<1x32xf32>
    %c0_97 = arith.constant 0 : index
    %c0_98 = arith.constant 0 : index
    %c448 = arith.constant 448 : index
    %187 = vector.load %arg10[%c0_97, %c0_98, %c448] : memref<1x2x832xf32, #tpu.memory_space<vmem>>, vector<1x1x32xf32>
    %188 = vector.shape_cast %187 : vector<1x1x32xf32> to vector<1x32xf32>
    %189 = vector.shape_cast %186 : vector<1x32xf32> to vector<1x1x32xf32>
    tpu.vector_store %arg10[%c0_97, %c0_98, %c448], %189 {strides = array<i32>} : memref<1x2x832xf32, #tpu.memory_space<vmem>>, vector<1x1x32xf32>,
    %190 = vector.extract_strided_slice %129 {offsets = [15, 0], sizes = [1, 32], strides = [1, 1]} : vector<26x32xf32> to vector<1x32xf32>
    %c0_99 = arith.constant 0 : index
    %c0_100 = arith.constant 0 : index
    %c480 = arith.constant 480 : index
    %191 = vector.load %arg10[%c0_99, %c0_100, %c480] : memref<1x2x832xf32, #tpu.memory_space<vmem>>, vector<1x1x32xf32>
    %192 = vector.shape_cast %191 : vector<1x1x32xf32> to vector<1x32xf32>
    %193 = vector.shape_cast %190 : vector<1x32xf32> to vector<1x1x32xf32>
    tpu.vector_store %arg10[%c0_99, %c0_100, %c480], %193 {strides = array<i32>} : memref<1x2x832xf32, #tpu.memory_space<vmem>>, vector<1x1x32xf32>,
    %194 = vector.extract_strided_slice %129 {offsets = [16, 0], sizes = [1, 32], strides = [1, 1]} : vector<26x32xf32> to vector<1x32xf32>
    %c0_101 = arith.constant 0 : index
    %c0_102 = arith.constant 0 : index
    %c512 = arith.constant 512 : index
    %195 = vector.load %arg10[%c0_101, %c0_102, %c512] : memref<1x2x832xf32, #tpu.memory_space<vmem>>, vector<1x1x32xf32>
    %196 = vector.shape_cast %195 : vector<1x1x32xf32> to vector<1x32xf32>
    %197 = vector.shape_cast %194 : vector<1x32xf32> to vector<1x1x32xf32>
    tpu.vector_store %arg10[%c0_101, %c0_102, %c512], %197 {strides = array<i32>} : memref<1x2x832xf32, #tpu.memory_space<vmem>>, vector<1x1x32xf32>,
    %198 = vector.extract_strided_slice %129 {offsets = [17, 0], sizes = [1, 32], strides = [1, 1]} : vector<26x32xf32> to vector<1x32xf32>
    %c0_103 = arith.constant 0 : index
    %c0_104 = arith.constant 0 : index
    %c544 = arith.constant 544 : index
    %199 = vector.load %arg10[%c0_103, %c0_104, %c544] : memref<1x2x832xf32, #tpu.memory_space<vmem>>, vector<1x1x32xf32>
    %200 = vector.shape_cast %199 : vector<1x1x32xf32> to vector<1x32xf32>
    %201 = vector.shape_cast %198 : vector<1x32xf32> to vector<1x1x32xf32>
    tpu.vector_store %arg10[%c0_103, %c0_104, %c544], %201 {strides = array<i32>} : memref<1x2x832xf32, #tpu.memory_space<vmem>>, vector<1x1x32xf32>,
    %202 = vector.extract_strided_slice %129 {offsets = [18, 0], sizes = [1, 32], strides = [1, 1]} : vector<26x32xf32> to vector<1x32xf32>
    %c0_105 = arith.constant 0 : index
    %c0_106 = arith.constant 0 : index
    %c576 = arith.constant 576 : index
    %203 = vector.load %arg10[%c0_105, %c0_106, %c576] : memref<1x2x832xf32, #tpu.memory_space<vmem>>, vector<1x1x32xf32>
    %204 = vector.shape_cast %203 : vector<1x1x32xf32> to vector<1x32xf32>
    %205 = vector.shape_cast %202 : vector<1x32xf32> to vector<1x1x32xf32>
    tpu.vector_store %arg10[%c0_105, %c0_106, %c576], %205 {strides = array<i32>} : memref<1x2x832xf32, #tpu.memory_space<vmem>>, vector<1x1x32xf32>,
    %206 = vector.extract_strided_slice %129 {offsets = [19, 0], sizes = [1, 32], strides = [1, 1]} : vector<26x32xf32> to vector<1x32xf32>
    %c0_107 = arith.constant 0 : index
    %c0_108 = arith.constant 0 : index
    %c608 = arith.constant 608 : index
    %207 = vector.load %arg10[%c0_107, %c0_108, %c608] : memref<1x2x832xf32, #tpu.memory_space<vmem>>, vector<1x1x32xf32>
    %208 = vector.shape_cast %207 : vector<1x1x32xf32> to vector<1x32xf32>
    %209 = vector.shape_cast %206 : vector<1x32xf32> to vector<1x1x32xf32>
    tpu.vector_store %arg10[%c0_107, %c0_108, %c608], %209 {strides = array<i32>} : memref<1x2x832xf32, #tpu.memory_space<vmem>>, vector<1x1x32xf32>,
    %210 = vector.extract_strided_slice %129 {offsets = [20, 0], sizes = [1, 32], strides = [1, 1]} : vector<26x32xf32> to vector<1x32xf32>
    %c0_109 = arith.constant 0 : index
    %c0_110 = arith.constant 0 : index
    %c640 = arith.constant 640 : index
    %211 = vector.load %arg10[%c0_109, %c0_110, %c640] : memref<1x2x832xf32, #tpu.memory_space<vmem>>, vector<1x1x32xf32>
    %212 = vector.shape_cast %211 : vector<1x1x32xf32> to vector<1x32xf32>
    %213 = vector.shape_cast %210 : vector<1x32xf32> to vector<1x1x32xf32>
    tpu.vector_store %arg10[%c0_109, %c0_110, %c640], %213 {strides = array<i32>} : memref<1x2x832xf32, #tpu.memory_space<vmem>>, vector<1x1x32xf32>,
    %214 = vector.extract_strided_slice %129 {offsets = [21, 0], sizes = [1, 32], strides = [1, 1]} : vector<26x32xf32> to vector<1x32xf32>
    %c0_111 = arith.constant 0 : index
    %c0_112 = arith.constant 0 : index
    %c672 = arith.constant 672 : index
    %215 = vector.load %arg10[%c0_111, %c0_112, %c672] : memref<1x2x832xf32, #tpu.memory_space<vmem>>, vector<1x1x32xf32>
    %216 = vector.shape_cast %215 : vector<1x1x32xf32> to vector<1x32xf32>
    %217 = vector.shape_cast %214 : vector<1x32xf32> to vector<1x1x32xf32>
    tpu.vector_store %arg10[%c0_111, %c0_112, %c672], %217 {strides = array<i32>} : memref<1x2x832xf32, #tpu.memory_space<vmem>>, vector<1x1x32xf32>,
    %218 = vector.extract_strided_slice %129 {offsets = [22, 0], sizes = [1, 32], strides = [1, 1]} : vector<26x32xf32> to vector<1x32xf32>
    %c0_113 = arith.constant 0 : index
    %c0_114 = arith.constant 0 : index
    %c704 = arith.constant 704 : index
    %219 = vector.load %arg10[%c0_113, %c0_114, %c704] : memref<1x2x832xf32, #tpu.memory_space<vmem>>, vector<1x1x32xf32>
    %220 = vector.shape_cast %219 : vector<1x1x32xf32> to vector<1x32xf32>
    %221 = vector.shape_cast %218 : vector<1x32xf32> to vector<1x1x32xf32>
    tpu.vector_store %arg10[%c0_113, %c0_114, %c704], %221 {strides = array<i32>} : memref<1x2x832xf32, #tpu.memory_space<vmem>>, vector<1x1x32xf32>,
    %222 = vector.extract_strided_slice %129 {offsets = [23, 0], sizes = [1, 32], strides = [1, 1]} : vector<26x32xf32> to vector<1x32xf32>
    %c0_115 = arith.constant 0 : index
    %c0_116 = arith.constant 0 : index
    %c736 = arith.constant 736 : index
    %223 = vector.load %arg10[%c0_115, %c0_116, %c736] : memref<1x2x832xf32, #tpu.memory_space<vmem>>, vector<1x1x32xf32>
    %224 = vector.shape_cast %223 : vector<1x1x32xf32> to vector<1x32xf32>
    %225 = vector.shape_cast %222 : vector<1x32xf32> to vector<1x1x32xf32>
    tpu.vector_store %arg10[%c0_115, %c0_116, %c736], %225 {strides = array<i32>} : memref<1x2x832xf32, #tpu.memory_space<vmem>>, vector<1x1x32xf32>,
    %226 = vector.extract_strided_slice %129 {offsets = [24, 0], sizes = [1, 32], strides = [1, 1]} : vector<26x32xf32> to vector<1x32xf32>
    %c0_117 = arith.constant 0 : index
    %c0_118 = arith.constant 0 : index
    %c768 = arith.constant 768 : index
    %227 = vector.load %arg10[%c0_117, %c0_118, %c768] : memref<1x2x832xf32, #tpu.memory_space<vmem>>, vector<1x1x32xf32>
    %228 = vector.shape_cast %227 : vector<1x1x32xf32> to vector<1x32xf32>
    %229 = vector.shape_cast %226 : vector<1x32xf32> to vector<1x1x32xf32>
    tpu.vector_store %arg10[%c0_117, %c0_118, %c768], %229 {strides = array<i32>} : memref<1x2x832xf32, #tpu.memory_space<vmem>>, vector<1x1x32xf32>,
    %230 = vector.extract_strided_slice %129 {offsets = [25, 0], sizes = [1, 32], strides = [1, 1]} : vector<26x32xf32> to vector<1x32xf32>
    %c0_119 = arith.constant 0 : index
    %c0_120 = arith.constant 0 : index
    %c800 = arith.constant 800 : index
    %231 = vector.load %arg10[%c0_119, %c0_120, %c800] : memref<1x2x832xf32, #tpu.memory_space<vmem>>, vector<1x1x32xf32>
    %232 = vector.shape_cast %231 : vector<1x1x32xf32> to vector<1x32xf32>
    %233 = vector.shape_cast %230 : vector<1x32xf32> to vector<1x1x32xf32>
    tpu.vector_store %arg10[%c0_119, %c0_120, %c800], %233 {strides = array<i32>} : memref<1x2x832xf32, #tpu.memory_space<vmem>>, vector<1x1x32xf32>,
    %c1_121 = arith.constant 1 : index
    %c0_122 = arith.constant 0 : index
    %c0_123 = arith.constant 0 : index
    %c0_124 = arith.constant 0 : index
    %234 = vector.load %arg1[%c1_121, %c0_122, %c0_123, %c0_124] : memref<2x1x42x48xf32, #tpu.memory_space<vmem>>, vector<1x1x42x48xf32>
    %235 = vector.shape_cast %234 : vector<1x1x42x48xf32> to vector<42x48xf32>
    %236 = vector.extract_strided_slice %235 {offsets = [0, 0], sizes = [40, 48], strides = [1, 1]} : vector<42x48xf32> to vector<40x48xf32>
    %c0_125 = arith.constant 0 : index
    %c0_126 = arith.constant 0 : index
    %c0_127 = arith.constant 0 : index
    %237 = vector.load %arg2[%c0_125, %c0_126, %c0_127] : memref<3x48x276xf32, #tpu.memory_space<vmem>>, vector<1x48x276xf32>
    %238 = vector.shape_cast %237 : vector<1x48x276xf32> to vector<48x276xf32>
    %cst_128 = arith.constant dense<0.000000e+00> : vector<40x276xf32>
    %239 = tpu.matmul %236, %238, %cst_128 {dimension_numbers = #tpu.dot_dimension_numbers<[1], [0], [0], [1], [0, 0, 1, 1], [], []>} : vector<40x48xf32>, vector<48x276xf32>, vector<40x276xf32> -> vector<40x276xf32>
    %240 = vector.extract_strided_slice %235 {offsets = [1, 0], sizes = [40, 48], strides = [1, 1]} : vector<42x48xf32> to vector<40x48xf32>
    %c1_129 = arith.constant 1 : index
    %c0_130 = arith.constant 0 : index
    %c0_131 = arith.constant 0 : index
    %241 = vector.load %arg2[%c1_129, %c0_130, %c0_131] : memref<3x48x276xf32, #tpu.memory_space<vmem>>, vector<1x48x276xf32>
    %242 = vector.shape_cast %241 : vector<1x48x276xf32> to vector<48x276xf32>
    %cst_132 = arith.constant dense<0.000000e+00> : vector<40x276xf32>
    %243 = tpu.matmul %240, %242, %cst_132 {dimension_numbers = #tpu.dot_dimension_numbers<[1], [0], [0], [1], [0, 0, 1, 1], [], []>} : vector<40x48xf32>, vector<48x276xf32>, vector<40x276xf32> -> vector<40x276xf32>
    %244 = arith.addf %239, %243 : vector<40x276xf32>
    %245 = vector.extract_strided_slice %235 {offsets = [2, 0], sizes = [40, 48], strides = [1, 1]} : vector<42x48xf32> to vector<40x48xf32>
    %c2_133 = arith.constant 2 : index
    %c0_134 = arith.constant 0 : index
    %c0_135 = arith.constant 0 : index
    %246 = vector.load %arg2[%c2_133, %c0_134, %c0_135] : memref<3x48x276xf32, #tpu.memory_space<vmem>>, vector<1x48x276xf32>
    %247 = vector.shape_cast %246 : vector<1x48x276xf32> to vector<48x276xf32>
    %cst_136 = arith.constant dense<0.000000e+00> : vector<40x276xf32>
    %248 = tpu.matmul %245, %247, %cst_136 {dimension_numbers = #tpu.dot_dimension_numbers<[1], [0], [0], [1], [0, 0, 1, 1], [], []>} : vector<40x48xf32>, vector<48x276xf32>, vector<40x276xf32> -> vector<40x276xf32>
    %249 = arith.addf %244, %248 : vector<40x276xf32>
    %250 = vector.extract_strided_slice %249 {offsets = [0, 0], sizes = [40, 274], strides = [1, 1]} : vector<40x276xf32> to vector<40x274xf32>
    %251 = vector.extract_strided_slice %249 {offsets = [0, 1], sizes = [40, 274], strides = [1, 1]} : vector<40x276xf32> to vector<40x274xf32>
    %252 = arith.maximumf %250, %251 : vector<40x274xf32>
    %253 = vector.extract_strided_slice %249 {offsets = [0, 2], sizes = [40, 274], strides = [1, 1]} : vector<40x276xf32> to vector<40x274xf32>
    %254 = arith.maximumf %252, %253 : vector<40x274xf32>
    %255 = vector.extract_strided_slice %254 {offsets = [0, 0], sizes = [38, 274], strides = [1, 1]} : vector<40x274xf32> to vector<38x274xf32>
    %256 = vector.extract_strided_slice %254 {offsets = [1, 0], sizes = [38, 274], strides = [1, 1]} : vector<40x274xf32> to vector<38x274xf32>
    %257 = arith.maximumf %255, %256 : vector<38x274xf32>
    %258 = vector.extract_strided_slice %254 {offsets = [2, 0], sizes = [38, 274], strides = [1, 1]} : vector<40x274xf32> to vector<38x274xf32>
    %259 = arith.maximumf %257, %258 : vector<38x274xf32>
    %c0_137 = arith.constant 0 : index
    %c0_138 = arith.constant 0 : index
    %260 = vector.load %arg6[%c0_137, %c0_138] : memref<2x274xf32, #tpu.memory_space<vmem>>, vector<1x274xf32>
    %261 = vector.broadcast %260 : vector<1x274xf32> to vector<38x274xf32>
    %262 = arith.mulf %259, %261 : vector<38x274xf32>
    %c1_139 = arith.constant 1 : index
    %c0_140 = arith.constant 0 : index
    %263 = vector.load %arg6[%c1_139, %c0_140] : memref<2x274xf32, #tpu.memory_space<vmem>>, vector<1x274xf32>
    %264 = vector.broadcast %263 : vector<1x274xf32> to vector<38x274xf32>
    %265 = arith.addf %262, %264 : vector<38x274xf32>
    %cst_141 = arith.constant 0.000000e+00 : f32
    %266 = vector.broadcast %cst_141 : f32 to vector<38x274xf32>
    %267 = arith.maximumf %265, %266 : vector<38x274xf32>
    %268 = vector.extract_strided_slice %267 {offsets = [0, 0], sizes = [36, 274], strides = [1, 1]} : vector<38x274xf32> to vector<36x274xf32>
    %c0_142 = arith.constant 0 : index
    %c0_143 = arith.constant 0 : index
    %c0_144 = arith.constant 0 : index
    %269 = vector.load %arg3[%c0_142, %c0_143, %c0_144] : memref<3x274x252xf32, #tpu.memory_space<vmem>>, vector<1x274x252xf32>
    %270 = vector.shape_cast %269 : vector<1x274x252xf32> to vector<274x252xf32>
    %cst_145 = arith.constant dense<0.000000e+00> : vector<36x252xf32>
    %271 = tpu.matmul %268, %270, %cst_145 {dimension_numbers = #tpu.dot_dimension_numbers<[1], [0], [0], [1], [0, 0, 1, 1], [], []>} : vector<36x274xf32>, vector<274x252xf32>, vector<36x252xf32> -> vector<36x252xf32>
    %272 = vector.extract_strided_slice %267 {offsets = [1, 0], sizes = [36, 274], strides = [1, 1]} : vector<38x274xf32> to vector<36x274xf32>
    %c1_146 = arith.constant 1 : index
    %c0_147 = arith.constant 0 : index
    %c0_148 = arith.constant 0 : index
    %273 = vector.load %arg3[%c1_146, %c0_147, %c0_148] : memref<3x274x252xf32, #tpu.memory_space<vmem>>, vector<1x274x252xf32>
    %274 = vector.shape_cast %273 : vector<1x274x252xf32> to vector<274x252xf32>
    %cst_149 = arith.constant dense<0.000000e+00> : vector<36x252xf32>
    %275 = tpu.matmul %272, %274, %cst_149 {dimension_numbers = #tpu.dot_dimension_numbers<[1], [0], [0], [1], [0, 0, 1, 1], [], []>} : vector<36x274xf32>, vector<274x252xf32>, vector<36x252xf32> -> vector<36x252xf32>
    %276 = arith.addf %271, %275 : vector<36x252xf32>
    %277 = vector.extract_strided_slice %267 {offsets = [2, 0], sizes = [36, 274], strides = [1, 1]} : vector<38x274xf32> to vector<36x274xf32>
    %c2_150 = arith.constant 2 : index
    %c0_151 = arith.constant 0 : index
    %c0_152 = arith.constant 0 : index
    %278 = vector.load %arg3[%c2_150, %c0_151, %c0_152] : memref<3x274x252xf32, #tpu.memory_space<vmem>>, vector<1x274x252xf32>
    %279 = vector.shape_cast %278 : vector<1x274x252xf32> to vector<274x252xf32>
    %cst_153 = arith.constant dense<0.000000e+00> : vector<36x252xf32>
    %280 = tpu.matmul %277, %279, %cst_153 {dimension_numbers = #tpu.dot_dimension_numbers<[1], [0], [0], [1], [0, 0, 1, 1], [], []>} : vector<36x274xf32>, vector<274x252xf32>, vector<36x252xf32> -> vector<36x252xf32>
    %281 = arith.addf %276, %280 : vector<36x252xf32>
    %282 = vector.extract_strided_slice %281 {offsets = [0, 0], sizes = [36, 250], strides = [1, 1]} : vector<36x252xf32> to vector<36x250xf32>
    %283 = vector.extract_strided_slice %281 {offsets = [0, 1], sizes = [36, 250], strides = [1, 1]} : vector<36x252xf32> to vector<36x250xf32>
    %284 = arith.maximumf %282, %283 : vector<36x250xf32>
    %285 = vector.extract_strided_slice %281 {offsets = [0, 2], sizes = [36, 250], strides = [1, 1]} : vector<36x252xf32> to vector<36x250xf32>
    %286 = arith.maximumf %284, %285 : vector<36x250xf32>
    %287 = vector.extract_strided_slice %286 {offsets = [0, 0], sizes = [34, 250], strides = [1, 1]} : vector<36x250xf32> to vector<34x250xf32>
    %288 = vector.extract_strided_slice %286 {offsets = [1, 0], sizes = [34, 250], strides = [1, 1]} : vector<36x250xf32> to vector<34x250xf32>
    %289 = arith.maximumf %287, %288 : vector<34x250xf32>
    %290 = vector.extract_strided_slice %286 {offsets = [2, 0], sizes = [34, 250], strides = [1, 1]} : vector<36x250xf32> to vector<34x250xf32>
    %291 = arith.maximumf %289, %290 : vector<34x250xf32>
    %c0_154 = arith.constant 0 : index
    %c0_155 = arith.constant 0 : index
    %292 = vector.load %arg7[%c0_154, %c0_155] : memref<2x250xf32, #tpu.memory_space<vmem>>, vector<1x250xf32>
    %293 = vector.broadcast %292 : vector<1x250xf32> to vector<34x250xf32>
    %294 = arith.mulf %291, %293 : vector<34x250xf32>
    %c1_156 = arith.constant 1 : index
    %c0_157 = arith.constant 0 : index
    %295 = vector.load %arg7[%c1_156, %c0_157] : memref<2x250xf32, #tpu.memory_space<vmem>>, vector<1x250xf32>
    %296 = vector.broadcast %295 : vector<1x250xf32> to vector<34x250xf32>
    %297 = arith.addf %294, %296 : vector<34x250xf32>
    %cst_158 = arith.constant 0.000000e+00 : f32
    %298 = vector.broadcast %cst_158 : f32 to vector<34x250xf32>
    %299 = arith.maximumf %297, %298 : vector<34x250xf32>
    %300 = vector.extract_strided_slice %299 {offsets = [0, 0], sizes = [32, 250], strides = [1, 1]} : vector<34x250xf32> to vector<32x250xf32>
    %c0_159 = arith.constant 0 : index
    %c0_160 = arith.constant 0 : index
    %c0_161 = arith.constant 0 : index
    %301 = vector.load %arg4[%c0_159, %c0_160, %c0_161] : memref<3x250x228xf32, #tpu.memory_space<vmem>>, vector<1x250x228xf32>
    %302 = vector.shape_cast %301 : vector<1x250x228xf32> to vector<250x228xf32>
    %cst_162 = arith.constant dense<0.000000e+00> : vector<32x228xf32>
    %303 = tpu.matmul %300, %302, %cst_162 {dimension_numbers = #tpu.dot_dimension_numbers<[1], [0], [0], [1], [0, 0, 1, 1], [], []>} : vector<32x250xf32>, vector<250x228xf32>, vector<32x228xf32> -> vector<32x228xf32>
    %304 = vector.extract_strided_slice %299 {offsets = [1, 0], sizes = [32, 250], strides = [1, 1]} : vector<34x250xf32> to vector<32x250xf32>
    %c1_163 = arith.constant 1 : index
    %c0_164 = arith.constant 0 : index
    %c0_165 = arith.constant 0 : index
    %305 = vector.load %arg4[%c1_163, %c0_164, %c0_165] : memref<3x250x228xf32, #tpu.memory_space<vmem>>, vector<1x250x228xf32>
    %306 = vector.shape_cast %305 : vector<1x250x228xf32> to vector<250x228xf32>
    %cst_166 = arith.constant dense<0.000000e+00> : vector<32x228xf32>
    %307 = tpu.matmul %304, %306, %cst_166 {dimension_numbers = #tpu.dot_dimension_numbers<[1], [0], [0], [1], [0, 0, 1, 1], [], []>} : vector<32x250xf32>, vector<250x228xf32>, vector<32x228xf32> -> vector<32x228xf32>
    %308 = arith.addf %303, %307 : vector<32x228xf32>
    %309 = vector.extract_strided_slice %299 {offsets = [2, 0], sizes = [32, 250], strides = [1, 1]} : vector<34x250xf32> to vector<32x250xf32>
    %c2_167 = arith.constant 2 : index
    %c0_168 = arith.constant 0 : index
    %c0_169 = arith.constant 0 : index
    %310 = vector.load %arg4[%c2_167, %c0_168, %c0_169] : memref<3x250x228xf32, #tpu.memory_space<vmem>>, vector<1x250x228xf32>
    %311 = vector.shape_cast %310 : vector<1x250x228xf32> to vector<250x228xf32>
    %cst_170 = arith.constant dense<0.000000e+00> : vector<32x228xf32>
    %312 = tpu.matmul %309, %311, %cst_170 {dimension_numbers = #tpu.dot_dimension_numbers<[1], [0], [0], [1], [0, 0, 1, 1], [], []>} : vector<32x250xf32>, vector<250x228xf32>, vector<32x228xf32> -> vector<32x228xf32>
    %313 = arith.addf %308, %312 : vector<32x228xf32>
    %314 = vector.extract_strided_slice %313 {offsets = [0, 0], sizes = [32, 226], strides = [1, 1]} : vector<32x228xf32> to vector<32x226xf32>
    %315 = vector.extract_strided_slice %313 {offsets = [0, 1], sizes = [32, 226], strides = [1, 1]} : vector<32x228xf32> to vector<32x226xf32>
    %316 = arith.maximumf %314, %315 : vector<32x226xf32>
    %317 = vector.extract_strided_slice %313 {offsets = [0, 2], sizes = [32, 226], strides = [1, 1]} : vector<32x228xf32> to vector<32x226xf32>
    %318 = arith.maximumf %316, %317 : vector<32x226xf32>
    %319 = vector.extract_strided_slice %318 {offsets = [0, 0], sizes = [30, 226], strides = [1, 1]} : vector<32x226xf32> to vector<30x226xf32>
    %320 = vector.extract_strided_slice %318 {offsets = [1, 0], sizes = [30, 226], strides = [1, 1]} : vector<32x226xf32> to vector<30x226xf32>
    %321 = arith.maximumf %319, %320 : vector<30x226xf32>
    %322 = vector.extract_strided_slice %318 {offsets = [2, 0], sizes = [30, 226], strides = [1, 1]} : vector<32x226xf32> to vector<30x226xf32>
    %323 = arith.maximumf %321, %322 : vector<30x226xf32>
    %c0_171 = arith.constant 0 : index
    %c0_172 = arith.constant 0 : index
    %324 = vector.load %arg8[%c0_171, %c0_172] : memref<2x226xf32, #tpu.memory_space<vmem>>, vector<1x226xf32>
    %325 = vector.broadcast %324 : vector<1x226xf32> to vector<30x226xf32>
    %326 = arith.mulf %323, %325 : vector<30x226xf32>
    %c1_173 = arith.constant 1 : index
    %c0_174 = arith.constant 0 : index
    %327 = vector.load %arg8[%c1_173, %c0_174] : memref<2x226xf32, #tpu.memory_space<vmem>>, vector<1x226xf32>
    %328 = vector.broadcast %327 : vector<1x226xf32> to vector<30x226xf32>
    %329 = arith.addf %326, %328 : vector<30x226xf32>
    %cst_175 = arith.constant 0.000000e+00 : f32
    %330 = vector.broadcast %cst_175 : f32 to vector<30x226xf32>
    %331 = arith.maximumf %329, %330 : vector<30x226xf32>
    %332 = vector.extract_strided_slice %331 {offsets = [0, 0], sizes = [28, 226], strides = [1, 1]} : vector<30x226xf32> to vector<28x226xf32>
    %c0_176 = arith.constant 0 : index
    %c0_177 = arith.constant 0 : index
    %c0_178 = arith.constant 0 : index
    %333 = vector.load %arg5[%c0_176, %c0_177, %c0_178] : memref<3x226x34xf32, #tpu.memory_space<vmem>>, vector<1x226x34xf32>
    %334 = vector.shape_cast %333 : vector<1x226x34xf32> to vector<226x34xf32>
    %cst_179 = arith.constant dense<0.000000e+00> : vector<28x34xf32>
    %335 = tpu.matmul %332, %334, %cst_179 {dimension_numbers = #tpu.dot_dimension_numbers<[1], [0], [0], [1], [0, 0, 1, 1], [], []>} : vector<28x226xf32>, vector<226x34xf32>, vector<28x34xf32> -> vector<28x34xf32>
    %336 = vector.extract_strided_slice %331 {offsets = [1, 0], sizes = [28, 226], strides = [1, 1]} : vector<30x226xf32> to vector<28x226xf32>
    %c1_180 = arith.constant 1 : index
    %c0_181 = arith.constant 0 : index
    %c0_182 = arith.constant 0 : index
    %337 = vector.load %arg5[%c1_180, %c0_181, %c0_182] : memref<3x226x34xf32, #tpu.memory_space<vmem>>, vector<1x226x34xf32>
    %338 = vector.shape_cast %337 : vector<1x226x34xf32> to vector<226x34xf32>
    %cst_183 = arith.constant dense<0.000000e+00> : vector<28x34xf32>
    %339 = tpu.matmul %336, %338, %cst_183 {dimension_numbers = #tpu.dot_dimension_numbers<[1], [0], [0], [1], [0, 0, 1, 1], [], []>} : vector<28x226xf32>, vector<226x34xf32>, vector<28x34xf32> -> vector<28x34xf32>
    %340 = arith.addf %335, %339 : vector<28x34xf32>
    %341 = vector.extract_strided_slice %331 {offsets = [2, 0], sizes = [28, 226], strides = [1, 1]} : vector<30x226xf32> to vector<28x226xf32>
    %c2_184 = arith.constant 2 : index
    %c0_185 = arith.constant 0 : index
    %c0_186 = arith.constant 0 : index
    %342 = vector.load %arg5[%c2_184, %c0_185, %c0_186] : memref<3x226x34xf32, #tpu.memory_space<vmem>>, vector<1x226x34xf32>
    %343 = vector.shape_cast %342 : vector<1x226x34xf32> to vector<226x34xf32>
    %cst_187 = arith.constant dense<0.000000e+00> : vector<28x34xf32>
    %344 = tpu.matmul %341, %343, %cst_187 {dimension_numbers = #tpu.dot_dimension_numbers<[1], [0], [0], [1], [0, 0, 1, 1], [], []>} : vector<28x226xf32>, vector<226x34xf32>, vector<28x34xf32> -> vector<28x34xf32>
    %345 = arith.addf %340, %344 : vector<28x34xf32>
    %346 = vector.extract_strided_slice %345 {offsets = [0, 0], sizes = [28, 32], strides = [1, 1]} : vector<28x34xf32> to vector<28x32xf32>
    %347 = vector.extract_strided_slice %345 {offsets = [0, 1], sizes = [28, 32], strides = [1, 1]} : vector<28x34xf32> to vector<28x32xf32>
    %348 = arith.maximumf %346, %347 : vector<28x32xf32>
    %349 = vector.extract_strided_slice %345 {offsets = [0, 2], sizes = [28, 32], strides = [1, 1]} : vector<28x34xf32> to vector<28x32xf32>
    %350 = arith.maximumf %348, %349 : vector<28x32xf32>
    %351 = vector.extract_strided_slice %350 {offsets = [0, 0], sizes = [26, 32], strides = [1, 1]} : vector<28x32xf32> to vector<26x32xf32>
    %352 = vector.extract_strided_slice %350 {offsets = [1, 0], sizes = [26, 32], strides = [1, 1]} : vector<28x32xf32> to vector<26x32xf32>
    %353 = arith.maximumf %351, %352 : vector<26x32xf32>
    %354 = vector.extract_strided_slice %350 {offsets = [2, 0], sizes = [26, 32], strides = [1, 1]} : vector<28x32xf32> to vector<26x32xf32>
    %355 = arith.maximumf %353, %354 : vector<26x32xf32>
    %c0_188 = arith.constant 0 : index
    %c0_189 = arith.constant 0 : index
    %356 = vector.load %arg9[%c0_188, %c0_189] : memref<2x32xf32, #tpu.memory_space<vmem>>, vector<1x32xf32>
    %357 = vector.broadcast %356 : vector<1x32xf32> to vector<26x32xf32>
    %358 = arith.mulf %355, %357 : vector<26x32xf32>
    %c1_190 = arith.constant 1 : index
    %c0_191 = arith.constant 0 : index
    %359 = vector.load %arg9[%c1_190, %c0_191] : memref<2x32xf32, #tpu.memory_space<vmem>>, vector<1x32xf32>
    %360 = vector.broadcast %359 : vector<1x32xf32> to vector<26x32xf32>
    %361 = arith.addf %358, %360 : vector<26x32xf32>
    %cst_192 = arith.constant 0.000000e+00 : f32
    %362 = vector.broadcast %cst_192 : f32 to vector<26x32xf32>
    %363 = arith.maximumf %361, %362 : vector<26x32xf32>
    %364 = vector.extract_strided_slice %363 {offsets = [0, 0], sizes = [1, 32], strides = [1, 1]} : vector<26x32xf32> to vector<1x32xf32>
    %c0_193 = arith.constant 0 : index
    %c1_194 = arith.constant 1 : index
    %c0_195 = arith.constant 0 : index
    %365 = vector.load %arg10[%c0_193, %c1_194, %c0_195] : memref<1x2x832xf32, #tpu.memory_space<vmem>>, vector<1x1x32xf32>
    %366 = vector.shape_cast %365 : vector<1x1x32xf32> to vector<1x32xf32>
    %367 = vector.shape_cast %364 : vector<1x32xf32> to vector<1x1x32xf32>
    tpu.vector_store %arg10[%c0_193, %c1_194, %c0_195], %367 {strides = array<i32>} : memref<1x2x832xf32, #tpu.memory_space<vmem>>, vector<1x1x32xf32>,
    %368 = vector.extract_strided_slice %363 {offsets = [1, 0], sizes = [1, 32], strides = [1, 1]} : vector<26x32xf32> to vector<1x32xf32>
    %c0_196 = arith.constant 0 : index
    %c1_197 = arith.constant 1 : index
    %c32_198 = arith.constant 32 : index
    %369 = vector.load %arg10[%c0_196, %c1_197, %c32_198] : memref<1x2x832xf32, #tpu.memory_space<vmem>>, vector<1x1x32xf32>
    %370 = vector.shape_cast %369 : vector<1x1x32xf32> to vector<1x32xf32>
    %371 = vector.shape_cast %368 : vector<1x32xf32> to vector<1x1x32xf32>
    tpu.vector_store %arg10[%c0_196, %c1_197, %c32_198], %371 {strides = array<i32>} : memref<1x2x832xf32, #tpu.memory_space<vmem>>, vector<1x1x32xf32>,
    %372 = vector.extract_strided_slice %363 {offsets = [2, 0], sizes = [1, 32], strides = [1, 1]} : vector<26x32xf32> to vector<1x32xf32>
    %c0_199 = arith.constant 0 : index
    %c1_200 = arith.constant 1 : index
    %c64_201 = arith.constant 64 : index
    %373 = vector.load %arg10[%c0_199, %c1_200, %c64_201] : memref<1x2x832xf32, #tpu.memory_space<vmem>>, vector<1x1x32xf32>
    %374 = vector.shape_cast %373 : vector<1x1x32xf32> to vector<1x32xf32>
    %375 = vector.shape_cast %372 : vector<1x32xf32> to vector<1x1x32xf32>
    tpu.vector_store %arg10[%c0_199, %c1_200, %c64_201], %375 {strides = array<i32>} : memref<1x2x832xf32, #tpu.memory_space<vmem>>, vector<1x1x32xf32>,
    %376 = vector.extract_strided_slice %363 {offsets = [3, 0], sizes = [1, 32], strides = [1, 1]} : vector<26x32xf32> to vector<1x32xf32>
    %c0_202 = arith.constant 0 : index
    %c1_203 = arith.constant 1 : index
    %c96_204 = arith.constant 96 : index
    %377 = vector.load %arg10[%c0_202, %c1_203, %c96_204] : memref<1x2x832xf32, #tpu.memory_space<vmem>>, vector<1x1x32xf32>
    %378 = vector.shape_cast %377 : vector<1x1x32xf32> to vector<1x32xf32>
    %379 = vector.shape_cast %376 : vector<1x32xf32> to vector<1x1x32xf32>
    tpu.vector_store %arg10[%c0_202, %c1_203, %c96_204], %379 {strides = array<i32>} : memref<1x2x832xf32, #tpu.memory_space<vmem>>, vector<1x1x32xf32>,
    %380 = vector.extract_strided_slice %363 {offsets = [4, 0], sizes = [1, 32], strides = [1, 1]} : vector<26x32xf32> to vector<1x32xf32>
    %c0_205 = arith.constant 0 : index
    %c1_206 = arith.constant 1 : index
    %c128_207 = arith.constant 128 : index
    %381 = vector.load %arg10[%c0_205, %c1_206, %c128_207] : memref<1x2x832xf32, #tpu.memory_space<vmem>>, vector<1x1x32xf32>
    %382 = vector.shape_cast %381 : vector<1x1x32xf32> to vector<1x32xf32>
    %383 = vector.shape_cast %380 : vector<1x32xf32> to vector<1x1x32xf32>
    tpu.vector_store %arg10[%c0_205, %c1_206, %c128_207], %383 {strides = array<i32>} : memref<1x2x832xf32, #tpu.memory_space<vmem>>, vector<1x1x32xf32>,
    %384 = vector.extract_strided_slice %363 {offsets = [5, 0], sizes = [1, 32], strides = [1, 1]} : vector<26x32xf32> to vector<1x32xf32>
    %c0_208 = arith.constant 0 : index
    %c1_209 = arith.constant 1 : index
    %c160_210 = arith.constant 160 : index
    %385 = vector.load %arg10[%c0_208, %c1_209, %c160_210] : memref<1x2x832xf32, #tpu.memory_space<vmem>>, vector<1x1x32xf32>
    %386 = vector.shape_cast %385 : vector<1x1x32xf32> to vector<1x32xf32>
    %387 = vector.shape_cast %384 : vector<1x32xf32> to vector<1x1x32xf32>
    tpu.vector_store %arg10[%c0_208, %c1_209, %c160_210], %387 {strides = array<i32>} : memref<1x2x832xf32, #tpu.memory_space<vmem>>, vector<1x1x32xf32>,
    %388 = vector.extract_strided_slice %363 {offsets = [6, 0], sizes = [1, 32], strides = [1, 1]} : vector<26x32xf32> to vector<1x32xf32>
    %c0_211 = arith.constant 0 : index
    %c1_212 = arith.constant 1 : index
    %c192_213 = arith.constant 192 : index
    %389 = vector.load %arg10[%c0_211, %c1_212, %c192_213] : memref<1x2x832xf32, #tpu.memory_space<vmem>>, vector<1x1x32xf32>
    %390 = vector.shape_cast %389 : vector<1x1x32xf32> to vector<1x32xf32>
    %391 = vector.shape_cast %388 : vector<1x32xf32> to vector<1x1x32xf32>
    tpu.vector_store %arg10[%c0_211, %c1_212, %c192_213], %391 {strides = array<i32>} : memref<1x2x832xf32, #tpu.memory_space<vmem>>, vector<1x1x32xf32>,
    %392 = vector.extract_strided_slice %363 {offsets = [7, 0], sizes = [1, 32], strides = [1, 1]} : vector<26x32xf32> to vector<1x32xf32>
    %c0_214 = arith.constant 0 : index
    %c1_215 = arith.constant 1 : index
    %c224_216 = arith.constant 224 : index
    %393 = vector.load %arg10[%c0_214, %c1_215, %c224_216] : memref<1x2x832xf32, #tpu.memory_space<vmem>>, vector<1x1x32xf32>
    %394 = vector.shape_cast %393 : vector<1x1x32xf32> to vector<1x32xf32>
    %395 = vector.shape_cast %392 : vector<1x32xf32> to vector<1x1x32xf32>
    tpu.vector_store %arg10[%c0_214, %c1_215, %c224_216], %395 {strides = array<i32>} : memref<1x2x832xf32, #tpu.memory_space<vmem>>, vector<1x1x32xf32>,
    %396 = vector.extract_strided_slice %363 {offsets = [8, 0], sizes = [1, 32], strides = [1, 1]} : vector<26x32xf32> to vector<1x32xf32>
    %c0_217 = arith.constant 0 : index
    %c1_218 = arith.constant 1 : index
    %c256_219 = arith.constant 256 : index
    %397 = vector.load %arg10[%c0_217, %c1_218, %c256_219] : memref<1x2x832xf32, #tpu.memory_space<vmem>>, vector<1x1x32xf32>
    %398 = vector.shape_cast %397 : vector<1x1x32xf32> to vector<1x32xf32>
    %399 = vector.shape_cast %396 : vector<1x32xf32> to vector<1x1x32xf32>
    tpu.vector_store %arg10[%c0_217, %c1_218, %c256_219], %399 {strides = array<i32>} : memref<1x2x832xf32, #tpu.memory_space<vmem>>, vector<1x1x32xf32>,
    %400 = vector.extract_strided_slice %363 {offsets = [9, 0], sizes = [1, 32], strides = [1, 1]} : vector<26x32xf32> to vector<1x32xf32>
    %c0_220 = arith.constant 0 : index
    %c1_221 = arith.constant 1 : index
    %c288_222 = arith.constant 288 : index
    %401 = vector.load %arg10[%c0_220, %c1_221, %c288_222] : memref<1x2x832xf32, #tpu.memory_space<vmem>>, vector<1x1x32xf32>
    %402 = vector.shape_cast %401 : vector<1x1x32xf32> to vector<1x32xf32>
    %403 = vector.shape_cast %400 : vector<1x32xf32> to vector<1x1x32xf32>
    tpu.vector_store %arg10[%c0_220, %c1_221, %c288_222], %403 {strides = array<i32>} : memref<1x2x832xf32, #tpu.memory_space<vmem>>, vector<1x1x32xf32>,
    %404 = vector.extract_strided_slice %363 {offsets = [10, 0], sizes = [1, 32], strides = [1, 1]} : vector<26x32xf32> to vector<1x32xf32>
    %c0_223 = arith.constant 0 : index
    %c1_224 = arith.constant 1 : index
    %c320_225 = arith.constant 320 : index
    %405 = vector.load %arg10[%c0_223, %c1_224, %c320_225] : memref<1x2x832xf32, #tpu.memory_space<vmem>>, vector<1x1x32xf32>
    %406 = vector.shape_cast %405 : vector<1x1x32xf32> to vector<1x32xf32>
    %407 = vector.shape_cast %404 : vector<1x32xf32> to vector<1x1x32xf32>
    tpu.vector_store %arg10[%c0_223, %c1_224, %c320_225], %407 {strides = array<i32>} : memref<1x2x832xf32, #tpu.memory_space<vmem>>, vector<1x1x32xf32>,
    %408 = vector.extract_strided_slice %363 {offsets = [11, 0], sizes = [1, 32], strides = [1, 1]} : vector<26x32xf32> to vector<1x32xf32>
    %c0_226 = arith.constant 0 : index
    %c1_227 = arith.constant 1 : index
    %c352_228 = arith.constant 352 : index
    %409 = vector.load %arg10[%c0_226, %c1_227, %c352_228] : memref<1x2x832xf32, #tpu.memory_space<vmem>>, vector<1x1x32xf32>
    %410 = vector.shape_cast %409 : vector<1x1x32xf32> to vector<1x32xf32>
    %411 = vector.shape_cast %408 : vector<1x32xf32> to vector<1x1x32xf32>
    tpu.vector_store %arg10[%c0_226, %c1_227, %c352_228], %411 {strides = array<i32>} : memref<1x2x832xf32, #tpu.memory_space<vmem>>, vector<1x1x32xf32>,
    %412 = vector.extract_strided_slice %363 {offsets = [12, 0], sizes = [1, 32], strides = [1, 1]} : vector<26x32xf32> to vector<1x32xf32>
    %c0_229 = arith.constant 0 : index
    %c1_230 = arith.constant 1 : index
    %c384_231 = arith.constant 384 : index
    %413 = vector.load %arg10[%c0_229, %c1_230, %c384_231] : memref<1x2x832xf32, #tpu.memory_space<vmem>>, vector<1x1x32xf32>
    %414 = vector.shape_cast %413 : vector<1x1x32xf32> to vector<1x32xf32>
    %415 = vector.shape_cast %412 : vector<1x32xf32> to vector<1x1x32xf32>
    tpu.vector_store %arg10[%c0_229, %c1_230, %c384_231], %415 {strides = array<i32>} : memref<1x2x832xf32, #tpu.memory_space<vmem>>, vector<1x1x32xf32>,
    %416 = vector.extract_strided_slice %363 {offsets = [13, 0], sizes = [1, 32], strides = [1, 1]} : vector<26x32xf32> to vector<1x32xf32>
    %c0_232 = arith.constant 0 : index
    %c1_233 = arith.constant 1 : index
    %c416_234 = arith.constant 416 : index
    %417 = vector.load %arg10[%c0_232, %c1_233, %c416_234] : memref<1x2x832xf32, #tpu.memory_space<vmem>>, vector<1x1x32xf32>
    %418 = vector.shape_cast %417 : vector<1x1x32xf32> to vector<1x32xf32>
    %419 = vector.shape_cast %416 : vector<1x32xf32> to vector<1x1x32xf32>
    tpu.vector_store %arg10[%c0_232, %c1_233, %c416_234], %419 {strides = array<i32>} : memref<1x2x832xf32, #tpu.memory_space<vmem>>, vector<1x1x32xf32>,
    %420 = vector.extract_strided_slice %363 {offsets = [14, 0], sizes = [1, 32], strides = [1, 1]} : vector<26x32xf32> to vector<1x32xf32>
    %c0_235 = arith.constant 0 : index
    %c1_236 = arith.constant 1 : index
    %c448_237 = arith.constant 448 : index
    %421 = vector.load %arg10[%c0_235, %c1_236, %c448_237] : memref<1x2x832xf32, #tpu.memory_space<vmem>>, vector<1x1x32xf32>
    %422 = vector.shape_cast %421 : vector<1x1x32xf32> to vector<1x32xf32>
    %423 = vector.shape_cast %420 : vector<1x32xf32> to vector<1x1x32xf32>
    tpu.vector_store %arg10[%c0_235, %c1_236, %c448_237], %423 {strides = array<i32>} : memref<1x2x832xf32, #tpu.memory_space<vmem>>, vector<1x1x32xf32>,
    %424 = vector.extract_strided_slice %363 {offsets = [15, 0], sizes = [1, 32], strides = [1, 1]} : vector<26x32xf32> to vector<1x32xf32>
    %c0_238 = arith.constant 0 : index
    %c1_239 = arith.constant 1 : index
    %c480_240 = arith.constant 480 : index
    %425 = vector.load %arg10[%c0_238, %c1_239, %c480_240] : memref<1x2x832xf32, #tpu.memory_space<vmem>>, vector<1x1x32xf32>
    %426 = vector.shape_cast %425 : vector<1x1x32xf32> to vector<1x32xf32>
    %427 = vector.shape_cast %424 : vector<1x32xf32> to vector<1x1x32xf32>
    tpu.vector_store %arg10[%c0_238, %c1_239, %c480_240], %427 {strides = array<i32>} : memref<1x2x832xf32, #tpu.memory_space<vmem>>, vector<1x1x32xf32>,
    %428 = vector.extract_strided_slice %363 {offsets = [16, 0], sizes = [1, 32], strides = [1, 1]} : vector<26x32xf32> to vector<1x32xf32>
    %c0_241 = arith.constant 0 : index
    %c1_242 = arith.constant 1 : index
    %c512_243 = arith.constant 512 : index
    %429 = vector.load %arg10[%c0_241, %c1_242, %c512_243] : memref<1x2x832xf32, #tpu.memory_space<vmem>>, vector<1x1x32xf32>
    %430 = vector.shape_cast %429 : vector<1x1x32xf32> to vector<1x32xf32>
    %431 = vector.shape_cast %428 : vector<1x32xf32> to vector<1x1x32xf32>
    tpu.vector_store %arg10[%c0_241, %c1_242, %c512_243], %431 {strides = array<i32>} : memref<1x2x832xf32, #tpu.memory_space<vmem>>, vector<1x1x32xf32>,
    %432 = vector.extract_strided_slice %363 {offsets = [17, 0], sizes = [1, 32], strides = [1, 1]} : vector<26x32xf32> to vector<1x32xf32>
    %c0_244 = arith.constant 0 : index
    %c1_245 = arith.constant 1 : index
    %c544_246 = arith.constant 544 : index
    %433 = vector.load %arg10[%c0_244, %c1_245, %c544_246] : memref<1x2x832xf32, #tpu.memory_space<vmem>>, vector<1x1x32xf32>
    %434 = vector.shape_cast %433 : vector<1x1x32xf32> to vector<1x32xf32>
    %435 = vector.shape_cast %432 : vector<1x32xf32> to vector<1x1x32xf32>
    tpu.vector_store %arg10[%c0_244, %c1_245, %c544_246], %435 {strides = array<i32>} : memref<1x2x832xf32, #tpu.memory_space<vmem>>, vector<1x1x32xf32>,
    %436 = vector.extract_strided_slice %363 {offsets = [18, 0], sizes = [1, 32], strides = [1, 1]} : vector<26x32xf32> to vector<1x32xf32>
    %c0_247 = arith.constant 0 : index
    %c1_248 = arith.constant 1 : index
    %c576_249 = arith.constant 576 : index
    %437 = vector.load %arg10[%c0_247, %c1_248, %c576_249] : memref<1x2x832xf32, #tpu.memory_space<vmem>>, vector<1x1x32xf32>
    %438 = vector.shape_cast %437 : vector<1x1x32xf32> to vector<1x32xf32>
    %439 = vector.shape_cast %436 : vector<1x32xf32> to vector<1x1x32xf32>
    tpu.vector_store %arg10[%c0_247, %c1_248, %c576_249], %439 {strides = array<i32>} : memref<1x2x832xf32, #tpu.memory_space<vmem>>, vector<1x1x32xf32>,
    %440 = vector.extract_strided_slice %363 {offsets = [19, 0], sizes = [1, 32], strides = [1, 1]} : vector<26x32xf32> to vector<1x32xf32>
    %c0_250 = arith.constant 0 : index
    %c1_251 = arith.constant 1 : index
    %c608_252 = arith.constant 608 : index
    %441 = vector.load %arg10[%c0_250, %c1_251, %c608_252] : memref<1x2x832xf32, #tpu.memory_space<vmem>>, vector<1x1x32xf32>
    %442 = vector.shape_cast %441 : vector<1x1x32xf32> to vector<1x32xf32>
    %443 = vector.shape_cast %440 : vector<1x32xf32> to vector<1x1x32xf32>
    tpu.vector_store %arg10[%c0_250, %c1_251, %c608_252], %443 {strides = array<i32>} : memref<1x2x832xf32, #tpu.memory_space<vmem>>, vector<1x1x32xf32>,
    %444 = vector.extract_strided_slice %363 {offsets = [20, 0], sizes = [1, 32], strides = [1, 1]} : vector<26x32xf32> to vector<1x32xf32>
    %c0_253 = arith.constant 0 : index
    %c1_254 = arith.constant 1 : index
    %c640_255 = arith.constant 640 : index
    %445 = vector.load %arg10[%c0_253, %c1_254, %c640_255] : memref<1x2x832xf32, #tpu.memory_space<vmem>>, vector<1x1x32xf32>
    %446 = vector.shape_cast %445 : vector<1x1x32xf32> to vector<1x32xf32>
    %447 = vector.shape_cast %444 : vector<1x32xf32> to vector<1x1x32xf32>
    tpu.vector_store %arg10[%c0_253, %c1_254, %c640_255], %447 {strides = array<i32>} : memref<1x2x832xf32, #tpu.memory_space<vmem>>, vector<1x1x32xf32>,
    %448 = vector.extract_strided_slice %363 {offsets = [21, 0], sizes = [1, 32], strides = [1, 1]} : vector<26x32xf32> to vector<1x32xf32>
    %c0_256 = arith.constant 0 : index
    %c1_257 = arith.constant 1 : index
    %c672_258 = arith.constant 672 : index
    %449 = vector.load %arg10[%c0_256, %c1_257, %c672_258] : memref<1x2x832xf32, #tpu.memory_space<vmem>>, vector<1x1x32xf32>
    %450 = vector.shape_cast %449 : vector<1x1x32xf32> to vector<1x32xf32>
    %451 = vector.shape_cast %448 : vector<1x32xf32> to vector<1x1x32xf32>
    tpu.vector_store %arg10[%c0_256, %c1_257, %c672_258], %451 {strides = array<i32>} : memref<1x2x832xf32, #tpu.memory_space<vmem>>, vector<1x1x32xf32>,
    %452 = vector.extract_strided_slice %363 {offsets = [22, 0], sizes = [1, 32], strides = [1, 1]} : vector<26x32xf32> to vector<1x32xf32>
    %c0_259 = arith.constant 0 : index
    %c1_260 = arith.constant 1 : index
    %c704_261 = arith.constant 704 : index
    %453 = vector.load %arg10[%c0_259, %c1_260, %c704_261] : memref<1x2x832xf32, #tpu.memory_space<vmem>>, vector<1x1x32xf32>
    %454 = vector.shape_cast %453 : vector<1x1x32xf32> to vector<1x32xf32>
    %455 = vector.shape_cast %452 : vector<1x32xf32> to vector<1x1x32xf32>
    tpu.vector_store %arg10[%c0_259, %c1_260, %c704_261], %455 {strides = array<i32>} : memref<1x2x832xf32, #tpu.memory_space<vmem>>, vector<1x1x32xf32>,
    %456 = vector.extract_strided_slice %363 {offsets = [23, 0], sizes = [1, 32], strides = [1, 1]} : vector<26x32xf32> to vector<1x32xf32>
    %c0_262 = arith.constant 0 : index
    %c1_263 = arith.constant 1 : index
    %c736_264 = arith.constant 736 : index
    %457 = vector.load %arg10[%c0_262, %c1_263, %c736_264] : memref<1x2x832xf32, #tpu.memory_space<vmem>>, vector<1x1x32xf32>
    %458 = vector.shape_cast %457 : vector<1x1x32xf32> to vector<1x32xf32>
    %459 = vector.shape_cast %456 : vector<1x32xf32> to vector<1x1x32xf32>
    tpu.vector_store %arg10[%c0_262, %c1_263, %c736_264], %459 {strides = array<i32>} : memref<1x2x832xf32, #tpu.memory_space<vmem>>, vector<1x1x32xf32>,
    %460 = vector.extract_strided_slice %363 {offsets = [24, 0], sizes = [1, 32], strides = [1, 1]} : vector<26x32xf32> to vector<1x32xf32>
    %c0_265 = arith.constant 0 : index
    %c1_266 = arith.constant 1 : index
    %c768_267 = arith.constant 768 : index
    %461 = vector.load %arg10[%c0_265, %c1_266, %c768_267] : memref<1x2x832xf32, #tpu.memory_space<vmem>>, vector<1x1x32xf32>
    %462 = vector.shape_cast %461 : vector<1x1x32xf32> to vector<1x32xf32>
    %463 = vector.shape_cast %460 : vector<1x32xf32> to vector<1x1x32xf32>
    tpu.vector_store %arg10[%c0_265, %c1_266, %c768_267], %463 {strides = array<i32>} : memref<1x2x832xf32, #tpu.memory_space<vmem>>, vector<1x1x32xf32>,
    %464 = vector.extract_strided_slice %363 {offsets = [25, 0], sizes = [1, 32], strides = [1, 1]} : vector<26x32xf32> to vector<1x32xf32>
    %c0_268 = arith.constant 0 : index
    %c1_269 = arith.constant 1 : index
    %c800_270 = arith.constant 800 : index
    %465 = vector.load %arg10[%c0_268, %c1_269, %c800_270] : memref<1x2x832xf32, #tpu.memory_space<vmem>>, vector<1x1x32xf32>
    %466 = vector.shape_cast %465 : vector<1x1x32xf32> to vector<1x32xf32>
    %467 = vector.shape_cast %464 : vector<1x32xf32> to vector<1x1x32xf32>
    tpu.vector_store %arg10[%c0_268, %c1_269, %c800_270], %467 {strides = array<i32>} : memref<1x2x832xf32, #tpu.memory_space<vmem>>, vector<1x1x32xf32>,
    return
  }
  func.func @transform_0(%arg0: i32) -> (i32, i32, i32, i32) {
    %c0_i32 = arith.constant 0 : i32
    %c0_i32_0 = arith.constant 0 : i32
    %c0_i32_1 = arith.constant 0 : i32
    %c0_i32_2 = arith.constant 0 : i32
    return %c0_i32, %arg0, %c0_i32_0, %c0_i32_1 : i32, i32, i32, i32
  }
  func.func @transform_1(%arg0: i32) -> (i32, i32, i32) {
    %c0_i32 = arith.constant 0 : i32
    %c0_i32_0 = arith.constant 0 : i32
    %c0_i32_1 = arith.constant 0 : i32
    %c0_i32_2 = arith.constant 0 : i32
    return %c0_i32, %c0_i32_0, %c0_i32_1 : i32, i32, i32
  }
  func.func @transform_2(%arg0: i32) -> (i32, i32, i32) {
    %c0_i32 = arith.constant 0 : i32
    %c0_i32_0 = arith.constant 0 : i32
    %c0_i32_1 = arith.constant 0 : i32
    %c0_i32_2 = arith.constant 0 : i32
    return %c0_i32, %c0_i32_0, %c0_i32_1 : i32, i32, i32
  }
  func.func @transform_3(%arg0: i32) -> (i32, i32, i32) {
    %c0_i32 = arith.constant 0 : i32
    %c0_i32_0 = arith.constant 0 : i32
    %c0_i32_1 = arith.constant 0 : i32
    %c0_i32_2 = arith.constant 0 : i32
    return %c0_i32, %c0_i32_0, %c0_i32_1 : i32, i32, i32
  }
  func.func @transform_4(%arg0: i32) -> (i32, i32, i32) {
    %c0_i32 = arith.constant 0 : i32
    %c0_i32_0 = arith.constant 0 : i32
    %c0_i32_1 = arith.constant 0 : i32
    %c0_i32_2 = arith.constant 0 : i32
    return %c0_i32, %c0_i32_0, %c0_i32_1 : i32, i32, i32
  }
  func.func @transform_5(%arg0: i32) -> (i32, i32) {
    %c0_i32 = arith.constant 0 : i32
    %c0_i32_0 = arith.constant 0 : i32
    %c0_i32_1 = arith.constant 0 : i32
    return %c0_i32, %c0_i32_0 : i32, i32
  }
  func.func @transform_6(%arg0: i32) -> (i32, i32) {
    %c0_i32 = arith.constant 0 : i32
    %c0_i32_0 = arith.constant 0 : i32
    %c0_i32_1 = arith.constant 0 : i32
    return %c0_i32, %c0_i32_0 : i32, i32
  }
  func.func @transform_7(%arg0: i32) -> (i32, i32) {
    %c0_i32 = arith.constant 0 : i32
    %c0_i32_0 = arith.constant 0 : i32
    %c0_i32_1 = arith.constant 0 : i32
    return %c0_i32, %c0_i32_0 : i32, i32
  }
  func.func @transform_8(%arg0: i32) -> (i32, i32) {
    %c0_i32 = arith.constant 0 : i32
    %c0_i32_0 = arith.constant 0 : i32
    %c0_i32_1 = arith.constant 0 : i32
    return %c0_i32, %c0_i32_0 : i32, i32
  }
  func.func @transform_9(%arg0: i32) -> (i32, i32, i32) {
    %c0_i32 = arith.constant 0 : i32
    %c0_i32_0 = arith.constant 0 : i32
    %c0_i32_1 = arith.constant 0 : i32
    return %arg0, %c0_i32, %c0_i32_0 : i32, i32, i32
  }
}

module attributes {stable_mosaic.version = 11 : i64} {
  func.func @lstm_head_kernel(%arg0: memref<8x832xf32, #tpu.memory_space<vmem>>, %arg1: memref<832x512xbf16, #tpu.memory_space<vmem>>, %arg2: memref<1x512xf32, #tpu.memory_space<vmem>>, %arg3: memref<128x512xbf16, #tpu.memory_space<vmem>>, %arg4: memref<128x2xbf16, #tpu.memory_space<vmem>>, %arg5: memref<1x2xf32, #tpu.memory_space<vmem>>, %arg6: memref<2x2xf32, #tpu.memory_space<vmem>>) attributes {dimension_semantics = [], scalar_prefetch = 0 : i64, scratch_operands = 0 : i64, tpu.core_type = #tpu.core_type<tc>} {
    %c0 = arith.constant 0 : index
    %c0_0 = arith.constant 0 : index
    %0 = vector.load %arg0[%c0, %c0_0] : memref<8x832xf32, #tpu.memory_space<vmem>>, vector<8x832xf32>
    %1 = arith.truncf %0 : vector<8x832xf32> to vector<8x832xbf16>
    %c0_1 = arith.constant 0 : index
    %c0_2 = arith.constant 0 : index
    %2 = vector.load %arg1[%c0_1, %c0_2] : memref<832x512xbf16, #tpu.memory_space<vmem>>, vector<832x512xbf16>
    %cst = arith.constant dense<0.000000e+00> : vector<8x512xf32>
    %3 = tpu.matmul %1, %2, %cst {dimension_numbers = #tpu.dot_dimension_numbers<[1], [0], [0], [1], [0, 0, 1, 1], [], []>} : vector<8x832xbf16>, vector<832x512xbf16>, vector<8x512xf32> -> vector<8x512xf32>
    %c0_3 = arith.constant 0 : index
    %c0_4 = arith.constant 0 : index
    %4 = vector.load %arg2[%c0_3, %c0_4] : memref<1x512xf32, #tpu.memory_space<vmem>>, vector<1x512xf32>
    %5 = vector.broadcast %4 : vector<1x512xf32> to vector<8x512xf32>
    %6 = arith.addf %3, %5 : vector<8x512xf32>
    %cst_5 = arith.constant 0.000000e+00 : f32
    %7 = vector.broadcast %cst_5 : f32 to vector<2x128xf32>
    %cst_6 = arith.constant 0.000000e+00 : f32
    %8 = vector.broadcast %cst_6 : f32 to vector<2x128xf32>
    %9 = vector.extract_strided_slice %6 {offsets = [0, 0], sizes = [2, 512], strides = [1, 1]} : vector<8x512xf32> to vector<2x512xf32>
    %10 = arith.truncf %7 : vector<2x128xf32> to vector<2x128xbf16>
    %c0_7 = arith.constant 0 : index
    %c0_8 = arith.constant 0 : index
    %11 = vector.load %arg3[%c0_7, %c0_8] : memref<128x512xbf16, #tpu.memory_space<vmem>>, vector<128x512xbf16>
    %cst_9 = arith.constant dense<0.000000e+00> : vector<2x512xf32>
    %12 = tpu.matmul %10, %11, %cst_9 {dimension_numbers = #tpu.dot_dimension_numbers<[1], [0], [0], [1], [0, 0, 1, 1], [], []>} : vector<2x128xbf16>, vector<128x512xbf16>, vector<2x512xf32> -> vector<2x512xf32>
    %13 = arith.addf %9, %12 : vector<2x512xf32>
    %14 = vector.extract_strided_slice %13 {offsets = [0, 0], sizes = [2, 128], strides = [1, 1]} : vector<2x512xf32> to vector<2x128xf32>
    %15 = arith.negf %14 : vector<2x128xf32>
    %16 = math.exp %15 : vector<2x128xf32>
    %cst_10 = arith.constant 1.000000e+00 : f32
    %17 = vector.broadcast %cst_10 : f32 to vector<2x128xf32>
    %18 = arith.addf %17, %16 : vector<2x128xf32>
    %19 = arith.divf %17, %18 : vector<2x128xf32>
    %20 = vector.extract_strided_slice %13 {offsets = [0, 128], sizes = [2, 128], strides = [1, 1]} : vector<2x512xf32> to vector<2x128xf32>
    %21 = arith.negf %20 : vector<2x128xf32>
    %22 = math.exp %21 : vector<2x128xf32>
    %cst_11 = arith.constant 1.000000e+00 : f32
    %23 = vector.broadcast %cst_11 : f32 to vector<2x128xf32>
    %24 = arith.addf %23, %22 : vector<2x128xf32>
    %25 = arith.divf %23, %24 : vector<2x128xf32>
    %26 = vector.extract_strided_slice %13 {offsets = [0, 256], sizes = [2, 128], strides = [1, 1]} : vector<2x512xf32> to vector<2x128xf32>
    %27 = math.tanh %26 : vector<2x128xf32>
    %28 = vector.extract_strided_slice %13 {offsets = [0, 384], sizes = [2, 128], strides = [1, 1]} : vector<2x512xf32> to vector<2x128xf32>
    %29 = arith.negf %28 : vector<2x128xf32>
    %30 = math.exp %29 : vector<2x128xf32>
    %cst_12 = arith.constant 1.000000e+00 : f32
    %31 = vector.broadcast %cst_12 : f32 to vector<2x128xf32>
    %32 = arith.addf %31, %30 : vector<2x128xf32>
    %33 = arith.divf %31, %32 : vector<2x128xf32>
    %34 = arith.mulf %25, %8 : vector<2x128xf32>
    %35 = arith.mulf %19, %27 : vector<2x128xf32>
    %36 = arith.addf %34, %35 : vector<2x128xf32>
    %37 = math.tanh %36 : vector<2x128xf32>
    %38 = arith.mulf %33, %37 : vector<2x128xf32>
    %39 = vector.extract_strided_slice %6 {offsets = [2, 0], sizes = [2, 512], strides = [1, 1]} : vector<8x512xf32> to vector<2x512xf32>
    %40 = arith.truncf %38 : vector<2x128xf32> to vector<2x128xbf16>
    %c0_13 = arith.constant 0 : index
    %c0_14 = arith.constant 0 : index
    %41 = vector.load %arg3[%c0_13, %c0_14] : memref<128x512xbf16, #tpu.memory_space<vmem>>, vector<128x512xbf16>
    %cst_15 = arith.constant dense<0.000000e+00> : vector<2x512xf32>
    %42 = tpu.matmul %40, %41, %cst_15 {dimension_numbers = #tpu.dot_dimension_numbers<[1], [0], [0], [1], [0, 0, 1, 1], [], []>} : vector<2x128xbf16>, vector<128x512xbf16>, vector<2x512xf32> -> vector<2x512xf32>
    %43 = arith.addf %39, %42 : vector<2x512xf32>
    %44 = vector.extract_strided_slice %43 {offsets = [0, 0], sizes = [2, 128], strides = [1, 1]} : vector<2x512xf32> to vector<2x128xf32>
    %45 = arith.negf %44 : vector<2x128xf32>
    %46 = math.exp %45 : vector<2x128xf32>
    %cst_16 = arith.constant 1.000000e+00 : f32
    %47 = vector.broadcast %cst_16 : f32 to vector<2x128xf32>
    %48 = arith.addf %47, %46 : vector<2x128xf32>
    %49 = arith.divf %47, %48 : vector<2x128xf32>
    %50 = vector.extract_strided_slice %43 {offsets = [0, 128], sizes = [2, 128], strides = [1, 1]} : vector<2x512xf32> to vector<2x128xf32>
    %51 = arith.negf %50 : vector<2x128xf32>
    %52 = math.exp %51 : vector<2x128xf32>
    %cst_17 = arith.constant 1.000000e+00 : f32
    %53 = vector.broadcast %cst_17 : f32 to vector<2x128xf32>
    %54 = arith.addf %53, %52 : vector<2x128xf32>
    %55 = arith.divf %53, %54 : vector<2x128xf32>
    %56 = vector.extract_strided_slice %43 {offsets = [0, 256], sizes = [2, 128], strides = [1, 1]} : vector<2x512xf32> to vector<2x128xf32>
    %57 = math.tanh %56 : vector<2x128xf32>
    %58 = vector.extract_strided_slice %43 {offsets = [0, 384], sizes = [2, 128], strides = [1, 1]} : vector<2x512xf32> to vector<2x128xf32>
    %59 = arith.negf %58 : vector<2x128xf32>
    %60 = math.exp %59 : vector<2x128xf32>
    %cst_18 = arith.constant 1.000000e+00 : f32
    %61 = vector.broadcast %cst_18 : f32 to vector<2x128xf32>
    %62 = arith.addf %61, %60 : vector<2x128xf32>
    %63 = arith.divf %61, %62 : vector<2x128xf32>
    %64 = arith.mulf %55, %36 : vector<2x128xf32>
    %65 = arith.mulf %49, %57 : vector<2x128xf32>
    %66 = arith.addf %64, %65 : vector<2x128xf32>
    %67 = math.tanh %66 : vector<2x128xf32>
    %68 = arith.mulf %63, %67 : vector<2x128xf32>
    %69 = vector.extract_strided_slice %6 {offsets = [4, 0], sizes = [2, 512], strides = [1, 1]} : vector<8x512xf32> to vector<2x512xf32>
    %70 = arith.truncf %68 : vector<2x128xf32> to vector<2x128xbf16>
    %c0_19 = arith.constant 0 : index
    %c0_20 = arith.constant 0 : index
    %71 = vector.load %arg3[%c0_19, %c0_20] : memref<128x512xbf16, #tpu.memory_space<vmem>>, vector<128x512xbf16>
    %cst_21 = arith.constant dense<0.000000e+00> : vector<2x512xf32>
    %72 = tpu.matmul %70, %71, %cst_21 {dimension_numbers = #tpu.dot_dimension_numbers<[1], [0], [0], [1], [0, 0, 1, 1], [], []>} : vector<2x128xbf16>, vector<128x512xbf16>, vector<2x512xf32> -> vector<2x512xf32>
    %73 = arith.addf %69, %72 : vector<2x512xf32>
    %74 = vector.extract_strided_slice %73 {offsets = [0, 0], sizes = [2, 128], strides = [1, 1]} : vector<2x512xf32> to vector<2x128xf32>
    %75 = arith.negf %74 : vector<2x128xf32>
    %76 = math.exp %75 : vector<2x128xf32>
    %cst_22 = arith.constant 1.000000e+00 : f32
    %77 = vector.broadcast %cst_22 : f32 to vector<2x128xf32>
    %78 = arith.addf %77, %76 : vector<2x128xf32>
    %79 = arith.divf %77, %78 : vector<2x128xf32>
    %80 = vector.extract_strided_slice %73 {offsets = [0, 128], sizes = [2, 128], strides = [1, 1]} : vector<2x512xf32> to vector<2x128xf32>
    %81 = arith.negf %80 : vector<2x128xf32>
    %82 = math.exp %81 : vector<2x128xf32>
    %cst_23 = arith.constant 1.000000e+00 : f32
    %83 = vector.broadcast %cst_23 : f32 to vector<2x128xf32>
    %84 = arith.addf %83, %82 : vector<2x128xf32>
    %85 = arith.divf %83, %84 : vector<2x128xf32>
    %86 = vector.extract_strided_slice %73 {offsets = [0, 256], sizes = [2, 128], strides = [1, 1]} : vector<2x512xf32> to vector<2x128xf32>
    %87 = math.tanh %86 : vector<2x128xf32>
    %88 = vector.extract_strided_slice %73 {offsets = [0, 384], sizes = [2, 128], strides = [1, 1]} : vector<2x512xf32> to vector<2x128xf32>
    %89 = arith.negf %88 : vector<2x128xf32>
    %90 = math.exp %89 : vector<2x128xf32>
    %cst_24 = arith.constant 1.000000e+00 : f32
    %91 = vector.broadcast %cst_24 : f32 to vector<2x128xf32>
    %92 = arith.addf %91, %90 : vector<2x128xf32>
    %93 = arith.divf %91, %92 : vector<2x128xf32>
    %94 = arith.mulf %85, %66 : vector<2x128xf32>
    %95 = arith.mulf %79, %87 : vector<2x128xf32>
    %96 = arith.addf %94, %95 : vector<2x128xf32>
    %97 = math.tanh %96 : vector<2x128xf32>
    %98 = arith.mulf %93, %97 : vector<2x128xf32>
    %99 = vector.extract_strided_slice %6 {offsets = [6, 0], sizes = [2, 512], strides = [1, 1]} : vector<8x512xf32> to vector<2x512xf32>
    %100 = arith.truncf %98 : vector<2x128xf32> to vector<2x128xbf16>
    %c0_25 = arith.constant 0 : index
    %c0_26 = arith.constant 0 : index
    %101 = vector.load %arg3[%c0_25, %c0_26] : memref<128x512xbf16, #tpu.memory_space<vmem>>, vector<128x512xbf16>
    %cst_27 = arith.constant dense<0.000000e+00> : vector<2x512xf32>
    %102 = tpu.matmul %100, %101, %cst_27 {dimension_numbers = #tpu.dot_dimension_numbers<[1], [0], [0], [1], [0, 0, 1, 1], [], []>} : vector<2x128xbf16>, vector<128x512xbf16>, vector<2x512xf32> -> vector<2x512xf32>
    %103 = arith.addf %99, %102 : vector<2x512xf32>
    %104 = vector.extract_strided_slice %103 {offsets = [0, 0], sizes = [2, 128], strides = [1, 1]} : vector<2x512xf32> to vector<2x128xf32>
    %105 = arith.negf %104 : vector<2x128xf32>
    %106 = math.exp %105 : vector<2x128xf32>
    %cst_28 = arith.constant 1.000000e+00 : f32
    %107 = vector.broadcast %cst_28 : f32 to vector<2x128xf32>
    %108 = arith.addf %107, %106 : vector<2x128xf32>
    %109 = arith.divf %107, %108 : vector<2x128xf32>
    %110 = vector.extract_strided_slice %103 {offsets = [0, 128], sizes = [2, 128], strides = [1, 1]} : vector<2x512xf32> to vector<2x128xf32>
    %111 = arith.negf %110 : vector<2x128xf32>
    %112 = math.exp %111 : vector<2x128xf32>
    %cst_29 = arith.constant 1.000000e+00 : f32
    %113 = vector.broadcast %cst_29 : f32 to vector<2x128xf32>
    %114 = arith.addf %113, %112 : vector<2x128xf32>
    %115 = arith.divf %113, %114 : vector<2x128xf32>
    %116 = vector.extract_strided_slice %103 {offsets = [0, 256], sizes = [2, 128], strides = [1, 1]} : vector<2x512xf32> to vector<2x128xf32>
    %117 = math.tanh %116 : vector<2x128xf32>
    %118 = vector.extract_strided_slice %103 {offsets = [0, 384], sizes = [2, 128], strides = [1, 1]} : vector<2x512xf32> to vector<2x128xf32>
    %119 = arith.negf %118 : vector<2x128xf32>
    %120 = math.exp %119 : vector<2x128xf32>
    %cst_30 = arith.constant 1.000000e+00 : f32
    %121 = vector.broadcast %cst_30 : f32 to vector<2x128xf32>
    %122 = arith.addf %121, %120 : vector<2x128xf32>
    %123 = arith.divf %121, %122 : vector<2x128xf32>
    %124 = arith.mulf %115, %96 : vector<2x128xf32>
    %125 = arith.mulf %109, %117 : vector<2x128xf32>
    %126 = arith.addf %124, %125 : vector<2x128xf32>
    %127 = math.tanh %126 : vector<2x128xf32>
    %128 = arith.mulf %123, %127 : vector<2x128xf32>
    %129 = arith.truncf %128 : vector<2x128xf32> to vector<2x128xbf16>
    %c0_31 = arith.constant 0 : index
    %c0_32 = arith.constant 0 : index
    %130 = vector.load %arg4[%c0_31, %c0_32] : memref<128x2xbf16, #tpu.memory_space<vmem>>, vector<128x2xbf16>
    %cst_33 = arith.constant dense<0.000000e+00> : vector<2x2xf32>
    %131 = tpu.matmul %129, %130, %cst_33 {dimension_numbers = #tpu.dot_dimension_numbers<[1], [0], [0], [1], [0, 0, 1, 1], [], []>} : vector<2x128xbf16>, vector<128x2xbf16>, vector<2x2xf32> -> vector<2x2xf32>
    %c0_34 = arith.constant 0 : index
    %c0_35 = arith.constant 0 : index
    %132 = vector.load %arg5[%c0_34, %c0_35] : memref<1x2xf32, #tpu.memory_space<vmem>>, vector<1x2xf32>
    %133 = vector.broadcast %132 : vector<1x2xf32> to vector<2x2xf32>
    %134 = arith.addf %131, %133 : vector<2x2xf32>
    %c0_36 = arith.constant 0 : index
    %c0_37 = arith.constant 0 : index
    %135 = vector.load %arg6[%c0_36, %c0_37] : memref<2x2xf32, #tpu.memory_space<vmem>>, vector<2x2xf32>
    tpu.vector_store %arg6[%c0_36, %c0_37], %134 {strides = array<i32>} : memref<2x2xf32, #tpu.memory_space<vmem>>, vector<2x2xf32>,
    return
  }
}

</mosaic_0001>

<llo_original>
// kernel: conv_rnn_forward.3
$region0: #{conv_rnn_forward.3}
  #allocation0 [shape = 'u32[]', space=smem, size = 0x4, offset = 0x4, fixed_abs, tag = 'smem constant byte address 0x4 - core index']
  #allocation1 [shape = 'u32[144,128]{1,0:T(1,128)}', space=vmem, size = 0x12000, scoped, tag = 'internal scratch']
  %s0 = inlined_call_operand.vmem [shape: f32[8,832], index: 0, kind: input, shape index: {}]
  %s1 = inlined_call_operand.vmem [shape: bf16[832,512], index: 1, kind: input, shape index: {}]
  %s2 = inlined_call_operand.vmem [shape: f32[1,512], index: 2, kind: input, shape index: {}]
  %s3 = inlined_call_operand.vmem [shape: bf16[128,512], index: 3, kind: input, shape index: {}]
  %s4 = inlined_call_operand.vmem [shape: bf16[128,2], index: 4, kind: input, shape index: {}]
  %s5 = inlined_call_operand.vmem [shape: f32[1,2], index: 5, kind: input, shape index: {}]
  %s6 = inlined_call_operand.hbm [shape: f32[2,2], index: 6, kind: output, shape index: {}]
  %s7 = sld [smem:[#allocation0]]
  $region34: #{conv_rnn_forward.3} parent=0
    _
  %s9 = ssub.s32 1, %s7
  %s10 = scalar_select 0, %s9, %s7
  $region1: #{conv_rnn_forward.3} parent=0
    #allocation2 [shape = 'u8[1024]{0}', space=vmem, size = 0x400, scoped, tag = 'output window, operand 0, single buffered']
    #allocation3 [shape = 's32[1]{0}', space=sflag, size = 0x4, scoped, tag = 'scoped memory for conv_rnn_forward.3']
    %11 = vsyncpa [#allocation3], 0
    // Predicated region
    $region2: #{conv_rnn_forward.3} parent=1 // pred_check
      _
    $region3: #{conv_rnn_forward.3} parent=1 // pred_check_branch
      %13 = sbr.rel (0) target = $region5
    $region4: #{conv_rnn_forward.3} parent=1 // pred_region
      _
    $region5: #{conv_rnn_forward.3} parent=1 // pred_fallthru
      _
    // Predicated region
    $region6: #{conv_rnn_forward.3} parent=1 // pred_check
      _
    $region7: #{conv_rnn_forward.3} parent=1 // pred_check_branch
      %15 = sbr.rel (0) target = $region9
    $region8: #{conv_rnn_forward.3} parent=1 // pred_region
      _
    $region9: #{conv_rnn_forward.3} parent=1 // pred_fallthru
      _
    // Predicated region
    $region10: #{conv_rnn_forward.3} parent=1 // pred_check
      _
    $region11: #{conv_rnn_forward.3} parent=1 // pred_check_branch
      %17 = sbr.rel (0) target = $region13
    $region12: #{conv_rnn_forward.3} parent=1 // pred_region
      _
    $region13: #{conv_rnn_forward.3} parent=1 // pred_fallthru
      _
    // Predicated region
    $region14: #{conv_rnn_forward.3} parent=1 // pred_check
      _
    $region15: #{conv_rnn_forward.3} parent=1 // pred_check_branch
      %19 = sbr.rel (0) target = $region17
    $region16: #{conv_rnn_forward.3} parent=1 // pred_region
      _
    $region17: #{conv_rnn_forward.3} parent=1 // pred_fallthru
      _
    // Predicated region
    $region18: #{conv_rnn_forward.3} parent=1 // pred_check
      _
    $region19: #{conv_rnn_forward.3} parent=1 // pred_check_branch
      %21 = sbr.rel (0) target = $region21
    $region20: #{conv_rnn_forward.3} parent=1 // pred_region
      _
    $region21: #{conv_rnn_forward.3} parent=1 // pred_fallthru
      _
    // Predicated region
    $region22: #{conv_rnn_forward.3} parent=1 // pred_check
      _
    $region23: #{conv_rnn_forward.3} parent=1 // pred_check_branch
      %23 = sbr.rel (0) target = $region25
    $region24: #{conv_rnn_forward.3} parent=1 // pred_region
      _
    $region25: #{conv_rnn_forward.3} parent=1 // pred_fallthru
      _
    %v25 = vld [vmem:[%s0] sm:$0xff]
    %v26 = vld [vmem:[%s0 + $0x8] sm:$0xff]
    %v27 = vld [vmem:[%s0 + $0x10] sm:$0xff]
    %v28 = vld [vmem:[%s0 + $0x18] sm:$0xff]
    %v29 = vld [vmem:[%s0 + $0x20] sm:$0xff]
    %v30 = vld [vmem:[%s0 + $0x28] sm:$0xff]
    %v31 = vld [vmem:[%s0 + $0x30] sm:$0xff]
    %v32 = vpack.c.bf16 %v25, %v25
    %v33 = vpack.c.bf16 %v26, %v26
    %v34 = vpack.c.bf16 %v27, %v27
    %v35 = vpack.c.bf16 %v28, %v28
    %v36 = vpack.c.bf16 %v29, %v29
    %v37 = vpack.c.bf16 %v30, %v30
    %v38 = vpack.c.bf16 %v31, %v31
    %v39 = vld [vmem:[%s1] sm:$0xff]
    %v40 = vld [vmem:[%s1 + $0x8] sm:$0xff]
    %v41 = vld [vmem:[%s1 + $0x10] sm:$0xff]
    %v42 = vld [vmem:[%s1 + $0x18] sm:$0xff]
    %v43 = vld [vmem:[%s1 + $0x20] sm:$0xff]
    %v44 = vld [vmem:[%s1 + $0x28] sm:$0xff]
    %v45 = vld [vmem:[%s1 + $0x30] sm:$0xff]
    %v46 = vld [vmem:[%s1 + $0x38] sm:$0xff]
    %v47 = vld [vmem:[%s1 + $0x40] sm:$0xff]
    %v48 = vld [vmem:[%s1 + $0x48] sm:$0xff]
    %v49 = vld [vmem:[%s1 + $0x50] sm:$0xff]
    %v50 = vld [vmem:[%s1 + $0x58] sm:$0xff]
    %v51 = vld [vmem:[%s1 + $0x60] sm:$0xff]
    %v52 = vld [vmem:[%s1 + $0x68] sm:$0xff]
    %v53 = vld [vmem:[%s1 + $0x70] sm:$0xff]
    %v54 = vld [vmem:[%s1 + $0x78] sm:$0xff]
    %v55 = vld [vmem:[%s1 + $0x80] sm:$0xff]
    %v56 = vld [vmem:[%s1 + $0x88] sm:$0xff]
    %v57 = vld [vmem:[%s1 + $0x90] sm:$0xff]
    %v58 = vld [vmem:[%s1 + $0x98] sm:$0xff]
    %v59 = vld [vmem:[%s1 + $0xa0] sm:$0xff]
    %v60 = vld [vmem:[%s1 + $0xa8] sm:$0xff]
    %v61 = vld [vmem:[%s1 + $0xb0] sm:$0xff]
    %v62 = vld [vmem:[%s1 + $0xb8] sm:$0xff]
    %v63 = vld [vmem:[%s1 + $0xc0] sm:$0xff]
    %v64 = vld [vmem:[%s1 + $0xc8] sm:$0xff]
    %v65 = vld [vmem:[%s1 + $0xd0] sm:$0xff]
    %v66 = vld [vmem:[%s1 + $0xd8] sm:$0xff]
    %v67 = vld [vmem:[%s1 + $0xe0] sm:$0xff]
    %v68 = vld [vmem:[%s1 + $0xe8] sm:$0xff]
    %v69 = vld [vmem:[%s1 + $0xf0] sm:$0xff]
    %v70 = vld [vmem:[%s1 + $0xf8] sm:$0xff]
    %v71 = vld [vmem:[%s1 + $0x100] sm:$0xff]
    %v72 = vld [vmem:[%s1 + $0x108] sm:$0xff]
    %v73 = vld [vmem:[%s1 + $0x110] sm:$0xff]
    %v74 = vld [vmem:[%s1 + $0x118] sm:$0xff]
    %v75 = vld [vmem:[%s1 + $0x120] sm:$0xff]
    %v76 = vld [vmem:[%s1 + $0x128] sm:$0xff]
    %v77 = vld [vmem:[%s1 + $0x130] sm:$0xff]
    %v78 = vld [vmem:[%s1 + $0x138] sm:$0xff]
    %v79 = vld [vmem:[%s1 + $0x140] sm:$0xff]
    %v80 = vld [vmem:[%s1 + $0x148] sm:$0xff]
    %v81 = vld [vmem:[%s1 + $0x150] sm:$0xff]
    %v82 = vld [vmem:[%s1 + $0x158] sm:$0xff]
    %v83 = vld [vmem:[%s1 + $0x160] sm:$0xff]
    %v84 = vld [vmem:[%s1 + $0x168] sm:$0xff]
    %v85 = vld [vmem:[%s1 + $0x170] sm:$0xff]
    %v86 = vld [vmem:[%s1 + $0x178] sm:$0xff]
    %v87 = vld [vmem:[%s1 + $0x180] sm:$0xff]
    %v88 = vld [vmem:[%s1 + $0x188] sm:$0xff]
    %v89 = vld [vmem:[%s1 + $0x190] sm:$0xff]
    %v90 = vld [vmem:[%s1 + $0x198] sm:$0xff]
    %v91 = vld [vmem:[%s1 + $0x1a0] sm:$0xff]
    %v92 = vld [vmem:[%s1 + $0x1a8] sm:$0xff]
    %v93 = vld [vmem:[%s1 + $0x1b0] sm:$0xff]
    %v94 = vld [vmem:[%s1 + $0x1b8] sm:$0xff]
    %v95 = vld [vmem:[%s1 + $0x1c0] sm:$0xff]
    %v96 = vld [vmem:[%s1 + $0x1c8] sm:$0xff]
    %v97 = vld [vmem:[%s1 + $0x1d0] sm:$0xff]
    %v98 = vld [vmem:[%s1 + $0x1d8] sm:$0xff]
    %v99 = vld [vmem:[%s1 + $0x1e0] sm:$0xff]
    %v100 = vld [vmem:[%s1 + $0x1e8] sm:$0xff]
    %v101 = vld [vmem:[%s1 + $0x1f0] sm:$0xff]
    %v102 = vld [vmem:[%s1 + $0x1f8] sm:$0xff]
    %v103 = vld [vmem:[%s1 + $0x200] sm:$0xff]
    %v104 = vld [vmem:[%s1 + $0x208] sm:$0xff]
    %v105 = vld [vmem:[%s1 + $0x210] sm:$0xff]
    %v106 = vld [vmem:[%s1 + $0x218] sm:$0xff]
    %v107 = vld [vmem:[%s1 + $0x220] sm:$0xff]
    %v108 = vld [vmem:[%s1 + $0x228] sm:$0xff]
    %v109 = vld [vmem:[%s1 + $0x230] sm:$0xff]
    %v110 = vld [vmem:[%s1 + $0x238] sm:$0xff]
    %v111 = vld [vmem:[%s1 + $0x240] sm:$0xff]
    %v112 = vld [vmem:[%s1 + $0x248] sm:$0xff]
    %v113 = vld [vmem:[%s1 + $0x250] sm:$0xff]
    %v114 = vld [vmem:[%s1 + $0x258] sm:$0xff]
    %v115 = vld [vmem:[%s1 + $0x260] sm:$0xff]
    %v116 = vld [vmem:[%s1 + $0x268] sm:$0xff]
    %v117 = vld [vmem:[%s1 + $0x270] sm:$0xff]
    %v118 = vld [vmem:[%s1 + $0x278] sm:$0xff]
    %v119 = vld [vmem:[%s1 + $0x280] sm:$0xff]
    %v120 = vld [vmem:[%s1 + $0x288] sm:$0xff]
    %v121 = vld [vmem:[%s1 + $0x290] sm:$0xff]
    %v122 = vld [vmem:[%s1 + $0x298] sm:$0xff]
    %v123 = vld [vmem:[%s1 + $0x2a0] sm:$0xff]
    %v124 = vld [vmem:[%s1 + $0x2a8] sm:$0xff]
    %v125 = vld [vmem:[%s1 + $0x2b0] sm:$0xff]
    %v126 = vld [vmem:[%s1 + $0x2b8] sm:$0xff]
    %v127 = vld [vmem:[%s1 + $0x2c0] sm:$0xff]
    %v128 = vld [vmem:[%s1 + $0x2c8] sm:$0xff]
    %v129 = vld [vmem:[%s1 + $0x2d0] sm:$0xff]
    %v130 = vld [vmem:[%s1 + $0x2d8] sm:$0xff]
    %v131 = vld [vmem:[%s1 + $0x2e0] sm:$0xff]
    %v132 = vld [vmem:[%s1 + $0x2e8] sm:$0xff]
    %v133 = vld [vmem:[%s1 + $0x2f0] sm:$0xff]
    %v134 = vld [vmem:[%s1 + $0x2f8] sm:$0xff]
    %v135 = vld [vmem:[%s1 + $0x300] sm:$0xff]
    %v136 = vld [vmem:[%s1 + $0x308] sm:$0xff]
    %v137 = vld [vmem:[%s1 + $0x310] sm:$0xff]
    %v138 = vld [vmem:[%s1 + $0x318] sm:$0xff]
    %v139 = vld [vmem:[%s1 + $0x320] sm:$0xff]
    %v140 = vld [vmem:[%s1 + $0x328] sm:$0xff]
    %v141 = vld [vmem:[%s1 + $0x330] sm:$0xff]
    %v142 = vld [vmem:[%s1 + $0x338] sm:$0xff]
    %v143 = vld [vmem:[%s1 + $0x340] sm:$0xff]
    %v144 = vld [vmem:[%s1 + $0x348] sm:$0xff]
    %v145 = vld [vmem:[%s1 + $0x350] sm:$0xff]
    %v146 = vld [vmem:[%s1 + $0x358] sm:$0xff]
    %v147 = vld [vmem:[%s1 + $0x360] sm:$0xff]
    %v148 = vld [vmem:[%s1 + $0x368] sm:$0xff]
    %v149 = vld [vmem:[%s1 + $0x370] sm:$0xff]
    %v150 = vld [vmem:[%s1 + $0x378] sm:$0xff]
    %v151 = vld [vmem:[%s1 + $0x380] sm:$0xff]
    %v152 = vld [vmem:[%s1 + $0x388] sm:$0xff]
    %v153 = vld [vmem:[%s1 + $0x390] sm:$0xff]
    %v154 = vld [vmem:[%s1 + $0x398] sm:$0xff]
    %v155 = vld [vmem:[%s1 + $0x3a0] sm:$0xff]
    %v156 = vld [vmem:[%s1 + $0x3a8] sm:$0xff]
    %v157 = vld [vmem:[%s1 + $0x3b0] sm:$0xff]
    %v158 = vld [vmem:[%s1 + $0x3b8] sm:$0xff]
    %v159 = vld [vmem:[%s1 + $0x3c0] sm:$0xff]
    %v160 = vld [vmem:[%s1 + $0x3c8] sm:$0xff]
    %v161 = vld [vmem:[%s1 + $0x3d0] sm:$0xff]
    %v162 = vld [vmem:[%s1 + $0x3d8] sm:$0xff]
    %v163 = vld [vmem:[%s1 + $0x3e0] sm:$0xff]
    %v164 = vld [vmem:[%s1 + $0x3e8] sm:$0xff]
    %v165 = vld [vmem:[%s1 + $0x3f0] sm:$0xff]
    %v166 = vld [vmem:[%s1 + $0x3f8] sm:$0xff]
    %v167 = vld [vmem:[%s1 + $0x400] sm:$0xff]
    %v168 = vld [vmem:[%s1 + $0x408] sm:$0xff]
    %v169 = vld [vmem:[%s1 + $0x410] sm:$0xff]
    %v170 = vld [vmem:[%s1 + $0x418] sm:$0xff]
    %v171 = vld [vmem:[%s1 + $0x420] sm:$0xff]
    %v172 = vld [vmem:[%s1 + $0x428] sm:$0xff]
    %v173 = vld [vmem:[%s1 + $0x430] sm:$0xff]
    %v174 = vld [vmem:[%s1 + $0x438] sm:$0xff]
    %v175 = vld [vmem:[%s1 + $0x440] sm:$0xff]
    %v176 = vld [vmem:[%s1 + $0x448] sm:$0xff]
    %v177 = vld [vmem:[%s1 + $0x450] sm:$0xff]
    %v178 = vld [vmem:[%s1 + $0x458] sm:$0xff]
    %v179 = vld [vmem:[%s1 + $0x460] sm:$0xff]
    %v180 = vld [vmem:[%s1 + $0x468] sm:$0xff]
    %v181 = vld [vmem:[%s1 + $0x470] sm:$0xff]
    %v182 = vld [vmem:[%s1 + $0x478] sm:$0xff]
    %v183 = vld [vmem:[%s1 + $0x480] sm:$0xff]
    %v184 = vld [vmem:[%s1 + $0x488] sm:$0xff]
    %v185 = vld [vmem:[%s1 + $0x490] sm:$0xff]
    %v186 = vld [vmem:[%s1 + $0x498] sm:$0xff]
    %v187 = vld [vmem:[%s1 + $0x4a0] sm:$0xff]
    %v188 = vld [vmem:[%s1 + $0x4a8] sm:$0xff]
    %v189 = vld [vmem:[%s1 + $0x4b0] sm:$0xff]
    %v190 = vld [vmem:[%s1 + $0x4b8] sm:$0xff]
    %v191 = vld [vmem:[%s1 + $0x4c0] sm:$0xff]
    %v192 = vld [vmem:[%s1 + $0x4c8] sm:$0xff]
    %v193 = vld [vmem:[%s1 + $0x4d0] sm:$0xff]
    %v194 = vld [vmem:[%s1 + $0x4d8] sm:$0xff]
    %v195 = vld [vmem:[%s1 + $0x4e0] sm:$0xff]
    %v196 = vld [vmem:[%s1 + $0x4e8] sm:$0xff]
    %v197 = vld [vmem:[%s1 + $0x4f0] sm:$0xff]
    %v198 = vld [vmem:[%s1 + $0x4f8] sm:$0xff]
    %v199 = vld [vmem:[%s1 + $0x500] sm:$0xff]
    %v200 = vld [vmem:[%s1 + $0x508] sm:$0xff]
    %v201 = vld [vmem:[%s1 + $0x510] sm:$0xff]
    %v202 = vld [vmem:[%s1 + $0x518] sm:$0xff]
    %v203 = vld [vmem:[%s1 + $0x520] sm:$0xff]
    %v204 = vld [vmem:[%s1 + $0x528] sm:$0xff]
    %v205 = vld [vmem:[%s1 + $0x530] sm:$0xff]
    %v206 = vld [vmem:[%s1 + $0x538] sm:$0xff]
    %v207 = vld [vmem:[%s1 + $0x540] sm:$0xff]
    %v208 = vld [vmem:[%s1 + $0x548] sm:$0xff]
    %v209 = vld [vmem:[%s1 + $0x550] sm:$0xff]
    %v210 = vld [vmem:[%s1 + $0x558] sm:$0xff]
    %v211 = vld [vmem:[%s1 + $0x560] sm:$0xff]
    %v212 = vld [vmem:[%s1 + $0x568] sm:$0xff]
    %v213 = vld [vmem:[%s1 + $0x570] sm:$0xff]
    %v214 = vld [vmem:[%s1 + $0x578] sm:$0xff]
    %v215 = vld [vmem:[%s1 + $0x580] sm:$0xff]
    %v216 = vld [vmem:[%s1 + $0x588] sm:$0xff]
    %v217 = vld [vmem:[%s1 + $0x590] sm:$0xff]
    %v218 = vld [vmem:[%s1 + $0x598] sm:$0xff]
    %v219 = vld [vmem:[%s1 + $0x5a0] sm:$0xff]
    %v220 = vld [vmem:[%s1 + $0x5a8] sm:$0xff]
    %v221 = vld [vmem:[%s1 + $0x5b0] sm:$0xff]
    %v222 = vld [vmem:[%s1 + $0x5b8] sm:$0xff]
    %v223 = vld [vmem:[%s1 + $0x5c0] sm:$0xff]
    %v224 = vld [vmem:[%s1 + $0x5c8] sm:$0xff]
    %v225 = vld [vmem:[%s1 + $0x5d0] sm:$0xff]
    %v226 = vld [vmem:[%s1 + $0x5d8] sm:$0xff]
    %v227 = vld [vmem:[%s1 + $0x5e0] sm:$0xff]
    %v228 = vld [vmem:[%s1 + $0x5e8] sm:$0xff]
    %v229 = vld [vmem:[%s1 + $0x5f0] sm:$0xff]
    %v230 = vld [vmem:[%s1 + $0x5f8] sm:$0xff]
    %v231 = vld [vmem:[%s1 + $0x600] sm:$0xff]
    %v232 = vld [vmem:[%s1 + $0x608] sm:$0xff]
    %v233 = vld [vmem:[%s1 + $0x610] sm:$0xff]
    %v234 = vld [vmem:[%s1 + $0x618] sm:$0xff]
    %v235 = vld [vmem:[%s1 + $0x620] sm:$0xff]
    %v236 = vld [vmem:[%s1 + $0x628] sm:$0xff]
    %v237 = vld [vmem:[%s1 + $0x630] sm:$0xff]
    %v238 = vld [vmem:[%s1 + $0x638] sm:$0xff]
    %v239 = vld [vmem:[%s1 + $0x640] sm:$0xff]
    %v240 = vld [vmem:[%s1 + $0x648] sm:$0xff]
    %v241 = vld [vmem:[%s1 + $0x650] sm:$0xff]
    %v242 = vld [vmem:[%s1 + $0x658] sm:$0xff]
    %v243 = vld [vmem:[%s1 + $0x660] sm:$0xff]
    %v244 = vld [vmem:[%s1 + $0x668] sm:$0xff]
    %v245 = vld [vmem:[%s1 + $0x670] sm:$0xff]
    %v246 = vld [vmem:[%s1 + $0x678] sm:$0xff]
    %v247 = vld [vmem:[%s2] sm:$0xf]
    %v249 = vlaneseq
    %v250 = vshrl.u32 %v249, 7
    %v251 = vsub.s32 0, %v250
    %v252 = vrot.slane %v247, %v251
    %v253 = vlaneseq
    %v254 = vshrl.u32 %v253, 7
    %v255 = vsub.s32 1, %v254
    %v256 = vrot.slane %v247, %v255
    %v257 = vlaneseq
    %v258 = vshrl.u32 %v257, 7
    %v259 = vsub.s32 2, %v258
    %v260 = vrot.slane %v247, %v259
    %v261 = vlaneseq
    %v262 = vshrl.u32 %v261, 7
    %v263 = vsub.s32 3, %v262
    %v264 = vrot.slane %v247, %v263
    %v477 = vunpack.c.l.b16 %v39
    %v478 = vunpack.c.h.b16 %v39
    %v479 = vunpack.c.l.b16 %v40
    %v480 = vunpack.c.h.b16 %v40
    %v481 = vunpack.c.l.b16 %v41
    %v482 = vunpack.c.h.b16 %v41
    %v483 = vunpack.c.l.b16 %v42
    %v484 = vunpack.c.h.b16 %v42
    %v485 = vunpack.c.l.b16 %v43
    %v486 = vunpack.c.h.b16 %v43
    %v487 = vunpack.c.l.b16 %v44
    %v488 = vunpack.c.h.b16 %v44
    %v489 = vunpack.c.l.b16 %v45
    %v490 = vunpack.c.h.b16 %v45
    %v491 = vunpack.c.l.b16 %v46
    %v492 = vunpack.c.h.b16 %v46
    %v493 = vunpack.c.l.b16 %v47
    %v494 = vunpack.c.h.b16 %v47
    %v495 = vunpack.c.l.b16 %v48
    %v496 = vunpack.c.h.b16 %v48
    %v497 = vunpack.c.l.b16 %v49
    %v498 = vunpack.c.h.b16 %v49
    %v499 = vunpack.c.l.b16 %v50
    %v500 = vunpack.c.h.b16 %v50
    %v501 = vunpack.c.l.b16 %v51
    %v502 = vunpack.c.h.b16 %v51
    %v503 = vunpack.c.l.b16 %v52
    %v504 = vunpack.c.h.b16 %v52
    %v505 = vunpack.c.l.b16 %v53
    %v506 = vunpack.c.h.b16 %v53
    %v507 = vunpack.c.l.b16 %v54
    %v508 = vunpack.c.h.b16 %v54
    %v509 = vunpack.c.l.b16 %v55
    %v510 = vunpack.c.h.b16 %v55
    %v511 = vunpack.c.l.b16 %v56
    %v512 = vunpack.c.h.b16 %v56
    %v513 = vunpack.c.l.b16 %v57
    %v514 = vunpack.c.h.b16 %v57
    %v515 = vunpack.c.l.b16 %v58
    %v516 = vunpack.c.h.b16 %v58
    %v517 = vunpack.c.l.b16 %v59
    %v518 = vunpack.c.h.b16 %v59
    %v519 = vunpack.c.l.b16 %v60
    %v520 = vunpack.c.h.b16 %v60
    %v521 = vunpack.c.l.b16 %v61
    %v522 = vunpack.c.h.b16 %v61
    %v523 = vunpack.c.l.b16 %v62
    %v524 = vunpack.c.h.b16 %v62
    %v525 = vunpack.c.l.b16 %v63
    %v526 = vunpack.c.h.b16 %v63
    %v527 = vunpack.c.l.b16 %v64
    %v528 = vunpack.c.h.b16 %v64
    %v529 = vunpack.c.l.b16 %v65
    %v530 = vunpack.c.h.b16 %v65
    %v531 = vunpack.c.l.b16 %v66
    %v532 = vunpack.c.h.b16 %v66
    %v533 = vunpack.c.l.b16 %v67
    %v534 = vunpack.c.h.b16 %v67
    %v535 = vunpack.c.l.b16 %v68
    %v536 = vunpack.c.h.b16 %v68
    %v537 = vunpack.c.l.b16 %v69
    %v538 = vunpack.c.h.b16 %v69
    %v539 = vunpack.c.l.b16 %v70
    %v540 = vunpack.c.h.b16 %v70
    %v541 = vunpack.c.l.b16 %v71
    %v542 = vunpack.c.h.b16 %v71
    %v543 = vunpack.c.l.b16 %v72
    %v544 = vunpack.c.h.b16 %v72
    %v545 = vunpack.c.l.b16 %v73
    %v546 = vunpack.c.h.b16 %v73
    %v547 = vunpack.c.l.b16 %v74
    %v548 = vunpack.c.h.b16 %v74
    %v549 = vunpack.c.l.b16 %v75
    %v550 = vunpack.c.h.b16 %v75
    %v551 = vunpack.c.l.b16 %v76
    %v552 = vunpack.c.h.b16 %v76
    %v553 = vunpack.c.l.b16 %v77
    %v554 = vunpack.c.h.b16 %v77
    %v555 = vunpack.c.l.b16 %v78
    %v556 = vunpack.c.h.b16 %v78
    %v557 = vunpack.c.l.b16 %v79
    %v558 = vunpack.c.h.b16 %v79
    %v559 = vunpack.c.l.b16 %v80
    %v560 = vunpack.c.h.b16 %v80
    %v561 = vunpack.c.l.b16 %v81
    %v562 = vunpack.c.h.b16 %v81
    %v563 = vunpack.c.l.b16 %v82
    %v564 = vunpack.c.h.b16 %v82
    %v565 = vunpack.c.l.b16 %v83
    %v566 = vunpack.c.h.b16 %v83
    %v567 = vunpack.c.l.b16 %v84
    %v568 = vunpack.c.h.b16 %v84
    %v569 = vunpack.c.l.b16 %v85
    %v570 = vunpack.c.h.b16 %v85
    %v571 = vunpack.c.l.b16 %v86
    %v572 = vunpack.c.h.b16 %v86
    %v573 = vunpack.c.l.b16 %v87
    %v574 = vunpack.c.h.b16 %v87
    %v575 = vunpack.c.l.b16 %v88
    %v576 = vunpack.c.h.b16 %v88
    %v577 = vunpack.c.l.b16 %v89
    %v578 = vunpack.c.h.b16 %v89
    %v579 = vunpack.c.l.b16 %v90
    %v580 = vunpack.c.h.b16 %v90
    %v581 = vunpack.c.l.b16 %v91
    %v582 = vunpack.c.h.b16 %v91
    %v583 = vunpack.c.l.b16 %v92
    %v584 = vunpack.c.h.b16 %v92
    %v585 = vunpack.c.l.b16 %v93
    %v586 = vunpack.c.h.b16 %v93
    %v587 = vunpack.c.l.b16 %v94
    %v588 = vunpack.c.h.b16 %v94
    %v589 = vunpack.c.l.b16 %v95
    %v590 = vunpack.c.h.b16 %v95
    %v591 = vunpack.c.l.b16 %v96
    %v592 = vunpack.c.h.b16 %v96
    %v593 = vunpack.c.l.b16 %v97
    %v594 = vunpack.c.h.b16 %v97
    %v595 = vunpack.c.l.b16 %v98
    %v596 = vunpack.c.h.b16 %v98
    %v597 = vunpack.c.l.b16 %v99
    %v598 = vunpack.c.h.b16 %v99
    %v599 = vunpack.c.l.b16 %v100
    %v600 = vunpack.c.h.b16 %v100
    %v601 = vunpack.c.l.b16 %v101
    %v602 = vunpack.c.h.b16 %v101
    %v603 = vunpack.c.l.b16 %v102
    %v604 = vunpack.c.h.b16 %v102
    %v605 = vunpack.c.l.b16 %v103
    %v606 = vunpack.c.h.b16 %v103
    %v607 = vunpack.c.l.b16 %v104
    %v608 = vunpack.c.h.b16 %v104
    %v609 = vunpack.c.l.b16 %v105
    %v610 = vunpack.c.h.b16 %v105
    %v611 = vunpack.c.l.b16 %v106
    %v612 = vunpack.c.h.b16 %v106
    %v613 = vunpack.c.l.b16 %v107
    %v614 = vunpack.c.h.b16 %v107
    %v615 = vunpack.c.l.b16 %v108
    %v616 = vunpack.c.h.b16 %v108
    %v617 = vunpack.c.l.b16 %v109
    %v618 = vunpack.c.h.b16 %v109
    %v619 = vunpack.c.l.b16 %v110
    %v620 = vunpack.c.h.b16 %v110
    %v621 = vunpack.c.l.b16 %v111
    %v622 = vunpack.c.h.b16 %v111
    %v623 = vunpack.c.l.b16 %v112
    %v624 = vunpack.c.h.b16 %v112
    %v625 = vunpack.c.l.b16 %v113
    %v626 = vunpack.c.h.b16 %v113
    %v627 = vunpack.c.l.b16 %v114
    %v628 = vunpack.c.h.b16 %v114
    %v629 = vunpack.c.l.b16 %v115
    %v630 = vunpack.c.h.b16 %v115
    %v631 = vunpack.c.l.b16 %v116
    %v632 = vunpack.c.h.b16 %v116
    %v633 = vunpack.c.l.b16 %v117
    %v634 = vunpack.c.h.b16 %v117
    %v635 = vunpack.c.l.b16 %v118
    %v636 = vunpack.c.h.b16 %v118
    %v637 = vunpack.c.l.b16 %v119
    %v638 = vunpack.c.h.b16 %v119
    %v639 = vunpack.c.l.b16 %v120
    %v640 = vunpack.c.h.b16 %v120
    %v641 = vunpack.c.l.b16 %v121
    %v642 = vunpack.c.h.b16 %v121
    %v643 = vunpack.c.l.b16 %v122
    %v644 = vunpack.c.h.b16 %v122
    %v645 = vunpack.c.l.b16 %v123
    %v646 = vunpack.c.h.b16 %v123
    %v647 = vunpack.c.l.b16 %v124
    %v648 = vunpack.c.h.b16 %v124
    %v649 = vunpack.c.l.b16 %v125
    %v650 = vunpack.c.h.b16 %v125
    %v651 = vunpack.c.l.b16 %v126
    %v652 = vunpack.c.h.b16 %v126
    %v653 = vunpack.c.l.b16 %v127
    %v654 = vunpack.c.h.b16 %v127
    %v655 = vunpack.c.l.b16 %v128
    %v656 = vunpack.c.h.b16 %v128
    %v657 = vunpack.c.l.b16 %v129
    %v658 = vunpack.c.h.b16 %v129
    %v659 = vunpack.c.l.b16 %v130
    %v660 = vunpack.c.h.b16 %v130
    %v661 = vunpack.c.l.b16 %v131
    %v662 = vunpack.c.h.b16 %v131
    %v663 = vunpack.c.l.b16 %v132
    %v664 = vunpack.c.h.b16 %v132
    %v665 = vunpack.c.l.b16 %v133
    %v666 = vunpack.c.h.b16 %v133
    %v667 = vunpack.c.l.b16 %v134
    %v668 = vunpack.c.h.b16 %v134
    %v669 = vunpack.c.l.b16 %v135
    %v670 = vunpack.c.h.b16 %v135
    %v671 = vunpack.c.l.b16 %v136
    %v672 = vunpack.c.h.b16 %v136
    %v673 = vunpack.c.l.b16 %v137
    %v674 = vunpack.c.h.b16 %v137
    %v675 = vunpack.c.l.b16 %v138
    %v676 = vunpack.c.h.b16 %v138
    %v677 = vunpack.c.l.b16 %v139
    %v678 = vunpack.c.h.b16 %v139
    %v679 = vunpack.c.l.b16 %v140
    %v680 = vunpack.c.h.b16 %v140
    %v681 = vunpack.c.l.b16 %v141
    %v682 = vunpack.c.h.b16 %v141
    %v683 = vunpack.c.l.b16 %v142
    %v684 = vunpack.c.h.b16 %v142
    %v685 = vunpack.c.l.b16 %v143
    %v686 = vunpack.c.h.b16 %v143
    %v687 = vunpack.c.l.b16 %v144
    %v688 = vunpack.c.h.b16 %v144
    %v689 = vunpack.c.l.b16 %v145
    %v690 = vunpack.c.h.b16 %v145
    %v691 = vunpack.c.l.b16 %v146
    %v692 = vunpack.c.h.b16 %v146
    %v693 = vunpack.c.l.b16 %v147
    %v694 = vunpack.c.h.b16 %v147
    %v695 = vunpack.c.l.b16 %v148
    %v696 = vunpack.c.h.b16 %v148
    %v697 = vunpack.c.l.b16 %v149
    %v698 = vunpack.c.h.b16 %v149
    %v699 = vunpack.c.l.b16 %v150
    %v700 = vunpack.c.h.b16 %v150
    %v701 = vunpack.c.l.b16 %v151
    %v702 = vunpack.c.h.b16 %v151
    %v703 = vunpack.c.l.b16 %v152
    %v704 = vunpack.c.h.b16 %v152
    %v705 = vunpack.c.l.b16 %v153
    %v706 = vunpack.c.h.b16 %v153
    %v707 = vunpack.c.l.b16 %v154
    %v708 = vunpack.c.h.b16 %v154
    %v709 = vunpack.c.l.b16 %v155
    %v710 = vunpack.c.h.b16 %v155
    %v711 = vunpack.c.l.b16 %v156
    %v712 = vunpack.c.h.b16 %v156
    %v713 = vunpack.c.l.b16 %v157
    %v714 = vunpack.c.h.b16 %v157
    %v715 = vunpack.c.l.b16 %v158
    %v716 = vunpack.c.h.b16 %v158
    %v717 = vunpack.c.l.b16 %v159
    %v718 = vunpack.c.h.b16 %v159
    %v719 = vunpack.c.l.b16 %v160
    %v720 = vunpack.c.h.b16 %v160
    %v721 = vunpack.c.l.b16 %v161
    %v722 = vunpack.c.h.b16 %v161
    %v723 = vunpack.c.l.b16 %v162
    %v724 = vunpack.c.h.b16 %v162
    %v725 = vunpack.c.l.b16 %v163
    %v726 = vunpack.c.h.b16 %v163
    %v727 = vunpack.c.l.b16 %v164
    %v728 = vunpack.c.h.b16 %v164
    %v729 = vunpack.c.l.b16 %v165
    %v730 = vunpack.c.h.b16 %v165
    %v731 = vunpack.c.l.b16 %v166
    %v732 = vunpack.c.h.b16 %v166
    %v733 = vunpack.c.l.b16 %v167
    %v734 = vunpack.c.h.b16 %v167
    %v735 = vunpack.c.l.b16 %v168
    %v736 = vunpack.c.h.b16 %v168
    %v737 = vunpack.c.l.b16 %v169
    %v738 = vunpack.c.h.b16 %v169
    %v739 = vunpack.c.l.b16 %v170
    %v740 = vunpack.c.h.b16 %v170
    %v741 = vunpack.c.l.b16 %v171
    %v742 = vunpack.c.h.b16 %v171
    %v743 = vunpack.c.l.b16 %v172
    %v744 = vunpack.c.h.b16 %v172
    %v745 = vunpack.c.l.b16 %v173
    %v746 = vunpack.c.h.b16 %v173
    %v747 = vunpack.c.l.b16 %v174
    %v748 = vunpack.c.h.b16 %v174
    %v749 = vunpack.c.l.b16 %v175
    %v750 = vunpack.c.h.b16 %v175
    %v751 = vunpack.c.l.b16 %v176
    %v752 = vunpack.c.h.b16 %v176
    %v753 = vunpack.c.l.b16 %v177
    %v754 = vunpack.c.h.b16 %v177
    %v755 = vunpack.c.l.b16 %v178
    %v756 = vunpack.c.h.b16 %v178
    %v757 = vunpack.c.l.b16 %v179
    %v758 = vunpack.c.h.b16 %v179
    %v759 = vunpack.c.l.b16 %v180
    %v760 = vunpack.c.h.b16 %v180
    %v761 = vunpack.c.l.b16 %v181
    %v762 = vunpack.c.h.b16 %v181
    %v763 = vunpack.c.l.b16 %v182
    %v764 = vunpack.c.h.b16 %v182
    %v765 = vunpack.c.l.b16 %v183
    %v766 = vunpack.c.h.b16 %v183
    %v767 = vunpack.c.l.b16 %v184
    %v768 = vunpack.c.h.b16 %v184
    %v769 = vunpack.c.l.b16 %v185
    %v770 = vunpack.c.h.b16 %v185
    %v771 = vunpack.c.l.b16 %v186
    %v772 = vunpack.c.h.b16 %v186
    %v773 = vunpack.c.l.b16 %v187
    %v774 = vunpack.c.h.b16 %v187
    %v775 = vunpack.c.l.b16 %v188
    %v776 = vunpack.c.h.b16 %v188
    %v777 = vunpack.c.l.b16 %v189
    %v778 = vunpack.c.h.b16 %v189
    %v779 = vunpack.c.l.b16 %v190
    %v780 = vunpack.c.h.b16 %v190
    %v781 = vunpack.c.l.b16 %v191
    %v782 = vunpack.c.h.b16 %v191
    %v783 = vunpack.c.l.b16 %v192
    %v784 = vunpack.c.h.b16 %v192
    %v785 = vunpack.c.l.b16 %v193
    %v786 = vunpack.c.h.b16 %v193
    %v787 = vunpack.c.l.b16 %v194
    %v788 = vunpack.c.h.b16 %v194
    %v789 = vunpack.c.l.b16 %v195
    %v790 = vunpack.c.h.b16 %v195
    %v791 = vunpack.c.l.b16 %v196
    %v792 = vunpack.c.h.b16 %v196
    %v793 = vunpack.c.l.b16 %v197
    %v794 = vunpack.c.h.b16 %v197
    %v795 = vunpack.c.l.b16 %v198
    %v796 = vunpack.c.h.b16 %v198
    %v797 = vunpack.c.l.b16 %v199
    %v798 = vunpack.c.h.b16 %v199
    %v799 = vunpack.c.l.b16 %v200
    %v800 = vunpack.c.h.b16 %v200
    %v801 = vunpack.c.l.b16 %v201
    %v802 = vunpack.c.h.b16 %v201
    %v803 = vunpack.c.l.b16 %v202
    %v804 = vunpack.c.h.b16 %v202
    %v805 = vunpack.c.l.b16 %v203
    %v806 = vunpack.c.h.b16 %v203
    %v807 = vunpack.c.l.b16 %v204
    %v808 = vunpack.c.h.b16 %v204
    %v809 = vunpack.c.l.b16 %v205
    %v810 = vunpack.c.h.b16 %v205
    %v811 = vunpack.c.l.b16 %v206
    %v812 = vunpack.c.h.b16 %v206
    %v813 = vunpack.c.l.b16 %v207
    %v814 = vunpack.c.h.b16 %v207
    %v815 = vunpack.c.l.b16 %v208
    %v816 = vunpack.c.h.b16 %v208
    %v817 = vunpack.c.l.b16 %v209
    %v818 = vunpack.c.h.b16 %v209
    %v819 = vunpack.c.l.b16 %v210
    %v820 = vunpack.c.h.b16 %v210
    %v821 = vunpack.c.l.b16 %v211
    %v822 = vunpack.c.h.b16 %v211
    %v823 = vunpack.c.l.b16 %v212
    %v824 = vunpack.c.h.b16 %v212
    %v825 = vunpack.c.l.b16 %v213
    %v826 = vunpack.c.h.b16 %v213
    %v827 = vunpack.c.l.b16 %v214
    %v828 = vunpack.c.h.b16 %v214
    %v829 = vunpack.c.l.b16 %v215
    %v830 = vunpack.c.h.b16 %v215
    %v831 = vunpack.c.l.b16 %v216
    %v832 = vunpack.c.h.b16 %v216
    %v833 = vunpack.c.l.b16 %v217
    %v834 = vunpack.c.h.b16 %v217
    %v835 = vunpack.c.l.b16 %v218
    %v836 = vunpack.c.h.b16 %v218
    %v837 = vunpack.c.l.b16 %v219
    %v838 = vunpack.c.h.b16 %v219
    %v839 = vunpack.c.l.b16 %v220
    %v840 = vunpack.c.h.b16 %v220
    %v841 = vunpack.c.l.b16 %v221
    %v842 = vunpack.c.h.b16 %v221
    %v843 = vunpack.c.l.b16 %v222
    %v844 = vunpack.c.h.b16 %v222
    %v845 = vunpack.c.l.b16 %v223
    %v846 = vunpack.c.h.b16 %v223
    %v847 = vunpack.c.l.b16 %v224
    %v848 = vunpack.c.h.b16 %v224
    %v849 = vunpack.c.l.b16 %v225
    %v850 = vunpack.c.h.b16 %v225
    %v851 = vunpack.c.l.b16 %v226
    %v852 = vunpack.c.h.b16 %v226
    %v853 = vunpack.c.l.b16 %v227
    %v854 = vunpack.c.h.b16 %v227
    %v855 = vunpack.c.l.b16 %v228
    %v856 = vunpack.c.h.b16 %v228
    %v857 = vunpack.c.l.b16 %v229
    %v858 = vunpack.c.h.b16 %v229
    %v859 = vunpack.c.l.b16 %v230
    %v860 = vunpack.c.h.b16 %v230
    %v861 = vunpack.c.l.b16 %v231
    %v862 = vunpack.c.h.b16 %v231
    %v863 = vunpack.c.l.b16 %v232
    %v864 = vunpack.c.h.b16 %v232
    %v865 = vunpack.c.l.b16 %v233
    %v866 = vunpack.c.h.b16 %v233
    %v867 = vunpack.c.l.b16 %v234
    %v868 = vunpack.c.h.b16 %v234
    %v869 = vunpack.c.l.b16 %v235
    %v870 = vunpack.c.h.b16 %v235
    %v871 = vunpack.c.l.b16 %v236
    %v872 = vunpack.c.h.b16 %v236
    %v873 = vunpack.c.l.b16 %v237
    %v874 = vunpack.c.h.b16 %v237
    %v875 = vunpack.c.l.b16 %v238
    %v876 = vunpack.c.h.b16 %v238
    %v877 = vunpack.c.l.b16 %v239
    %v878 = vunpack.c.h.b16 %v239
    %v879 = vunpack.c.l.b16 %v240
    %v880 = vunpack.c.h.b16 %v240
    %v881 = vunpack.c.l.b16 %v241
    %v882 = vunpack.c.h.b16 %v241
    %v883 = vunpack.c.l.b16 %v242
    %v884 = vunpack.c.h.b16 %v242
    %v885 = vunpack.c.l.b16 %v243
    %v886 = vunpack.c.h.b16 %v243
    %v887 = vunpack.c.l.b16 %v244
    %v888 = vunpack.c.h.b16 %v244
    %v889 = vunpack.c.l.b16 %v245
    %v890 = vunpack.c.h.b16 %v245
    %v891 = vunpack.c.l.b16 %v246
    %v892 = vunpack.c.h.b16 %v246
    %v893 = vpack.c.b16 %v481, %v477
    %v894 = vpack.c.b16 %v482, %v478
    %v895 = vpack.c.b16 %v483, %v479
    %v896 = vpack.c.b16 %v484, %v480
    %v897 = vpack.c.b16 %v489, %v485
    %v898 = vpack.c.b16 %v490, %v486
    %v899 = vpack.c.b16 %v491, %v487
    %v900 = vpack.c.b16 %v492, %v488
    %v901 = vpack.c.b16 %v497, %v493
    %v902 = vpack.c.b16 %v498, %v494
    %v903 = vpack.c.b16 %v499, %v495
    %v904 = vpack.c.b16 %v500, %v496
    %v905 = vpack.c.b16 %v505, %v501
    %v906 = vpack.c.b16 %v506, %v502
    %v907 = vpack.c.b16 %v507, %v503
    %v908 = vpack.c.b16 %v508, %v504
    %v909 = vpack.c.b16 %v513, %v509
    %v910 = vpack.c.b16 %v514, %v510
    %v911 = vpack.c.b16 %v515, %v511
    %v912 = vpack.c.b16 %v516, %v512
    %v913 = vpack.c.b16 %v521, %v517
    %v914 = vpack.c.b16 %v522, %v518
    %v915 = vpack.c.b16 %v523, %v519
    %v916 = vpack.c.b16 %v524, %v520
    %v917 = vpack.c.b16 %v529, %v525
    %v918 = vpack.c.b16 %v530, %v526
    %v919 = vpack.c.b16 %v531, %v527
    %v920 = vpack.c.b16 %v532, %v528
    %v921 = vpack.c.b16 %v537, %v533
    %v922 = vpack.c.b16 %v538, %v534
    %v923 = vpack.c.b16 %v539, %v535
    %v924 = vpack.c.b16 %v540, %v536
    %v925 = vpack.c.b16 %v545, %v541
    %v926 = vpack.c.b16 %v546, %v542
    %v927 = vpack.c.b16 %v547, %v543
    %v928 = vpack.c.b16 %v548, %v544
    %v929 = vpack.c.b16 %v553, %v549
    %v930 = vpack.c.b16 %v554, %v550
    %v931 = vpack.c.b16 %v555, %v551
    %v932 = vpack.c.b16 %v556, %v552
    %v933 = vpack.c.b16 %v561, %v557
    %v934 = vpack.c.b16 %v562, %v558
    %v935 = vpack.c.b16 %v563, %v559
    %v936 = vpack.c.b16 %v564, %v560
    %v937 = vpack.c.b16 %v569, %v565
    %v938 = vpack.c.b16 %v570, %v566
    %v939 = vpack.c.b16 %v571, %v567
    %v940 = vpack.c.b16 %v572, %v568
    %v941 = vpack.c.b16 %v577, %v573
    %v942 = vpack.c.b16 %v578, %v574
    %v943 = vpack.c.b16 %v579, %v575
    %v944 = vpack.c.b16 %v580, %v576
    %v945 = vpack.c.b16 %v585, %v581
    %v946 = vpack.c.b16 %v586, %v582
    %v947 = vpack.c.b16 %v587, %v583
    %v948 = vpack.c.b16 %v588, %v584
    %v949 = vpack.c.b16 %v593, %v589
    %v950 = vpack.c.b16 %v594, %v590
    %v951 = vpack.c.b16 %v595, %v591
    %v952 = vpack.c.b16 %v596, %v592
    %v953 = vpack.c.b16 %v601, %v597
    %v954 = vpack.c.b16 %v602, %v598
    %v955 = vpack.c.b16 %v603, %v599
    %v956 = vpack.c.b16 %v604, %v600
    %v957 = vpack.c.b16 %v609, %v605
    %v958 = vpack.c.b16 %v610, %v606
    %v959 = vpack.c.b16 %v611, %v607
    %v960 = vpack.c.b16 %v612, %v608
    %v961 = vpack.c.b16 %v617, %v613
    %v962 = vpack.c.b16 %v618, %v614
    %v963 = vpack.c.b16 %v619, %v615
    %v964 = vpack.c.b16 %v620, %v616
    %v965 = vpack.c.b16 %v625, %v621
    %v966 = vpack.c.b16 %v626, %v622
    %v967 = vpack.c.b16 %v627, %v623
    %v968 = vpack.c.b16 %v628, %v624
    %v969 = vpack.c.b16 %v633, %v629
    %v970 = vpack.c.b16 %v634, %v630
    %v971 = vpack.c.b16 %v635, %v631
    %v972 = vpack.c.b16 %v636, %v632
    %v973 = vpack.c.b16 %v641, %v637
    %v974 = vpack.c.b16 %v642, %v638
    %v975 = vpack.c.b16 %v643, %v639
    %v976 = vpack.c.b16 %v644, %v640
    %v977 = vpack.c.b16 %v649, %v645
    %v978 = vpack.c.b16 %v650, %v646
    %v979 = vpack.c.b16 %v651, %v647
    %v980 = vpack.c.b16 %v652, %v648
    %v981 = vpack.c.b16 %v657, %v653
    %v982 = vpack.c.b16 %v658, %v654
    %v983 = vpack.c.b16 %v659, %v655
    %v984 = vpack.c.b16 %v660, %v656
    %v985 = vpack.c.b16 %v665, %v661
    %v986 = vpack.c.b16 %v666, %v662
    %v987 = vpack.c.b16 %v667, %v663
    %v988 = vpack.c.b16 %v668, %v664
    %v989 = vpack.c.b16 %v673, %v669
    %v990 = vpack.c.b16 %v674, %v670
    %v991 = vpack.c.b16 %v675, %v671
    %v992 = vpack.c.b16 %v676, %v672
    %v993 = vpack.c.b16 %v681, %v677
    %v994 = vpack.c.b16 %v682, %v678
    %v995 = vpack.c.b16 %v683, %v679
    %v996 = vpack.c.b16 %v684, %v680
    %v997 = vpack.c.b16 %v689, %v685
    %v998 = vpack.c.b16 %v690, %v686
    %v999 = vpack.c.b16 %v691, %v687
    %v1000 = vpack.c.b16 %v692, %v688
    %v1001 = vpack.c.b16 %v697, %v693
    %v1002 = vpack.c.b16 %v698, %v694
    %v1003 = vpack.c.b16 %v699, %v695
    %v1004 = vpack.c.b16 %v700, %v696
    %v1005 = vpack.c.b16 %v705, %v701
    %v1006 = vpack.c.b16 %v706, %v702
    %v1007 = vpack.c.b16 %v707, %v703
    %v1008 = vpack.c.b16 %v708, %v704
    %v1009 = vpack.c.b16 %v713, %v709
    %v1010 = vpack.c.b16 %v714, %v710
    %v1011 = vpack.c.b16 %v715, %v711
    %v1012 = vpack.c.b16 %v716, %v712
    %v1013 = vpack.c.b16 %v721, %v717
    %v1014 = vpack.c.b16 %v722, %v718
    %v1015 = vpack.c.b16 %v723, %v719
    %v1016 = vpack.c.b16 %v724, %v720
    %v1017 = vpack.c.b16 %v729, %v725
    %v1018 = vpack.c.b16 %v730, %v726
    %v1019 = vpack.c.b16 %v731, %v727
    %v1020 = vpack.c.b16 %v732, %v728
    %v1021 = vpack.c.b16 %v737, %v733
    %v1022 = vpack.c.b16 %v738, %v734
    %v1023 = vpack.c.b16 %v739, %v735
    %v1024 = vpack.c.b16 %v740, %v736
    %v1025 = vpack.c.b16 %v745, %v741
    %v1026 = vpack.c.b16 %v746, %v742
    %v1027 = vpack.c.b16 %v747, %v743
    %v1028 = vpack.c.b16 %v748, %v744
    %v1029 = vpack.c.b16 %v753, %v749
    %v1030 = vpack.c.b16 %v754, %v750
    %v1031 = vpack.c.b16 %v755, %v751
    %v1032 = vpack.c.b16 %v756, %v752
    %v1033 = vpack.c.b16 %v761, %v757
    %v1034 = vpack.c.b16 %v762, %v758
    %v1035 = vpack.c.b16 %v763, %v759
    %v1036 = vpack.c.b16 %v764, %v760
    %v1037 = vpack.c.b16 %v769, %v765
    %v1038 = vpack.c.b16 %v770, %v766
    %v1039 = vpack.c.b16 %v771, %v767
    %v1040 = vpack.c.b16 %v772, %v768
    %v1041 = vpack.c.b16 %v777, %v773
    %v1042 = vpack.c.b16 %v778, %v774
    %v1043 = vpack.c.b16 %v779, %v775
    %v1044 = vpack.c.b16 %v780, %v776
    %v1045 = vpack.c.b16 %v785, %v781
    %v1046 = vpack.c.b16 %v786, %v782
    %v1047 = vpack.c.b16 %v787, %v783
    %v1048 = vpack.c.b16 %v788, %v784
    %v1049 = vpack.c.b16 %v793, %v789
    %v1050 = vpack.c.b16 %v794, %v790
    %v1051 = vpack.c.b16 %v795, %v791
    %v1052 = vpack.c.b16 %v796, %v792
    %v1053 = vpack.c.b16 %v801, %v797
    %v1054 = vpack.c.b16 %v802, %v798
    %v1055 = vpack.c.b16 %v803, %v799
    %v1056 = vpack.c.b16 %v804, %v800
    %v1057 = vpack.c.b16 %v809, %v805
    %v1058 = vpack.c.b16 %v810, %v806
    %v1059 = vpack.c.b16 %v811, %v807
    %v1060 = vpack.c.b16 %v812, %v808
    %v1061 = vpack.c.b16 %v817, %v813
    %v1062 = vpack.c.b16 %v818, %v814
    %v1063 = vpack.c.b16 %v819, %v815
    %v1064 = vpack.c.b16 %v820, %v816
    %v1065 = vpack.c.b16 %v825, %v821
    %v1066 = vpack.c.b16 %v826, %v822
    %v1067 = vpack.c.b16 %v827, %v823
    %v1068 = vpack.c.b16 %v828, %v824
    %v1069 = vpack.c.b16 %v833, %v829
    %v1070 = vpack.c.b16 %v834, %v830
    %v1071 = vpack.c.b16 %v835, %v831
    %v1072 = vpack.c.b16 %v836, %v832
    %v1073 = vpack.c.b16 %v841, %v837
    %v1074 = vpack.c.b16 %v842, %v838
    %v1075 = vpack.c.b16 %v843, %v839
    %v1076 = vpack.c.b16 %v844, %v840
    %v1077 = vpack.c.b16 %v849, %v845
    %v1078 = vpack.c.b16 %v850, %v846
    %v1079 = vpack.c.b16 %v851, %v847
    %v1080 = vpack.c.b16 %v852, %v848
    %v1081 = vpack.c.b16 %v857, %v853
    %v1082 = vpack.c.b16 %v858, %v854
    %v1083 = vpack.c.b16 %v859, %v855
    %v1084 = vpack.c.b16 %v860, %v856
    %v1085 = vpack.c.b16 %v865, %v861
    %v1086 = vpack.c.b16 %v866, %v862
    %v1087 = vpack.c.b16 %v867, %v863
    %v1088 = vpack.c.b16 %v868, %v864
    %v1089 = vpack.c.b16 %v873, %v869
    %v1090 = vpack.c.b16 %v874, %v870
    %v1091 = vpack.c.b16 %v875, %v871
    %v1092 = vpack.c.b16 %v876, %v872
    %v1093 = vpack.c.b16 %v881, %v877
    %v1094 = vpack.c.b16 %v882, %v878
    %v1095 = vpack.c.b16 %v883, %v879
    %v1096 = vpack.c.b16 %v884, %v880
    %v1097 = vpack.c.b16 %v889, %v885
    %v1098 = vpack.c.b16 %v890, %v886
    %v1099 = vpack.c.b16 %v891, %v887
    %v1100 = vpack.c.b16 %v892, %v888
    %vm1309 = vcmask 523264
    %v1311 = vsel %vm1309, %v38, 0
    %1313 = vmatprep.subr.bf16.mxu0 %v894
    %1314 = vmatpush1.bf16.msra.mxu0 %v893
    %1315 = vmatprep.subr.bf16.mxu0 %v898
    %1316 = vmatpush1.bf16.msra.mxu0 %v897
    %1317 = vmatprep.subr.bf16.mxu0 %v902
    %1318 = vmatpush1.bf16.msra.mxu0 %v901
    %1319 = vmatprep.subr.bf16.mxu0 %v906
    %1320 = vmatpush1.bf16.msra.mxu0 %v905
    %1321 = vmatprep.subr.bf16.mxu0 %v910
    %1322 = vmatpush1.bf16.msra.mxu0 %v909
    %1323 = vmatprep.subr.bf16.mxu0 %v914
    %1324 = vmatpush1.bf16.msra.mxu0 %v913
    %1325 = vmatprep.subr.bf16.mxu0 %v918
    %1326 = vmatpush1.bf16.msra.mxu0 %v917
    %1327 = vmatprep.subr.bf16.mxu0 %v922
    %1328 = vmatpush1.bf16.msra.mxu0 %v921
    %1329 = vmatprep.subr.bf16.mxu0 %v926
    %1330 = vmatpush1.bf16.msra.mxu0 %v925
    %1331 = vmatprep.subr.bf16.mxu0 %v930
    %1332 = vmatpush1.bf16.msra.mxu0 %v929
    %1333 = vmatprep.subr.bf16.mxu0 %v934
    %1334 = vmatpush1.bf16.msra.mxu0 %v933
    %1335 = vmatprep.subr.bf16.mxu0 %v938
    %1336 = vmatpush1.bf16.msra.mxu0 %v937
    %1337 = vmatprep.subr.bf16.mxu0 %v942
    %1338 = vmatpush1.bf16.msra.mxu0 %v941
    %1339 = vmatprep.subr.bf16.mxu0 %v946
    %1340 = vmatpush1.bf16.msra.mxu0 %v945
    %1341 = vmatprep.subr.bf16.mxu0 %v950
    %1342 = vmatpush1.bf16.msra.mxu0 %v949
    %1343 = vmatprep.subr.bf16.mxu0 %v954
    %1344 = vmatpush1.bf16.msra.mxu0 %v953
    %1345 = vmatprep.mubr.bf16.mxu0 %v33
    %1346 = vmatmul.mubr.bf16.gmra.mrb[0].mxu0 %v32
    %v1347 = vpop.f32.mrb[0].mxu0
    %v1348 = vadd.f32 %v252, %v1347
    %v1349 = vpop.f32.mrb[0].mxu0
    %v1350 = vadd.f32 %v256, %v1349
    %v1351 = vpop.f32.mrb[0].mxu0
    %v1352 = vpop.f32.mrb[0].mxu0
    %1353 = vdwg.mxu0
    %1354 = vmatprep.subr.bf16.mxu0 %v958
    %1355 = vmatpush1.bf16.msra.mxu0 %v957
    %1356 = vmatprep.subr.bf16.mxu0 %v962
    %1357 = vmatpush1.bf16.msra.mxu0 %v961
    %1358 = vmatprep.subr.bf16.mxu0 %v966
    %1359 = vmatpush1.bf16.msra.mxu0 %v965
    %1360 = vmatprep.subr.bf16.mxu0 %v970
    %1361 = vmatpush1.bf16.msra.mxu0 %v969
    %1362 = vmatprep.subr.bf16.mxu0 %v974
    %1363 = vmatpush1.bf16.msra.mxu0 %v973
    %1364 = vmatprep.subr.bf16.mxu0 %v978
    %1365 = vmatpush1.bf16.msra.mxu0 %v977
    %1366 = vmatprep.subr.bf16.mxu0 %v982
    %1367 = vmatpush1.bf16.msra.mxu0 %v981
    %1368 = vmatprep.subr.bf16.mxu0 %v986
    %1369 = vmatpush1.bf16.msra.mxu0 %v985
    %1370 = vmatprep.subr.bf16.mxu0 %v990
    %1371 = vmatpush1.bf16.msra.mxu0 %v989
    %1372 = vmatprep.subr.bf16.mxu0 %v994
    %1373 = vmatpush1.bf16.msra.mxu0 %v993
    %1374 = vmatprep.subr.bf16.mxu0 %v998
    %1375 = vmatpush1.bf16.msra.mxu0 %v997
    %1376 = vmatprep.subr.bf16.mxu0 %v1002
    %1377 = vmatpush1.bf16.msra.mxu0 %v1001
    %1378 = vmatprep.subr.bf16.mxu0 %v1006
    %1379 = vmatpush1.bf16.msra.mxu0 %v1005
    %1380 = vmatprep.subr.bf16.mxu0 %v1010
    %1381 = vmatpush1.bf16.msra.mxu0 %v1009
    %1382 = vmatprep.subr.bf16.mxu0 %v1014
    %1383 = vmatpush1.bf16.msra.mxu0 %v1013
    %1384 = vmatprep.subr.bf16.mxu0 %v1018
    %1385 = vmatpush1.bf16.msra.mxu0 %v1017
    %1386 = vmatprep.mubr.bf16.mxu0 %v35
    %1387 = vmatmul.mubr.bf16.gmra.mrb[0].mxu0 %v34
    %v1388 = vpop.f32.mrb[0].mxu0
    %v1389 = vadd.f32 %v1348, %v1388
    %v1390 = vpop.f32.mrb[0].mxu0
    %v1391 = vadd.f32 %v1350, %v1390
    %v1392 = vpop.f32.mrb[0].mxu0
    %v1393 = vpop.f32.mrb[0].mxu0
    %1394 = vdwg.mxu0
    %1395 = vmatprep.subr.bf16.mxu0 %v1022
    %1396 = vmatpush1.bf16.msra.mxu0 %v1021
    %1397 = vmatprep.subr.bf16.mxu0 %v1026
    %1398 = vmatpush1.bf16.msra.mxu0 %v1025
    %1399 = vmatprep.subr.bf16.mxu0 %v1030
    %1400 = vmatpush1.bf16.msra.mxu0 %v1029
    %1401 = vmatprep.subr.bf16.mxu0 %v1034
    %1402 = vmatpush1.bf16.msra.mxu0 %v1033
    %1403 = vmatprep.subr.bf16.mxu0 %v1038
    %1404 = vmatpush1.bf16.msra.mxu0 %v1037
    %1405 = vmatprep.subr.bf16.mxu0 %v1042
    %1406 = vmatpush1.bf16.msra.mxu0 %v1041
    %1407 = vmatprep.subr.bf16.mxu0 %v1046
    %1408 = vmatpush1.bf16.msra.mxu0 %v1045
    %1409 = vmatprep.subr.bf16.mxu0 %v1050
    %1410 = vmatpush1.bf16.msra.mxu0 %v1049
    %1411 = vmatprep.subr.bf16.mxu0 %v1054
    %1412 = vmatpush1.bf16.msra.mxu0 %v1053
    %1413 = vmatprep.subr.bf16.mxu0 %v1058
    %1414 = vmatpush1.bf16.msra.mxu0 %v1057
    %1415 = vmatprep.subr.bf16.mxu0 %v1062
    %1416 = vmatpush1.bf16.msra.mxu0 %v1061
    %1417 = vmatprep.subr.bf16.mxu0 %v1066
    %1418 = vmatpush1.bf16.msra.mxu0 %v1065
    %1419 = vmatprep.subr.bf16.mxu0 %v1070
    %1420 = vmatpush1.bf16.msra.mxu0 %v1069
    %1421 = vmatprep.subr.bf16.mxu0 %v1074
    %1422 = vmatpush1.bf16.msra.mxu0 %v1073
    %1423 = vmatprep.subr.bf16.mxu0 %v1078
    %1424 = vmatpush1.bf16.msra.mxu0 %v1077
    %1425 = vmatprep.subr.bf16.mxu0 %v1082
    %1426 = vmatpush1.bf16.msra.mxu0 %v1081
    %1427 = vmatprep.mubr.bf16.mxu0 %v37
    %1428 = vmatmul.mubr.bf16.gmra.mrb[0].mxu0 %v36
    %v1429 = vpop.f32.mrb[0].mxu0
    %v1430 = vadd.f32 %v1389, %v1429
    %v1431 = vpop.f32.mrb[0].mxu0
    %v1432 = vadd.f32 %v1391, %v1431
    %v1433 = vpop.f32.mrb[0].mxu0
    %v1434 = vpop.f32.mrb[0].mxu0
    %1435 = vdwg.mxu0
    %1436 = vmatprep.subr.bf16.mxu0 %v1086
    %1437 = vmatpush1.bf16.msra.mxu0 %v1085
    %1438 = vmatprep.subr.bf16.mxu0 %v1090
    %1439 = vmatpush1.bf16.msra.mxu0 %v1089
    %1440 = vmatprep.subr.bf16.mxu0 %v1094
    %1441 = vmatpush1.bf16.msra.mxu0 %v1093
    %1442 = vmatprep.subr.bf16.mxu0 %v1098
    %1443 = vmatpush1.bf16.msra.mxu0 %v1097
    %1444 = vmatprep.subr.bf16.mxu0 0
    %1445 = vmatpush1.bf16.msra.mxu0 0
    %1446 = vmatprep.subr.bf16.mxu0 0
    %1447 = vmatpush1.bf16.msra.mxu0 0
    %1448 = vmatprep.subr.bf16.mxu0 0
    %1449 = vmatpush1.bf16.msra.mxu0 0
    %1450 = vmatprep.subr.bf16.mxu0 0
    %1451 = vmatpush1.bf16.msra.mxu0 0
    %1452 = vmatprep.subr.bf16.mxu0 0
    %1453 = vmatpush1.bf16.msra.mxu0 0
    %1454 = vmatprep.subr.bf16.mxu0 0
    %1455 = vmatpush1.bf16.msra.mxu0 0
    %1456 = vmatprep.subr.bf16.mxu0 0
    %1457 = vmatpush1.bf16.msra.mxu0 0
    %1458 = vmatprep.subr.bf16.mxu0 0
    %1459 = vmatpush1.bf16.msra.mxu0 0
    %1460 = vmatprep.subr.bf16.mxu0 0
    %1461 = vmatpush1.bf16.msra.mxu0 0
    %1462 = vmatprep.subr.bf16.mxu0 0
    %1463 = vmatpush1.bf16.msra.mxu0 0
    %1464 = vmatprep.subr.bf16.mxu0 0
    %1465 = vmatpush1.bf16.msra.mxu0 0
    %1466 = vmatprep.subr.bf16.mxu0 0
    %1467 = vmatpush1.bf16.msra.mxu0 0
    %1468 = vmatprep.mubr.bf16.mxu0 0
    %1469 = vmatmul.mubr.bf16.gmra.mrb[0].mxu0 %v1311
    %v1470 = vpop.f32.mrb[0].mxu0
    %v1471 = vadd.f32 %v1430, %v1470
    %v1472 = vpop.f32.mrb[0].mxu0
    %v1473 = vadd.f32 %v1432, %v1472
    %v1474 = vpop.f32.mrb[0].mxu0
    %v1475 = vpop.f32.mrb[0].mxu0
    %1476 = vdwg.mxu0
    %1477 = vmatprep.subr.bf16.mxu0 %v896
    %1478 = vmatpush1.bf16.msra.mxu0 %v895
    %1479 = vmatprep.subr.bf16.mxu0 %v900
    %1480 = vmatpush1.bf16.msra.mxu0 %v899
    %1481 = vmatprep.subr.bf16.mxu0 %v904
    %1482 = vmatpush1.bf16.msra.mxu0 %v903
    %1483 = vmatprep.subr.bf16.mxu0 %v908
    %1484 = vmatpush1.bf16.msra.mxu0 %v907
    %1485 = vmatprep.subr.bf16.mxu0 %v912
    %1486 = vmatpush1.bf16.msra.mxu0 %v911
    %1487 = vmatprep.subr.bf16.mxu0 %v916
    %1488 = vmatpush1.bf16.msra.mxu0 %v915
    %1489 = vmatprep.subr.bf16.mxu0 %v920
    %1490 = vmatpush1.bf16.msra.mxu0 %v919
    %1491 = vmatprep.subr.bf16.mxu0 %v924
    %1492 = vmatpush1.bf16.msra.mxu0 %v923
    %1493 = vmatprep.subr.bf16.mxu0 %v928
    %1494 = vmatpush1.bf16.msra.mxu0 %v927
    %1495 = vmatprep.subr.bf16.mxu0 %v932
    %1496 = vmatpush1.bf16.msra.mxu0 %v931
    %1497 = vmatprep.subr.bf16.mxu0 %v936
    %1498 = vmatpush1.bf16.msra.mxu0 %v935
    %1499 = vmatprep.subr.bf16.mxu0 %v940
    %1500 = vmatpush1.bf16.msra.mxu0 %v939
    %1501 = vmatprep.subr.bf16.mxu0 %v944
    %1502 = vmatpush1.bf16.msra.mxu0 %v943
    %1503 = vmatprep.subr.bf16.mxu0 %v948
    %1504 = vmatpush1.bf16.msra.mxu0 %v947
    %1505 = vmatprep.subr.bf16.mxu0 %v952
    %1506 = vmatpush1.bf16.msra.mxu0 %v951
    %1507 = vmatprep.subr.bf16.mxu0 %v956
    %1508 = vmatpush1.bf16.msra.mxu0 %v955
    %1509 = vmatprep.mubr.bf16.mxu0 %v33
    %1510 = vmatmul.mubr.bf16.gmra.mrb[0].mxu0 %v32
    %v1511 = vpop.f32.mrb[0].mxu0
    %v1512 = vadd.f32 %v260, %v1511
    %v1513 = vpop.f32.mrb[0].mxu0
    %v1514 = vadd.f32 %v264, %v1513
    %v1515 = vpop.f32.mrb[0].mxu0
    %v1516 = vpop.f32.mrb[0].mxu0
    %1517 = vdwg.mxu0
    %1518 = vmatprep.subr.bf16.mxu0 %v960
    %1519 = vmatpush1.bf16.msra.mxu0 %v959
    %1520 = vmatprep.subr.bf16.mxu0 %v964
    %1521 = vmatpush1.bf16.msra.mxu0 %v963
    %1522 = vmatprep.subr.bf16.mxu0 %v968
    %1523 = vmatpush1.bf16.msra.mxu0 %v967
    %1524 = vmatprep.subr.bf16.mxu0 %v972
    %1525 = vmatpush1.bf16.msra.mxu0 %v971
    %1526 = vmatprep.subr.bf16.mxu0 %v976
    %1527 = vmatpush1.bf16.msra.mxu0 %v975
    %1528 = vmatprep.subr.bf16.mxu0 %v980
    %1529 = vmatpush1.bf16.msra.mxu0 %v979
    %1530 = vmatprep.subr.bf16.mxu0 %v984
    %1531 = vmatpush1.bf16.msra.mxu0 %v983
    %1532 = vmatprep.subr.bf16.mxu0 %v988
    %1533 = vmatpush1.bf16.msra.mxu0 %v987
    %1534 = vmatprep.subr.bf16.mxu0 %v992
    %1535 = vmatpush1.bf16.msra.mxu0 %v991
    %1536 = vmatprep.subr.bf16.mxu0 %v996
    %1537 = vmatpush1.bf16.msra.mxu0 %v995
    %1538 = vmatprep.subr.bf16.mxu0 %v1000
    %1539 = vmatpush1.bf16.msra.mxu0 %v999
    %1540 = vmatprep.subr.bf16.mxu0 %v1004
    %1541 = vmatpush1.bf16.msra.mxu0 %v1003
    %1542 = vmatprep.subr.bf16.mxu0 %v1008
    %1543 = vmatpush1.bf16.msra.mxu0 %v1007
    %1544 = vmatprep.subr.bf16.mxu0 %v1012
    %1545 = vmatpush1.bf16.msra.mxu0 %v1011
    %1546 = vmatprep.subr.bf16.mxu0 %v1016
    %1547 = vmatpush1.bf16.msra.mxu0 %v1015
    %1548 = vmatprep.subr.bf16.mxu0 %v1020
    %1549 = vmatpush1.bf16.msra.mxu0 %v1019
    %1550 = vmatprep.mubr.bf16.mxu0 %v35
    %1551 = vmatmul.mubr.bf16.gmra.mrb[0].mxu0 %v34
    %v1552 = vpop.f32.mrb[0].mxu0
    %v1553 = vadd.f32 %v1512, %v1552
    %v1554 = vpop.f32.mrb[0].mxu0
    %v1555 = vadd.f32 %v1514, %v1554
    %v1556 = vpop.f32.mrb[0].mxu0
    %v1557 = vpop.f32.mrb[0].mxu0
    %1558 = vdwg.mxu0
    %1559 = vmatprep.subr.bf16.mxu0 %v1024
    %1560 = vmatpush1.bf16.msra.mxu0 %v1023
    %1561 = vmatprep.subr.bf16.mxu0 %v1028
    %1562 = vmatpush1.bf16.msra.mxu0 %v1027
    %1563 = vmatprep.subr.bf16.mxu0 %v1032
    %1564 = vmatpush1.bf16.msra.mxu0 %v1031
    %1565 = vmatprep.subr.bf16.mxu0 %v1036
    %1566 = vmatpush1.bf16.msra.mxu0 %v1035
    %1567 = vmatprep.subr.bf16.mxu0 %v1040
    %1568 = vmatpush1.bf16.msra.mxu0 %v1039
    %1569 = vmatprep.subr.bf16.mxu0 %v1044
    %1570 = vmatpush1.bf16.msra.mxu0 %v1043
    %1571 = vmatprep.subr.bf16.mxu0 %v1048
    %1572 = vmatpush1.bf16.msra.mxu0 %v1047
    %1573 = vmatprep.subr.bf16.mxu0 %v1052
    %1574 = vmatpush1.bf16.msra.mxu0 %v1051
    %1575 = vmatprep.subr.bf16.mxu0 %v1056
    %1576 = vmatpush1.bf16.msra.mxu0 %v1055
    %1577 = vmatprep.subr.bf16.mxu0 %v1060
    %1578 = vmatpush1.bf16.msra.mxu0 %v1059
    %1579 = vmatprep.subr.bf16.mxu0 %v1064
    %1580 = vmatpush1.bf16.msra.mxu0 %v1063
    %1581 = vmatprep.subr.bf16.mxu0 %v1068
    %1582 = vmatpush1.bf16.msra.mxu0 %v1067
    %1583 = vmatprep.subr.bf16.mxu0 %v1072
    %1584 = vmatpush1.bf16.msra.mxu0 %v1071
    %1585 = vmatprep.subr.bf16.mxu0 %v1076
    %1586 = vmatpush1.bf16.msra.mxu0 %v1075
    %1587 = vmatprep.subr.bf16.mxu0 %v1080
    %1588 = vmatpush1.bf16.msra.mxu0 %v1079
    %1589 = vmatprep.subr.bf16.mxu0 %v1084
    %1590 = vmatpush1.bf16.msra.mxu0 %v1083
    %1591 = vmatprep.mubr.bf16.mxu0 %v37
    %1592 = vmatmul.mubr.bf16.gmra.mrb[0].mxu0 %v36
    %v1593 = vpop.f32.mrb[0].mxu0
    %v1594 = vadd.f32 %v1553, %v1593
    %v1595 = vpop.f32.mrb[0].mxu0
    %v1596 = vadd.f32 %v1555, %v1595
    %v1597 = vpop.f32.mrb[0].mxu0
    %v1598 = vpop.f32.mrb[0].mxu0
    %1599 = vdwg.mxu0
    %1600 = vmatprep.subr.bf16.mxu0 %v1088
    %1601 = vmatpush1.bf16.msra.mxu0 %v1087
    %1602 = vmatprep.subr.bf16.mxu0 %v1092
    %1603 = vmatpush1.bf16.msra.mxu0 %v1091
    %1604 = vmatprep.subr.bf16.mxu0 %v1096
    %1605 = vmatpush1.bf16.msra.mxu0 %v1095
    %1606 = vmatprep.subr.bf16.mxu0 %v1100
    %1607 = vmatpush1.bf16.msra.mxu0 %v1099
    %1608 = vmatprep.subr.bf16.mxu0 0
    %1609 = vmatpush1.bf16.msra.mxu0 0
    %1610 = vmatprep.subr.bf16.mxu0 0
    %1611 = vmatpush1.bf16.msra.mxu0 0
    %1612 = vmatprep.subr.bf16.mxu0 0
    %1613 = vmatpush1.bf16.msra.mxu0 0
    %1614 = vmatprep.subr.bf16.mxu0 0
    %1615 = vmatpush1.bf16.msra.mxu0 0
    %1616 = vmatprep.subr.bf16.mxu0 0
    %1617 = vmatpush1.bf16.msra.mxu0 0
    %1618 = vmatprep.subr.bf16.mxu0 0
    %1619 = vmatpush1.bf16.msra.mxu0 0
    %1620 = vmatprep.subr.bf16.mxu0 0
    %1621 = vmatpush1.bf16.msra.mxu0 0
    %1622 = vmatprep.subr.bf16.mxu0 0
    %1623 = vmatpush1.bf16.msra.mxu0 0
    %1624 = vmatprep.subr.bf16.mxu0 0
    %1625 = vmatpush1.bf16.msra.mxu0 0
    %1626 = vmatprep.subr.bf16.mxu0 0
    %1627 = vmatpush1.bf16.msra.mxu0 0
    %1628 = vmatprep.subr.bf16.mxu0 0
    %1629 = vmatpush1.bf16.msra.mxu0 0
    %1630 = vmatprep.subr.bf16.mxu0 0
    %1631 = vmatpush1.bf16.msra.mxu0 0
    %1632 = vmatprep.mubr.bf16.mxu0 0
    %1633 = vmatmul.mubr.bf16.gmra.mrb[0].mxu0 %v1311
    %v1634 = vpop.f32.mrb[0].mxu0
    %v1635 = vadd.f32 %v1594, %v1634
    %v1636 = vpop.f32.mrb[0].mxu0
    %v1637 = vadd.f32 %v1596, %v1636
    %v1638 = vpop.f32.mrb[0].mxu0
    %v1639 = vpop.f32.mrb[0].mxu0
    %1640 = vdwg.mxu0
    %v1641 = vld [vmem:[%s3] sm:$0xff]
    %v1642 = vld [vmem:[%s3 + $0x8] sm:$0xff]
    %v1643 = vld [vmem:[%s3 + $0x10] sm:$0xff]
    %v1644 = vld [vmem:[%s3 + $0x18] sm:$0xff]
    %v1645 = vld [vmem:[%s3 + $0x20] sm:$0xff]
    %v1646 = vld [vmem:[%s3 + $0x28] sm:$0xff]
    %v1647 = vld [vmem:[%s3 + $0x30] sm:$0xff]
    %v1648 = vld [vmem:[%s3 + $0x38] sm:$0xff]
    %v1649 = vld [vmem:[%s3 + $0x40] sm:$0xff]
    %v1650 = vld [vmem:[%s3 + $0x48] sm:$0xff]
    %v1651 = vld [vmem:[%s3 + $0x50] sm:$0xff]
    %v1652 = vld [vmem:[%s3 + $0x58] sm:$0xff]
    %v1653 = vld [vmem:[%s3 + $0x60] sm:$0xff]
    %v1654 = vld [vmem:[%s3 + $0x68] sm:$0xff]
    %v1655 = vld [vmem:[%s3 + $0x70] sm:$0xff]
    %v1656 = vld [vmem:[%s3 + $0x78] sm:$0xff]
    %v1657 = vld [vmem:[%s3 + $0x80] sm:$0xff]
    %v1658 = vld [vmem:[%s3 + $0x88] sm:$0xff]
    %v1659 = vld [vmem:[%s3 + $0x90] sm:$0xff]
    %v1660 = vld [vmem:[%s3 + $0x98] sm:$0xff]
    %v1661 = vld [vmem:[%s3 + $0xa0] sm:$0xff]
    %v1662 = vld [vmem:[%s3 + $0xa8] sm:$0xff]
    %v1663 = vld [vmem:[%s3 + $0xb0] sm:$0xff]
    %v1664 = vld [vmem:[%s3 + $0xb8] sm:$0xff]
    %v1665 = vld [vmem:[%s3 + $0xc0] sm:$0xff]
    %v1666 = vld [vmem:[%s3 + $0xc8] sm:$0xff]
    %v1667 = vld [vmem:[%s3 + $0xd0] sm:$0xff]
    %v1668 = vld [vmem:[%s3 + $0xd8] sm:$0xff]
    %v1669 = vld [vmem:[%s3 + $0xe0] sm:$0xff]
    %v1670 = vld [vmem:[%s3 + $0xe8] sm:$0xff]
    %v1671 = vld [vmem:[%s3 + $0xf0] sm:$0xff]
    %v1672 = vld [vmem:[%s3 + $0xf8] sm:$0xff]
    %v1705 = vunpack.c.l.b16 %v1641
    %v1706 = vunpack.c.h.b16 %v1641
    %v1707 = vunpack.c.l.b16 %v1642
    %v1708 = vunpack.c.h.b16 %v1642
    %v1709 = vunpack.c.l.b16 %v1643
    %v1710 = vunpack.c.h.b16 %v1643
    %v1711 = vunpack.c.l.b16 %v1644
    %v1712 = vunpack.c.h.b16 %v1644
    %v1713 = vunpack.c.l.b16 %v1645
    %v1714 = vunpack.c.h.b16 %v1645
    %v1715 = vunpack.c.l.b16 %v1646
    %v1716 = vunpack.c.h.b16 %v1646
    %v1717 = vunpack.c.l.b16 %v1647
    %v1718 = vunpack.c.h.b16 %v1647
    %v1719 = vunpack.c.l.b16 %v1648
    %v1720 = vunpack.c.h.b16 %v1648
    %v1721 = vunpack.c.l.b16 %v1649
    %v1722 = vunpack.c.h.b16 %v1649
    %v1723 = vunpack.c.l.b16 %v1650
    %v1724 = vunpack.c.h.b16 %v1650
    %v1725 = vunpack.c.l.b16 %v1651
    %v1726 = vunpack.c.h.b16 %v1651
    %v1727 = vunpack.c.l.b16 %v1652
    %v1728 = vunpack.c.h.b16 %v1652
    %v1729 = vunpack.c.l.b16 %v1653
    %v1730 = vunpack.c.h.b16 %v1653
    %v1731 = vunpack.c.l.b16 %v1654
    %v1732 = vunpack.c.h.b16 %v1654
    %v1733 = vunpack.c.l.b16 %v1655
    %v1734 = vunpack.c.h.b16 %v1655
    %v1735 = vunpack.c.l.b16 %v1656
    %v1736 = vunpack.c.h.b16 %v1656
    %v1737 = vunpack.c.l.b16 %v1657
    %v1738 = vunpack.c.h.b16 %v1657
    %v1739 = vunpack.c.l.b16 %v1658
    %v1740 = vunpack.c.h.b16 %v1658
    %v1741 = vunpack.c.l.b16 %v1659
    %v1742 = vunpack.c.h.b16 %v1659
    %v1743 = vunpack.c.l.b16 %v1660
    %v1744 = vunpack.c.h.b16 %v1660
    %v1745 = vunpack.c.l.b16 %v1661
    %v1746 = vunpack.c.h.b16 %v1661
    %v1747 = vunpack.c.l.b16 %v1662
    %v1748 = vunpack.c.h.b16 %v1662
    %v1749 = vunpack.c.l.b16 %v1663
    %v1750 = vunpack.c.h.b16 %v1663
    %v1751 = vunpack.c.l.b16 %v1664
    %v1752 = vunpack.c.h.b16 %v1664
    %v1753 = vunpack.c.l.b16 %v1665
    %v1754 = vunpack.c.h.b16 %v1665
    %v1755 = vunpack.c.l.b16 %v1666
    %v1756 = vunpack.c.h.b16 %v1666
    %v1757 = vunpack.c.l.b16 %v1667
    %v1758 = vunpack.c.h.b16 %v1667
    %v1759 = vunpack.c.l.b16 %v1668
    %v1760 = vunpack.c.h.b16 %v1668
    %v1761 = vunpack.c.l.b16 %v1669
    %v1762 = vunpack.c.h.b16 %v1669
    %v1763 = vunpack.c.l.b16 %v1670
    %v1764 = vunpack.c.h.b16 %v1670
    %v1765 = vunpack.c.l.b16 %v1671
    %v1766 = vunpack.c.h.b16 %v1671
    %v1767 = vunpack.c.l.b16 %v1672
    %v1768 = vunpack.c.h.b16 %v1672
    %v1769 = vpack.c.b16 %v1709, %v1705
    %v1770 = vpack.c.b16 %v1710, %v1706
    %v1771 = vpack.c.b16 %v1711, %v1707
    %v1772 = vpack.c.b16 %v1712, %v1708
    %v1773 = vpack.c.b16 %v1717, %v1713
    %v1774 = vpack.c.b16 %v1718, %v1714
    %v1775 = vpack.c.b16 %v1719, %v1715
    %v1776 = vpack.c.b16 %v1720, %v1716
    %v1777 = vpack.c.b16 %v1725, %v1721
    %v1778 = vpack.c.b16 %v1726, %v1722
    %v1779 = vpack.c.b16 %v1727, %v1723
    %v1780 = vpack.c.b16 %v1728, %v1724
    %v1781 = vpack.c.b16 %v1733, %v1729
    %v1782 = vpack.c.b16 %v1734, %v1730
    %v1783 = vpack.c.b16 %v1735, %v1731
    %v1784 = vpack.c.b16 %v1736, %v1732
    %v1785 = vpack.c.b16 %v1741, %v1737
    %v1786 = vpack.c.b16 %v1742, %v1738
    %v1787 = vpack.c.b16 %v1743, %v1739
    %v1788 = vpack.c.b16 %v1744, %v1740
    %v1789 = vpack.c.b16 %v1749, %v1745
    %v1790 = vpack.c.b16 %v1750, %v1746
    %v1791 = vpack.c.b16 %v1751, %v1747
    %v1792 = vpack.c.b16 %v1752, %v1748
    %v1793 = vpack.c.b16 %v1757, %v1753
    %v1794 = vpack.c.b16 %v1758, %v1754
    %v1795 = vpack.c.b16 %v1759, %v1755
    %v1796 = vpack.c.b16 %v1760, %v1756
    %v1797 = vpack.c.b16 %v1765, %v1761
    %v1798 = vpack.c.b16 %v1766, %v1762
    %v1799 = vpack.c.b16 %v1767, %v1763
    %v1800 = vpack.c.b16 %v1768, %v1764
    %1833 = vmatprep.subr.bf16.mxu0 %v1770
    %1834 = vmatpush1.bf16.msra.mxu0 %v1769
    %1835 = vmatprep.subr.bf16.mxu0 %v1774
    %1836 = vmatpush1.bf16.msra.mxu0 %v1773
    %1837 = vmatprep.subr.bf16.mxu0 %v1778
    %1838 = vmatpush1.bf16.msra.mxu0 %v1777
    %1839 = vmatprep.subr.bf16.mxu0 %v1782
    %1840 = vmatpush1.bf16.msra.mxu0 %v1781
    %1841 = vmatprep.subr.bf16.mxu0 %v1786
    %1842 = vmatpush1.bf16.msra.mxu0 %v1785
    %1843 = vmatprep.subr.bf16.mxu0 %v1790
    %1844 = vmatpush1.bf16.msra.mxu0 %v1789
    %1845 = vmatprep.subr.bf16.mxu0 %v1794
    %1846 = vmatpush1.bf16.msra.mxu0 %v1793
    %1847 = vmatprep.subr.bf16.mxu0 %v1798
    %1848 = vmatpush1.bf16.msra.mxu0 %v1797
    %1849 = vmatprep.subr.bf16.mxu0 0
    %1850 = vmatpush1.bf16.msra.mxu0 0
    %1851 = vmatprep.subr.bf16.mxu0 0
    %1852 = vmatpush1.bf16.msra.mxu0 0
    %1853 = vmatprep.subr.bf16.mxu0 0
    %1854 = vmatpush1.bf16.msra.mxu0 0
    %1855 = vmatprep.subr.bf16.mxu0 0
    %1856 = vmatpush1.bf16.msra.mxu0 0
    %1857 = vmatprep.subr.bf16.mxu0 0
    %1858 = vmatpush1.bf16.msra.mxu0 0
    %1859 = vmatprep.subr.bf16.mxu0 0
    %1860 = vmatpush1.bf16.msra.mxu0 0
    %1861 = vmatprep.subr.bf16.mxu0 0
    %1862 = vmatpush1.bf16.msra.mxu0 0
    %1863 = vmatprep.subr.bf16.mxu0 0
    %1864 = vmatpush1.bf16.msra.mxu0 0
    %1865 = vmatprep.mubr.bf16.mxu0 0
    %1866 = vmatmul.mubr.bf16.gmra.mrb[0].mxu0 0
    %v1867 = vpop.f32.mrb[0].mxu0
    %v1868 = vadd.f32 0.0, %v1867
    %v1869 = vpop.f32.mrb[0].mxu0
    %v1870 = vadd.f32 0.0, %v1869
    %v1871 = vpop.f32.mrb[0].mxu0
    %v1872 = vpop.f32.mrb[0].mxu0
    %1873 = vdwg.mxu0
    %1874 = vmatprep.subr.bf16.mxu0 %v1772
    %1875 = vmatpush1.bf16.msra.mxu0 %v1771
    %1876 = vmatprep.subr.bf16.mxu0 %v1776
    %1877 = vmatpush1.bf16.msra.mxu0 %v1775
    %1878 = vmatprep.subr.bf16.mxu0 %v1780
    %1879 = vmatpush1.bf16.msra.mxu0 %v1779
    %1880 = vmatprep.subr.bf16.mxu0 %v1784
    %1881 = vmatpush1.bf16.msra.mxu0 %v1783
    %1882 = vmatprep.subr.bf16.mxu0 %v1788
    %1883 = vmatpush1.bf16.msra.mxu0 %v1787
    %1884 = vmatprep.subr.bf16.mxu0 %v1792
    %1885 = vmatpush1.bf16.msra.mxu0 %v1791
    %1886 = vmatprep.subr.bf16.mxu0 %v1796
    %1887 = vmatpush1.bf16.msra.mxu0 %v1795
    %1888 = vmatprep.subr.bf16.mxu0 %v1800
    %1889 = vmatpush1.bf16.msra.mxu0 %v1799
    %1890 = vmatprep.subr.bf16.mxu0 0
    %1891 = vmatpush1.bf16.msra.mxu0 0
    %1892 = vmatprep.subr.bf16.mxu0 0
    %1893 = vmatpush1.bf16.msra.mxu0 0
    %1894 = vmatprep.subr.bf16.mxu0 0
    %1895 = vmatpush1.bf16.msra.mxu0 0
    %1896 = vmatprep.subr.bf16.mxu0 0
    %1897 = vmatpush1.bf16.msra.mxu0 0
    %1898 = vmatprep.subr.bf16.mxu0 0
    %1899 = vmatpush1.bf16.msra.mxu0 0
    %1900 = vmatprep.subr.bf16.mxu0 0
    %1901 = vmatpush1.bf16.msra.mxu0 0
    %1902 = vmatprep.subr.bf16.mxu0 0
    %1903 = vmatpush1.bf16.msra.mxu0 0
    %1904 = vmatprep.subr.bf16.mxu0 0
    %1905 = vmatpush1.bf16.msra.mxu0 0
    %1906 = vmatprep.mubr.bf16.mxu0 0
    %1907 = vmatmul.mubr.bf16.gmra.mrb[0].mxu0 0
    %v1908 = vpop.f32.mrb[0].mxu0
    %v1909 = vadd.f32 0.0, %v1908
    %v1910 = vpop.f32.mrb[0].mxu0
    %v1911 = vadd.f32 0.0, %v1910
    %v1912 = vpop.f32.mrb[0].mxu0
    %v1913 = vpop.f32.mrb[0].mxu0
    %1914 = vdwg.mxu0
    %v1915 = vadd.f32 %v1471, %v1868
    %v1916 = vadd.f32 %v1473, %v1870
    %v1917 = vadd.f32 %v1635, %v1909
    %v1918 = vadd.f32 %v1637, %v1911
    %v1919 = vxor.u32 %v1915, 2147483648
    %v1920 = vmul.f32 %v1919, 1.442695
    %v1921 = vpow.pop %v1920
    %v1922 = vadd.f32 %v1921, 1.0
    %v1923 = vrcp.pop %v1922
    %v1924 = vmul.f32 1.0, %v1923
    %v1925 = vxor.u32 %v1916, 2147483648
    %v1926 = vmul.f32 %v1925, 1.442695
    %v1927 = vpow.pop %v1926
    %v1928 = vadd.f32 %v1927, 1.0
    %v1929 = vrcp.pop %v1928
    %v1930 = vmul.f32 1.0, %v1929
    %v1931 = vtanh.pop %v1917
    %v1932 = vxor.u32 %v1918, 2147483648
    %v1933 = vmul.f32 %v1932, 1.442695
    %v1934 = vpow.pop %v1933
    %v1935 = vadd.f32 %v1934, 1.0
    %v1936 = vrcp.pop %v1935
    %v1937 = vmul.f32 1.0, %v1936
    %v1938 = vmul.f32 %v1930, 0.0
    %v1939 = vmul.f32 %v1924, %v1931
    %v1940 = vadd.f32 %v1938, %v1939
    %v1941 = vtanh.pop %v1940
    %v1942 = vmul.f32 %v1937, %v1941
    %v1943 = vpack.c.bf16 %v1942, %v1942
    %1944 = vmatprep.subr.bf16.mxu0 %v1770
    %1945 = vmatpush1.bf16.msra.mxu0 %v1769
    %1946 = vmatprep.subr.bf16.mxu0 %v1774
    %1947 = vmatpush1.bf16.msra.mxu0 %v1773
    %1948 = vmatprep.subr.bf16.mxu0 %v1778
    %1949 = vmatpush1.bf16.msra.mxu0 %v1777
    %1950 = vmatprep.subr.bf16.mxu0 %v1782
    %1951 = vmatpush1.bf16.msra.mxu0 %v1781
    %1952 = vmatprep.subr.bf16.mxu0 %v1786
    %1953 = vmatpush1.bf16.msra.mxu0 %v1785
    %1954 = vmatprep.subr.bf16.mxu0 %v1790
    %1955 = vmatpush1.bf16.msra.mxu0 %v1789
    %1956 = vmatprep.subr.bf16.mxu0 %v1794
    %1957 = vmatpush1.bf16.msra.mxu0 %v1793
    %1958 = vmatprep.subr.bf16.mxu0 %v1798
    %1959 = vmatpush1.bf16.msra.mxu0 %v1797
    %1960 = vmatprep.subr.bf16.mxu0 0
    %1961 = vmatpush1.bf16.msra.mxu0 0
    %1962 = vmatprep.subr.bf16.mxu0 0
    %1963 = vmatpush1.bf16.msra.mxu0 0
    %1964 = vmatprep.subr.bf16.mxu0 0
    %1965 = vmatpush1.bf16.msra.mxu0 0
    %1966 = vmatprep.subr.bf16.mxu0 0
    %1967 = vmatpush1.bf16.msra.mxu0 0
    %1968 = vmatprep.subr.bf16.mxu0 0
    %1969 = vmatpush1.bf16.msra.mxu0 0
    %1970 = vmatprep.subr.bf16.mxu0 0
    %1971 = vmatpush1.bf16.msra.mxu0 0
    %1972 = vmatprep.subr.bf16.mxu0 0
    %1973 = vmatpush1.bf16.msra.mxu0 0
    %1974 = vmatprep.subr.bf16.mxu0 0
    %1975 = vmatpush1.bf16.msra.mxu0 0
    %1976 = vmatprep.mubr.bf16.mxu0 0
    %1977 = vmatmul.mubr.bf16.gmra.mrb[0].mxu0 %v1943
    %v1978 = vpop.f32.mrb[0].mxu0
    %v1979 = vadd.f32 0.0, %v1978
    %v1980 = vpop.f32.mrb[0].mxu0
    %v1981 = vadd.f32 0.0, %v1980
    %v1982 = vpop.f32.mrb[0].mxu0
    %v1983 = vpop.f32.mrb[0].mxu0
    %1984 = vdwg.mxu0
    %1985 = vmatprep.subr.bf16.mxu0 %v1772
    %1986 = vmatpush1.bf16.msra.mxu0 %v1771
    %1987 = vmatprep.subr.bf16.mxu0 %v1776
    %1988 = vmatpush1.bf16.msra.mxu0 %v1775
    %1989 = vmatprep.subr.bf16.mxu0 %v1780
    %1990 = vmatpush1.bf16.msra.mxu0 %v1779
    %1991 = vmatprep.subr.bf16.mxu0 %v1784
    %1992 = vmatpush1.bf16.msra.mxu0 %v1783
    %1993 = vmatprep.subr.bf16.mxu0 %v1788
    %1994 = vmatpush1.bf16.msra.mxu0 %v1787
    %1995 = vmatprep.subr.bf16.mxu0 %v1792
    %1996 = vmatpush1.bf16.msra.mxu0 %v1791
    %1997 = vmatprep.subr.bf16.mxu0 %v1796
    %1998 = vmatpush1.bf16.msra.mxu0 %v1795
    %1999 = vmatprep.subr.bf16.mxu0 %v1800
    %2000 = vmatpush1.bf16.msra.mxu0 %v1799
    %2001 = vmatprep.subr.bf16.mxu0 0
    %2002 = vmatpush1.bf16.msra.mxu0 0
    %2003 = vmatprep.subr.bf16.mxu0 0
    %2004 = vmatpush1.bf16.msra.mxu0 0
    %2005 = vmatprep.subr.bf16.mxu0 0
    %2006 = vmatpush1.bf16.msra.mxu0 0
    %2007 = vmatprep.subr.bf16.mxu0 0
    %2008 = vmatpush1.bf16.msra.mxu0 0
    %2009 = vmatprep.subr.bf16.mxu0 0
    %2010 = vmatpush1.bf16.msra.mxu0 0
    %2011 = vmatprep.subr.bf16.mxu0 0
    %2012 = vmatpush1.bf16.msra.mxu0 0
    %2013 = vmatprep.subr.bf16.mxu0 0
    %2014 = vmatpush1.bf16.msra.mxu0 0
    %2015 = vmatprep.subr.bf16.mxu0 0
    %2016 = vmatpush1.bf16.msra.mxu0 0
    %2017 = vmatprep.mubr.bf16.mxu0 0
    %2018 = vmatmul.mubr.bf16.gmra.mrb[0].mxu0 %v1943
    %v2019 = vpop.f32.mrb[0].mxu0
    %v2020 = vadd.f32 0.0, %v2019
    %v2021 = vpop.f32.mrb[0].mxu0
    %v2022 = vadd.f32 0.0, %v2021
    %v2023 = vpop.f32.mrb[0].mxu0
    %v2024 = vpop.f32.mrb[0].mxu0
    %2025 = vdwg.mxu0
    %v2030 = vrot.slane %v1979, 6
    %v2031 = vrot.slane %v1981, 6
    %v2032 = vrot.slane %v2020, 6
    %v2033 = vrot.slane %v2022, 6
    %v2038 = vadd.f32 %v1471, %v2030
    %v2039 = vadd.f32 %v1473, %v2031
    %v2040 = vadd.f32 %v1635, %v2032
    %v2041 = vadd.f32 %v1637, %v2033
    %v2042 = vxor.u32 %v2038, 2147483648
    %v2043 = vmul.f32 %v2042, 1.442695
    %v2044 = vpow.pop %v2043
    %v2045 = vadd.f32 %v2044, 1.0
    %v2046 = vrcp.pop %v2045
    %v2047 = vmul.f32 1.0, %v2046
    %v2048 = vxor.u32 %v2039, 2147483648
    %v2049 = vmul.f32 %v2048, 1.442695
    %v2050 = vpow.pop %v2049
    %v2051 = vadd.f32 %v2050, 1.0
    %v2052 = vrcp.pop %v2051
    %v2053 = vmul.f32 1.0, %v2052
    %v2054 = vtanh.pop %v2040
    %v2055 = vxor.u32 %v2041, 2147483648
    %v2056 = vmul.f32 %v2055, 1.442695
    %v2057 = vpow.pop %v2056
    %v2058 = vadd.f32 %v2057, 1.0
    %v2059 = vrcp.pop %v2058
    %v2060 = vmul.f32 1.0, %v2059
    %v2062 = vrot.slane %v1940, 6
    %v2064 = vmul.f32 %v2053, %v2062
    %v2065 = vmul.f32 %v2047, %v2054
    %v2066 = vadd.f32 %v2064, %v2065
    %v2067 = vtanh.pop %v2066
    %v2068 = vmul.f32 %v2060, %v2067
    %v2069 = vpack.c.bf16 %v2068, %v2068
    %v2071 = vrot.slane %v2069, 1
    %2073 = vmatprep.subr.bf16.mxu0 %v1770
    %2074 = vmatpush1.bf16.msra.mxu0 %v1769
    %2075 = vmatprep.subr.bf16.mxu0 %v1774
    %2076 = vmatpush1.bf16.msra.mxu0 %v1773
    %2077 = vmatprep.subr.bf16.mxu0 %v1778
    %2078 = vmatpush1.bf16.msra.mxu0 %v1777
    %2079 = vmatprep.subr.bf16.mxu0 %v1782
    %2080 = vmatpush1.bf16.msra.mxu0 %v1781
    %2081 = vmatprep.subr.bf16.mxu0 %v1786
    %2082 = vmatpush1.bf16.msra.mxu0 %v1785
    %2083 = vmatprep.subr.bf16.mxu0 %v1790
    %2084 = vmatpush1.bf16.msra.mxu0 %v1789
    %2085 = vmatprep.subr.bf16.mxu0 %v1794
    %2086 = vmatpush1.bf16.msra.mxu0 %v1793
    %2087 = vmatprep.subr.bf16.mxu0 %v1798
    %2088 = vmatpush1.bf16.msra.mxu0 %v1797
    %2089 = vmatprep.subr.bf16.mxu0 0
    %2090 = vmatpush1.bf16.msra.mxu0 0
    %2091 = vmatprep.subr.bf16.mxu0 0
    %2092 = vmatpush1.bf16.msra.mxu0 0
    %2093 = vmatprep.subr.bf16.mxu0 0
    %2094 = vmatpush1.bf16.msra.mxu0 0
    %2095 = vmatprep.subr.bf16.mxu0 0
    %2096 = vmatpush1.bf16.msra.mxu0 0
    %2097 = vmatprep.subr.bf16.mxu0 0
    %2098 = vmatpush1.bf16.msra.mxu0 0
    %2099 = vmatprep.subr.bf16.mxu0 0
    %2100 = vmatpush1.bf16.msra.mxu0 0
    %2101 = vmatprep.subr.bf16.mxu0 0
    %2102 = vmatpush1.bf16.msra.mxu0 0
    %2103 = vmatprep.subr.bf16.mxu0 0
    %2104 = vmatpush1.bf16.msra.mxu0 0
    %2105 = vmatprep.mubr.bf16.mxu0 0
    %2106 = vmatmul.mubr.bf16.gmra.mrb[0].mxu0 %v2071
    %v2107 = vpop.f32.mrb[0].mxu0
    %v2108 = vadd.f32 0.0, %v2107
    %v2109 = vpop.f32.mrb[0].mxu0
    %v2110 = vadd.f32 0.0, %v2109
    %v2111 = vpop.f32.mrb[0].mxu0
    %v2112 = vpop.f32.mrb[0].mxu0
    %2113 = vdwg.mxu0
    %2114 = vmatprep.subr.bf16.mxu0 %v1772
    %2115 = vmatpush1.bf16.msra.mxu0 %v1771
    %2116 = vmatprep.subr.bf16.mxu0 %v1776
    %2117 = vmatpush1.bf16.msra.mxu0 %v1775
    %2118 = vmatprep.subr.bf16.mxu0 %v1780
    %2119 = vmatpush1.bf16.msra.mxu0 %v1779
    %2120 = vmatprep.subr.bf16.mxu0 %v1784
    %2121 = vmatpush1.bf16.msra.mxu0 %v1783
    %2122 = vmatprep.subr.bf16.mxu0 %v1788
    %2123 = vmatpush1.bf16.msra.mxu0 %v1787
    %2124 = vmatprep.subr.bf16.mxu0 %v1792
    %2125 = vmatpush1.bf16.msra.mxu0 %v1791
    %2126 = vmatprep.subr.bf16.mxu0 %v1796
    %2127 = vmatpush1.bf16.msra.mxu0 %v1795
    %2128 = vmatprep.subr.bf16.mxu0 %v1800
    %2129 = vmatpush1.bf16.msra.mxu0 %v1799
    %2130 = vmatprep.subr.bf16.mxu0 0
    %2131 = vmatpush1.bf16.msra.mxu0 0
    %2132 = vmatprep.subr.bf16.mxu0 0
    %2133 = vmatpush1.bf16.msra.mxu0 0
    %2134 = vmatprep.subr.bf16.mxu0 0
    %2135 = vmatpush1.bf16.msra.mxu0 0
    %2136 = vmatprep.subr.bf16.mxu0 0
    %2137 = vmatpush1.bf16.msra.mxu0 0
    %2138 = vmatprep.subr.bf16.mxu0 0
    %2139 = vmatpush1.bf16.msra.mxu0 0
    %2140 = vmatprep.subr.bf16.mxu0 0
    %2141 = vmatpush1.bf16.msra.mxu0 0
    %2142 = vmatprep.subr.bf16.mxu0 0
    %2143 = vmatpush1.bf16.msra.mxu0 0
    %2144 = vmatprep.subr.bf16.mxu0 0
    %2145 = vmatpush1.bf16.msra.mxu0 0
    %2146 = vmatprep.mubr.bf16.mxu0 0
    %2147 = vmatmul.mubr.bf16.gmra.mrb[0].mxu0 %v2071
    %v2148 = vpop.f32.mrb[0].mxu0
    %v2149 = vadd.f32 0.0, %v2148
    %v2150 = vpop.f32.mrb[0].mxu0
    %v2151 = vadd.f32 0.0, %v2150
    %v2152 = vpop.f32.mrb[0].mxu0
    %v2153 = vpop.f32.mrb[0].mxu0
    %2154 = vdwg.mxu0
    %v2159 = vrot.slane %v2108, 4
    %v2160 = vrot.slane %v2110, 4
    %v2161 = vrot.slane %v2149, 4
    %v2162 = vrot.slane %v2151, 4
    %v2167 = vadd.f32 %v1471, %v2159
    %v2168 = vadd.f32 %v1473, %v2160
    %v2169 = vadd.f32 %v1635, %v2161
    %v2170 = vadd.f32 %v1637, %v2162
    %v2171 = vxor.u32 %v2167, 2147483648
    %v2172 = vmul.f32 %v2171, 1.442695
    %v2173 = vpow.pop %v2172
    %v2174 = vadd.f32 %v2173, 1.0
    %v2175 = vrcp.pop %v2174
    %v2176 = vmul.f32 1.0, %v2175
    %v2177 = vxor.u32 %v2168, 2147483648
    %v2178 = vmul.f32 %v2177, 1.442695
    %v2179 = vpow.pop %v2178
    %v2180 = vadd.f32 %v2179, 1.0
    %v2181 = vrcp.pop %v2180
    %v2182 = vmul.f32 1.0, %v2181
    %v2183 = vtanh.pop %v2169
    %v2184 = vxor.u32 %v2170, 2147483648
    %v2185 = vmul.f32 %v2184, 1.442695
    %v2186 = vpow.pop %v2185
    %v2187 = vadd.f32 %v2186, 1.0
    %v2188 = vrcp.pop %v2187
    %v2189 = vmul.f32 1.0, %v2188
    %v2191 = vrot.slane %v2066, 6
    %v2193 = vmul.f32 %v2182, %v2191
    %v2194 = vmul.f32 %v2176, %v2183
    %v2195 = vadd.f32 %v2193, %v2194
    %v2196 = vtanh.pop %v2195
    %v2197 = vmul.f32 %v2189, %v2196
    %v2198 = vpack.c.bf16 %v2197, %v2197
    %v2200 = vrot.slane %v2198, 2
    %2202 = vmatprep.subr.bf16.mxu0 %v1770
    %2203 = vmatpush1.bf16.msra.mxu0 %v1769
    %2204 = vmatprep.subr.bf16.mxu0 %v1774
    %2205 = vmatpush1.bf16.msra.mxu0 %v1773
    %2206 = vmatprep.subr.bf16.mxu0 %v1778
    %2207 = vmatpush1.bf16.msra.mxu0 %v1777
    %2208 = vmatprep.subr.bf16.mxu0 %v1782
    %2209 = vmatpush1.bf16.msra.mxu0 %v1781
    %2210 = vmatprep.subr.bf16.mxu0 %v1786
    %2211 = vmatpush1.bf16.msra.mxu0 %v1785
    %2212 = vmatprep.subr.bf16.mxu0 %v1790
    %2213 = vmatpush1.bf16.msra.mxu0 %v1789
    %2214 = vmatprep.subr.bf16.mxu0 %v1794
    %2215 = vmatpush1.bf16.msra.mxu0 %v1793
    %2216 = vmatprep.subr.bf16.mxu0 %v1798
    %2217 = vmatpush1.bf16.msra.mxu0 %v1797
    %2218 = vmatprep.subr.bf16.mxu0 0
    %2219 = vmatpush1.bf16.msra.mxu0 0
    %2220 = vmatprep.subr.bf16.mxu0 0
    %2221 = vmatpush1.bf16.msra.mxu0 0
    %2222 = vmatprep.subr.bf16.mxu0 0
    %2223 = vmatpush1.bf16.msra.mxu0 0
    %2224 = vmatprep.subr.bf16.mxu0 0
    %2225 = vmatpush1.bf16.msra.mxu0 0
    %2226 = vmatprep.subr.bf16.mxu0 0
    %2227 = vmatpush1.bf16.msra.mxu0 0
    %2228 = vmatprep.subr.bf16.mxu0 0
    %2229 = vmatpush1.bf16.msra.mxu0 0
    %2230 = vmatprep.subr.bf16.mxu0 0
    %2231 = vmatpush1.bf16.msra.mxu0 0
    %2232 = vmatprep.subr.bf16.mxu0 0
    %2233 = vmatpush1.bf16.msra.mxu0 0
    %2234 = vmatprep.mubr.bf16.mxu0 0
    %2235 = vmatmul.mubr.bf16.gmra.mrb[0].mxu0 %v2200
    %v2236 = vpop.f32.mrb[0].mxu0
    %v2237 = vadd.f32 0.0, %v2236
    %v2238 = vpop.f32.mrb[0].mxu0
    %v2239 = vadd.f32 0.0, %v2238
    %v2240 = vpop.f32.mrb[0].mxu0
    %v2241 = vpop.f32.mrb[0].mxu0
    %2242 = vdwg.mxu0
    %2243 = vmatprep.subr.bf16.mxu0 %v1772
    %2244 = vmatpush1.bf16.msra.mxu0 %v1771
    %2245 = vmatprep.subr.bf16.mxu0 %v1776
    %2246 = vmatpush1.bf16.msra.mxu0 %v1775
    %2247 = vmatprep.subr.bf16.mxu0 %v1780
    %2248 = vmatpush1.bf16.msra.mxu0 %v1779
    %2249 = vmatprep.subr.bf16.mxu0 %v1784
    %2250 = vmatpush1.bf16.msra.mxu0 %v1783
    %2251 = vmatprep.subr.bf16.mxu0 %v1788
    %2252 = vmatpush1.bf16.msra.mxu0 %v1787
    %2253 = vmatprep.subr.bf16.mxu0 %v1792
    %2254 = vmatpush1.bf16.msra.mxu0 %v1791
    %2255 = vmatprep.subr.bf16.mxu0 %v1796
    %2256 = vmatpush1.bf16.msra.mxu0 %v1795
    %2257 = vmatprep.subr.bf16.mxu0 %v1800
    %2258 = vmatpush1.bf16.msra.mxu0 %v1799
    %2259 = vmatprep.subr.bf16.mxu0 0
    %2260 = vmatpush1.bf16.msra.mxu0 0
    %2261 = vmatprep.subr.bf16.mxu0 0
    %2262 = vmatpush1.bf16.msra.mxu0 0
    %2263 = vmatprep.subr.bf16.mxu0 0
    %2264 = vmatpush1.bf16.msra.mxu0 0
    %2265 = vmatprep.subr.bf16.mxu0 0
    %2266 = vmatpush1.bf16.msra.mxu0 0
    %2267 = vmatprep.subr.bf16.mxu0 0
    %2268 = vmatpush1.bf16.msra.mxu0 0
    %2269 = vmatprep.subr.bf16.mxu0 0
    %2270 = vmatpush1.bf16.msra.mxu0 0
    %2271 = vmatprep.subr.bf16.mxu0 0
    %2272 = vmatpush1.bf16.msra.mxu0 0
    %2273 = vmatprep.subr.bf16.mxu0 0
    %2274 = vmatpush1.bf16.msra.mxu0 0
    %2275 = vmatprep.mubr.bf16.mxu0 0
    %2276 = vmatmul.mubr.bf16.gmra.mrb[0].mxu0 %v2200
    %v2277 = vpop.f32.mrb[0].mxu0
    %v2278 = vadd.f32 0.0, %v2277
    %v2279 = vpop.f32.mrb[0].mxu0
    %v2280 = vadd.f32 0.0, %v2279
    %v2281 = vpop.f32.mrb[0].mxu0
    %v2282 = vpop.f32.mrb[0].mxu0
    %2283 = vdwg.mxu0
    %v2288 = vrot.slane %v2237, 2
    %v2289 = vrot.slane %v2239, 2
    %v2290 = vrot.slane %v2278, 2
    %v2291 = vrot.slane %v2280, 2
    %v2296 = vadd.f32 %v1471, %v2288
    %v2297 = vadd.f32 %v1473, %v2289
    %v2298 = vadd.f32 %v1635, %v2290
    %v2299 = vadd.f32 %v1637, %v2291
    %v2300 = vxor.u32 %v2296, 2147483648
    %v2301 = vmul.f32 %v2300, 1.442695
    %v2302 = vpow.pop %v2301
    %v2303 = vadd.f32 %v2302, 1.0
    %v2304 = vrcp.pop %v2303
    %v2305 = vmul.f32 1.0, %v2304
    %v2306 = vxor.u32 %v2297, 2147483648
    %v2307 = vmul.f32 %v2306, 1.442695
    %v2308 = vpow.pop %v2307
    %v2309 = vadd.f32 %v2308, 1.0
    %v2310 = vrcp.pop %v2309
    %v2311 = vmul.f32 1.0, %v2310
    %v2312 = vtanh.pop %v2298
    %v2313 = vxor.u32 %v2299, 2147483648
    %v2314 = vmul.f32 %v2313, 1.442695
    %v2315 = vpow.pop %v2314
    %v2316 = vadd.f32 %v2315, 1.0
    %v2317 = vrcp.pop %v2316
    %v2318 = vmul.f32 1.0, %v2317
    %v2320 = vrot.slane %v2195, 6
    %v2322 = vmul.f32 %v2311, %v2320
    %v2323 = vmul.f32 %v2305, %v2312
    %v2324 = vadd.f32 %v2322, %v2323
    %v2325 = vtanh.pop %v2324
    %v2326 = vmul.f32 %v2318, %v2325
    %v2327 = vpack.c.bf16 %v2326, %v2326
    %v2328 = vld [vmem:[%s4] sm:$0xf]
    %v2329 = vld [vmem:[%s4 + $0x4] sm:$0xf]
    %v2330 = vld [vmem:[%s4 + $0x8] sm:$0xf]
    %v2331 = vld [vmem:[%s4 + $0xc] sm:$0xf]
    %v2332 = vld [vmem:[%s4 + $0x10] sm:$0xf]
    %v2333 = vld [vmem:[%s4 + $0x14] sm:$0xf]
    %v2334 = vld [vmem:[%s4 + $0x18] sm:$0xf]
    %v2335 = vld [vmem:[%s4 + $0x1c] sm:$0xf]
    %v2336 = vld [vmem:[%s4 + $0x20] sm:$0xf]
    %v2337 = vld [vmem:[%s4 + $0x24] sm:$0xf]
    %v2338 = vld [vmem:[%s4 + $0x28] sm:$0xf]
    %v2339 = vld [vmem:[%s4 + $0x2c] sm:$0xf]
    %v2340 = vld [vmem:[%s4 + $0x30] sm:$0xf]
    %v2341 = vld [vmem:[%s4 + $0x34] sm:$0xf]
    %v2342 = vld [vmem:[%s4 + $0x38] sm:$0xf]
    %v2343 = vld [vmem:[%s4 + $0x3c] sm:$0xf]
    %v2344 = vld [vmem:[%s5] sm:$0x1]
    %v2346 = vlaneseq
    %v2347 = vshrl.u32 %v2346, 7
    %v2348 = vsub.s32 0, %v2347
    %v2349 = vrot.slane %v2344, %v2348
    %v2352 = vrot.slane %v2327, 3
    %v2370 = vunpack.c.l.b16 %v2328
    %v2371 = vunpack.c.l.b16 %v2329
    %v2372 = vunpack.c.l.b16 %v2330
    %v2373 = vunpack.c.l.b16 %v2331
    %v2374 = vunpack.c.l.b16 %v2332
    %v2375 = vunpack.c.l.b16 %v2333
    %v2376 = vunpack.c.l.b16 %v2334
    %v2377 = vunpack.c.l.b16 %v2335
    %v2378 = vunpack.c.l.b16 %v2336
    %v2379 = vunpack.c.l.b16 %v2337
    %v2380 = vunpack.c.l.b16 %v2338
    %v2381 = vunpack.c.l.b16 %v2339
    %v2382 = vunpack.c.l.b16 %v2340
    %v2383 = vunpack.c.l.b16 %v2341
    %v2384 = vunpack.c.l.b16 %v2342
    %v2385 = vunpack.c.l.b16 %v2343
    %v2386 = vpack.c.b16 %v2371, %v2370
    %v2387 = vpack.c.b16 %v2373, %v2372
    %v2388 = vpack.c.b16 %v2375, %v2374
    %v2389 = vpack.c.b16 %v2377, %v2376
    %v2390 = vpack.c.b16 %v2379, %v2378
    %v2391 = vpack.c.b16 %v2381, %v2380
    %v2392 = vpack.c.b16 %v2383, %v2382
    %v2393 = vpack.c.b16 %v2385, %v2384
    %2402 = vmatprep.subr.bf16.mxu0 0
    %2403 = vmatpush1.bf16.msra.mxu0 %v2386
    %2404 = vmatprep.subr.bf16.mxu0 0
    %2405 = vmatpush1.bf16.msra.mxu0 %v2387
    %2406 = vmatprep.subr.bf16.mxu0 0
    %2407 = vmatpush1.bf16.msra.mxu0 %v2388
    %2408 = vmatprep.subr.bf16.mxu0 0
    %2409 = vmatpush1.bf16.msra.mxu0 %v2389
    %2410 = vmatprep.subr.bf16.mxu0 0
    %2411 = vmatpush1.bf16.msra.mxu0 %v2390
    %2412 = vmatprep.subr.bf16.mxu0 0
    %2413 = vmatpush1.bf16.msra.mxu0 %v2391
    %2414 = vmatprep.subr.bf16.mxu0 0
    %2415 = vmatpush1.bf16.msra.mxu0 %v2392
    %2416 = vmatprep.subr.bf16.mxu0 0
    %2417 = vmatpush1.bf16.msra.mxu0 %v2393
    %2418 = vmatprep.subr.bf16.mxu0 0
    %2419 = vmatpush1.bf16.msra.mxu0 0
    %2420 = vmatprep.subr.bf16.mxu0 0
    %2421 = vmatpush1.bf16.msra.mxu0 0
    %2422 = vmatprep.subr.bf16.mxu0 0
    %2423 = vmatpush1.bf16.msra.mxu0 0
    %2424 = vmatprep.subr.bf16.mxu0 0
    %2425 = vmatpush1.bf16.msra.mxu0 0
    %2426 = vmatprep.subr.bf16.mxu0 0
    %2427 = vmatpush1.bf16.msra.mxu0 0
    %2428 = vmatprep.subr.bf16.mxu0 0
    %2429 = vmatpush1.bf16.msra.mxu0 0
    %2430 = vmatprep.subr.bf16.mxu0 0
    %2431 = vmatpush1.bf16.msra.mxu0 0
    %2432 = vmatprep.subr.bf16.mxu0 0
    %2433 = vmatpush1.bf16.msra.mxu0 0
    %2434 = vmatprep.mubr.bf16.mxu0 0
    %2435 = vmatmul.mubr.bf16.gmra.mrb[0].mxu0 %v2352
    %v2436 = vpop.f32.mrb[0].mxu0
    %v2437 = vadd.f32 %v2349, %v2436
    %v2438 = vpop.f32.mrb[0].mxu0
    %v2439 = vpop.f32.mrb[0].mxu0
    %v2440 = vpop.f32.mrb[0].mxu0
    %2441 = vdwg.mxu0
    %vm2442 = vcmask 9216
    %2443 = vst.msk [vmem:[#allocation2] sm:$0x3] %vm2442, %v2437
    // Predicated region
    $region26: #{conv_rnn_forward.3} parent=1 // pred_check
      _
    $region27: #{conv_rnn_forward.3} parent=1 // pred_check_branch
      %2445 = sbr.rel (0) target = $region29
    $region28: #{conv_rnn_forward.3} parent=1 // pred_region
      %s2447 = ssub.s32 32, 32
      %2448 = vsyncadd [#allocation3], %s2447
      %s2450 = sshll.u32 [#allocation2], 4
      %s2451 = int_to_ptr.vmem [resolvable:$true] %s2450
      %2453 = dma.vmem_to_hbm [thread:$0]  %s2451, 32, %s6, [#allocation3]
    $region29: #{conv_rnn_forward.3} parent=1 // pred_fallthru
      _
    // Predicated region
    $region30: #{conv_rnn_forward.3} parent=1 // pred_check
      _
    $region31: #{conv_rnn_forward.3} parent=1 // pred_check_branch
      %2455 = sbr.rel (0) target = $region33
    $region32: #{conv_rnn_forward.3} parent=1 // pred_region
      %2456 = dma.done [#allocation3], 32
    $region33: #{conv_rnn_forward.3} parent=1 // pred_fallthru
      _
    %2457 = vsyncpa [#allocation3], 1

// kernel: conv_rnn_forward.2
$region0: #{conv_rnn_forward.2}
  #allocation0 [shape = 'u32[]', space=smem, size = 0x4, offset = 0x4, fixed_abs, tag = 'smem constant byte address 0x4 - core index']
  #allocation1 [shape = 'u32[144,128]{1,0:T(1,128)}', space=vmem, size = 0x12000, scoped, tag = 'internal scratch']
  %s0 = inlined_call_operand.vmem [shape: f32[2,4,42,48], index: 0, kind: input, shape index: {}]
  %s1 = inlined_call_operand.vmem [shape: f32[3,48,276], index: 1, kind: input, shape index: {}]
  %s2 = inlined_call_operand.vmem [shape: f32[3,274,252], index: 2, kind: input, shape index: {}]
  %s3 = inlined_call_operand.vmem [shape: f32[3,250,228], index: 3, kind: input, shape index: {}]
  %s4 = inlined_call_operand.vmem [shape: f32[3,226,34], index: 4, kind: input, shape index: {}]
  %s5 = inlined_call_operand.vmem [shape: f32[2,274], index: 5, kind: input, shape index: {}]
  %s6 = inlined_call_operand.vmem [shape: f32[2,250], index: 6, kind: input, shape index: {}]
  %s7 = inlined_call_operand.vmem [shape: f32[2,226], index: 7, kind: input, shape index: {}]
  %s8 = inlined_call_operand.vmem [shape: f32[2,32], index: 8, kind: input, shape index: {}]
  %s9 = inlined_call_operand.vmem [shape: f32[4,2,832], index: 9, kind: output, shape index: {}]
  %s10 = sld [smem:[#allocation0]]
  $region107: #{conv_rnn_forward.2} parent=0
    _
  %s12 = ssub.s32 1, %s10
  %s13 = scalar_select 0, %s12, %s10
  $region1: #{conv_rnn_forward.2} parent=0
    #allocation2 [shape = 'u8[98304]{0}', space=vmem, size = 0x18000, scoped, tag = 'input window, operand 0']
    loop: start=0, step=1, limit=6
    $region2: #{conv_rnn_forward.2} parent=1 // loop_pre_header
      _
    $region3: #{conv_rnn_forward.2} parent=1 // loop_header
      %s15 = sphi 0, %s19
      %p16 = scmp.ge.s32.totalorder %s15, 6
      %s25 = sphi 0, %s27
      %s28 = sphi 0, %s25
      %s29 = sphi 0, %s28
      %s45 = sphi 0, %s29
      %s49 = sphi 0, %s49
      %s51 = sphi 0, %s49
      %s52 = sphi 0, %s51
      %s66 = sphi 0, %s52
      %s70 = sphi 0, %s70
      %s72 = sphi 0, %s70
      %s73 = sphi 0, %s72
      %s87 = sphi 0, %s73
      %s91 = sphi 0, %s91
      %s93 = sphi 0, %s91
      %s94 = sphi 0, %s93
      %s108 = sphi 0, %s94
      %s112 = sphi 0, %s112
      %s114 = sphi 0, %s112
      %s115 = sphi 0, %s114
      %s129 = sphi 0, %s115
      %s133 = sphi 0, %s133
      %s135 = sphi 0, %s133
      %s136 = sphi 0, %s135
      %s150 = sphi 0, %s136
      %s154 = sphi 0, %s154
      %s156 = sphi 0, %s154
      %s157 = sphi 0, %s156
      %s171 = sphi 0, %s157
      %s175 = sphi 0, %s175
      %s177 = sphi 0, %s175
      %s178 = sphi 0, %s177
      %s192 = sphi 0, %s178
      %s196 = sphi 0, %s196
      %s198 = sphi 0, %s196
      %s199 = sphi 0, %s198
      %s213 = sphi 0, %s199
      %s219 = sphi 0, %s221
      %s222 = sphi 0, %s219
      %s223 = sphi 0, %s222
      %s239 = sphi 0, %s223
    $region4: #{conv_rnn_forward.2} parent=1 // loop_header_branch
      %18 = sbr.rel (%p16) target = $region8
    $region5: #{conv_rnn_forward.2} parent=1 // loop_body
      %s20 = ssub.s32 %s15, 1
      %s21 = ssub.s32 %s15, 2
      %s22 = sadd.s32 %s15, 1
      %s23 = ssub.s32 %s15, %s22
      %p24 = scmp.eq.s32.totalorder %s23, 0
      %s26 = sadd.s32 %s25, 1
      %s27 = scalar_select %p24, %s25, %s26
      %p30 = pneg %p24
      %p31 = scmp.eq.s32.totalorder %s15, 3
      %p32 = por %p30, %p31
      %p33 = scmp.ne.s32.totalorder %s25, %s28
      %p34 = scmp.eq.s32.totalorder %s15, 0
      %p35 = por %p33, %p34
      %p36 = scmp.ne.s32.totalorder %s25, %s28
      %p37 = scmp.eq.s32.totalorder %s20, 3
      %p38 = por %p36, %p37
      %p39 = scmp.ne.s32.totalorder %s28, %s29
      %p40 = scmp.eq.s32.totalorder %s20, 0
      %p41 = por %p39, %p40
      %p42 = scmp.ne.s32.totalorder %s28, %s29
      %p43 = scmp.eq.s32.totalorder %s21, 3
      %p44 = por %p42, %p43
      %p46 = scmp.ne.s32.totalorder %s29, %s45
      %p47 = scmp.eq.s32.totalorder %s21, 0
      %p48 = por %p46, %p47
      %s50 = sadd.s32 %s49, 1
      %p53 = scmp.eq.s32.totalorder %s15, 3
      %p54 = scmp.ne.s32.totalorder %s49, %s51
      %p55 = scmp.eq.s32.totalorder %s15, 0
      %p56 = por %p54, %p55
      %p57 = scmp.ne.s32.totalorder %s49, %s51
      %p58 = scmp.eq.s32.totalorder %s20, 3
      %p59 = por %p57, %p58
      %p60 = scmp.ne.s32.totalorder %s51, %s52
      %p61 = scmp.eq.s32.totalorder %s20, 0
      %p62 = por %p60, %p61
      %p63 = scmp.ne.s32.totalorder %s51, %s52
      %p64 = scmp.eq.s32.totalorder %s21, 3
      %p65 = por %p63, %p64
      %p67 = scmp.ne.s32.totalorder %s52, %s66
      %p68 = scmp.eq.s32.totalorder %s21, 0
      %p69 = por %p67, %p68
      %s71 = sadd.s32 %s70, 1
      %p74 = scmp.eq.s32.totalorder %s15, 3
      %p75 = scmp.ne.s32.totalorder %s70, %s72
      %p76 = scmp.eq.s32.totalorder %s15, 0
      %p77 = por %p75, %p76
      %p78 = scmp.ne.s32.totalorder %s70, %s72
      %p79 = scmp.eq.s32.totalorder %s20, 3
      %p80 = por %p78, %p79
      %p81 = scmp.ne.s32.totalorder %s72, %s73
      %p82 = scmp.eq.s32.totalorder %s20, 0
      %p83 = por %p81, %p82
      %p84 = scmp.ne.s32.totalorder %s72, %s73
      %p85 = scmp.eq.s32.totalorder %s21, 3
      %p86 = por %p84, %p85
      %p88 = scmp.ne.s32.totalorder %s73, %s87
      %p89 = scmp.eq.s32.totalorder %s21, 0
      %p90 = por %p88, %p89
      %s92 = sadd.s32 %s91, 1
      %p95 = scmp.eq.s32.totalorder %s15, 3
      %p96 = scmp.ne.s32.totalorder %s91, %s93
      %p97 = scmp.eq.s32.totalorder %s15, 0
      %p98 = por %p96, %p97
      %p99 = scmp.ne.s32.totalorder %s91, %s93
      %p100 = scmp.eq.s32.totalorder %s20, 3
      %p101 = por %p99, %p100
      %p102 = scmp.ne.s32.totalorder %s93, %s94
      %p103 = scmp.eq.s32.totalorder %s20, 0
      %p104 = por %p102, %p103
      %p105 = scmp.ne.s32.totalorder %s93, %s94
      %p106 = scmp.eq.s32.totalorder %s21, 3
      %p107 = por %p105, %p106
      %p109 = scmp.ne.s32.totalorder %s94, %s108
      %p110 = scmp.eq.s32.totalorder %s21, 0
      %p111 = por %p109, %p110
      %s113 = sadd.s32 %s112, 1
      %p116 = scmp.eq.s32.totalorder %s15, 3
      %p117 = scmp.ne.s32.totalorder %s112, %s114
      %p118 = scmp.eq.s32.totalorder %s15, 0
      %p119 = por %p117, %p118
      %p120 = scmp.ne.s32.totalorder %s112, %s114
      %p121 = scmp.eq.s32.totalorder %s20, 3
      %p122 = por %p120, %p121
      %p123 = scmp.ne.s32.totalorder %s114, %s115
      %p124 = scmp.eq.s32.totalorder %s20, 0
      %p125 = por %p123, %p124
      %p126 = scmp.ne.s32.totalorder %s114, %s115
      %p127 = scmp.eq.s32.totalorder %s21, 3
      %p128 = por %p126, %p127
      %p130 = scmp.ne.s32.totalorder %s115, %s129
      %p131 = scmp.eq.s32.totalorder %s21, 0
      %p132 = por %p130, %p131
      %s134 = sadd.s32 %s133, 1
      %p137 = scmp.eq.s32.totalorder %s15, 3
      %p138 = scmp.ne.s32.totalorder %s133, %s135
      %p139 = scmp.eq.s32.totalorder %s15, 0
      %p140 = por %p138, %p139
      %p141 = scmp.ne.s32.totalorder %s133, %s135
      %p142 = scmp.eq.s32.totalorder %s20, 3
      %p143 = por %p141, %p142
      %p144 = scmp.ne.s32.totalorder %s135, %s136
      %p145 = scmp.eq.s32.totalorder %s20, 0
      %p146 = por %p144, %p145
      %p147 = scmp.ne.s32.totalorder %s135, %s136
      %p148 = scmp.eq.s32.totalorder %s21, 3
      %p149 = por %p147, %p148
      %p151 = scmp.ne.s32.totalorder %s136, %s150
      %p152 = scmp.eq.s32.totalorder %s21, 0
      %p153 = por %p151, %p152
      %s155 = sadd.s32 %s154, 1
      %p158 = scmp.eq.s32.totalorder %s15, 3
      %p159 = scmp.ne.s32.totalorder %s154, %s156
      %p160 = scmp.eq.s32.totalorder %s15, 0
      %p161 = por %p159, %p160
      %p162 = scmp.ne.s32.totalorder %s154, %s156
      %p163 = scmp.eq.s32.totalorder %s20, 3
      %p164 = por %p162, %p163
      %p165 = scmp.ne.s32.totalorder %s156, %s157
      %p166 = scmp.eq.s32.totalorder %s20, 0
      %p167 = por %p165, %p166
      %p168 = scmp.ne.s32.totalorder %s156, %s157
      %p169 = scmp.eq.s32.totalorder %s21, 3
      %p170 = por %p168, %p169
      %p172 = scmp.ne.s32.totalorder %s157, %s171
      %p173 = scmp.eq.s32.totalorder %s21, 0
      %p174 = por %p172, %p173
      %s176 = sadd.s32 %s175, 1
      %p179 = scmp.eq.s32.totalorder %s15, 3
      %p180 = scmp.ne.s32.totalorder %s175, %s177
      %p181 = scmp.eq.s32.totalorder %s15, 0
      %p182 = por %p180, %p181
      %p183 = scmp.ne.s32.totalorder %s175, %s177
      %p184 = scmp.eq.s32.totalorder %s20, 3
      %p185 = por %p183, %p184
      %p186 = scmp.ne.s32.totalorder %s177, %s178
      %p187 = scmp.eq.s32.totalorder %s20, 0
      %p188 = por %p186, %p187
      %p189 = scmp.ne.s32.totalorder %s177, %s178
      %p190 = scmp.eq.s32.totalorder %s21, 3
      %p191 = por %p189, %p190
      %p193 = scmp.ne.s32.totalorder %s178, %s192
      %p194 = scmp.eq.s32.totalorder %s21, 0
      %p195 = por %p193, %p194
      %s197 = sadd.s32 %s196, 1
      %p200 = scmp.eq.s32.totalorder %s15, 3
      %p201 = scmp.ne.s32.totalorder %s196, %s198
      %p202 = scmp.eq.s32.totalorder %s15, 0
      %p203 = por %p201, %p202
      %p204 = scmp.ne.s32.totalorder %s196, %s198
      %p205 = scmp.eq.s32.totalorder %s20, 3
      %p206 = por %p204, %p205
      %p207 = scmp.ne.s32.totalorder %s198, %s199
      %p208 = scmp.eq.s32.totalorder %s20, 0
      %p209 = por %p207, %p208
      %p210 = scmp.ne.s32.totalorder %s198, %s199
      %p211 = scmp.eq.s32.totalorder %s21, 3
      %p212 = por %p210, %p211
      %p214 = scmp.ne.s32.totalorder %s199, %s213
      %p215 = scmp.eq.s32.totalorder %s21, 0
      %p216 = por %p214, %p215
      %s217 = ssub.s32 %s15, %s22
      %p218 = scmp.eq.s32.totalorder %s217, 0
      %s220 = sadd.s32 %s219, 1
      %s221 = scalar_select %p218, %s219, %s220
      %p224 = pneg %p218
      %p225 = scmp.eq.s32.totalorder %s15, 3
      %p226 = por %p224, %p225
      %p227 = scmp.ne.s32.totalorder %s219, %s222
      %p228 = scmp.eq.s32.totalorder %s15, 0
      %p229 = por %p227, %p228
      %p230 = scmp.ne.s32.totalorder %s219, %s222
      %p231 = scmp.eq.s32.totalorder %s20, 3
      %p232 = por %p230, %p231
      %p233 = scmp.ne.s32.totalorder %s222, %s223
      %p234 = scmp.eq.s32.totalorder %s20, 0
      %p235 = por %p233, %p234
      %p236 = scmp.ne.s32.totalorder %s222, %s223
      %p237 = scmp.eq.s32.totalorder %s21, 3
      %p238 = por %p236, %p237
      %p240 = scmp.ne.s32.totalorder %s223, %s239
      %p241 = scmp.eq.s32.totalorder %s21, 0
      %p242 = por %p240, %p241
      %p243 = scmp.le.s32.totalorder 1, %s15
      %p244 = scmp.lt.s32.totalorder %s15, 5
      %p245 = pnand %p243, %p244
      %p246 = pneg %p245
      // Predicated region
      $region9: #{conv_rnn_forward.2} parent=5 // pred_check
        _
      $region10: #{conv_rnn_forward.2} parent=5 // pred_check_branch
        %248 = sbr.rel (%p245) target = $region12
      $region11: #{conv_rnn_forward.2} parent=5 // pred_region
        %s249 = ssub.s32 %s15, 1
        // Predicated region
        $region13: #{conv_rnn_forward.2} parent=11 // pred_check
          %p250 = pneg %p62
        $region14: #{conv_rnn_forward.2} parent=11 // pred_check_branch
          %252 = sbr.rel (%p250) target = $region16
        $region15: #{conv_rnn_forward.2} parent=11 // pred_region
          _
        $region16: #{conv_rnn_forward.2} parent=11 // pred_fallthru
          _
        // Predicated region
        $region17: #{conv_rnn_forward.2} parent=11 // pred_check
          %p253 = pneg %p83
        $region18: #{conv_rnn_forward.2} parent=11 // pred_check_branch
          %255 = sbr.rel (%p253) target = $region20
        $region19: #{conv_rnn_forward.2} parent=11 // pred_region
          _
        $region20: #{conv_rnn_forward.2} parent=11 // pred_fallthru
          _
        // Predicated region
        $region21: #{conv_rnn_forward.2} parent=11 // pred_check
          %p256 = pneg %p104
        $region22: #{conv_rnn_forward.2} parent=11 // pred_check_branch
          %258 = sbr.rel (%p256) target = $region24
        $region23: #{conv_rnn_forward.2} parent=11 // pred_region
          _
        $region24: #{conv_rnn_forward.2} parent=11 // pred_fallthru
          _
        // Predicated region
        $region25: #{conv_rnn_forward.2} parent=11 // pred_check
          %p259 = pneg %p125
        $region26: #{conv_rnn_forward.2} parent=11 // pred_check_branch
          %261 = sbr.rel (%p259) target = $region28
        $region27: #{conv_rnn_forward.2} parent=11 // pred_region
          _
        $region28: #{conv_rnn_forward.2} parent=11 // pred_fallthru
          _
        // Predicated region
        $region29: #{conv_rnn_forward.2} parent=11 // pred_check
          %p262 = pneg %p146
        $region30: #{conv_rnn_forward.2} parent=11 // pred_check_branch
          %264 = sbr.rel (%p262) target = $region32
        $region31: #{conv_rnn_forward.2} parent=11 // pred_region
          _
        $region32: #{conv_rnn_forward.2} parent=11 // pred_fallthru
          _
        // Predicated region
        $region33: #{conv_rnn_forward.2} parent=11 // pred_check
          %p265 = pneg %p167
        $region34: #{conv_rnn_forward.2} parent=11 // pred_check_branch
          %267 = sbr.rel (%p265) target = $region36
        $region35: #{conv_rnn_forward.2} parent=11 // pred_region
          _
        $region36: #{conv_rnn_forward.2} parent=11 // pred_fallthru
          _
        // Predicated region
        $region37: #{conv_rnn_forward.2} parent=11 // pred_check
          %p268 = pneg %p188
        $region38: #{conv_rnn_forward.2} parent=11 // pred_check_branch
          %270 = sbr.rel (%p268) target = $region40
        $region39: #{conv_rnn_forward.2} parent=11 // pred_region
          _
        $region40: #{conv_rnn_forward.2} parent=11 // pred_fallthru
          _
        // Predicated region
        $region41: #{conv_rnn_forward.2} parent=11 // pred_check
          %p271 = pneg %p209
        $region42: #{conv_rnn_forward.2} parent=11 // pred_check_branch
          %273 = sbr.rel (%p271) target = $region44
        $region43: #{conv_rnn_forward.2} parent=11 // pred_region
          _
        $region44: #{conv_rnn_forward.2} parent=11 // pred_fallthru
          _
      $region12: #{conv_rnn_forward.2} parent=5 // pred_fallthru
        _
      %p274 = scmp.lt.s32.totalorder %s15, 4
      // Predicated region
      $region45: #{conv_rnn_forward.2} parent=5 // pred_check
        %p275 = pneg %p274
      $region46: #{conv_rnn_forward.2} parent=5 // pred_check_branch
        %277 = sbr.rel (%p275) target = $region48
      $region47: #{conv_rnn_forward.2} parent=5 // pred_region
        // Predicated region
        $region49: #{conv_rnn_forward.2} parent=47 // pred_check
          %p278 = pneg %p35
        $region50: #{conv_rnn_forward.2} parent=47 // pred_check_branch
          %280 = sbr.rel (%p278) target = $region52
        $region51: #{conv_rnn_forward.2} parent=47 // pred_region
          %s281 = sand.u32 %s25, 1
          %s282 = sand.u32 %s25, 1
          %s283 = smul.addr %s282, 96
          %s284 = scalar_lea.vmem [#allocation2], %s283
          %s285 = smul.addr %s15, 6
          %s286 = smul.addr %s285, 8
          %s287 = scalar_lea.vmem %s0, %s286
          // Predicated region
          $region53: #{conv_rnn_forward.2} parent=51 // pred_check
            _
          $region54: #{conv_rnn_forward.2} parent=51 // pred_check_branch
            %289 = sbr.rel (0) target = $region56
          $region55: #{conv_rnn_forward.2} parent=51 // pred_region
            // Predicated region
            $region57: #{conv_rnn_forward.2} parent=55 // pred_check
              _
            $region58: #{conv_rnn_forward.2} parent=55 // pred_check_branch
              %291 = sbr.rel (0) target = $region60
            $region59: #{conv_rnn_forward.2} parent=55 // pred_region
              // Predicated region
              $region72: #{conv_rnn_forward.2} parent=59 // pred_check
                _
              $region73: #{conv_rnn_forward.2} parent=59 // pred_check_branch
                %328 = sbr.rel (0) target = $region75
              $region74: #{conv_rnn_forward.2} parent=59 // pred_region
                loop: start=0, step=1, limit=1
                $region76: #{conv_rnn_forward.2} parent=74 // loop_pre_header
                  _
                $region77: #{conv_rnn_forward.2} parent=74 // loop_header
                  %s330 = sphi 0, %s334
                  %p331 = scmp.ge.s32.totalorder %s330, 1
                  %s335 = sphi %s287, %s287
                  %s336 = sphi %s284, %s284
                $region78: #{conv_rnn_forward.2} parent=74 // loop_header_branch
                  %333 = sbr.rel (%p331) target = $region82
                $region79: #{conv_rnn_forward.2} parent=74 // loop_body
                  %v337 = vld [vmem:[%s335] sm:$0xff]
                  %338 = vst [vmem:[%s336] sm:$0xff] %v337
                  %v339 = vld [vmem:[%s335 + $0x8] sm:$0xff]
                  %340 = vst [vmem:[%s336 + $0x8] sm:$0xff] %v339
                  %v341 = vld [vmem:[%s335 + $0x10] sm:$0xff]
                  %342 = vst [vmem:[%s336 + $0x10] sm:$0xff] %v341
                  %v343 = vld [vmem:[%s335 + $0x18] sm:$0xff]
                  %344 = vst [vmem:[%s336 + $0x18] sm:$0xff] %v343
                  %v345 = vld [vmem:[%s335 + $0x20] sm:$0xff]
                  %346 = vst [vmem:[%s336 + $0x20] sm:$0xff] %v345
                  %v347 = vld [vmem:[%s335 + $0x28] sm:$0xff]
                  %348 = vst [vmem:[%s336 + $0x28] sm:$0xff] %v347
                  %v349 = vld [vmem:[%s335 + $0xc0] sm:$0xff]
                  %350 = vst [vmem:[%s336 + $0x30] sm:$0xff] %v349
                  %v351 = vld [vmem:[%s335 + $0xc8] sm:$0xff]
                  %352 = vst [vmem:[%s336 + $0x38] sm:$0xff] %v351
                  %v353 = vld [vmem:[%s335 + $0xd0] sm:$0xff]
                  %354 = vst [vmem:[%s336 + $0x40] sm:$0xff] %v353
                  %v355 = vld [vmem:[%s335 + $0xd8] sm:$0xff]
                  %356 = vst [vmem:[%s336 + $0x48] sm:$0xff] %v355
                  %v357 = vld [vmem:[%s335 + $0xe0] sm:$0xff]
                  %358 = vst [vmem:[%s336 + $0x50] sm:$0xff] %v357
                  %v359 = vld [vmem:[%s335 + $0xe8] sm:$0xff]
                  %360 = vst [vmem:[%s336 + $0x58] sm:$0xff] %v359
                $region80: #{conv_rnn_forward.2} parent=74 // loop_footer
                  %s334 = sadd.s32 1, %s330
                $region81: #{conv_rnn_forward.2} parent=74 // loop_footer_branch
                  %329 = sbr.rel target = $region77
                $region82: #{conv_rnn_forward.2} parent=74 // loop_exit
                  _
              $region75: #{conv_rnn_forward.2} parent=59 // pred_fallthru
                _
              // Predicated region
              $region83: #{conv_rnn_forward.2} parent=59 // pred_check
                _
              $region84: #{conv_rnn_forward.2} parent=59 // pred_check_branch
                %362 = sbr.rel target = $region86
              $region85: #{conv_rnn_forward.2} parent=59 // pred_region
                _
              $region86: #{conv_rnn_forward.2} parent=59 // pred_fallthru
                _
            $region60: #{conv_rnn_forward.2} parent=55 // pred_fallthru
              _
            // Predicated region
            $region61: #{conv_rnn_forward.2} parent=55 // pred_check
              _
            $region62: #{conv_rnn_forward.2} parent=55 // pred_check_branch
              %293 = sbr.rel target = $region64
            $region63: #{conv_rnn_forward.2} parent=55 // pred_region
              loop: start=0, step=1, limit=1
              $region65: #{conv_rnn_forward.2} parent=63 // loop_pre_header
                _
              $region66: #{conv_rnn_forward.2} parent=63 // loop_header
                %s296 = sphi 0, %s300
                %p297 = scmp.ge.s32.totalorder %s296, 1
                %s301 = sphi %s287, %s287
                %s302 = sphi %s284, %s284
              $region67: #{conv_rnn_forward.2} parent=63 // loop_header_branch
                %299 = sbr.rel (%p297) target = $region71
              $region68: #{conv_rnn_forward.2} parent=63 // loop_body
                %v303 = vld [vmem:[%s301] sm:$0xff]
                %304 = vst [vmem:[%s302] sm:$0xff] %v303
                %v305 = vld [vmem:[%s301 + $0x8] sm:$0xff]
                %306 = vst [vmem:[%s302 + $0x8] sm:$0xff] %v305
                %v307 = vld [vmem:[%s301 + $0x10] sm:$0xff]
                %308 = vst [vmem:[%s302 + $0x10] sm:$0xff] %v307
                %v309 = vld [vmem:[%s301 + $0x18] sm:$0xff]
                %310 = vst [vmem:[%s302 + $0x18] sm:$0xff] %v309
                %v311 = vld [vmem:[%s301 + $0x20] sm:$0xff]
                %312 = vst [vmem:[%s302 + $0x20] sm:$0xff] %v311
                %v313 = vld [vmem:[%s301 + $0x28] sm:$0xff]
                %314 = vst [vmem:[%s302 + $0x28] sm:$0xff] %v313
                %v315 = vld [vmem:[%s301 + $0xc0] sm:$0xff]
                %316 = vst [vmem:[%s302 + $0x30] sm:$0xff] %v315
                %v317 = vld [vmem:[%s301 + $0xc8] sm:$0xff]
                %318 = vst [vmem:[%s302 + $0x38] sm:$0xff] %v317
                %v319 = vld [vmem:[%s301 + $0xd0] sm:$0xff]
                %320 = vst [vmem:[%s302 + $0x40] sm:$0xff] %v319
                %v321 = vld [vmem:[%s301 + $0xd8] sm:$0xff]
                %322 = vst [vmem:[%s302 + $0x48] sm:$0xff] %v321
                %v323 = vld [vmem:[%s301 + $0xe0] sm:$0xff]
                %324 = vst [vmem:[%s302 + $0x50] sm:$0xff] %v323
                %v325 = vld [vmem:[%s301 + $0xe8] sm:$0xff]
                %326 = vst [vmem:[%s302 + $0x58] sm:$0xff] %v325
              $region69: #{conv_rnn_forward.2} parent=63 // loop_footer
                %s300 = sadd.s32 1, %s296
              $region70: #{conv_rnn_forward.2} parent=63 // loop_footer_branch
                %295 = sbr.rel target = $region66
              $region71: #{conv_rnn_forward.2} parent=63 // loop_exit
                _
            $region64: #{conv_rnn_forward.2} parent=55 // pred_fallthru
              _
          $region56: #{conv_rnn_forward.2} parent=51 // pred_fallthru
            _
          %363 = vnop
        $region52: #{conv_rnn_forward.2} parent=47 // pred_fallthru
          _
      $region48: #{conv_rnn_forward.2} parent=5 // pred_fallthru
        _
      %p364 = scmp.le.s32.totalorder 1, %s15
      %p365 = scmp.lt.s32.totalorder %s15, 5
      %p366 = pnand %p364, %p365
      %p367 = pneg %p366
      // Predicated region
      $region87: #{conv_rnn_forward.2} parent=5 // pred_check
        _
      $region88: #{conv_rnn_forward.2} parent=5 // pred_check_branch
        %369 = sbr.rel (%p366) target = $region90
      $region89: #{conv_rnn_forward.2} parent=5 // pred_region
        %s370 = ssub.s32 %s15, 1
        %s371 = sand.u32 %s28, 1
        %s372 = sand.u32 %s28, 1
        %s373 = smul.addr %s372, 96
        %s374 = scalar_lea.vmem [#allocation2], %s373
        // Predicated region
        $region91: #{conv_rnn_forward.2} parent=89 // pred_check
          %p375 = pneg %p41
        $region92: #{conv_rnn_forward.2} parent=89 // pred_check_branch
          %377 = sbr.rel (%p375) target = $region94
        $region93: #{conv_rnn_forward.2} parent=89 // pred_region
          _
        $region94: #{conv_rnn_forward.2} parent=89 // pred_fallthru
          _
        %s378 = sand.u32 %s28, 1
        %s379 = sand.u32 %s28, 1
        %s380 = smul.addr %s379, 96
        %s381 = scalar_lea.vmem [#allocation2], %s380
        %p382 = pneg %p41
        %p383 = pneg %p38
        %p384 = pneg %p62
        %p385 = pneg %p59
        %p386 = pneg %p83
        %p387 = pneg %p80
        %p388 = pneg %p104
        %p389 = pneg %p101
        %p390 = pneg %p125
        %p391 = pneg %p122
        %p392 = pneg %p146
        %p393 = pneg %p143
        %p394 = pneg %p167
        %p395 = pneg %p164
        %p396 = pneg %p188
        %p397 = pneg %p185
        %p398 = pneg %p209
        %p399 = pneg %p206
        %p400 = pneg %p235
        %p401 = pneg %p232
        %p402 = scmp.lt.s32.totalorder %s20, 3
        %s403 = scalar_select %p402, %s20, 3
        %s404 = smul.addr %s403, 7
        %s405 = smul.addr %s404, 2
        %s406 = scalar_lea.vmem %s9, %s405
        %p407 = scmp.lt.s32.totalorder %s20, 3
        %s408 = scalar_select %p407, %s20, 3
        %s409 = smul.addr %s408, 7
        %s410 = smul.addr %s409, 2
        %s411 = scalar_lea.vmem %s9, %s410
        %v412 = vld [vmem:[%s374] sm:$0xff]
        %v413 = vld [vmem:[%s374 + $0x8] sm:$0xff]
        %v414 = vld [vmem:[%s374 + $0x10] sm:$0xff]
        %v415 = vld [vmem:[%s374 + $0x18] sm:$0xff]
        %v416 = vld [vmem:[%s374 + $0x20] sm:$0xff]
        %v417 = vld [vmem:[%s374 + $0x28] sm:$0x3]
        %v418 = vld [vmem:[%s1] sm:$0xff]
        %v419 = vld [vmem:[%s1 + $0x8] sm:$0xff]
        %v420 = vld [vmem:[%s1 + $0x10] sm:$0xff]
        %v421 = vld [vmem:[%s1 + $0x18] sm:$0xff]
        %v422 = vld [vmem:[%s1 + $0x20] sm:$0xff]
        %v423 = vld [vmem:[%s1 + $0x28] sm:$0xff]
        %v424 = vld [vmem:[%s1 + $0x30] sm:$0xff]
        %v425 = vld [vmem:[%s1 + $0x38] sm:$0xff]
        %v426 = vld [vmem:[%s1 + $0x40] sm:$0xff]
        %v427 = vld [vmem:[%s1 + $0x48] sm:$0xff]
        %v428 = vld [vmem:[%s1 + $0x50] sm:$0xff]
        %v429 = vld [vmem:[%s1 + $0x58] sm:$0xff]
        %v430 = vld [vmem:[%s1 + $0x60] sm:$0xff]
        %v431 = vld [vmem:[%s1 + $0x68] sm:$0xff]
        %v432 = vld [vmem:[%s1 + $0x70] sm:$0xff]
        %v433 = vld [vmem:[%s1 + $0x78] sm:$0xff]
        %v434 = vld [vmem:[%s1 + $0x80] sm:$0xff]
        %v435 = vld [vmem:[%s1 + $0x88] sm:$0xff]
        %s436 = scalar_lea.vmem %s1, 144
        %v437 = vld [vmem:[%s436] sm:$0xff]
        %v438 = vld [vmem:[%s436 + $0x8] sm:$0xff]
        %v439 = vld [vmem:[%s436 + $0x10] sm:$0xff]
        %v440 = vld [vmem:[%s436 + $0x18] sm:$0xff]
        %v441 = vld [vmem:[%s436 + $0x20] sm:$0xff]
        %v442 = vld [vmem:[%s436 + $0x28] sm:$0xff]
        %v443 = vld [vmem:[%s436 + $0x30] sm:$0xff]
        %v444 = vld [vmem:[%s436 + $0x38] sm:$0xff]
        %v445 = vld [vmem:[%s436 + $0x40] sm:$0xff]
        %v446 = vld [vmem:[%s436 + $0x48] sm:$0xff]
        %v447 = vld [vmem:[%s436 + $0x50] sm:$0xff]
        %v448 = vld [vmem:[%s436 + $0x58] sm:$0xff]
        %v449 = vld [vmem:[%s436 + $0x60] sm:$0xff]
        %v450 = vld [vmem:[%s436 + $0x68] sm:$0xff]
        %v451 = vld [vmem:[%s436 + $0x70] sm:$0xff]
        %v452 = vld [vmem:[%s436 + $0x78] sm:$0xff]
        %v453 = vld [vmem:[%s436 + $0x80] sm:$0xff]
        %v454 = vld [vmem:[%s436 + $0x88] sm:$0xff]
        %vm461 = vcmask 1046528
        %v462 = vrot.slane %v412, 1
        %v463 = vrot.slane %v413, 1
        %v464 = vsel %vm461, %v462, %v463
        %v465 = vrot.slane %v414, 1
        %v466 = vsel %vm461, %v463, %v465
        %v467 = vrot.slane %v415, 1
        %v468 = vsel %vm461, %v465, %v467
        %v469 = vrot.slane %v416, 1
        %v470 = vsel %vm461, %v467, %v469
        %v471 = vrot.slane %v417, 1
        %v472 = vsel %vm461, %v469, %v471
        %vm473 = vcmask 392192
        %v474 = vsel %vm473, %v464, 0
        %v476 = vsel %vm473, %v466, 0
        %v478 = vsel %vm473, %v468, 0
        %v480 = vsel %vm473, %v470, 0
        %v482 = vsel %vm473, %v472, 0
        %484 = vmatprep.subr.mxu0 %v438
        %485 = vmatpush1.msra.mxu0 %v437
        %486 = vmatprep.subr.mxu0 %v441
        %487 = vmatpush1.msra.mxu0 %v440
        %488 = vmatprep.subr.mxu0 %v444
        %489 = vmatpush1.msra.mxu0 %v443
        %490 = vmatprep.subr.mxu0 %v447
        %491 = vmatpush1.msra.mxu0 %v446
        %492 = vmatprep.subr.mxu0 %v450
        %493 = vmatpush1.msra.mxu0 %v449
        %494 = vmatprep.subr.mxu0 %v453
        %495 = vmatpush1.msra.mxu0 %v452
        %496 = vmatprep.subr.mxu0 0.0
        %497 = vmatpush1.msra.mxu0 0.0
        %498 = vmatprep.subr.mxu0 0.0
        %499 = vmatpush1.msra.mxu0 0.0
        %500 = vmatprep.subr.mxu0 0.0
        %501 = vmatpush1.msra.mxu0 0.0
        %502 = vmatprep.subr.mxu0 0.0
        %503 = vmatpush1.msra.mxu0 0.0
        %504 = vmatprep.subr.mxu0 0.0
        %505 = vmatpush1.msra.mxu0 0.0
        %506 = vmatprep.subr.mxu0 0.0
        %507 = vmatpush1.msra.mxu0 0.0
        %508 = vmatprep.subr.mxu0 0.0
        %509 = vmatpush1.msra.mxu0 0.0
        %510 = vmatprep.subr.mxu0 0.0
        %511 = vmatpush1.msra.mxu0 0.0
        %512 = vmatprep.subr.mxu0 0.0
        %513 = vmatpush1.msra.mxu0 0.0
        %514 = vmatprep.subr.mxu0 0.0
        %515 = vmatpush1.msra.mxu0 0.0
        %516 = vmatprep.subr.mxu0 0.0
        %517 = vmatpush1.msra.mxu0 0.0
        %518 = vmatprep.subr.mxu0 0.0
        %519 = vmatpush1.msra.mxu0 0.0
        %520 = vmatprep.subr.mxu0 0.0
        %521 = vmatpush1.msra.mxu0 0.0
        %522 = vmatprep.subr.mxu0 0.0
        %523 = vmatpush1.msra.mxu0 0.0
        %524 = vmatprep.subr.mxu0 0.0
        %525 = vmatpush1.msra.mxu0 0.0
        %526 = vmatprep.subr.mxu0 0.0
        %527 = vmatpush1.msra.mxu0 0.0
        %528 = vmatprep.subr.mxu0 0.0
        %529 = vmatpush1.msra.mxu0 0.0
        %530 = vmatprep.subr.mxu0 0.0
        %531 = vmatpush1.msra.mxu0 0.0
        %532 = vmatprep.subr.mxu0 0.0
        %533 = vmatpush1.msra.mxu0 0.0
        %534 = vmatprep.subr.mxu0 0.0
        %535 = vmatpush1.msra.mxu0 0.0
        %536 = vmatprep.subr.mxu0 0.0
        %537 = vmatpush1.msra.mxu0 0.0
        %538 = vmatprep.subr.mxu0 0.0
        %539 = vmatpush1.msra.mxu0 0.0
        %540 = vmatprep.subr.mxu0 0.0
        %541 = vmatpush1.msra.mxu0 0.0
        %542 = vmatprep.subr.mxu0 0.0
        %543 = vmatpush1.msra.mxu0 0.0
        %544 = vmatprep.subr.mxu0 0.0
        %545 = vmatpush1.msra.mxu0 0.0
        %546 = vmatprep.subr.mxu0 0.0
        %547 = vmatpush1.msra.mxu0 0.0
        %548 = vmatprep.mubr.f32.mxu0 0.0
        %549 = vmatmul.mubr.f32.gmra.mrb[0].mxu0 %v474
        %v550 = vpop.f32.mrb[0].mxu0
        %v551 = vadd.f32 0.0, %v550
        %v552 = vpop.f32.mrb[0].mxu0
        %v553 = vadd.f32 0.0, %v552
        %554 = vmatprep.mubr.f32.mxu0 0.0
        %555 = vmatmul.mubr.f32.gmra.mrb[0].mxu0 %v476
        %v556 = vpop.f32.mrb[0].mxu0
        %v557 = vadd.f32 0.0, %v556
        %v558 = vpop.f32.mrb[0].mxu0
        %v559 = vadd.f32 0.0, %v558
        %560 = vmatprep.mubr.f32.mxu0 0.0
        %561 = vmatmul.mubr.f32.gmra.mrb[0].mxu0 %v478
        %v562 = vpop.f32.mrb[0].mxu0
        %v563 = vadd.f32 0.0, %v562
        %v564 = vpop.f32.mrb[0].mxu0
        %v565 = vadd.f32 0.0, %v564
        %566 = vmatprep.mubr.f32.mxu0 0.0
        %567 = vmatmul.mubr.f32.gmra.mrb[0].mxu0 %v480
        %v568 = vpop.f32.mrb[0].mxu0
        %v569 = vadd.f32 0.0, %v568
        %v570 = vpop.f32.mrb[0].mxu0
        %v571 = vadd.f32 0.0, %v570
        %572 = vmatprep.mubr.f32.mxu0 0.0
        %573 = vmatmul.mubr.f32.gmra.mrb[0].mxu0 %v482
        %v574 = vpop.f32.mrb[0].mxu0
        %v575 = vadd.f32 0.0, %v574
        %v576 = vpop.f32.mrb[0].mxu0
        %v577 = vadd.f32 0.0, %v576
        %578 = vdwg.mxu0
        %579 = vmatprep.subr.mxu0 0.0
        %580 = vmatpush1.msra.mxu0 %v439
        %581 = vmatprep.subr.mxu0 0.0
        %582 = vmatpush1.msra.mxu0 %v442
        %583 = vmatprep.subr.mxu0 0.0
        %584 = vmatpush1.msra.mxu0 %v445
        %585 = vmatprep.subr.mxu0 0.0
        %586 = vmatpush1.msra.mxu0 %v448
        %587 = vmatprep.subr.mxu0 0.0
        %588 = vmatpush1.msra.mxu0 %v451
        %589 = vmatprep.subr.mxu0 0.0
        %590 = vmatpush1.msra.mxu0 %v454
        %591 = vmatprep.subr.mxu0 0.0
        %592 = vmatpush1.msra.mxu0 0.0
        %593 = vmatprep.subr.mxu0 0.0
        %594 = vmatpush1.msra.mxu0 0.0
        %595 = vmatprep.subr.mxu0 0.0
        %596 = vmatpush1.msra.mxu0 0.0
        %597 = vmatprep.subr.mxu0 0.0
        %598 = vmatpush1.msra.mxu0 0.0
        %599 = vmatprep.subr.mxu0 0.0
        %600 = vmatpush1.msra.mxu0 0.0
        %601 = vmatprep.subr.mxu0 0.0
        %602 = vmatpush1.msra.mxu0 0.0
        %603 = vmatprep.subr.mxu0 0.0
        %604 = vmatpush1.msra.mxu0 0.0
        %605 = vmatprep.subr.mxu0 0.0
        %606 = vmatpush1.msra.mxu0 0.0
        %607 = vmatprep.subr.mxu0 0.0
        %608 = vmatpush1.msra.mxu0 0.0
        %609 = vmatprep.subr.mxu0 0.0
        %610 = vmatpush1.msra.mxu0 0.0
        %611 = vmatprep.subr.mxu0 0.0
        %612 = vmatpush1.msra.mxu0 0.0
        %613 = vmatprep.subr.mxu0 0.0
        %614 = vmatpush1.msra.mxu0 0.0
        %615 = vmatprep.subr.mxu0 0.0
        %616 = vmatpush1.msra.mxu0 0.0
        %617 = vmatprep.subr.mxu0 0.0
        %618 = vmatpush1.msra.mxu0 0.0
        %619 = vmatprep.subr.mxu0 0.0
        %620 = vmatpush1.msra.mxu0 0.0
        %621 = vmatprep.subr.mxu0 0.0
        %622 = vmatpush1.msra.mxu0 0.0
        %623 = vmatprep.subr.mxu0 0.0
        %624 = vmatpush1.msra.mxu0 0.0
        %625 = vmatprep.subr.mxu0 0.0
        %626 = vmatpush1.msra.mxu0 0.0
        %627 = vmatprep.subr.mxu0 0.0
        %628 = vmatpush1.msra.mxu0 0.0
        %629 = vmatprep.subr.mxu0 0.0
        %630 = vmatpush1.msra.mxu0 0.0
        %631 = vmatprep.subr.mxu0 0.0
        %632 = vmatpush1.msra.mxu0 0.0
        %633 = vmatprep.subr.mxu0 0.0
        %634 = vmatpush1.msra.mxu0 0.0
        %635 = vmatprep.subr.mxu0 0.0
        %636 = vmatpush1.msra.mxu0 0.0
        %637 = vmatprep.subr.mxu0 0.0
        %638 = vmatpush1.msra.mxu0 0.0
        %639 = vmatprep.subr.mxu0 0.0
        %640 = vmatpush1.msra.mxu0 0.0
        %641 = vmatprep.subr.mxu0 0.0
        %642 = vmatpush1.msra.mxu0 0.0
        %643 = vmatprep.mubr.f32.mxu0 0.0
        %644 = vmatmul.mubr.f32.gmra.mrb[0].mxu0 %v474
        %v645 = vpop.f32.mrb[0].mxu0
        %v646 = vadd.f32 0.0, %v645
        %v647 = vpop.f32.mrb[0].mxu0
        %648 = vmatprep.mubr.f32.mxu0 0.0
        %649 = vmatmul.mubr.f32.gmra.mrb[0].mxu0 %v476
        %v650 = vpop.f32.mrb[0].mxu0
        %v651 = vadd.f32 0.0, %v650
        %v652 = vpop.f32.mrb[0].mxu0
        %653 = vmatprep.mubr.f32.mxu0 0.0
        %654 = vmatmul.mubr.f32.gmra.mrb[0].mxu0 %v478
        %v655 = vpop.f32.mrb[0].mxu0
        %v656 = vadd.f32 0.0, %v655
        %v657 = vpop.f32.mrb[0].mxu0
        %658 = vmatprep.mubr.f32.mxu0 0.0
        %659 = vmatmul.mubr.f32.gmra.mrb[0].mxu0 %v480
        %v660 = vpop.f32.mrb[0].mxu0
        %v661 = vadd.f32 0.0, %v660
        %v662 = vpop.f32.mrb[0].mxu0
        %663 = vmatprep.mubr.f32.mxu0 0.0
        %664 = vmatmul.mubr.f32.gmra.mrb[0].mxu0 %v482
        %v665 = vpop.f32.mrb[0].mxu0
        %v666 = vadd.f32 0.0, %v665
        %v667 = vpop.f32.mrb[0].mxu0
        %668 = vdwg.mxu0
        %v669 = vsel %vm473, %v412, 0
        %v671 = vsel %vm473, %v413, 0
        %v673 = vsel %vm473, %v414, 0
        %v675 = vsel %vm473, %v415, 0
        %v677 = vsel %vm473, %v416, 0
        %679 = vmatprep.subr.mxu0 %v419
        %680 = vmatpush1.msra.mxu0 %v418
        %681 = vmatprep.subr.mxu0 %v422
        %682 = vmatpush1.msra.mxu0 %v421
        %683 = vmatprep.subr.mxu0 %v425
        %684 = vmatpush1.msra.mxu0 %v424
        %685 = vmatprep.subr.mxu0 %v428
        %686 = vmatpush1.msra.mxu0 %v427
        %687 = vmatprep.subr.mxu0 %v431
        %688 = vmatpush1.msra.mxu0 %v430
        %689 = vmatprep.subr.mxu0 %v434
        %690 = vmatpush1.msra.mxu0 %v433
        %691 = vmatprep.subr.mxu0 0.0
        %692 = vmatpush1.msra.mxu0 0.0
        %693 = vmatprep.subr.mxu0 0.0
        %694 = vmatpush1.msra.mxu0 0.0
        %695 = vmatprep.subr.mxu0 0.0
        %696 = vmatpush1.msra.mxu0 0.0
        %697 = vmatprep.subr.mxu0 0.0
        %698 = vmatpush1.msra.mxu0 0.0
        %699 = vmatprep.subr.mxu0 0.0
        %700 = vmatpush1.msra.mxu0 0.0
        %701 = vmatprep.subr.mxu0 0.0
        %702 = vmatpush1.msra.mxu0 0.0
        %703 = vmatprep.subr.mxu0 0.0
        %704 = vmatpush1.msra.mxu0 0.0
        %705 = vmatprep.subr.mxu0 0.0
        %706 = vmatpush1.msra.mxu0 0.0
        %707 = vmatprep.subr.mxu0 0.0
        %708 = vmatpush1.msra.mxu0 0.0
        %709 = vmatprep.subr.mxu0 0.0
        %710 = vmatpush1.msra.mxu0 0.0
        %711 = vmatprep.subr.mxu0 0.0
        %712 = vmatpush1.msra.mxu0 0.0
        %713 = vmatprep.subr.mxu0 0.0
        %714 = vmatpush1.msra.mxu0 0.0
        %715 = vmatprep.subr.mxu0 0.0
        %716 = vmatpush1.msra.mxu0 0.0
        %717 = vmatprep.subr.mxu0 0.0
        %718 = vmatpush1.msra.mxu0 0.0
        %719 = vmatprep.subr.mxu0 0.0
        %720 = vmatpush1.msra.mxu0 0.0
        %721 = vmatprep.subr.mxu0 0.0
        %722 = vmatpush1.msra.mxu0 0.0
        %723 = vmatprep.subr.mxu0 0.0
        %724 = vmatpush1.msra.mxu0 0.0
        %725 = vmatprep.subr.mxu0 0.0
        %726 = vmatpush1.msra.mxu0 0.0
        %727 = vmatprep.subr.mxu0 0.0
        %728 = vmatpush1.msra.mxu0 0.0
        %729 = vmatprep.subr.mxu0 0.0
        %730 = vmatpush1.msra.mxu0 0.0
        %731 = vmatprep.subr.mxu0 0.0
        %732 = vmatpush1.msra.mxu0 0.0
        %733 = vmatprep.subr.mxu0 0.0
        %734 = vmatpush1.msra.mxu0 0.0
        %735 = vmatprep.subr.mxu0 0.0
        %736 = vmatpush1.msra.mxu0 0.0
        %737 = vmatprep.subr.mxu0 0.0
        %738 = vmatpush1.msra.mxu0 0.0
        %739 = vmatprep.subr.mxu0 0.0
        %740 = vmatpush1.msra.mxu0 0.0
        %741 = vmatprep.subr.mxu0 0.0
        %742 = vmatpush1.msra.mxu0 0.0
        %743 = vmatprep.mubr.f32.mxu0 0.0
        %744 = vmatmul.mubr.f32.gmra.mrb[0].mxu0 %v669
        %v745 = vpop.f32.mrb[0].mxu0
        %v746 = vadd.f32 %v551, %v745
        %v747 = vpop.f32.mrb[0].mxu0
        %v748 = vadd.f32 %v553, %v747
        %749 = vmatprep.mubr.f32.mxu0 0.0
        %750 = vmatmul.mubr.f32.gmra.mrb[0].mxu0 %v671
        %v751 = vpop.f32.mrb[0].mxu0
        %v752 = vadd.f32 %v557, %v751
        %v753 = vpop.f32.mrb[0].mxu0
        %v754 = vadd.f32 %v559, %v753
        %755 = vmatprep.mubr.f32.mxu0 0.0
        %756 = vmatmul.mubr.f32.gmra.mrb[0].mxu0 %v673
        %v757 = vpop.f32.mrb[0].mxu0
        %v758 = vadd.f32 %v563, %v757
        %v759 = vpop.f32.mrb[0].mxu0
        %v760 = vadd.f32 %v565, %v759
        %761 = vmatprep.mubr.f32.mxu0 0.0
        %762 = vmatmul.mubr.f32.gmra.mrb[0].mxu0 %v675
        %v763 = vpop.f32.mrb[0].mxu0
        %v764 = vadd.f32 %v569, %v763
        %v765 = vpop.f32.mrb[0].mxu0
        %v766 = vadd.f32 %v571, %v765
        %767 = vmatprep.mubr.f32.mxu0 0.0
        %768 = vmatmul.mubr.f32.gmra.mrb[0].mxu0 %v677
        %v769 = vpop.f32.mrb[0].mxu0
        %v770 = vadd.f32 %v575, %v769
        %v771 = vpop.f32.mrb[0].mxu0
        %v772 = vadd.f32 %v577, %v771
        %773 = vdwg.mxu0
        %774 = vmatprep.subr.mxu0 0.0
        %775 = vmatpush1.msra.mxu0 %v420
        %776 = vmatprep.subr.mxu0 0.0
        %777 = vmatpush1.msra.mxu0 %v423
        %778 = vmatprep.subr.mxu0 0.0
        %779 = vmatpush1.msra.mxu0 %v426
        %780 = vmatprep.subr.mxu0 0.0
        %781 = vmatpush1.msra.mxu0 %v429
        %782 = vmatprep.subr.mxu0 0.0
        %783 = vmatpush1.msra.mxu0 %v432
        %784 = vmatprep.subr.mxu0 0.0
        %785 = vmatpush1.msra.mxu0 %v435
        %786 = vmatprep.subr.mxu0 0.0
        %787 = vmatpush1.msra.mxu0 0.0
        %788 = vmatprep.subr.mxu0 0.0
        %789 = vmatpush1.msra.mxu0 0.0
        %790 = vmatprep.subr.mxu0 0.0
        %791 = vmatpush1.msra.mxu0 0.0
        %792 = vmatprep.subr.mxu0 0.0
        %793 = vmatpush1.msra.mxu0 0.0
        %794 = vmatprep.subr.mxu0 0.0
        %795 = vmatpush1.msra.mxu0 0.0
        %796 = vmatprep.subr.mxu0 0.0
        %797 = vmatpush1.msra.mxu0 0.0
        %798 = vmatprep.subr.mxu0 0.0
        %799 = vmatpush1.msra.mxu0 0.0
        %800 = vmatprep.subr.mxu0 0.0
        %801 = vmatpush1.msra.mxu0 0.0
        %802 = vmatprep.subr.mxu0 0.0
        %803 = vmatpush1.msra.mxu0 0.0
        %804 = vmatprep.subr.mxu0 0.0
        %805 = vmatpush1.msra.mxu0 0.0
        %806 = vmatprep.subr.mxu0 0.0
        %807 = vmatpush1.msra.mxu0 0.0
        %808 = vmatprep.subr.mxu0 0.0
        %809 = vmatpush1.msra.mxu0 0.0
        %810 = vmatprep.subr.mxu0 0.0
        %811 = vmatpush1.msra.mxu0 0.0
        %812 = vmatprep.subr.mxu0 0.0
        %813 = vmatpush1.msra.mxu0 0.0
        %814 = vmatprep.subr.mxu0 0.0
        %815 = vmatpush1.msra.mxu0 0.0
        %816 = vmatprep.subr.mxu0 0.0
        %817 = vmatpush1.msra.mxu0 0.0
        %818 = vmatprep.subr.mxu0 0.0
        %819 = vmatpush1.msra.mxu0 0.0
        %820 = vmatprep.subr.mxu0 0.0
        %821 = vmatpush1.msra.mxu0 0.0
        %822 = vmatprep.subr.mxu0 0.0
        %823 = vmatpush1.msra.mxu0 0.0
        %824 = vmatprep.subr.mxu0 0.0
        %825 = vmatpush1.msra.mxu0 0.0
        %826 = vmatprep.subr.mxu0 0.0
        %827 = vmatpush1.msra.mxu0 0.0
        %828 = vmatprep.subr.mxu0 0.0
        %829 = vmatpush1.msra.mxu0 0.0
        %830 = vmatprep.subr.mxu0 0.0
        %831 = vmatpush1.msra.mxu0 0.0
        %832 = vmatprep.subr.mxu0 0.0
        %833 = vmatpush1.msra.mxu0 0.0
        %834 = vmatprep.subr.mxu0 0.0
        %835 = vmatpush1.msra.mxu0 0.0
        %836 = vmatprep.subr.mxu0 0.0
        %837 = vmatpush1.msra.mxu0 0.0
        %838 = vmatprep.mubr.f32.mxu0 0.0
        %839 = vmatmul.mubr.f32.gmra.mrb[0].mxu0 %v669
        %v840 = vpop.f32.mrb[0].mxu0
        %v841 = vadd.f32 %v646, %v840
        %v842 = vpop.f32.mrb[0].mxu0
        %843 = vmatprep.mubr.f32.mxu0 0.0
        %844 = vmatmul.mubr.f32.gmra.mrb[0].mxu0 %v671
        %v845 = vpop.f32.mrb[0].mxu0
        %v846 = vadd.f32 %v651, %v845
        %v847 = vpop.f32.mrb[0].mxu0
        %848 = vmatprep.mubr.f32.mxu0 0.0
        %849 = vmatmul.mubr.f32.gmra.mrb[0].mxu0 %v673
        %v850 = vpop.f32.mrb[0].mxu0
        %v851 = vadd.f32 %v656, %v850
        %v852 = vpop.f32.mrb[0].mxu0
        %853 = vmatprep.mubr.f32.mxu0 0.0
        %854 = vmatmul.mubr.f32.gmra.mrb[0].mxu0 %v675
        %v855 = vpop.f32.mrb[0].mxu0
        %v856 = vadd.f32 %v661, %v855
        %v857 = vpop.f32.mrb[0].mxu0
        %858 = vmatprep.mubr.f32.mxu0 0.0
        %859 = vmatmul.mubr.f32.gmra.mrb[0].mxu0 %v677
        %v860 = vpop.f32.mrb[0].mxu0
        %v861 = vadd.f32 %v666, %v860
        %v862 = vpop.f32.mrb[0].mxu0
        %863 = vdwg.mxu0
        %s864 = scalar_lea.vmem %s1, 288
        %v865 = vld [vmem:[%s864] sm:$0xff]
        %v866 = vld [vmem:[%s864 + $0x8] sm:$0xff]
        %v867 = vld [vmem:[%s864 + $0x10] sm:$0xff]
        %v868 = vld [vmem:[%s864 + $0x18] sm:$0xff]
        %v869 = vld [vmem:[%s864 + $0x20] sm:$0xff]
        %v870 = vld [vmem:[%s864 + $0x28] sm:$0xff]
        %v871 = vld [vmem:[%s864 + $0x30] sm:$0xff]
        %v872 = vld [vmem:[%s864 + $0x38] sm:$0xff]
        %v873 = vld [vmem:[%s864 + $0x40] sm:$0xff]
        %v874 = vld [vmem:[%s864 + $0x48] sm:$0xff]
        %v875 = vld [vmem:[%s864 + $0x50] sm:$0xff]
        %v876 = vld [vmem:[%s864 + $0x58] sm:$0xff]
        %v877 = vld [vmem:[%s864 + $0x60] sm:$0xff]
        %v878 = vld [vmem:[%s864 + $0x68] sm:$0xff]
        %v879 = vld [vmem:[%s864 + $0x70] sm:$0xff]
        %v880 = vld [vmem:[%s864 + $0x78] sm:$0xff]
        %v881 = vld [vmem:[%s864 + $0x80] sm:$0xff]
        %v882 = vld [vmem:[%s864 + $0x88] sm:$0xff]
        %vm883 = vcmask 1045504
        %v884 = vrot.slane %v412, 2
        %v885 = vrot.slane %v413, 2
        %v886 = vsel %vm883, %v884, %v885
        %v887 = vrot.slane %v414, 2
        %v888 = vsel %vm883, %v885, %v887
        %v889 = vrot.slane %v415, 2
        %v890 = vsel %vm883, %v887, %v889
        %v891 = vrot.slane %v416, 2
        %v892 = vsel %vm883, %v889, %v891
        %v893 = vrot.slane %v417, 2
        %v894 = vsel %vm883, %v891, %v893
        %v895 = vsel %vm473, %v886, 0
        %v897 = vsel %vm473, %v888, 0
        %v899 = vsel %vm473, %v890, 0
        %v901 = vsel %vm473, %v892, 0
        %v903 = vsel %vm473, %v894, 0
        %905 = vmatprep.subr.mxu0 %v866
        %906 = vmatpush1.msra.mxu0 %v865
        %907 = vmatprep.subr.mxu0 %v869
        %908 = vmatpush1.msra.mxu0 %v868
        %909 = vmatprep.subr.mxu0 %v872
        %910 = vmatpush1.msra.mxu0 %v871
        %911 = vmatprep.subr.mxu0 %v875
        %912 = vmatpush1.msra.mxu0 %v874
        %913 = vmatprep.subr.mxu0 %v878
        %914 = vmatpush1.msra.mxu0 %v877
        %915 = vmatprep.subr.mxu0 %v881
        %916 = vmatpush1.msra.mxu0 %v880
        %917 = vmatprep.subr.mxu0 0.0
        %918 = vmatpush1.msra.mxu0 0.0
        %919 = vmatprep.subr.mxu0 0.0
        %920 = vmatpush1.msra.mxu0 0.0
        %921 = vmatprep.subr.mxu0 0.0
        %922 = vmatpush1.msra.mxu0 0.0
        %923 = vmatprep.subr.mxu0 0.0
        %924 = vmatpush1.msra.mxu0 0.0
        %925 = vmatprep.subr.mxu0 0.0
        %926 = vmatpush1.msra.mxu0 0.0
        %927 = vmatprep.subr.mxu0 0.0
        %928 = vmatpush1.msra.mxu0 0.0
        %929 = vmatprep.subr.mxu0 0.0
        %930 = vmatpush1.msra.mxu0 0.0
        %931 = vmatprep.subr.mxu0 0.0
        %932 = vmatpush1.msra.mxu0 0.0
        %933 = vmatprep.subr.mxu0 0.0
        %934 = vmatpush1.msra.mxu0 0.0
        %935 = vmatprep.subr.mxu0 0.0
        %936 = vmatpush1.msra.mxu0 0.0
        %937 = vmatprep.subr.mxu0 0.0
        %938 = vmatpush1.msra.mxu0 0.0
        %939 = vmatprep.subr.mxu0 0.0
        %940 = vmatpush1.msra.mxu0 0.0
        %941 = vmatprep.subr.mxu0 0.0
        %942 = vmatpush1.msra.mxu0 0.0
        %943 = vmatprep.subr.mxu0 0.0
        %944 = vmatpush1.msra.mxu0 0.0
        %945 = vmatprep.subr.mxu0 0.0
        %946 = vmatpush1.msra.mxu0 0.0
        %947 = vmatprep.subr.mxu0 0.0
        %948 = vmatpush1.msra.mxu0 0.0
        %949 = vmatprep.subr.mxu0 0.0
        %950 = vmatpush1.msra.mxu0 0.0
        %951 = vmatprep.subr.mxu0 0.0
        %952 = vmatpush1.msra.mxu0 0.0
        %953 = vmatprep.subr.mxu0 0.0
        %954 = vmatpush1.msra.mxu0 0.0
        %955 = vmatprep.subr.mxu0 0.0
        %956 = vmatpush1.msra.mxu0 0.0
        %957 = vmatprep.subr.mxu0 0.0
        %958 = vmatpush1.msra.mxu0 0.0
        %959 = vmatprep.subr.mxu0 0.0
        %960 = vmatpush1.msra.mxu0 0.0
        %961 = vmatprep.subr.mxu0 0.0
        %962 = vmatpush1.msra.mxu0 0.0
        %963 = vmatprep.subr.mxu0 0.0
        %964 = vmatpush1.msra.mxu0 0.0
        %965 = vmatprep.subr.mxu0 0.0
        %966 = vmatpush1.msra.mxu0 0.0
        %967 = vmatprep.subr.mxu0 0.0
        %968 = vmatpush1.msra.mxu0 0.0
        %969 = vmatprep.mubr.f32.mxu0 0.0
        %970 = vmatmul.mubr.f32.gmra.mrb[0].mxu0 %v895
        %v971 = vpop.f32.mrb[0].mxu0
        %v972 = vadd.f32 0.0, %v971
        %v973 = vpop.f32.mrb[0].mxu0
        %v974 = vadd.f32 0.0, %v973
        %975 = vmatprep.mubr.f32.mxu0 0.0
        %976 = vmatmul.mubr.f32.gmra.mrb[0].mxu0 %v897
        %v977 = vpop.f32.mrb[0].mxu0
        %v978 = vadd.f32 0.0, %v977
        %v979 = vpop.f32.mrb[0].mxu0
        %v980 = vadd.f32 0.0, %v979
        %981 = vmatprep.mubr.f32.mxu0 0.0
        %982 = vmatmul.mubr.f32.gmra.mrb[0].mxu0 %v899
        %v983 = vpop.f32.mrb[0].mxu0
        %v984 = vadd.f32 0.0, %v983
        %v985 = vpop.f32.mrb[0].mxu0
        %v986 = vadd.f32 0.0, %v985
        %987 = vmatprep.mubr.f32.mxu0 0.0
        %988 = vmatmul.mubr.f32.gmra.mrb[0].mxu0 %v901
        %v989 = vpop.f32.mrb[0].mxu0
        %v990 = vadd.f32 0.0, %v989
        %v991 = vpop.f32.mrb[0].mxu0
        %v992 = vadd.f32 0.0, %v991
        %993 = vmatprep.mubr.f32.mxu0 0.0
        %994 = vmatmul.mubr.f32.gmra.mrb[0].mxu0 %v903
        %v995 = vpop.f32.mrb[0].mxu0
        %v996 = vadd.f32 0.0, %v995
        %v997 = vpop.f32.mrb[0].mxu0
        %v998 = vadd.f32 0.0, %v997
        %999 = vdwg.mxu0
        %1000 = vmatprep.subr.mxu0 0.0
        %1001 = vmatpush1.msra.mxu0 %v867
        %1002 = vmatprep.subr.mxu0 0.0
        %1003 = vmatpush1.msra.mxu0 %v870
        %1004 = vmatprep.subr.mxu0 0.0
        %1005 = vmatpush1.msra.mxu0 %v873
        %1006 = vmatprep.subr.mxu0 0.0
        %1007 = vmatpush1.msra.mxu0 %v876
        %1008 = vmatprep.subr.mxu0 0.0
        %1009 = vmatpush1.msra.mxu0 %v879
        %1010 = vmatprep.subr.mxu0 0.0
        %1011 = vmatpush1.msra.mxu0 %v882
        %1012 = vmatprep.subr.mxu0 0.0
        %1013 = vmatpush1.msra.mxu0 0.0
        %1014 = vmatprep.subr.mxu0 0.0
        %1015 = vmatpush1.msra.mxu0 0.0
        %1016 = vmatprep.subr.mxu0 0.0
        %1017 = vmatpush1.msra.mxu0 0.0
        %1018 = vmatprep.subr.mxu0 0.0
        %1019 = vmatpush1.msra.mxu0 0.0
        %1020 = vmatprep.subr.mxu0 0.0
        %1021 = vmatpush1.msra.mxu0 0.0
        %1022 = vmatprep.subr.mxu0 0.0
        %1023 = vmatpush1.msra.mxu0 0.0
        %1024 = vmatprep.subr.mxu0 0.0
        %1025 = vmatpush1.msra.mxu0 0.0
        %1026 = vmatprep.subr.mxu0 0.0
        %1027 = vmatpush1.msra.mxu0 0.0
        %1028 = vmatprep.subr.mxu0 0.0
        %1029 = vmatpush1.msra.mxu0 0.0
        %1030 = vmatprep.subr.mxu0 0.0
        %1031 = vmatpush1.msra.mxu0 0.0
        %1032 = vmatprep.subr.mxu0 0.0
        %1033 = vmatpush1.msra.mxu0 0.0
        %1034 = vmatprep.subr.mxu0 0.0
        %1035 = vmatpush1.msra.mxu0 0.0
        %1036 = vmatprep.subr.mxu0 0.0
        %1037 = vmatpush1.msra.mxu0 0.0
        %1038 = vmatprep.subr.mxu0 0.0
        %1039 = vmatpush1.msra.mxu0 0.0
        %1040 = vmatprep.subr.mxu0 0.0
        %1041 = vmatpush1.msra.mxu0 0.0
        %1042 = vmatprep.subr.mxu0 0.0
        %1043 = vmatpush1.msra.mxu0 0.0
        %1044 = vmatprep.subr.mxu0 0.0
        %1045 = vmatpush1.msra.mxu0 0.0
        %1046 = vmatprep.subr.mxu0 0.0
        %1047 = vmatpush1.msra.mxu0 0.0
        %1048 = vmatprep.subr.mxu0 0.0
        %1049 = vmatpush1.msra.mxu0 0.0
        %1050 = vmatprep.subr.mxu0 0.0
        %1051 = vmatpush1.msra.mxu0 0.0
        %1052 = vmatprep.subr.mxu0 0.0
        %1053 = vmatpush1.msra.mxu0 0.0
        %1054 = vmatprep.subr.mxu0 0.0
        %1055 = vmatpush1.msra.mxu0 0.0
        %1056 = vmatprep.subr.mxu0 0.0
        %1057 = vmatpush1.msra.mxu0 0.0
        %1058 = vmatprep.subr.mxu0 0.0
        %1059 = vmatpush1.msra.mxu0 0.0
        %1060 = vmatprep.subr.mxu0 0.0
        %1061 = vmatpush1.msra.mxu0 0.0
        %1062 = vmatprep.subr.mxu0 0.0
        %1063 = vmatpush1.msra.mxu0 0.0
        %1064 = vmatprep.mubr.f32.mxu0 0.0
        %1065 = vmatmul.mubr.f32.gmra.mrb[0].mxu0 %v895
        %v1066 = vpop.f32.mrb[0].mxu0
        %v1067 = vadd.f32 0.0, %v1066
        %v1068 = vpop.f32.mrb[0].mxu0
        %1069 = vmatprep.mubr.f32.mxu0 0.0
        %1070 = vmatmul.mubr.f32.gmra.mrb[0].mxu0 %v897
        %v1071 = vpop.f32.mrb[0].mxu0
        %v1072 = vadd.f32 0.0, %v1071
        %v1073 = vpop.f32.mrb[0].mxu0
        %1074 = vmatprep.mubr.f32.mxu0 0.0
        %1075 = vmatmul.mubr.f32.gmra.mrb[0].mxu0 %v899
        %v1076 = vpop.f32.mrb[0].mxu0
        %v1077 = vadd.f32 0.0, %v1076
        %v1078 = vpop.f32.mrb[0].mxu0
        %1079 = vmatprep.mubr.f32.mxu0 0.0
        %1080 = vmatmul.mubr.f32.gmra.mrb[0].mxu0 %v901
        %v1081 = vpop.f32.mrb[0].mxu0
        %v1082 = vadd.f32 0.0, %v1081
        %v1083 = vpop.f32.mrb[0].mxu0
        %1084 = vmatprep.mubr.f32.mxu0 0.0
        %1085 = vmatmul.mubr.f32.gmra.mrb[0].mxu0 %v903
        %v1086 = vpop.f32.mrb[0].mxu0
        %v1087 = vadd.f32 0.0, %v1086
        %v1088 = vpop.f32.mrb[0].mxu0
        %1089 = vdwg.mxu0
        %v1090 = vadd.f32 %v746, %v972
        %v1091 = vadd.f32 %v748, %v974
        %v1092 = vadd.f32 %v841, %v1067
        %v1093 = vadd.f32 %v752, %v978
        %v1094 = vadd.f32 %v754, %v980
        %v1095 = vadd.f32 %v846, %v1072
        %v1096 = vadd.f32 %v758, %v984
        %v1097 = vadd.f32 %v760, %v986
        %v1098 = vadd.f32 %v851, %v1077
        %v1099 = vadd.f32 %v764, %v990
        %v1100 = vadd.f32 %v766, %v992
        %v1101 = vadd.f32 %v856, %v1082
        %v1102 = vadd.f32 %v770, %v996
        %v1103 = vadd.f32 %v772, %v998
        %v1104 = vadd.f32 %v861, %v1087
        %1120 = vrot.lane.b32.xlu0 %v1090, 127
        %v1121 = vpop.permute.xlu0 %1120
        %1122 = vrot.lane.b32.xlu0 %v1091, 127
        %v1123 = vpop.permute.xlu0 %1122
        %1124 = vrot.lane.b32.xlu0 %v1092, 127
        %v1125 = vpop.permute.xlu0 %1124
        %1126 = vrot.lane.b32.xlu0 %v1093, 127
        %v1127 = vpop.permute.xlu0 %1126
        %1128 = vrot.lane.b32.xlu0 %v1094, 127
        %v1129 = vpop.permute.xlu0 %1128
        %1130 = vrot.lane.b32.xlu0 %v1095, 127
        %v1131 = vpop.permute.xlu0 %1130
        %1132 = vrot.lane.b32.xlu0 %v1096, 127
        %v1133 = vpop.permute.xlu0 %1132
        %1134 = vrot.lane.b32.xlu0 %v1097, 127
        %v1135 = vpop.permute.xlu0 %1134
        %1136 = vrot.lane.b32.xlu0 %v1098, 127
        %v1137 = vpop.permute.xlu0 %1136
        %1138 = vrot.lane.b32.xlu0 %v1099, 127
        %v1139 = vpop.permute.xlu0 %1138
        %1140 = vrot.lane.b32.xlu0 %v1100, 127
        %v1141 = vpop.permute.xlu0 %1140
        %1142 = vrot.lane.b32.xlu0 %v1101, 127
        %v1143 = vpop.permute.xlu0 %1142
        %1144 = vrot.lane.b32.xlu0 %v1102, 127
        %v1145 = vpop.permute.xlu0 %1144
        %1146 = vrot.lane.b32.xlu0 %v1103, 127
        %v1147 = vpop.permute.xlu0 %1146
        %1148 = vrot.lane.b32.xlu0 %v1104, 127
        %v1149 = vpop.permute.xlu0 %1148
        %vm1150 = vcmask 1039360
        %v1151 = vsel %vm1150, %v1121, %v1123
        %v1152 = vsel %vm1150, %v1123, %v1125
        %v1153 = vsel %vm1150, %v1127, %v1129
        %v1154 = vsel %vm1150, %v1129, %v1131
        %v1155 = vsel %vm1150, %v1133, %v1135
        %v1156 = vsel %vm1150, %v1135, %v1137
        %v1157 = vsel %vm1150, %v1139, %v1141
        %v1158 = vsel %vm1150, %v1141, %v1143
        %v1159 = vsel %vm1150, %v1145, %v1147
        %v1160 = vsel %vm1150, %v1147, %v1149
        %v1176 = vmax.f32 %v1090, %v1151
        %v1177 = vmax.f32 %v1091, %v1152
        %v1178 = vmax.f32 %v1092, %v1125
        %v1179 = vmax.f32 %v1093, %v1153
        %v1180 = vmax.f32 %v1094, %v1154
        %v1181 = vmax.f32 %v1095, %v1131
        %v1182 = vmax.f32 %v1096, %v1155
        %v1183 = vmax.f32 %v1097, %v1156
        %v1184 = vmax.f32 %v1098, %v1137
        %v1185 = vmax.f32 %v1099, %v1157
        %v1186 = vmax.f32 %v1100, %v1158
        %v1187 = vmax.f32 %v1101, %v1143
        %v1188 = vmax.f32 %v1102, %v1159
        %v1189 = vmax.f32 %v1103, %v1160
        %v1190 = vmax.f32 %v1104, %v1149
        %1191 = vrot.lane.b32.xlu0 %v1090, 126
        %v1192 = vpop.permute.xlu0 %1191
        %1193 = vrot.lane.b32.xlu0 %v1091, 126
        %v1194 = vpop.permute.xlu0 %1193
        %1195 = vrot.lane.b32.xlu0 %v1092, 126
        %v1196 = vpop.permute.xlu0 %1195
        %1197 = vrot.lane.b32.xlu0 %v1093, 126
        %v1198 = vpop.permute.xlu0 %1197
        %1199 = vrot.lane.b32.xlu0 %v1094, 126
        %v1200 = vpop.permute.xlu0 %1199
        %1201 = vrot.lane.b32.xlu0 %v1095, 126
        %v1202 = vpop.permute.xlu0 %1201
        %1203 = vrot.lane.b32.xlu0 %v1096, 126
        %v1204 = vpop.permute.xlu0 %1203
        %1205 = vrot.lane.b32.xlu0 %v1097, 126
        %v1206 = vpop.permute.xlu0 %1205
        %1207 = vrot.lane.b32.xlu0 %v1098, 126
        %v1208 = vpop.permute.xlu0 %1207
        %1209 = vrot.lane.b32.xlu0 %v1099, 126
        %v1210 = vpop.permute.xlu0 %1209
        %1211 = vrot.lane.b32.xlu0 %v1100, 126
        %v1212 = vpop.permute.xlu0 %1211
        %1213 = vrot.lane.b32.xlu0 %v1101, 126
        %v1214 = vpop.permute.xlu0 %1213
        %1215 = vrot.lane.b32.xlu0 %v1102, 126
        %v1216 = vpop.permute.xlu0 %1215
        %1217 = vrot.lane.b32.xlu0 %v1103, 126
        %v1218 = vpop.permute.xlu0 %1217
        %1219 = vrot.lane.b32.xlu0 %v1104, 126
        %v1220 = vpop.permute.xlu0 %1219
        %vm1221 = vcmask 1031168
        %v1222 = vsel %vm1221, %v1192, %v1194
        %v1223 = vsel %vm1221, %v1194, %v1196
        %v1224 = vsel %vm1221, %v1198, %v1200
        %v1225 = vsel %vm1221, %v1200, %v1202
        %v1226 = vsel %vm1221, %v1204, %v1206
        %v1227 = vsel %vm1221, %v1206, %v1208
        %v1228 = vsel %vm1221, %v1210, %v1212
        %v1229 = vsel %vm1221, %v1212, %v1214
        %v1230 = vsel %vm1221, %v1216, %v1218
        %v1231 = vsel %vm1221, %v1218, %v1220
        %v1247 = vmax.f32 %v1176, %v1222
        %v1248 = vmax.f32 %v1177, %v1223
        %v1249 = vmax.f32 %v1178, %v1196
        %v1250 = vmax.f32 %v1179, %v1224
        %v1251 = vmax.f32 %v1180, %v1225
        %v1252 = vmax.f32 %v1181, %v1202
        %v1253 = vmax.f32 %v1182, %v1226
        %v1254 = vmax.f32 %v1183, %v1227
        %v1255 = vmax.f32 %v1184, %v1208
        %v1256 = vmax.f32 %v1185, %v1228
        %v1257 = vmax.f32 %v1186, %v1229
        %v1258 = vmax.f32 %v1187, %v1214
        %v1259 = vmax.f32 %v1188, %v1230
        %v1260 = vmax.f32 %v1189, %v1231
        %v1261 = vmax.f32 %v1190, %v1220
        %v1277 = vrot.slane %v1247, 1
        %v1278 = vrot.slane %v1250, 1
        %v1279 = vsel %vm461, %v1277, %v1278
        %v1280 = vrot.slane %v1248, 1
        %v1281 = vrot.slane %v1251, 1
        %v1282 = vsel %vm461, %v1280, %v1281
        %v1283 = vrot.slane %v1249, 1
        %v1284 = vrot.slane %v1252, 1
        %v1285 = vsel %vm461, %v1283, %v1284
        %v1286 = vrot.slane %v1253, 1
        %v1287 = vsel %vm461, %v1278, %v1286
        %v1288 = vrot.slane %v1254, 1
        %v1289 = vsel %vm461, %v1281, %v1288
        %v1290 = vrot.slane %v1255, 1
        %v1291 = vsel %vm461, %v1284, %v1290
        %v1292 = vrot.slane %v1256, 1
        %v1293 = vsel %vm461, %v1286, %v1292
        %v1294 = vrot.slane %v1257, 1
        %v1295 = vsel %vm461, %v1288, %v1294
        %v1296 = vrot.slane %v1258, 1
        %v1297 = vsel %vm461, %v1290, %v1296
        %v1298 = vrot.slane %v1259, 1
        %v1299 = vsel %vm461, %v1292, %v1298
        %v1300 = vrot.slane %v1260, 1
        %v1301 = vsel %vm461, %v1294, %v1300
        %v1302 = vrot.slane %v1261, 1
        %v1303 = vsel %vm461, %v1296, %v1302
        %v1319 = vmax.f32 %v1247, %v1279
        %v1320 = vmax.f32 %v1248, %v1282
        %v1321 = vmax.f32 %v1249, %v1285
        %v1322 = vmax.f32 %v1250, %v1287
        %v1323 = vmax.f32 %v1251, %v1289
        %v1324 = vmax.f32 %v1252, %v1291
        %v1325 = vmax.f32 %v1253, %v1293
        %v1326 = vmax.f32 %v1254, %v1295
        %v1327 = vmax.f32 %v1255, %v1297
        %v1328 = vmax.f32 %v1256, %v1299
        %v1329 = vmax.f32 %v1257, %v1301
        %v1330 = vmax.f32 %v1258, %v1303
        %v1331 = vmax.f32 %v1259, %v1298
        %v1332 = vmax.f32 %v1260, %v1300
        %v1333 = vmax.f32 %v1261, %v1302
        %v1334 = vrot.slane %v1247, 2
        %v1335 = vrot.slane %v1250, 2
        %v1336 = vsel %vm883, %v1334, %v1335
        %v1337 = vrot.slane %v1248, 2
        %v1338 = vrot.slane %v1251, 2
        %v1339 = vsel %vm883, %v1337, %v1338
        %v1340 = vrot.slane %v1249, 2
        %v1341 = vrot.slane %v1252, 2
        %v1342 = vsel %vm883, %v1340, %v1341
        %v1343 = vrot.slane %v1253, 2
        %v1344 = vsel %vm883, %v1335, %v1343
        %v1345 = vrot.slane %v1254, 2
        %v1346 = vsel %vm883, %v1338, %v1345
        %v1347 = vrot.slane %v1255, 2
        %v1348 = vsel %vm883, %v1341, %v1347
        %v1349 = vrot.slane %v1256, 2
        %v1350 = vsel %vm883, %v1343, %v1349
        %v1351 = vrot.slane %v1257, 2
        %v1352 = vsel %vm883, %v1345, %v1351
        %v1353 = vrot.slane %v1258, 2
        %v1354 = vsel %vm883, %v1347, %v1353
        %v1355 = vrot.slane %v1259, 2
        %v1356 = vsel %vm883, %v1349, %v1355
        %v1357 = vrot.slane %v1260, 2
        %v1358 = vsel %vm883, %v1351, %v1357
        %v1359 = vrot.slane %v1261, 2
        %v1360 = vsel %vm883, %v1353, %v1359
        %v1376 = vmax.f32 %v1319, %v1336
        %v1377 = vmax.f32 %v1320, %v1339
        %v1378 = vmax.f32 %v1321, %v1342
        %v1379 = vmax.f32 %v1322, %v1344
        %v1380 = vmax.f32 %v1323, %v1346
        %v1381 = vmax.f32 %v1324, %v1348
        %v1382 = vmax.f32 %v1325, %v1350
        %v1383 = vmax.f32 %v1326, %v1352
        %v1384 = vmax.f32 %v1327, %v1354
        %v1385 = vmax.f32 %v1328, %v1356
        %v1386 = vmax.f32 %v1329, %v1358
        %v1387 = vmax.f32 %v1330, %v1360
        %v1388 = vmax.f32 %v1331, %v1355
        %v1389 = vmax.f32 %v1332, %v1357
        %v1390 = vmax.f32 %v1333, %v1359
        %v1391 = vld [vmem:[%s5] ss:$2 sm:$0x7]
        %v1393 = vlaneseq
        %v1394 = vshrl.u32 %v1393, 7
        %v1395 = vsub.s32 0, %v1394
        %v1396 = vrot.slane %v1391, %v1395
        %v1397 = vlaneseq
        %v1398 = vshrl.u32 %v1397, 7
        %v1399 = vsub.s32 1, %v1398
        %v1400 = vrot.slane %v1391, %v1399
        %v1401 = vlaneseq
        %v1402 = vshrl.u32 %v1401, 7
        %v1403 = vsub.s32 2, %v1402
        %v1404 = vrot.slane %v1391, %v1403
        %v1408 = vmul.f32 %v1376, %v1396
        %v1409 = vmul.f32 %v1377, %v1400
        %v1410 = vmul.f32 %v1378, %v1404
        %v1411 = vmul.f32 %v1379, %v1396
        %v1412 = vmul.f32 %v1380, %v1400
        %v1413 = vmul.f32 %v1381, %v1404
        %v1414 = vmul.f32 %v1382, %v1396
        %v1415 = vmul.f32 %v1383, %v1400
        %v1416 = vmul.f32 %v1384, %v1404
        %v1417 = vmul.f32 %v1385, %v1396
        %v1418 = vmul.f32 %v1386, %v1400
        %v1419 = vmul.f32 %v1387, %v1404
        %v1420 = vmul.f32 %v1388, %v1396
        %v1421 = vmul.f32 %v1389, %v1400
        %v1422 = vmul.f32 %v1390, %v1404
        %s1423 = scalar_lea.vmem %s5, 1
        %v1424 = vld [vmem:[%s1423] ss:$2 sm:$0x7]
        %v1426 = vlaneseq
        %v1427 = vshrl.u32 %v1426, 7
        %v1428 = vsub.s32 0, %v1427
        %v1429 = vrot.slane %v1424, %v1428
        %v1430 = vlaneseq
        %v1431 = vshrl.u32 %v1430, 7
        %v1432 = vsub.s32 1, %v1431
        %v1433 = vrot.slane %v1424, %v1432
        %v1434 = vlaneseq
        %v1435 = vshrl.u32 %v1434, 7
        %v1436 = vsub.s32 2, %v1435
        %v1437 = vrot.slane %v1424, %v1436
        %v1441 = vadd.f32 %v1408, %v1429
        %v1442 = vadd.f32 %v1409, %v1433
        %v1443 = vadd.f32 %v1410, %v1437
        %v1444 = vadd.f32 %v1411, %v1429
        %v1445 = vadd.f32 %v1412, %v1433
        %v1446 = vadd.f32 %v1413, %v1437
        %v1447 = vadd.f32 %v1414, %v1429
        %v1448 = vadd.f32 %v1415, %v1433
        %v1449 = vadd.f32 %v1416, %v1437
        %v1450 = vadd.f32 %v1417, %v1429
        %v1451 = vadd.f32 %v1418, %v1433
        %v1452 = vadd.f32 %v1419, %v1437
        %v1453 = vadd.f32 %v1420, %v1429
        %v1454 = vadd.f32 %v1421, %v1433
        %v1455 = vadd.f32 %v1422, %v1437
        %v1456 = vmax.f32 %v1441, 0.0
        %v1457 = vmax.f32 %v1442, 0.0
        %v1458 = vmax.f32 %v1443, 0.0
        %v1459 = vmax.f32 %v1444, 0.0
        %v1460 = vmax.f32 %v1445, 0.0
        %v1461 = vmax.f32 %v1446, 0.0
        %v1462 = vmax.f32 %v1447, 0.0
        %v1463 = vmax.f32 %v1448, 0.0
        %v1464 = vmax.f32 %v1449, 0.0
        %v1465 = vmax.f32 %v1450, 0.0
        %v1466 = vmax.f32 %v1451, 0.0
        %v1467 = vmax.f32 %v1452, 0.0
        %v1468 = vmax.f32 %v1453, 0.0
        %v1469 = vmax.f32 %v1454, 0.0
        %v1470 = vmax.f32 %v1455, 0.0
        %v1471 = vld [vmem:[%s2] sm:$0xff]
        %v1472 = vld [vmem:[%s2 + $0x8] sm:$0xff]
        %v1473 = vld [vmem:[%s2 + $0x10] sm:$0xff]
        %v1474 = vld [vmem:[%s2 + $0x18] sm:$0xff]
        %v1475 = vld [vmem:[%s2 + $0x20] sm:$0xff]
        %v1476 = vld [vmem:[%s2 + $0x28] sm:$0xff]
        %v1477 = vld [vmem:[%s2 + $0x30] sm:$0xff]
        %v1478 = vld [vmem:[%s2 + $0x38] sm:$0xff]
        %v1479 = vld [vmem:[%s2 + $0x40] sm:$0xff]
        %v1480 = vld [vmem:[%s2 + $0x48] sm:$0xff]
        %v1481 = vld [vmem:[%s2 + $0x50] sm:$0xff]
        %v1482 = vld [vmem:[%s2 + $0x58] sm:$0xff]
        %v1483 = vld [vmem:[%s2 + $0x60] sm:$0xff]
        %v1484 = vld [vmem:[%s2 + $0x68] sm:$0xff]
        %v1485 = vld [vmem:[%s2 + $0x70] sm:$0xff]
        %v1486 = vld [vmem:[%s2 + $0x78] sm:$0xff]
        %v1487 = vld [vmem:[%s2 + $0x80] sm:$0xff]
        %v1488 = vld [vmem:[%s2 + $0x88] sm:$0xff]
        %v1489 = vld [vmem:[%s2 + $0x90] sm:$0xff]
        %v1490 = vld [vmem:[%s2 + $0x98] sm:$0xff]
        %v1491 = vld [vmem:[%s2 + $0xa0] sm:$0xff]
        %v1492 = vld [vmem:[%s2 + $0xa8] sm:$0xff]
        %v1493 = vld [vmem:[%s2 + $0xb0] sm:$0xff]
        %v1494 = vld [vmem:[%s2 + $0xb8] sm:$0xff]
        %v1495 = vld [vmem:[%s2 + $0xc0] sm:$0xff]
        %v1496 = vld [vmem:[%s2 + $0xc8] sm:$0xff]
        %v1497 = vld [vmem:[%s2 + $0xd0] sm:$0xff]
        %v1498 = vld [vmem:[%s2 + $0xd8] sm:$0xff]
        %v1499 = vld [vmem:[%s2 + $0xe0] sm:$0xff]
        %v1500 = vld [vmem:[%s2 + $0xe8] sm:$0xff]
        %v1501 = vld [vmem:[%s2 + $0xf0] sm:$0xff]
        %v1502 = vld [vmem:[%s2 + $0xf8] sm:$0xff]
        %v1503 = vld [vmem:[%s2 + $0x100] sm:$0xff]
        %v1504 = vld [vmem:[%s2 + $0x108] sm:$0xff]
        %v1505 = vld [vmem:[%s2 + $0x110] sm:$0xff]
        %v1506 = vld [vmem:[%s2 + $0x118] sm:$0xff]
        %v1507 = vld [vmem:[%s2 + $0x120] sm:$0xff]
        %v1508 = vld [vmem:[%s2 + $0x128] sm:$0xff]
        %v1509 = vld [vmem:[%s2 + $0x130] sm:$0xff]
        %v1510 = vld [vmem:[%s2 + $0x138] sm:$0xff]
        %v1511 = vld [vmem:[%s2 + $0x140] sm:$0xff]
        %v1512 = vld [vmem:[%s2 + $0x148] sm:$0xff]
        %v1513 = vld [vmem:[%s2 + $0x150] sm:$0xff]
        %v1514 = vld [vmem:[%s2 + $0x158] sm:$0xff]
        %v1515 = vld [vmem:[%s2 + $0x160] sm:$0xff]
        %v1516 = vld [vmem:[%s2 + $0x168] sm:$0xff]
        %v1517 = vld [vmem:[%s2 + $0x170] sm:$0xff]
        %v1518 = vld [vmem:[%s2 + $0x178] sm:$0xff]
        %v1519 = vld [vmem:[%s2 + $0x180] sm:$0xff]
        %v1520 = vld [vmem:[%s2 + $0x188] sm:$0xff]
        %v1521 = vld [vmem:[%s2 + $0x190] sm:$0xff]
        %v1522 = vld [vmem:[%s2 + $0x198] sm:$0xff]
        %v1523 = vld [vmem:[%s2 + $0x1a0] sm:$0xff]
        %v1524 = vld [vmem:[%s2 + $0x1a8] sm:$0xff]
        %v1525 = vld [vmem:[%s2 + $0x1b0] sm:$0xff]
        %v1526 = vld [vmem:[%s2 + $0x1b8] sm:$0xff]
        %v1527 = vld [vmem:[%s2 + $0x1c0] sm:$0xff]
        %v1528 = vld [vmem:[%s2 + $0x1c8] sm:$0xff]
        %v1529 = vld [vmem:[%s2 + $0x1d0] sm:$0xff]
        %v1530 = vld [vmem:[%s2 + $0x1d8] sm:$0xff]
        %v1531 = vld [vmem:[%s2 + $0x1e0] sm:$0xff]
        %v1532 = vld [vmem:[%s2 + $0x1e8] sm:$0xff]
        %v1533 = vld [vmem:[%s2 + $0x1f0] sm:$0xff]
        %v1534 = vld [vmem:[%s2 + $0x1f8] sm:$0xff]
        %v1535 = vld [vmem:[%s2 + $0x200] sm:$0xff]
        %v1536 = vld [vmem:[%s2 + $0x208] sm:$0xff]
        %v1537 = vld [vmem:[%s2 + $0x210] sm:$0xff]
        %v1538 = vld [vmem:[%s2 + $0x218] sm:$0xff]
        %v1539 = vld [vmem:[%s2 + $0x220] sm:$0x3]
        %v1540 = vld [vmem:[%s2 + $0x228] sm:$0x3]
        %s1541 = scalar_lea.vmem %s2, 560
        %v1542 = vld [vmem:[%s1541] sm:$0xff]
        %v1543 = vld [vmem:[%s1541 + $0x8] sm:$0xff]
        %v1544 = vld [vmem:[%s1541 + $0x10] sm:$0xff]
        %v1545 = vld [vmem:[%s1541 + $0x18] sm:$0xff]
        %v1546 = vld [vmem:[%s1541 + $0x20] sm:$0xff]
        %v1547 = vld [vmem:[%s1541 + $0x28] sm:$0xff]
        %v1548 = vld [vmem:[%s1541 + $0x30] sm:$0xff]
        %v1549 = vld [vmem:[%s1541 + $0x38] sm:$0xff]
        %v1550 = vld [vmem:[%s1541 + $0x40] sm:$0xff]
        %v1551 = vld [vmem:[%s1541 + $0x48] sm:$0xff]
        %v1552 = vld [vmem:[%s1541 + $0x50] sm:$0xff]
        %v1553 = vld [vmem:[%s1541 + $0x58] sm:$0xff]
        %v1554 = vld [vmem:[%s1541 + $0x60] sm:$0xff]
        %v1555 = vld [vmem:[%s1541 + $0x68] sm:$0xff]
        %v1556 = vld [vmem:[%s1541 + $0x70] sm:$0xff]
        %v1557 = vld [vmem:[%s1541 + $0x78] sm:$0xff]
        %v1558 = vld [vmem:[%s1541 + $0x80] sm:$0xff]
        %v1559 = vld [vmem:[%s1541 + $0x88] sm:$0xff]
        %v1560 = vld [vmem:[%s1541 + $0x90] sm:$0xff]
        %v1561 = vld [vmem:[%s1541 + $0x98] sm:$0xff]
        %v1562 = vld [vmem:[%s1541 + $0xa0] sm:$0xff]
        %v1563 = vld [vmem:[%s1541 + $0xa8] sm:$0xff]
        %v1564 = vld [vmem:[%s1541 + $0xb0] sm:$0xff]
        %v1565 = vld [vmem:[%s1541 + $0xb8] sm:$0xff]
        %v1566 = vld [vmem:[%s1541 + $0xc0] sm:$0xff]
        %v1567 = vld [vmem:[%s1541 + $0xc8] sm:$0xff]
        %v1568 = vld [vmem:[%s1541 + $0xd0] sm:$0xff]
        %v1569 = vld [vmem:[%s1541 + $0xd8] sm:$0xff]
        %v1570 = vld [vmem:[%s1541 + $0xe0] sm:$0xff]
        %v1571 = vld [vmem:[%s1541 + $0xe8] sm:$0xff]
        %v1572 = vld [vmem:[%s1541 + $0xf0] sm:$0xff]
        %v1573 = vld [vmem:[%s1541 + $0xf8] sm:$0xff]
        %v1574 = vld [vmem:[%s1541 + $0x100] sm:$0xff]
        %v1575 = vld [vmem:[%s1541 + $0x108] sm:$0xff]
        %v1576 = vld [vmem:[%s1541 + $0x110] sm:$0xff]
        %v1577 = vld [vmem:[%s1541 + $0x118] sm:$0xff]
        %v1578 = vld [vmem:[%s1541 + $0x120] sm:$0xff]
        %v1579 = vld [vmem:[%s1541 + $0x128] sm:$0xff]
        %v1580 = vld [vmem:[%s1541 + $0x130] sm:$0xff]
        %v1581 = vld [vmem:[%s1541 + $0x138] sm:$0xff]
        %v1582 = vld [vmem:[%s1541 + $0x140] sm:$0xff]
        %v1583 = vld [vmem:[%s1541 + $0x148] sm:$0xff]
        %v1584 = vld [vmem:[%s1541 + $0x150] sm:$0xff]
        %v1585 = vld [vmem:[%s1541 + $0x158] sm:$0xff]
        %v1586 = vld [vmem:[%s1541 + $0x160] sm:$0xff]
        %v1587 = vld [vmem:[%s1541 + $0x168] sm:$0xff]
        %v1588 = vld [vmem:[%s1541 + $0x170] sm:$0xff]
        %v1589 = vld [vmem:[%s1541 + $0x178] sm:$0xff]
        %v1590 = vld [vmem:[%s1541 + $0x180] sm:$0xff]
        %v1591 = vld [vmem:[%s1541 + $0x188] sm:$0xff]
        %v1592 = vld [vmem:[%s1541 + $0x190] sm:$0xff]
        %v1593 = vld [vmem:[%s1541 + $0x198] sm:$0xff]
        %v1594 = vld [vmem:[%s1541 + $0x1a0] sm:$0xff]
        %v1595 = vld [vmem:[%s1541 + $0x1a8] sm:$0xff]
        %v1596 = vld [vmem:[%s1541 + $0x1b0] sm:$0xff]
        %v1597 = vld [vmem:[%s1541 + $0x1b8] sm:$0xff]
        %v1598 = vld [vmem:[%s1541 + $0x1c0] sm:$0xff]
        %v1599 = vld [vmem:[%s1541 + $0x1c8] sm:$0xff]
        %v1600 = vld [vmem:[%s1541 + $0x1d0] sm:$0xff]
        %v1601 = vld [vmem:[%s1541 + $0x1d8] sm:$0xff]
        %v1602 = vld [vmem:[%s1541 + $0x1e0] sm:$0xff]
        %v1603 = vld [vmem:[%s1541 + $0x1e8] sm:$0xff]
        %v1604 = vld [vmem:[%s1541 + $0x1f0] sm:$0xff]
        %v1605 = vld [vmem:[%s1541 + $0x1f8] sm:$0xff]
        %v1606 = vld [vmem:[%s1541 + $0x200] sm:$0xff]
        %v1607 = vld [vmem:[%s1541 + $0x208] sm:$0xff]
        %v1608 = vld [vmem:[%s1541 + $0x210] sm:$0xff]
        %v1609 = vld [vmem:[%s1541 + $0x218] sm:$0xff]
        %v1610 = vld [vmem:[%s1541 + $0x220] sm:$0x3]
        %v1611 = vld [vmem:[%s1541 + $0x228] sm:$0x3]
        %v1627 = vrot.slane %v1456, 1
        %v1628 = vrot.slane %v1459, 1
        %v1629 = vsel %vm461, %v1627, %v1628
        %v1630 = vrot.slane %v1457, 1
        %v1631 = vrot.slane %v1460, 1
        %v1632 = vsel %vm461, %v1630, %v1631
        %v1633 = vrot.slane %v1458, 1
        %v1634 = vrot.slane %v1461, 1
        %v1635 = vsel %vm461, %v1633, %v1634
        %v1636 = vrot.slane %v1462, 1
        %v1637 = vsel %vm461, %v1628, %v1636
        %v1638 = vrot.slane %v1463, 1
        %v1639 = vsel %vm461, %v1631, %v1638
        %v1640 = vrot.slane %v1464, 1
        %v1641 = vsel %vm461, %v1634, %v1640
        %v1642 = vrot.slane %v1465, 1
        %v1643 = vsel %vm461, %v1636, %v1642
        %v1644 = vrot.slane %v1466, 1
        %v1645 = vsel %vm461, %v1638, %v1644
        %v1646 = vrot.slane %v1467, 1
        %v1647 = vsel %vm461, %v1640, %v1646
        %v1648 = vrot.slane %v1468, 1
        %v1649 = vsel %vm461, %v1642, %v1648
        %v1650 = vrot.slane %v1469, 1
        %v1651 = vsel %vm461, %v1644, %v1650
        %v1652 = vrot.slane %v1470, 1
        %v1653 = vsel %vm461, %v1646, %v1652
        %vm1664 = vcmask 146432
        %v1665 = vsel %vm1664, %v1635, 0
        %v1667 = vsel %vm1664, %v1641, 0
        %v1669 = vsel %vm1664, %v1647, 0
        %v1671 = vsel %vm1664, %v1653, 0
        %v1673 = vsel %vm1664, %v1652, 0
        %vm1675 = vcmask 1041408
        %v1677 = vsel %vm1675, %v1610, 0
        %v1680 = vsel %vm1675, %v1611, 0
        %1682 = vmatprep.subr.mxu0 %v1543
        %1683 = vmatpush1.msra.mxu0 %v1542
        %1684 = vmatprep.subr.mxu0 %v1545
        %1685 = vmatpush1.msra.mxu0 %v1544
        %1686 = vmatprep.subr.mxu0 %v1547
        %1687 = vmatpush1.msra.mxu0 %v1546
        %1688 = vmatprep.subr.mxu0 %v1549
        %1689 = vmatpush1.msra.mxu0 %v1548
        %1690 = vmatprep.subr.mxu0 %v1551
        %1691 = vmatpush1.msra.mxu0 %v1550
        %1692 = vmatprep.subr.mxu0 %v1553
        %1693 = vmatpush1.msra.mxu0 %v1552
        %1694 = vmatprep.subr.mxu0 %v1555
        %1695 = vmatpush1.msra.mxu0 %v1554
        %1696 = vmatprep.subr.mxu0 %v1557
        %1697 = vmatpush1.msra.mxu0 %v1556
        %1698 = vmatprep.subr.mxu0 %v1559
        %1699 = vmatpush1.msra.mxu0 %v1558
        %1700 = vmatprep.subr.mxu0 %v1561
        %1701 = vmatpush1.msra.mxu0 %v1560
        %1702 = vmatprep.subr.mxu0 %v1563
        %1703 = vmatpush1.msra.mxu0 %v1562
        %1704 = vmatprep.subr.mxu0 %v1565
        %1705 = vmatpush1.msra.mxu0 %v1564
        %1706 = vmatprep.subr.mxu0 %v1567
        %1707 = vmatpush1.msra.mxu0 %v1566
        %1708 = vmatprep.subr.mxu0 %v1569
        %1709 = vmatpush1.msra.mxu0 %v1568
        %1710 = vmatprep.subr.mxu0 %v1571
        %1711 = vmatpush1.msra.mxu0 %v1570
        %1712 = vmatprep.subr.mxu0 %v1573
        %1713 = vmatpush1.msra.mxu0 %v1572
        %1714 = vmatprep.subr.mxu0 %v1575
        %1715 = vmatpush1.msra.mxu0 %v1574
        %1716 = vmatprep.subr.mxu0 %v1577
        %1717 = vmatpush1.msra.mxu0 %v1576
        %1718 = vmatprep.subr.mxu0 %v1579
        %1719 = vmatpush1.msra.mxu0 %v1578
        %1720 = vmatprep.subr.mxu0 %v1581
        %1721 = vmatpush1.msra.mxu0 %v1580
        %1722 = vmatprep.subr.mxu0 %v1583
        %1723 = vmatpush1.msra.mxu0 %v1582
        %1724 = vmatprep.subr.mxu0 %v1585
        %1725 = vmatpush1.msra.mxu0 %v1584
        %1726 = vmatprep.subr.mxu0 %v1587
        %1727 = vmatpush1.msra.mxu0 %v1586
        %1728 = vmatprep.subr.mxu0 %v1589
        %1729 = vmatpush1.msra.mxu0 %v1588
        %1730 = vmatprep.subr.mxu0 %v1591
        %1731 = vmatpush1.msra.mxu0 %v1590
        %1732 = vmatprep.subr.mxu0 %v1593
        %1733 = vmatpush1.msra.mxu0 %v1592
        %1734 = vmatprep.subr.mxu0 %v1595
        %1735 = vmatpush1.msra.mxu0 %v1594
        %1736 = vmatprep.subr.mxu0 %v1597
        %1737 = vmatpush1.msra.mxu0 %v1596
        %1738 = vmatprep.subr.mxu0 %v1599
        %1739 = vmatpush1.msra.mxu0 %v1598
        %1740 = vmatprep.subr.mxu0 %v1601
        %1741 = vmatpush1.msra.mxu0 %v1600
        %1742 = vmatprep.subr.mxu0 %v1603
        %1743 = vmatpush1.msra.mxu0 %v1602
        %1744 = vmatprep.subr.mxu0 %v1605
        %1745 = vmatpush1.msra.mxu0 %v1604
        %1746 = vmatprep.mubr.f32.mxu0 %v1632
        %1747 = vmatmul.mubr.f32.gmra.mrb[0].mxu0 %v1629
        %v1748 = vpop.f32.mrb[0].mxu0
        %v1749 = vadd.f32 0.0, %v1748
        %v1750 = vpop.f32.mrb[0].mxu0
        %v1751 = vadd.f32 0.0, %v1750
        %1752 = vmatprep.mubr.f32.mxu0 %v1639
        %1753 = vmatmul.mubr.f32.gmra.mrb[0].mxu0 %v1637
        %v1754 = vpop.f32.mrb[0].mxu0
        %v1755 = vadd.f32 0.0, %v1754
        %v1756 = vpop.f32.mrb[0].mxu0
        %v1757 = vadd.f32 0.0, %v1756
        %1758 = vmatprep.mubr.f32.mxu0 %v1645
        %1759 = vmatmul.mubr.f32.gmra.mrb[0].mxu0 %v1643
        %v1760 = vpop.f32.mrb[0].mxu0
        %v1761 = vadd.f32 0.0, %v1760
        %v1762 = vpop.f32.mrb[0].mxu0
        %v1763 = vadd.f32 0.0, %v1762
        %1764 = vmatprep.mubr.f32.mxu0 %v1651
        %1765 = vmatmul.mubr.f32.gmra.mrb[0].mxu0 %v1649
        %v1766 = vpop.f32.mrb[0].mxu0
        %v1767 = vadd.f32 0.0, %v1766
        %v1768 = vpop.f32.mrb[0].mxu0
        %v1769 = vadd.f32 0.0, %v1768
        %1770 = vmatprep.mubr.f32.mxu0 %v1650
        %1771 = vmatmul.mubr.f32.gmra.mrb[0].mxu0 %v1648
        %v1772 = vpop.f32.mrb[0].mxu0
        %v1773 = vadd.f32 0.0, %v1772
        %v1774 = vpop.f32.mrb[0].mxu0
        %v1775 = vadd.f32 0.0, %v1774
        %1776 = vdwg.mxu0
        %1777 = vmatprep.subr.mxu0 %v1607
        %1778 = vmatpush1.msra.mxu0 %v1606
        %1779 = vmatprep.subr.mxu0 %v1609
        %1780 = vmatpush1.msra.mxu0 %v1608
        %1781 = vmatprep.subr.mxu0 %v1680
        %1782 = vmatpush1.msra.mxu0 %v1677
        %1783 = vmatprep.subr.mxu0 0.0
        %1784 = vmatpush1.msra.mxu0 0.0
        %1785 = vmatprep.subr.mxu0 0.0
        %1786 = vmatpush1.msra.mxu0 0.0
        %1787 = vmatprep.subr.mxu0 0.0
        %1788 = vmatpush1.msra.mxu0 0.0
        %1789 = vmatprep.subr.mxu0 0.0
        %1790 = vmatpush1.msra.mxu0 0.0
        %1791 = vmatprep.subr.mxu0 0.0
        %1792 = vmatpush1.msra.mxu0 0.0
        %1793 = vmatprep.subr.mxu0 0.0
        %1794 = vmatpush1.msra.mxu0 0.0
        %1795 = vmatprep.subr.mxu0 0.0
        %1796 = vmatpush1.msra.mxu0 0.0
        %1797 = vmatprep.subr.mxu0 0.0
        %1798 = vmatpush1.msra.mxu0 0.0
        %1799 = vmatprep.subr.mxu0 0.0
        %1800 = vmatpush1.msra.mxu0 0.0
        %1801 = vmatprep.subr.mxu0 0.0
        %1802 = vmatpush1.msra.mxu0 0.0
        %1803 = vmatprep.subr.mxu0 0.0
        %1804 = vmatpush1.msra.mxu0 0.0
        %1805 = vmatprep.subr.mxu0 0.0
        %1806 = vmatpush1.msra.mxu0 0.0
        %1807 = vmatprep.subr.mxu0 0.0
        %1808 = vmatpush1.msra.mxu0 0.0
        %1809 = vmatprep.subr.mxu0 0.0
        %1810 = vmatpush1.msra.mxu0 0.0
        %1811 = vmatprep.subr.mxu0 0.0
        %1812 = vmatpush1.msra.mxu0 0.0
        %1813 = vmatprep.subr.mxu0 0.0
        %1814 = vmatpush1.msra.mxu0 0.0
        %1815 = vmatprep.subr.mxu0 0.0
        %1816 = vmatpush1.msra.mxu0 0.0
        %1817 = vmatprep.subr.mxu0 0.0
        %1818 = vmatpush1.msra.mxu0 0.0
        %1819 = vmatprep.subr.mxu0 0.0
        %1820 = vmatpush1.msra.mxu0 0.0
        %1821 = vmatprep.subr.mxu0 0.0
        %1822 = vmatpush1.msra.mxu0 0.0
        %1823 = vmatprep.subr.mxu0 0.0
        %1824 = vmatpush1.msra.mxu0 0.0
        %1825 = vmatprep.subr.mxu0 0.0
        %1826 = vmatpush1.msra.mxu0 0.0
        %1827 = vmatprep.subr.mxu0 0.0
        %1828 = vmatpush1.msra.mxu0 0.0
        %1829 = vmatprep.subr.mxu0 0.0
        %1830 = vmatpush1.msra.mxu0 0.0
        %1831 = vmatprep.subr.mxu0 0.0
        %1832 = vmatpush1.msra.mxu0 0.0
        %1833 = vmatprep.subr.mxu0 0.0
        %1834 = vmatpush1.msra.mxu0 0.0
        %1835 = vmatprep.subr.mxu0 0.0
        %1836 = vmatpush1.msra.mxu0 0.0
        %1837 = vmatprep.subr.mxu0 0.0
        %1838 = vmatpush1.msra.mxu0 0.0
        %1839 = vmatprep.subr.mxu0 0.0
        %1840 = vmatpush1.msra.mxu0 0.0
        %1841 = vmatprep.mubr.f32.mxu0 0.0
        %1842 = vmatmul.mubr.f32.gmra.mrb[0].mxu0 %v1665
        %v1843 = vpop.f32.mrb[0].mxu0
        %v1844 = vadd.f32 %v1749, %v1843
        %v1845 = vpop.f32.mrb[0].mxu0
        %v1846 = vadd.f32 %v1751, %v1845
        %1847 = vmatprep.mubr.f32.mxu0 0.0
        %1848 = vmatmul.mubr.f32.gmra.mrb[0].mxu0 %v1667
        %v1849 = vpop.f32.mrb[0].mxu0
        %v1850 = vadd.f32 %v1755, %v1849
        %v1851 = vpop.f32.mrb[0].mxu0
        %v1852 = vadd.f32 %v1757, %v1851
        %1853 = vmatprep.mubr.f32.mxu0 0.0
        %1854 = vmatmul.mubr.f32.gmra.mrb[0].mxu0 %v1669
        %v1855 = vpop.f32.mrb[0].mxu0
        %v1856 = vadd.f32 %v1761, %v1855
        %v1857 = vpop.f32.mrb[0].mxu0
        %v1858 = vadd.f32 %v1763, %v1857
        %1859 = vmatprep.mubr.f32.mxu0 0.0
        %1860 = vmatmul.mubr.f32.gmra.mrb[0].mxu0 %v1671
        %v1861 = vpop.f32.mrb[0].mxu0
        %v1862 = vadd.f32 %v1767, %v1861
        %v1863 = vpop.f32.mrb[0].mxu0
        %v1864 = vadd.f32 %v1769, %v1863
        %1865 = vmatprep.mubr.f32.mxu0 0.0
        %1866 = vmatmul.mubr.f32.gmra.mrb[0].mxu0 %v1673
        %v1867 = vpop.f32.mrb[0].mxu0
        %v1868 = vadd.f32 %v1773, %v1867
        %v1869 = vpop.f32.mrb[0].mxu0
        %v1870 = vadd.f32 %v1775, %v1869
        %1871 = vdwg.mxu0
        %v1872 = vsel %vm1664, %v1458, 0
        %v1874 = vsel %vm1664, %v1461, 0
        %v1876 = vsel %vm1664, %v1464, 0
        %v1878 = vsel %vm1664, %v1467, 0
        %v1880 = vsel %vm1664, %v1470, 0
        %v1883 = vsel %vm1675, %v1539, 0
        %v1886 = vsel %vm1675, %v1540, 0
        %1888 = vmatprep.subr.mxu0 %v1472
        %1889 = vmatpush1.msra.mxu0 %v1471
        %1890 = vmatprep.subr.mxu0 %v1474
        %1891 = vmatpush1.msra.mxu0 %v1473
        %1892 = vmatprep.subr.mxu0 %v1476
        %1893 = vmatpush1.msra.mxu0 %v1475
        %1894 = vmatprep.subr.mxu0 %v1478
        %1895 = vmatpush1.msra.mxu0 %v1477
        %1896 = vmatprep.subr.mxu0 %v1480
        %1897 = vmatpush1.msra.mxu0 %v1479
        %1898 = vmatprep.subr.mxu0 %v1482
        %1899 = vmatpush1.msra.mxu0 %v1481
        %1900 = vmatprep.subr.mxu0 %v1484
        %1901 = vmatpush1.msra.mxu0 %v1483
        %1902 = vmatprep.subr.mxu0 %v1486
        %1903 = vmatpush1.msra.mxu0 %v1485
        %1904 = vmatprep.subr.mxu0 %v1488
        %1905 = vmatpush1.msra.mxu0 %v1487
        %1906 = vmatprep.subr.mxu0 %v1490
        %1907 = vmatpush1.msra.mxu0 %v1489
        %1908 = vmatprep.subr.mxu0 %v1492
        %1909 = vmatpush1.msra.mxu0 %v1491
        %1910 = vmatprep.subr.mxu0 %v1494
        %1911 = vmatpush1.msra.mxu0 %v1493
        %1912 = vmatprep.subr.mxu0 %v1496
        %1913 = vmatpush1.msra.mxu0 %v1495
        %1914 = vmatprep.subr.mxu0 %v1498
        %1915 = vmatpush1.msra.mxu0 %v1497
        %1916 = vmatprep.subr.mxu0 %v1500
        %1917 = vmatpush1.msra.mxu0 %v1499
        %1918 = vmatprep.subr.mxu0 %v1502
        %1919 = vmatpush1.msra.mxu0 %v1501
        %1920 = vmatprep.subr.mxu0 %v1504
        %1921 = vmatpush1.msra.mxu0 %v1503
        %1922 = vmatprep.subr.mxu0 %v1506
        %1923 = vmatpush1.msra.mxu0 %v1505
        %1924 = vmatprep.subr.mxu0 %v1508
        %1925 = vmatpush1.msra.mxu0 %v1507
        %1926 = vmatprep.subr.mxu0 %v1510
        %1927 = vmatpush1.msra.mxu0 %v1509
        %1928 = vmatprep.subr.mxu0 %v1512
        %1929 = vmatpush1.msra.mxu0 %v1511
        %1930 = vmatprep.subr.mxu0 %v1514
        %1931 = vmatpush1.msra.mxu0 %v1513
        %1932 = vmatprep.subr.mxu0 %v1516
        %1933 = vmatpush1.msra.mxu0 %v1515
        %1934 = vmatprep.subr.mxu0 %v1518
        %1935 = vmatpush1.msra.mxu0 %v1517
        %1936 = vmatprep.subr.mxu0 %v1520
        %1937 = vmatpush1.msra.mxu0 %v1519
        %1938 = vmatprep.subr.mxu0 %v1522
        %1939 = vmatpush1.msra.mxu0 %v1521
        %1940 = vmatprep.subr.mxu0 %v1524
        %1941 = vmatpush1.msra.mxu0 %v1523
        %1942 = vmatprep.subr.mxu0 %v1526
        %1943 = vmatpush1.msra.mxu0 %v1525
        %1944 = vmatprep.subr.mxu0 %v1528
        %1945 = vmatpush1.msra.mxu0 %v1527
        %1946 = vmatprep.subr.mxu0 %v1530
        %1947 = vmatpush1.msra.mxu0 %v1529
        %1948 = vmatprep.subr.mxu0 %v1532
        %1949 = vmatpush1.msra.mxu0 %v1531
        %1950 = vmatprep.subr.mxu0 %v1534
        %1951 = vmatpush1.msra.mxu0 %v1533
        %1952 = vmatprep.mubr.f32.mxu0 %v1457
        %1953 = vmatmul.mubr.f32.gmra.mrb[0].mxu0 %v1456
        %v1954 = vpop.f32.mrb[0].mxu0
        %v1955 = vadd.f32 %v1844, %v1954
        %v1956 = vpop.f32.mrb[0].mxu0
        %v1957 = vadd.f32 %v1846, %v1956
        %1958 = vmatprep.mubr.f32.mxu0 %v1460
        %1959 = vmatmul.mubr.f32.gmra.mrb[0].mxu0 %v1459
        %v1960 = vpop.f32.mrb[0].mxu0
        %v1961 = vadd.f32 %v1850, %v1960
        %v1962 = vpop.f32.mrb[0].mxu0
        %v1963 = vadd.f32 %v1852, %v1962
        %1964 = vmatprep.mubr.f32.mxu0 %v1463
        %1965 = vmatmul.mubr.f32.gmra.mrb[0].mxu0 %v1462
        %v1966 = vpop.f32.mrb[0].mxu0
        %v1967 = vadd.f32 %v1856, %v1966
        %v1968 = vpop.f32.mrb[0].mxu0
        %v1969 = vadd.f32 %v1858, %v1968
        %1970 = vmatprep.mubr.f32.mxu0 %v1466
        %1971 = vmatmul.mubr.f32.gmra.mrb[0].mxu0 %v1465
        %v1972 = vpop.f32.mrb[0].mxu0
        %v1973 = vadd.f32 %v1862, %v1972
        %v1974 = vpop.f32.mrb[0].mxu0
        %v1975 = vadd.f32 %v1864, %v1974
        %1976 = vmatprep.mubr.f32.mxu0 %v1469
        %1977 = vmatmul.mubr.f32.gmra.mrb[0].mxu0 %v1468
        %v1978 = vpop.f32.mrb[0].mxu0
        %v1979 = vadd.f32 %v1868, %v1978
        %v1980 = vpop.f32.mrb[0].mxu0
        %v1981 = vadd.f32 %v1870, %v1980
        %1982 = vdwg.mxu0
        %1983 = vmatprep.subr.mxu0 %v1536
        %1984 = vmatpush1.msra.mxu0 %v1535
        %1985 = vmatprep.subr.mxu0 %v1538
        %1986 = vmatpush1.msra.mxu0 %v1537
        %1987 = vmatprep.subr.mxu0 %v1886
        %1988 = vmatpush1.msra.mxu0 %v1883
        %1989 = vmatprep.subr.mxu0 0.0
        %1990 = vmatpush1.msra.mxu0 0.0
        %1991 = vmatprep.subr.mxu0 0.0
        %1992 = vmatpush1.msra.mxu0 0.0
        %1993 = vmatprep.subr.mxu0 0.0
        %1994 = vmatpush1.msra.mxu0 0.0
        %1995 = vmatprep.subr.mxu0 0.0
        %1996 = vmatpush1.msra.mxu0 0.0
        %1997 = vmatprep.subr.mxu0 0.0
        %1998 = vmatpush1.msra.mxu0 0.0
        %1999 = vmatprep.subr.mxu0 0.0
        %2000 = vmatpush1.msra.mxu0 0.0
        %2001 = vmatprep.subr.mxu0 0.0
        %2002 = vmatpush1.msra.mxu0 0.0
        %2003 = vmatprep.subr.mxu0 0.0
        %2004 = vmatpush1.msra.mxu0 0.0
        %2005 = vmatprep.subr.mxu0 0.0
        %2006 = vmatpush1.msra.mxu0 0.0
        %2007 = vmatprep.subr.mxu0 0.0
        %2008 = vmatpush1.msra.mxu0 0.0
        %2009 = vmatprep.subr.mxu0 0.0
        %2010 = vmatpush1.msra.mxu0 0.0
        %2011 = vmatprep.subr.mxu0 0.0
        %2012 = vmatpush1.msra.mxu0 0.0
        %2013 = vmatprep.subr.mxu0 0.0
        %2014 = vmatpush1.msra.mxu0 0.0
        %2015 = vmatprep.subr.mxu0 0.0
        %2016 = vmatpush1.msra.mxu0 0.0
        %2017 = vmatprep.subr.mxu0 0.0
        %2018 = vmatpush1.msra.mxu0 0.0
        %2019 = vmatprep.subr.mxu0 0.0
        %2020 = vmatpush1.msra.mxu0 0.0
        %2021 = vmatprep.subr.mxu0 0.0
        %2022 = vmatpush1.msra.mxu0 0.0
        %2023 = vmatprep.subr.mxu0 0.0
        %2024 = vmatpush1.msra.mxu0 0.0
        %2025 = vmatprep.subr.mxu0 0.0
        %2026 = vmatpush1.msra.mxu0 0.0
        %2027 = vmatprep.subr.mxu0 0.0
        %2028 = vmatpush1.msra.mxu0 0.0
        %2029 = vmatprep.subr.mxu0 0.0
        %2030 = vmatpush1.msra.mxu0 0.0
        %2031 = vmatprep.subr.mxu0 0.0
        %2032 = vmatpush1.msra.mxu0 0.0
        %2033 = vmatprep.subr.mxu0 0.0
        %2034 = vmatpush1.msra.mxu0 0.0
        %2035 = vmatprep.subr.mxu0 0.0
        %2036 = vmatpush1.msra.mxu0 0.0
        %2037 = vmatprep.subr.mxu0 0.0
        %2038 = vmatpush1.msra.mxu0 0.0
        %2039 = vmatprep.subr.mxu0 0.0
        %2040 = vmatpush1.msra.mxu0 0.0
        %2041 = vmatprep.subr.mxu0 0.0
        %2042 = vmatpush1.msra.mxu0 0.0
        %2043 = vmatprep.subr.mxu0 0.0
        %2044 = vmatpush1.msra.mxu0 0.0
        %2045 = vmatprep.subr.mxu0 0.0
        %2046 = vmatpush1.msra.mxu0 0.0
        %2047 = vmatprep.mubr.f32.mxu0 0.0
        %2048 = vmatmul.mubr.f32.gmra.mrb[0].mxu0 %v1872
        %v2049 = vpop.f32.mrb[0].mxu0
        %v2050 = vadd.f32 %v1955, %v2049
        %v2051 = vpop.f32.mrb[0].mxu0
        %v2052 = vadd.f32 %v1957, %v2051
        %2053 = vmatprep.mubr.f32.mxu0 0.0
        %2054 = vmatmul.mubr.f32.gmra.mrb[0].mxu0 %v1874
        %v2055 = vpop.f32.mrb[0].mxu0
        %v2056 = vadd.f32 %v1961, %v2055
        %v2057 = vpop.f32.mrb[0].mxu0
        %v2058 = vadd.f32 %v1963, %v2057
        %2059 = vmatprep.mubr.f32.mxu0 0.0
        %2060 = vmatmul.mubr.f32.gmra.mrb[0].mxu0 %v1876
        %v2061 = vpop.f32.mrb[0].mxu0
        %v2062 = vadd.f32 %v1967, %v2061
        %v2063 = vpop.f32.mrb[0].mxu0
        %v2064 = vadd.f32 %v1969, %v2063
        %2065 = vmatprep.mubr.f32.mxu0 0.0
        %2066 = vmatmul.mubr.f32.gmra.mrb[0].mxu0 %v1878
        %v2067 = vpop.f32.mrb[0].mxu0
        %v2068 = vadd.f32 %v1973, %v2067
        %v2069 = vpop.f32.mrb[0].mxu0
        %v2070 = vadd.f32 %v1975, %v2069
        %2071 = vmatprep.mubr.f32.mxu0 0.0
        %2072 = vmatmul.mubr.f32.gmra.mrb[0].mxu0 %v1880
        %v2073 = vpop.f32.mrb[0].mxu0
        %v2074 = vadd.f32 %v1979, %v2073
        %v2075 = vpop.f32.mrb[0].mxu0
        %v2076 = vadd.f32 %v1981, %v2075
        %2077 = vdwg.mxu0
        %s2078 = scalar_lea.vmem %s2, 1120
        %v2079 = vld [vmem:[%s2078] sm:$0xff]
        %v2080 = vld [vmem:[%s2078 + $0x8] sm:$0xff]
        %v2081 = vld [vmem:[%s2078 + $0x10] sm:$0xff]
        %v2082 = vld [vmem:[%s2078 + $0x18] sm:$0xff]
        %v2083 = vld [vmem:[%s2078 + $0x20] sm:$0xff]
        %v2084 = vld [vmem:[%s2078 + $0x28] sm:$0xff]
        %v2085 = vld [vmem:[%s2078 + $0x30] sm:$0xff]
        %v2086 = vld [vmem:[%s2078 + $0x38] sm:$0xff]
        %v2087 = vld [vmem:[%s2078 + $0x40] sm:$0xff]
        %v2088 = vld [vmem:[%s2078 + $0x48] sm:$0xff]
        %v2089 = vld [vmem:[%s2078 + $0x50] sm:$0xff]
        %v2090 = vld [vmem:[%s2078 + $0x58] sm:$0xff]
        %v2091 = vld [vmem:[%s2078 + $0x60] sm:$0xff]
        %v2092 = vld [vmem:[%s2078 + $0x68] sm:$0xff]
        %v2093 = vld [vmem:[%s2078 + $0x70] sm:$0xff]
        %v2094 = vld [vmem:[%s2078 + $0x78] sm:$0xff]
        %v2095 = vld [vmem:[%s2078 + $0x80] sm:$0xff]
        %v2096 = vld [vmem:[%s2078 + $0x88] sm:$0xff]
        %v2097 = vld [vmem:[%s2078 + $0x90] sm:$0xff]
        %v2098 = vld [vmem:[%s2078 + $0x98] sm:$0xff]
        %v2099 = vld [vmem:[%s2078 + $0xa0] sm:$0xff]
        %v2100 = vld [vmem:[%s2078 + $0xa8] sm:$0xff]
        %v2101 = vld [vmem:[%s2078 + $0xb0] sm:$0xff]
        %v2102 = vld [vmem:[%s2078 + $0xb8] sm:$0xff]
        %v2103 = vld [vmem:[%s2078 + $0xc0] sm:$0xff]
        %v2104 = vld [vmem:[%s2078 + $0xc8] sm:$0xff]
        %v2105 = vld [vmem:[%s2078 + $0xd0] sm:$0xff]
        %v2106 = vld [vmem:[%s2078 + $0xd8] sm:$0xff]
        %v2107 = vld [vmem:[%s2078 + $0xe0] sm:$0xff]
        %v2108 = vld [vmem:[%s2078 + $0xe8] sm:$0xff]
        %v2109 = vld [vmem:[%s2078 + $0xf0] sm:$0xff]
        %v2110 = vld [vmem:[%s2078 + $0xf8] sm:$0xff]
        %v2111 = vld [vmem:[%s2078 + $0x100] sm:$0xff]
        %v2112 = vld [vmem:[%s2078 + $0x108] sm:$0xff]
        %v2113 = vld [vmem:[%s2078 + $0x110] sm:$0xff]
        %v2114 = vld [vmem:[%s2078 + $0x118] sm:$0xff]
        %v2115 = vld [vmem:[%s2078 + $0x120] sm:$0xff]
        %v2116 = vld [vmem:[%s2078 + $0x128] sm:$0xff]
        %v2117 = vld [vmem:[%s2078 + $0x130] sm:$0xff]
        %v2118 = vld [vmem:[%s2078 + $0x138] sm:$0xff]
        %v2119 = vld [vmem:[%s2078 + $0x140] sm:$0xff]
        %v2120 = vld [vmem:[%s2078 + $0x148] sm:$0xff]
        %v2121 = vld [vmem:[%s2078 + $0x150] sm:$0xff]
        %v2122 = vld [vmem:[%s2078 + $0x158] sm:$0xff]
        %v2123 = vld [vmem:[%s2078 + $0x160] sm:$0xff]
        %v2124 = vld [vmem:[%s2078 + $0x168] sm:$0xff]
        %v2125 = vld [vmem:[%s2078 + $0x170] sm:$0xff]
        %v2126 = vld [vmem:[%s2078 + $0x178] sm:$0xff]
        %v2127 = vld [vmem:[%s2078 + $0x180] sm:$0xff]
        %v2128 = vld [vmem:[%s2078 + $0x188] sm:$0xff]
        %v2129 = vld [vmem:[%s2078 + $0x190] sm:$0xff]
        %v2130 = vld [vmem:[%s2078 + $0x198] sm:$0xff]
        %v2131 = vld [vmem:[%s2078 + $0x1a0] sm:$0xff]
        %v2132 = vld [vmem:[%s2078 + $0x1a8] sm:$0xff]
        %v2133 = vld [vmem:[%s2078 + $0x1b0] sm:$0xff]
        %v2134 = vld [vmem:[%s2078 + $0x1b8] sm:$0xff]
        %v2135 = vld [vmem:[%s2078 + $0x1c0] sm:$0xff]
        %v2136 = vld [vmem:[%s2078 + $0x1c8] sm:$0xff]
        %v2137 = vld [vmem:[%s2078 + $0x1d0] sm:$0xff]
        %v2138 = vld [vmem:[%s2078 + $0x1d8] sm:$0xff]
        %v2139 = vld [vmem:[%s2078 + $0x1e0] sm:$0xff]
        %v2140 = vld [vmem:[%s2078 + $0x1e8] sm:$0xff]
        %v2141 = vld [vmem:[%s2078 + $0x1f0] sm:$0xff]
        %v2142 = vld [vmem:[%s2078 + $0x1f8] sm:$0xff]
        %v2143 = vld [vmem:[%s2078 + $0x200] sm:$0xff]
        %v2144 = vld [vmem:[%s2078 + $0x208] sm:$0xff]
        %v2145 = vld [vmem:[%s2078 + $0x210] sm:$0xff]
        %v2146 = vld [vmem:[%s2078 + $0x218] sm:$0xff]
        %v2147 = vld [vmem:[%s2078 + $0x220] sm:$0x3]
        %v2148 = vld [vmem:[%s2078 + $0x228] sm:$0x3]
        %v2149 = vrot.slane %v1456, 2
        %v2150 = vrot.slane %v1459, 2
        %v2151 = vsel %vm883, %v2149, %v2150
        %v2152 = vrot.slane %v1457, 2
        %v2153 = vrot.slane %v1460, 2
        %v2154 = vsel %vm883, %v2152, %v2153
        %v2155 = vrot.slane %v1458, 2
        %v2156 = vrot.slane %v1461, 2
        %v2157 = vsel %vm883, %v2155, %v2156
        %v2158 = vrot.slane %v1462, 2
        %v2159 = vsel %vm883, %v2150, %v2158
        %v2160 = vrot.slane %v1463, 2
        %v2161 = vsel %vm883, %v2153, %v2160
        %v2162 = vrot.slane %v1464, 2
        %v2163 = vsel %vm883, %v2156, %v2162
        %v2164 = vrot.slane %v1465, 2
        %v2165 = vsel %vm883, %v2158, %v2164
        %v2166 = vrot.slane %v1466, 2
        %v2167 = vsel %vm883, %v2160, %v2166
        %v2168 = vrot.slane %v1467, 2
        %v2169 = vsel %vm883, %v2162, %v2168
        %v2170 = vrot.slane %v1468, 2
        %v2171 = vsel %vm883, %v2164, %v2170
        %v2172 = vrot.slane %v1469, 2
        %v2173 = vsel %vm883, %v2166, %v2172
        %v2174 = vrot.slane %v1470, 2
        %v2175 = vsel %vm883, %v2168, %v2174
        %v2186 = vsel %vm1664, %v2157, 0
        %v2188 = vsel %vm1664, %v2163, 0
        %v2190 = vsel %vm1664, %v2169, 0
        %v2192 = vsel %vm1664, %v2175, 0
        %v2194 = vsel %vm1664, %v2174, 0
        %v2197 = vsel %vm1675, %v2147, 0
        %v2200 = vsel %vm1675, %v2148, 0
        %2202 = vmatprep.subr.mxu0 %v2080
        %2203 = vmatpush1.msra.mxu0 %v2079
        %2204 = vmatprep.subr.mxu0 %v2082
        %2205 = vmatpush1.msra.mxu0 %v2081
        %2206 = vmatprep.subr.mxu0 %v2084
        %2207 = vmatpush1.msra.mxu0 %v2083
        %2208 = vmatprep.subr.mxu0 %v2086
        %2209 = vmatpush1.msra.mxu0 %v2085
        %2210 = vmatprep.subr.mxu0 %v2088
        %2211 = vmatpush1.msra.mxu0 %v2087
        %2212 = vmatprep.subr.mxu0 %v2090
        %2213 = vmatpush1.msra.mxu0 %v2089
        %2214 = vmatprep.subr.mxu0 %v2092
        %2215 = vmatpush1.msra.mxu0 %v2091
        %2216 = vmatprep.subr.mxu0 %v2094
        %2217 = vmatpush1.msra.mxu0 %v2093
        %2218 = vmatprep.subr.mxu0 %v2096
        %2219 = vmatpush1.msra.mxu0 %v2095
        %2220 = vmatprep.subr.mxu0 %v2098
        %2221 = vmatpush1.msra.mxu0 %v2097
        %2222 = vmatprep.subr.mxu0 %v2100
        %2223 = vmatpush1.msra.mxu0 %v2099
        %2224 = vmatprep.subr.mxu0 %v2102
        %2225 = vmatpush1.msra.mxu0 %v2101
        %2226 = vmatprep.subr.mxu0 %v2104
        %2227 = vmatpush1.msra.mxu0 %v2103
        %2228 = vmatprep.subr.mxu0 %v2106
        %2229 = vmatpush1.msra.mxu0 %v2105
        %2230 = vmatprep.subr.mxu0 %v2108
        %2231 = vmatpush1.msra.mxu0 %v2107
        %2232 = vmatprep.subr.mxu0 %v2110
        %2233 = vmatpush1.msra.mxu0 %v2109
        %2234 = vmatprep.subr.mxu0 %v2112
        %2235 = vmatpush1.msra.mxu0 %v2111
        %2236 = vmatprep.subr.mxu0 %v2114
        %2237 = vmatpush1.msra.mxu0 %v2113
        %2238 = vmatprep.subr.mxu0 %v2116
        %2239 = vmatpush1.msra.mxu0 %v2115
        %2240 = vmatprep.subr.mxu0 %v2118
        %2241 = vmatpush1.msra.mxu0 %v2117
        %2242 = vmatprep.subr.mxu0 %v2120
        %2243 = vmatpush1.msra.mxu0 %v2119
        %2244 = vmatprep.subr.mxu0 %v2122
        %2245 = vmatpush1.msra.mxu0 %v2121
        %2246 = vmatprep.subr.mxu0 %v2124
        %2247 = vmatpush1.msra.mxu0 %v2123
        %2248 = vmatprep.subr.mxu0 %v2126
        %2249 = vmatpush1.msra.mxu0 %v2125
        %2250 = vmatprep.subr.mxu0 %v2128
        %2251 = vmatpush1.msra.mxu0 %v2127
        %2252 = vmatprep.subr.mxu0 %v2130
        %2253 = vmatpush1.msra.mxu0 %v2129
        %2254 = vmatprep.subr.mxu0 %v2132
        %2255 = vmatpush1.msra.mxu0 %v2131
        %2256 = vmatprep.subr.mxu0 %v2134
        %2257 = vmatpush1.msra.mxu0 %v2133
        %2258 = vmatprep.subr.mxu0 %v2136
        %2259 = vmatpush1.msra.mxu0 %v2135
        %2260 = vmatprep.subr.mxu0 %v2138
        %2261 = vmatpush1.msra.mxu0 %v2137
        %2262 = vmatprep.subr.mxu0 %v2140
        %2263 = vmatpush1.msra.mxu0 %v2139
        %2264 = vmatprep.subr.mxu0 %v2142
        %2265 = vmatpush1.msra.mxu0 %v2141
        %2266 = vmatprep.mubr.f32.mxu0 %v2154
        %2267 = vmatmul.mubr.f32.gmra.mrb[0].mxu0 %v2151
        %v2268 = vpop.f32.mrb[0].mxu0
        %v2269 = vadd.f32 0.0, %v2268
        %v2270 = vpop.f32.mrb[0].mxu0
        %v2271 = vadd.f32 0.0, %v2270
        %2272 = vmatprep.mubr.f32.mxu0 %v2161
        %2273 = vmatmul.mubr.f32.gmra.mrb[0].mxu0 %v2159
        %v2274 = vpop.f32.mrb[0].mxu0
        %v2275 = vadd.f32 0.0, %v2274
        %v2276 = vpop.f32.mrb[0].mxu0
        %v2277 = vadd.f32 0.0, %v2276
        %2278 = vmatprep.mubr.f32.mxu0 %v2167
        %2279 = vmatmul.mubr.f32.gmra.mrb[0].mxu0 %v2165
        %v2280 = vpop.f32.mrb[0].mxu0
        %v2281 = vadd.f32 0.0, %v2280
        %v2282 = vpop.f32.mrb[0].mxu0
        %v2283 = vadd.f32 0.0, %v2282
        %2284 = vmatprep.mubr.f32.mxu0 %v2173
        %2285 = vmatmul.mubr.f32.gmra.mrb[0].mxu0 %v2171
        %v2286 = vpop.f32.mrb[0].mxu0
        %v2287 = vadd.f32 0.0, %v2286
        %v2288 = vpop.f32.mrb[0].mxu0
        %v2289 = vadd.f32 0.0, %v2288
        %2290 = vmatprep.mubr.f32.mxu0 %v2172
        %2291 = vmatmul.mubr.f32.gmra.mrb[0].mxu0 %v2170
        %v2292 = vpop.f32.mrb[0].mxu0
        %v2293 = vadd.f32 0.0, %v2292
        %v2294 = vpop.f32.mrb[0].mxu0
        %v2295 = vadd.f32 0.0, %v2294
        %2296 = vdwg.mxu0
        %2297 = vmatprep.subr.mxu0 %v2144
        %2298 = vmatpush1.msra.mxu0 %v2143
        %2299 = vmatprep.subr.mxu0 %v2146
        %2300 = vmatpush1.msra.mxu0 %v2145
        %2301 = vmatprep.subr.mxu0 %v2200
        %2302 = vmatpush1.msra.mxu0 %v2197
        %2303 = vmatprep.subr.mxu0 0.0
        %2304 = vmatpush1.msra.mxu0 0.0
        %2305 = vmatprep.subr.mxu0 0.0
        %2306 = vmatpush1.msra.mxu0 0.0
        %2307 = vmatprep.subr.mxu0 0.0
        %2308 = vmatpush1.msra.mxu0 0.0
        %2309 = vmatprep.subr.mxu0 0.0
        %2310 = vmatpush1.msra.mxu0 0.0
        %2311 = vmatprep.subr.mxu0 0.0
        %2312 = vmatpush1.msra.mxu0 0.0
        %2313 = vmatprep.subr.mxu0 0.0
        %2314 = vmatpush1.msra.mxu0 0.0
        %2315 = vmatprep.subr.mxu0 0.0
        %2316 = vmatpush1.msra.mxu0 0.0
        %2317 = vmatprep.subr.mxu0 0.0
        %2318 = vmatpush1.msra.mxu0 0.0
        %2319 = vmatprep.subr.mxu0 0.0
        %2320 = vmatpush1.msra.mxu0 0.0
        %2321 = vmatprep.subr.mxu0 0.0
        %2322 = vmatpush1.msra.mxu0 0.0
        %2323 = vmatprep.subr.mxu0 0.0
        %2324 = vmatpush1.msra.mxu0 0.0
        %2325 = vmatprep.subr.mxu0 0.0
        %2326 = vmatpush1.msra.mxu0 0.0
        %2327 = vmatprep.subr.mxu0 0.0
        %2328 = vmatpush1.msra.mxu0 0.0
        %2329 = vmatprep.subr.mxu0 0.0
        %2330 = vmatpush1.msra.mxu0 0.0
        %2331 = vmatprep.subr.mxu0 0.0
        %2332 = vmatpush1.msra.mxu0 0.0
        %2333 = vmatprep.subr.mxu0 0.0
        %2334 = vmatpush1.msra.mxu0 0.0
        %2335 = vmatprep.subr.mxu0 0.0
        %2336 = vmatpush1.msra.mxu0 0.0
        %2337 = vmatprep.subr.mxu0 0.0
        %2338 = vmatpush1.msra.mxu0 0.0
        %2339 = vmatprep.subr.mxu0 0.0
        %2340 = vmatpush1.msra.mxu0 0.0
        %2341 = vmatprep.subr.mxu0 0.0
        %2342 = vmatpush1.msra.mxu0 0.0
        %2343 = vmatprep.subr.mxu0 0.0
        %2344 = vmatpush1.msra.mxu0 0.0
        %2345 = vmatprep.subr.mxu0 0.0
        %2346 = vmatpush1.msra.mxu0 0.0
        %2347 = vmatprep.subr.mxu0 0.0
        %2348 = vmatpush1.msra.mxu0 0.0
        %2349 = vmatprep.subr.mxu0 0.0
        %2350 = vmatpush1.msra.mxu0 0.0
        %2351 = vmatprep.subr.mxu0 0.0
        %2352 = vmatpush1.msra.mxu0 0.0
        %2353 = vmatprep.subr.mxu0 0.0
        %2354 = vmatpush1.msra.mxu0 0.0
        %2355 = vmatprep.subr.mxu0 0.0
        %2356 = vmatpush1.msra.mxu0 0.0
        %2357 = vmatprep.subr.mxu0 0.0
        %2358 = vmatpush1.msra.mxu0 0.0
        %2359 = vmatprep.subr.mxu0 0.0
        %2360 = vmatpush1.msra.mxu0 0.0
        %2361 = vmatprep.mubr.f32.mxu0 0.0
        %2362 = vmatmul.mubr.f32.gmra.mrb[0].mxu0 %v2186
        %v2363 = vpop.f32.mrb[0].mxu0
        %v2364 = vadd.f32 %v2269, %v2363
        %v2365 = vpop.f32.mrb[0].mxu0
        %v2366 = vadd.f32 %v2271, %v2365
        %2367 = vmatprep.mubr.f32.mxu0 0.0
        %2368 = vmatmul.mubr.f32.gmra.mrb[0].mxu0 %v2188
        %v2369 = vpop.f32.mrb[0].mxu0
        %v2370 = vadd.f32 %v2275, %v2369
        %v2371 = vpop.f32.mrb[0].mxu0
        %v2372 = vadd.f32 %v2277, %v2371
        %2373 = vmatprep.mubr.f32.mxu0 0.0
        %2374 = vmatmul.mubr.f32.gmra.mrb[0].mxu0 %v2190
        %v2375 = vpop.f32.mrb[0].mxu0
        %v2376 = vadd.f32 %v2281, %v2375
        %v2377 = vpop.f32.mrb[0].mxu0
        %v2378 = vadd.f32 %v2283, %v2377
        %2379 = vmatprep.mubr.f32.mxu0 0.0
        %2380 = vmatmul.mubr.f32.gmra.mrb[0].mxu0 %v2192
        %v2381 = vpop.f32.mrb[0].mxu0
        %v2382 = vadd.f32 %v2287, %v2381
        %v2383 = vpop.f32.mrb[0].mxu0
        %v2384 = vadd.f32 %v2289, %v2383
        %2385 = vmatprep.mubr.f32.mxu0 0.0
        %2386 = vmatmul.mubr.f32.gmra.mrb[0].mxu0 %v2194
        %v2387 = vpop.f32.mrb[0].mxu0
        %v2388 = vadd.f32 %v2293, %v2387
        %v2389 = vpop.f32.mrb[0].mxu0
        %v2390 = vadd.f32 %v2295, %v2389
        %2391 = vdwg.mxu0
        %v2392 = vadd.f32 %v2050, %v2364
        %v2393 = vadd.f32 %v2052, %v2366
        %v2394 = vadd.f32 %v2056, %v2370
        %v2395 = vadd.f32 %v2058, %v2372
        %v2396 = vadd.f32 %v2062, %v2376
        %v2397 = vadd.f32 %v2064, %v2378
        %v2398 = vadd.f32 %v2068, %v2382
        %v2399 = vadd.f32 %v2070, %v2384
        %v2400 = vadd.f32 %v2074, %v2388
        %v2401 = vadd.f32 %v2076, %v2390
        %2412 = vrot.lane.b32.xlu0 %v2392, 127
        %v2413 = vpop.permute.xlu0 %2412
        %2414 = vrot.lane.b32.xlu0 %v2393, 127
        %v2415 = vpop.permute.xlu0 %2414
        %2416 = vrot.lane.b32.xlu0 %v2394, 127
        %v2417 = vpop.permute.xlu0 %2416
        %2418 = vrot.lane.b32.xlu0 %v2395, 127
        %v2419 = vpop.permute.xlu0 %2418
        %2420 = vrot.lane.b32.xlu0 %v2396, 127
        %v2421 = vpop.permute.xlu0 %2420
        %2422 = vrot.lane.b32.xlu0 %v2397, 127
        %v2423 = vpop.permute.xlu0 %2422
        %2424 = vrot.lane.b32.xlu0 %v2398, 127
        %v2425 = vpop.permute.xlu0 %2424
        %2426 = vrot.lane.b32.xlu0 %v2399, 127
        %v2427 = vpop.permute.xlu0 %2426
        %2428 = vrot.lane.b32.xlu0 %v2400, 127
        %v2429 = vpop.permute.xlu0 %2428
        %2430 = vrot.lane.b32.xlu0 %v2401, 127
        %v2431 = vpop.permute.xlu0 %2430
        %v2432 = vsel %vm1150, %v2413, %v2415
        %v2433 = vsel %vm1150, %v2417, %v2419
        %v2434 = vsel %vm1150, %v2421, %v2423
        %v2435 = vsel %vm1150, %v2425, %v2427
        %v2436 = vsel %vm1150, %v2429, %v2431
        %v2447 = vmax.f32 %v2392, %v2432
        %v2448 = vmax.f32 %v2393, %v2415
        %v2449 = vmax.f32 %v2394, %v2433
        %v2450 = vmax.f32 %v2395, %v2419
        %v2451 = vmax.f32 %v2396, %v2434
        %v2452 = vmax.f32 %v2397, %v2423
        %v2453 = vmax.f32 %v2398, %v2435
        %v2454 = vmax.f32 %v2399, %v2427
        %v2455 = vmax.f32 %v2400, %v2436
        %v2456 = vmax.f32 %v2401, %v2431
        %2457 = vrot.lane.b32.xlu0 %v2392, 126
        %v2458 = vpop.permute.xlu0 %2457
        %2459 = vrot.lane.b32.xlu0 %v2393, 126
        %v2460 = vpop.permute.xlu0 %2459
        %2461 = vrot.lane.b32.xlu0 %v2394, 126
        %v2462 = vpop.permute.xlu0 %2461
        %2463 = vrot.lane.b32.xlu0 %v2395, 126
        %v2464 = vpop.permute.xlu0 %2463
        %2465 = vrot.lane.b32.xlu0 %v2396, 126
        %v2466 = vpop.permute.xlu0 %2465
        %2467 = vrot.lane.b32.xlu0 %v2397, 126
        %v2468 = vpop.permute.xlu0 %2467
        %2469 = vrot.lane.b32.xlu0 %v2398, 126
        %v2470 = vpop.permute.xlu0 %2469
        %2471 = vrot.lane.b32.xlu0 %v2399, 126
        %v2472 = vpop.permute.xlu0 %2471
        %2473 = vrot.lane.b32.xlu0 %v2400, 126
        %v2474 = vpop.permute.xlu0 %2473
        %2475 = vrot.lane.b32.xlu0 %v2401, 126
        %v2476 = vpop.permute.xlu0 %2475
        %v2477 = vsel %vm1221, %v2458, %v2460
        %v2478 = vsel %vm1221, %v2462, %v2464
        %v2479 = vsel %vm1221, %v2466, %v2468
        %v2480 = vsel %vm1221, %v2470, %v2472
        %v2481 = vsel %vm1221, %v2474, %v2476
        %v2492 = vmax.f32 %v2447, %v2477
        %v2493 = vmax.f32 %v2448, %v2460
        %v2494 = vmax.f32 %v2449, %v2478
        %v2495 = vmax.f32 %v2450, %v2464
        %v2496 = vmax.f32 %v2451, %v2479
        %v2497 = vmax.f32 %v2452, %v2468
        %v2498 = vmax.f32 %v2453, %v2480
        %v2499 = vmax.f32 %v2454, %v2472
        %v2500 = vmax.f32 %v2455, %v2481
        %v2501 = vmax.f32 %v2456, %v2476
        %v2512 = vrot.slane %v2492, 1
        %v2513 = vrot.slane %v2494, 1
        %v2514 = vsel %vm461, %v2512, %v2513
        %v2515 = vrot.slane %v2493, 1
        %v2516 = vrot.slane %v2495, 1
        %v2517 = vsel %vm461, %v2515, %v2516
        %v2518 = vrot.slane %v2496, 1
        %v2519 = vsel %vm461, %v2513, %v2518
        %v2520 = vrot.slane %v2497, 1
        %v2521 = vsel %vm461, %v2516, %v2520
        %v2522 = vrot.slane %v2498, 1
        %v2523 = vsel %vm461, %v2518, %v2522
        %v2524 = vrot.slane %v2499, 1
        %v2525 = vsel %vm461, %v2520, %v2524
        %v2526 = vrot.slane %v2500, 1
        %v2527 = vsel %vm461, %v2522, %v2526
        %v2528 = vrot.slane %v2501, 1
        %v2529 = vsel %vm461, %v2524, %v2528
        %v2540 = vmax.f32 %v2492, %v2514
        %v2541 = vmax.f32 %v2493, %v2517
        %v2542 = vmax.f32 %v2494, %v2519
        %v2543 = vmax.f32 %v2495, %v2521
        %v2544 = vmax.f32 %v2496, %v2523
        %v2545 = vmax.f32 %v2497, %v2525
        %v2546 = vmax.f32 %v2498, %v2527
        %v2547 = vmax.f32 %v2499, %v2529
        %v2548 = vmax.f32 %v2500, %v2526
        %v2549 = vmax.f32 %v2501, %v2528
        %v2550 = vrot.slane %v2492, 2
        %v2551 = vrot.slane %v2494, 2
        %v2552 = vsel %vm883, %v2550, %v2551
        %v2553 = vrot.slane %v2493, 2
        %v2554 = vrot.slane %v2495, 2
        %v2555 = vsel %vm883, %v2553, %v2554
        %v2556 = vrot.slane %v2496, 2
        %v2557 = vsel %vm883, %v2551, %v2556
        %v2558 = vrot.slane %v2497, 2
        %v2559 = vsel %vm883, %v2554, %v2558
        %v2560 = vrot.slane %v2498, 2
        %v2561 = vsel %vm883, %v2556, %v2560
        %v2562 = vrot.slane %v2499, 2
        %v2563 = vsel %vm883, %v2558, %v2562
        %v2564 = vrot.slane %v2500, 2
        %v2565 = vsel %vm883, %v2560, %v2564
        %v2566 = vrot.slane %v2501, 2
        %v2567 = vsel %vm883, %v2562, %v2566
        %v2578 = vmax.f32 %v2540, %v2552
        %v2579 = vmax.f32 %v2541, %v2555
        %v2580 = vmax.f32 %v2542, %v2557
        %v2581 = vmax.f32 %v2543, %v2559
        %v2582 = vmax.f32 %v2544, %v2561
        %v2583 = vmax.f32 %v2545, %v2563
        %v2584 = vmax.f32 %v2546, %v2565
        %v2585 = vmax.f32 %v2547, %v2567
        %v2586 = vmax.f32 %v2548, %v2564
        %v2587 = vmax.f32 %v2549, %v2566
        %v2588 = vld [vmem:[%s6] ss:$2 sm:$0x3]
        %v2590 = vlaneseq
        %v2591 = vshrl.u32 %v2590, 7
        %v2592 = vsub.s32 0, %v2591
        %v2593 = vrot.slane %v2588, %v2592
        %v2594 = vlaneseq
        %v2595 = vshrl.u32 %v2594, 7
        %v2596 = vsub.s32 1, %v2595
        %v2597 = vrot.slane %v2588, %v2596
        %v2600 = vmul.f32 %v2578, %v2593
        %v2601 = vmul.f32 %v2579, %v2597
        %v2602 = vmul.f32 %v2580, %v2593
        %v2603 = vmul.f32 %v2581, %v2597
        %v2604 = vmul.f32 %v2582, %v2593
        %v2605 = vmul.f32 %v2583, %v2597
        %v2606 = vmul.f32 %v2584, %v2593
        %v2607 = vmul.f32 %v2585, %v2597
        %v2608 = vmul.f32 %v2586, %v2593
        %v2609 = vmul.f32 %v2587, %v2597
        %s2610 = scalar_lea.vmem %s6, 1
        %v2611 = vld [vmem:[%s2610] ss:$2 sm:$0x3]
        %v2613 = vlaneseq
        %v2614 = vshrl.u32 %v2613, 7
        %v2615 = vsub.s32 0, %v2614
        %v2616 = vrot.slane %v2611, %v2615
        %v2617 = vlaneseq
        %v2618 = vshrl.u32 %v2617, 7
        %v2619 = vsub.s32 1, %v2618
        %v2620 = vrot.slane %v2611, %v2619
        %v2623 = vadd.f32 %v2600, %v2616
        %v2624 = vadd.f32 %v2601, %v2620
        %v2625 = vadd.f32 %v2602, %v2616
        %v2626 = vadd.f32 %v2603, %v2620
        %v2627 = vadd.f32 %v2604, %v2616
        %v2628 = vadd.f32 %v2605, %v2620
        %v2629 = vadd.f32 %v2606, %v2616
        %v2630 = vadd.f32 %v2607, %v2620
        %v2631 = vadd.f32 %v2608, %v2616
        %v2632 = vadd.f32 %v2609, %v2620
        %v2633 = vmax.f32 %v2623, 0.0
        %v2634 = vmax.f32 %v2624, 0.0
        %v2635 = vmax.f32 %v2625, 0.0
        %v2636 = vmax.f32 %v2626, 0.0
        %v2637 = vmax.f32 %v2627, 0.0
        %v2638 = vmax.f32 %v2628, 0.0
        %v2639 = vmax.f32 %v2629, 0.0
        %v2640 = vmax.f32 %v2630, 0.0
        %v2641 = vmax.f32 %v2631, 0.0
        %v2642 = vmax.f32 %v2632, 0.0
        %v2643 = vld [vmem:[%s3] sm:$0xff]
        %v2644 = vld [vmem:[%s3 + $0x8] sm:$0xff]
        %v2645 = vld [vmem:[%s3 + $0x10] sm:$0xff]
        %v2646 = vld [vmem:[%s3 + $0x18] sm:$0xff]
        %v2647 = vld [vmem:[%s3 + $0x20] sm:$0xff]
        %v2648 = vld [vmem:[%s3 + $0x28] sm:$0xff]
        %v2649 = vld [vmem:[%s3 + $0x30] sm:$0xff]
        %v2650 = vld [vmem:[%s3 + $0x38] sm:$0xff]
        %v2651 = vld [vmem:[%s3 + $0x40] sm:$0xff]
        %v2652 = vld [vmem:[%s3 + $0x48] sm:$0xff]
        %v2653 = vld [vmem:[%s3 + $0x50] sm:$0xff]
        %v2654 = vld [vmem:[%s3 + $0x58] sm:$0xff]
        %v2655 = vld [vmem:[%s3 + $0x60] sm:$0xff]
        %v2656 = vld [vmem:[%s3 + $0x68] sm:$0xff]
        %v2657 = vld [vmem:[%s3 + $0x70] sm:$0xff]
        %v2658 = vld [vmem:[%s3 + $0x78] sm:$0xff]
        %v2659 = vld [vmem:[%s3 + $0x80] sm:$0xff]
        %v2660 = vld [vmem:[%s3 + $0x88] sm:$0xff]
        %v2661 = vld [vmem:[%s3 + $0x90] sm:$0xff]
        %v2662 = vld [vmem:[%s3 + $0x98] sm:$0xff]
        %v2663 = vld [vmem:[%s3 + $0xa0] sm:$0xff]
        %v2664 = vld [vmem:[%s3 + $0xa8] sm:$0xff]
        %v2665 = vld [vmem:[%s3 + $0xb0] sm:$0xff]
        %v2666 = vld [vmem:[%s3 + $0xb8] sm:$0xff]
        %v2667 = vld [vmem:[%s3 + $0xc0] sm:$0xff]
        %v2668 = vld [vmem:[%s3 + $0xc8] sm:$0xff]
        %v2669 = vld [vmem:[%s3 + $0xd0] sm:$0xff]
        %v2670 = vld [vmem:[%s3 + $0xd8] sm:$0xff]
        %v2671 = vld [vmem:[%s3 + $0xe0] sm:$0xff]
        %v2672 = vld [vmem:[%s3 + $0xe8] sm:$0xff]
        %v2673 = vld [vmem:[%s3 + $0xf0] sm:$0xff]
        %v2674 = vld [vmem:[%s3 + $0xf8] sm:$0xff]
        %v2675 = vld [vmem:[%s3 + $0x100] sm:$0xff]
        %v2676 = vld [vmem:[%s3 + $0x108] sm:$0xff]
        %v2677 = vld [vmem:[%s3 + $0x110] sm:$0xff]
        %v2678 = vld [vmem:[%s3 + $0x118] sm:$0xff]
        %v2679 = vld [vmem:[%s3 + $0x120] sm:$0xff]
        %v2680 = vld [vmem:[%s3 + $0x128] sm:$0xff]
        %v2681 = vld [vmem:[%s3 + $0x130] sm:$0xff]
        %v2682 = vld [vmem:[%s3 + $0x138] sm:$0xff]
        %v2683 = vld [vmem:[%s3 + $0x140] sm:$0xff]
        %v2684 = vld [vmem:[%s3 + $0x148] sm:$0xff]
        %v2685 = vld [vmem:[%s3 + $0x150] sm:$0xff]
        %v2686 = vld [vmem:[%s3 + $0x158] sm:$0xff]
        %v2687 = vld [vmem:[%s3 + $0x160] sm:$0xff]
        %v2688 = vld [vmem:[%s3 + $0x168] sm:$0xff]
        %v2689 = vld [vmem:[%s3 + $0x170] sm:$0xff]
        %v2690 = vld [vmem:[%s3 + $0x178] sm:$0xff]
        %v2691 = vld [vmem:[%s3 + $0x180] sm:$0xff]
        %v2692 = vld [vmem:[%s3 + $0x188] sm:$0xff]
        %v2693 = vld [vmem:[%s3 + $0x190] sm:$0xff]
        %v2694 = vld [vmem:[%s3 + $0x198] sm:$0xff]
        %v2695 = vld [vmem:[%s3 + $0x1a0] sm:$0xff]
        %v2696 = vld [vmem:[%s3 + $0x1a8] sm:$0xff]
        %v2697 = vld [vmem:[%s3 + $0x1b0] sm:$0xff]
        %v2698 = vld [vmem:[%s3 + $0x1b8] sm:$0xff]
        %v2699 = vld [vmem:[%s3 + $0x1c0] sm:$0xff]
        %v2700 = vld [vmem:[%s3 + $0x1c8] sm:$0xff]
        %v2701 = vld [vmem:[%s3 + $0x1d0] sm:$0xff]
        %v2702 = vld [vmem:[%s3 + $0x1d8] sm:$0xff]
        %v2703 = vld [vmem:[%s3 + $0x1e0] sm:$0xff]
        %v2704 = vld [vmem:[%s3 + $0x1e8] sm:$0xff]
        %v2705 = vld [vmem:[%s3 + $0x1f0] sm:$0x3]
        %v2706 = vld [vmem:[%s3 + $0x1f8] sm:$0x3]
        %s2707 = scalar_lea.vmem %s3, 512
        %v2708 = vld [vmem:[%s2707] sm:$0xff]
        %v2709 = vld [vmem:[%s2707 + $0x8] sm:$0xff]
        %v2710 = vld [vmem:[%s2707 + $0x10] sm:$0xff]
        %v2711 = vld [vmem:[%s2707 + $0x18] sm:$0xff]
        %v2712 = vld [vmem:[%s2707 + $0x20] sm:$0xff]
        %v2713 = vld [vmem:[%s2707 + $0x28] sm:$0xff]
        %v2714 = vld [vmem:[%s2707 + $0x30] sm:$0xff]
        %v2715 = vld [vmem:[%s2707 + $0x38] sm:$0xff]
        %v2716 = vld [vmem:[%s2707 + $0x40] sm:$0xff]
        %v2717 = vld [vmem:[%s2707 + $0x48] sm:$0xff]
        %v2718 = vld [vmem:[%s2707 + $0x50] sm:$0xff]
        %v2719 = vld [vmem:[%s2707 + $0x58] sm:$0xff]
        %v2720 = vld [vmem:[%s2707 + $0x60] sm:$0xff]
        %v2721 = vld [vmem:[%s2707 + $0x68] sm:$0xff]
        %v2722 = vld [vmem:[%s2707 + $0x70] sm:$0xff]
        %v2723 = vld [vmem:[%s2707 + $0x78] sm:$0xff]
        %v2724 = vld [vmem:[%s2707 + $0x80] sm:$0xff]
        %v2725 = vld [vmem:[%s2707 + $0x88] sm:$0xff]
        %v2726 = vld [vmem:[%s2707 + $0x90] sm:$0xff]
        %v2727 = vld [vmem:[%s2707 + $0x98] sm:$0xff]
        %v2728 = vld [vmem:[%s2707 + $0xa0] sm:$0xff]
        %v2729 = vld [vmem:[%s2707 + $0xa8] sm:$0xff]
        %v2730 = vld [vmem:[%s2707 + $0xb0] sm:$0xff]
        %v2731 = vld [vmem:[%s2707 + $0xb8] sm:$0xff]
        %v2732 = vld [vmem:[%s2707 + $0xc0] sm:$0xff]
        %v2733 = vld [vmem:[%s2707 + $0xc8] sm:$0xff]
        %v2734 = vld [vmem:[%s2707 + $0xd0] sm:$0xff]
        %v2735 = vld [vmem:[%s2707 + $0xd8] sm:$0xff]
        %v2736 = vld [vmem:[%s2707 + $0xe0] sm:$0xff]
        %v2737 = vld [vmem:[%s2707 + $0xe8] sm:$0xff]
        %v2738 = vld [vmem:[%s2707 + $0xf0] sm:$0xff]
        %v2739 = vld [vmem:[%s2707 + $0xf8] sm:$0xff]
        %v2740 = vld [vmem:[%s2707 + $0x100] sm:$0xff]
        %v2741 = vld [vmem:[%s2707 + $0x108] sm:$0xff]
        %v2742 = vld [vmem:[%s2707 + $0x110] sm:$0xff]
        %v2743 = vld [vmem:[%s2707 + $0x118] sm:$0xff]
        %v2744 = vld [vmem:[%s2707 + $0x120] sm:$0xff]
        %v2745 = vld [vmem:[%s2707 + $0x128] sm:$0xff]
        %v2746 = vld [vmem:[%s2707 + $0x130] sm:$0xff]
        %v2747 = vld [vmem:[%s2707 + $0x138] sm:$0xff]
        %v2748 = vld [vmem:[%s2707 + $0x140] sm:$0xff]
        %v2749 = vld [vmem:[%s2707 + $0x148] sm:$0xff]
        %v2750 = vld [vmem:[%s2707 + $0x150] sm:$0xff]
        %v2751 = vld [vmem:[%s2707 + $0x158] sm:$0xff]
        %v2752 = vld [vmem:[%s2707 + $0x160] sm:$0xff]
        %v2753 = vld [vmem:[%s2707 + $0x168] sm:$0xff]
        %v2754 = vld [vmem:[%s2707 + $0x170] sm:$0xff]
        %v2755 = vld [vmem:[%s2707 + $0x178] sm:$0xff]
        %v2756 = vld [vmem:[%s2707 + $0x180] sm:$0xff]
        %v2757 = vld [vmem:[%s2707 + $0x188] sm:$0xff]
        %v2758 = vld [vmem:[%s2707 + $0x190] sm:$0xff]
        %v2759 = vld [vmem:[%s2707 + $0x198] sm:$0xff]
        %v2760 = vld [vmem:[%s2707 + $0x1a0] sm:$0xff]
        %v2761 = vld [vmem:[%s2707 + $0x1a8] sm:$0xff]
        %v2762 = vld [vmem:[%s2707 + $0x1b0] sm:$0xff]
        %v2763 = vld [vmem:[%s2707 + $0x1b8] sm:$0xff]
        %v2764 = vld [vmem:[%s2707 + $0x1c0] sm:$0xff]
        %v2765 = vld [vmem:[%s2707 + $0x1c8] sm:$0xff]
        %v2766 = vld [vmem:[%s2707 + $0x1d0] sm:$0xff]
        %v2767 = vld [vmem:[%s2707 + $0x1d8] sm:$0xff]
        %v2768 = vld [vmem:[%s2707 + $0x1e0] sm:$0xff]
        %v2769 = vld [vmem:[%s2707 + $0x1e8] sm:$0xff]
        %v2770 = vld [vmem:[%s2707 + $0x1f0] sm:$0x3]
        %v2771 = vld [vmem:[%s2707 + $0x1f8] sm:$0x3]
        %v2782 = vrot.slane %v2633, 1
        %v2783 = vrot.slane %v2635, 1
        %v2784 = vsel %vm461, %v2782, %v2783
        %v2785 = vrot.slane %v2634, 1
        %v2786 = vrot.slane %v2636, 1
        %v2787 = vsel %vm461, %v2785, %v2786
        %v2788 = vrot.slane %v2637, 1
        %v2789 = vsel %vm461, %v2783, %v2788
        %v2790 = vrot.slane %v2638, 1
        %v2791 = vsel %vm461, %v2786, %v2790
        %v2792 = vrot.slane %v2639, 1
        %v2793 = vsel %vm461, %v2788, %v2792
        %v2794 = vrot.slane %v2640, 1
        %v2795 = vsel %vm461, %v2790, %v2794
        %v2796 = vrot.slane %v2641, 1
        %v2797 = vsel %vm461, %v2792, %v2796
        %v2798 = vrot.slane %v2642, 1
        %v2799 = vsel %vm461, %v2794, %v2798
        %vm2804 = vcmask 998400
        %v2805 = vsel %vm2804, %v2787, 0
        %v2807 = vsel %vm2804, %v2791, 0
        %v2809 = vsel %vm2804, %v2795, 0
        %v2811 = vsel %vm2804, %v2799, 0
        %v2814 = vsel %vm1675, %v2770, 0
        %v2817 = vsel %vm1675, %v2771, 0
        %2819 = vmatprep.subr.mxu0 %v2709
        %2820 = vmatpush1.msra.mxu0 %v2708
        %2821 = vmatprep.subr.mxu0 %v2711
        %2822 = vmatpush1.msra.mxu0 %v2710
        %2823 = vmatprep.subr.mxu0 %v2713
        %2824 = vmatpush1.msra.mxu0 %v2712
        %2825 = vmatprep.subr.mxu0 %v2715
        %2826 = vmatpush1.msra.mxu0 %v2714
        %2827 = vmatprep.subr.mxu0 %v2717
        %2828 = vmatpush1.msra.mxu0 %v2716
        %2829 = vmatprep.subr.mxu0 %v2719
        %2830 = vmatpush1.msra.mxu0 %v2718
        %2831 = vmatprep.subr.mxu0 %v2721
        %2832 = vmatpush1.msra.mxu0 %v2720
        %2833 = vmatprep.subr.mxu0 %v2723
        %2834 = vmatpush1.msra.mxu0 %v2722
        %2835 = vmatprep.subr.mxu0 %v2725
        %2836 = vmatpush1.msra.mxu0 %v2724
        %2837 = vmatprep.subr.mxu0 %v2727
        %2838 = vmatpush1.msra.mxu0 %v2726
        %2839 = vmatprep.subr.mxu0 %v2729
        %2840 = vmatpush1.msra.mxu0 %v2728
        %2841 = vmatprep.subr.mxu0 %v2731
        %2842 = vmatpush1.msra.mxu0 %v2730
        %2843 = vmatprep.subr.mxu0 %v2733
        %2844 = vmatpush1.msra.mxu0 %v2732
        %2845 = vmatprep.subr.mxu0 %v2735
        %2846 = vmatpush1.msra.mxu0 %v2734
        %2847 = vmatprep.subr.mxu0 %v2737
        %2848 = vmatpush1.msra.mxu0 %v2736
        %2849 = vmatprep.subr.mxu0 %v2739
        %2850 = vmatpush1.msra.mxu0 %v2738
        %2851 = vmatprep.subr.mxu0 %v2741
        %2852 = vmatpush1.msra.mxu0 %v2740
        %2853 = vmatprep.subr.mxu0 %v2743
        %2854 = vmatpush1.msra.mxu0 %v2742
        %2855 = vmatprep.subr.mxu0 %v2745
        %2856 = vmatpush1.msra.mxu0 %v2744
        %2857 = vmatprep.subr.mxu0 %v2747
        %2858 = vmatpush1.msra.mxu0 %v2746
        %2859 = vmatprep.subr.mxu0 %v2749
        %2860 = vmatpush1.msra.mxu0 %v2748
        %2861 = vmatprep.subr.mxu0 %v2751
        %2862 = vmatpush1.msra.mxu0 %v2750
        %2863 = vmatprep.subr.mxu0 %v2753
        %2864 = vmatpush1.msra.mxu0 %v2752
        %2865 = vmatprep.subr.mxu0 %v2755
        %2866 = vmatpush1.msra.mxu0 %v2754
        %2867 = vmatprep.subr.mxu0 %v2757
        %2868 = vmatpush1.msra.mxu0 %v2756
        %2869 = vmatprep.subr.mxu0 %v2759
        %2870 = vmatpush1.msra.mxu0 %v2758
        %2871 = vmatprep.subr.mxu0 %v2761
        %2872 = vmatpush1.msra.mxu0 %v2760
        %2873 = vmatprep.subr.mxu0 %v2763
        %2874 = vmatpush1.msra.mxu0 %v2762
        %2875 = vmatprep.subr.mxu0 %v2765
        %2876 = vmatpush1.msra.mxu0 %v2764
        %2877 = vmatprep.subr.mxu0 %v2767
        %2878 = vmatpush1.msra.mxu0 %v2766
        %2879 = vmatprep.subr.mxu0 %v2769
        %2880 = vmatpush1.msra.mxu0 %v2768
        %2881 = vmatprep.subr.mxu0 %v2817
        %2882 = vmatpush1.msra.mxu0 %v2814
        %2883 = vmatprep.mubr.f32.mxu0 %v2805
        %2884 = vmatmul.mubr.f32.gmra.mrb[0].mxu0 %v2784
        %v2885 = vpop.f32.mrb[0].mxu0
        %v2886 = vadd.f32 0.0, %v2885
        %v2887 = vpop.f32.mrb[0].mxu0
        %v2888 = vadd.f32 0.0, %v2887
        %2889 = vmatprep.mubr.f32.mxu0 %v2807
        %2890 = vmatmul.mubr.f32.gmra.mrb[0].mxu0 %v2789
        %v2891 = vpop.f32.mrb[0].mxu0
        %v2892 = vadd.f32 0.0, %v2891
        %v2893 = vpop.f32.mrb[0].mxu0
        %v2894 = vadd.f32 0.0, %v2893
        %2895 = vmatprep.mubr.f32.mxu0 %v2809
        %2896 = vmatmul.mubr.f32.gmra.mrb[0].mxu0 %v2793
        %v2897 = vpop.f32.mrb[0].mxu0
        %v2898 = vadd.f32 0.0, %v2897
        %v2899 = vpop.f32.mrb[0].mxu0
        %v2900 = vadd.f32 0.0, %v2899
        %2901 = vmatprep.mubr.f32.mxu0 %v2811
        %2902 = vmatmul.mubr.f32.gmra.mrb[0].mxu0 %v2797
        %v2903 = vpop.f32.mrb[0].mxu0
        %v2904 = vadd.f32 0.0, %v2903
        %v2905 = vpop.f32.mrb[0].mxu0
        %v2906 = vadd.f32 0.0, %v2905
        %2907 = vdwg.mxu0
        %v2908 = vsel %vm2804, %v2634, 0
        %v2910 = vsel %vm2804, %v2636, 0
        %v2912 = vsel %vm2804, %v2638, 0
        %v2914 = vsel %vm2804, %v2640, 0
        %v2917 = vsel %vm1675, %v2705, 0
        %v2920 = vsel %vm1675, %v2706, 0
        %2922 = vmatprep.subr.mxu0 %v2644
        %2923 = vmatpush1.msra.mxu0 %v2643
        %2924 = vmatprep.subr.mxu0 %v2646
        %2925 = vmatpush1.msra.mxu0 %v2645
        %2926 = vmatprep.subr.mxu0 %v2648
        %2927 = vmatpush1.msra.mxu0 %v2647
        %2928 = vmatprep.subr.mxu0 %v2650
        %2929 = vmatpush1.msra.mxu0 %v2649
        %2930 = vmatprep.subr.mxu0 %v2652
        %2931 = vmatpush1.msra.mxu0 %v2651
        %2932 = vmatprep.subr.mxu0 %v2654
        %2933 = vmatpush1.msra.mxu0 %v2653
        %2934 = vmatprep.subr.mxu0 %v2656
        %2935 = vmatpush1.msra.mxu0 %v2655
        %2936 = vmatprep.subr.mxu0 %v2658
        %2937 = vmatpush1.msra.mxu0 %v2657
        %2938 = vmatprep.subr.mxu0 %v2660
        %2939 = vmatpush1.msra.mxu0 %v2659
        %2940 = vmatprep.subr.mxu0 %v2662
        %2941 = vmatpush1.msra.mxu0 %v2661
        %2942 = vmatprep.subr.mxu0 %v2664
        %2943 = vmatpush1.msra.mxu0 %v2663
        %2944 = vmatprep.subr.mxu0 %v2666
        %2945 = vmatpush1.msra.mxu0 %v2665
        %2946 = vmatprep.subr.mxu0 %v2668
        %2947 = vmatpush1.msra.mxu0 %v2667
        %2948 = vmatprep.subr.mxu0 %v2670
        %2949 = vmatpush1.msra.mxu0 %v2669
        %2950 = vmatprep.subr.mxu0 %v2672
        %2951 = vmatpush1.msra.mxu0 %v2671
        %2952 = vmatprep.subr.mxu0 %v2674
        %2953 = vmatpush1.msra.mxu0 %v2673
        %2954 = vmatprep.subr.mxu0 %v2676
        %2955 = vmatpush1.msra.mxu0 %v2675
        %2956 = vmatprep.subr.mxu0 %v2678
        %2957 = vmatpush1.msra.mxu0 %v2677
        %2958 = vmatprep.subr.mxu0 %v2680
        %2959 = vmatpush1.msra.mxu0 %v2679
        %2960 = vmatprep.subr.mxu0 %v2682
        %2961 = vmatpush1.msra.mxu0 %v2681
        %2962 = vmatprep.subr.mxu0 %v2684
        %2963 = vmatpush1.msra.mxu0 %v2683
        %2964 = vmatprep.subr.mxu0 %v2686
        %2965 = vmatpush1.msra.mxu0 %v2685
        %2966 = vmatprep.subr.mxu0 %v2688
        %2967 = vmatpush1.msra.mxu0 %v2687
        %2968 = vmatprep.subr.mxu0 %v2690
        %2969 = vmatpush1.msra.mxu0 %v2689
        %2970 = vmatprep.subr.mxu0 %v2692
        %2971 = vmatpush1.msra.mxu0 %v2691
        %2972 = vmatprep.subr.mxu0 %v2694
        %2973 = vmatpush1.msra.mxu0 %v2693
        %2974 = vmatprep.subr.mxu0 %v2696
        %2975 = vmatpush1.msra.mxu0 %v2695
        %2976 = vmatprep.subr.mxu0 %v2698
        %2977 = vmatpush1.msra.mxu0 %v2697
        %2978 = vmatprep.subr.mxu0 %v2700
        %2979 = vmatpush1.msra.mxu0 %v2699
        %2980 = vmatprep.subr.mxu0 %v2702
        %2981 = vmatpush1.msra.mxu0 %v2701
        %2982 = vmatprep.subr.mxu0 %v2704
        %2983 = vmatpush1.msra.mxu0 %v2703
        %2984 = vmatprep.subr.mxu0 %v2920
        %2985 = vmatpush1.msra.mxu0 %v2917
        %2986 = vmatprep.mubr.f32.mxu0 %v2908
        %2987 = vmatmul.mubr.f32.gmra.mrb[0].mxu0 %v2633
        %v2988 = vpop.f32.mrb[0].mxu0
        %v2989 = vadd.f32 %v2886, %v2988
        %v2990 = vpop.f32.mrb[0].mxu0
        %v2991 = vadd.f32 %v2888, %v2990
        %2992 = vmatprep.mubr.f32.mxu0 %v2910
        %2993 = vmatmul.mubr.f32.gmra.mrb[0].mxu0 %v2635
        %v2994 = vpop.f32.mrb[0].mxu0
        %v2995 = vadd.f32 %v2892, %v2994
        %v2996 = vpop.f32.mrb[0].mxu0
        %v2997 = vadd.f32 %v2894, %v2996
        %2998 = vmatprep.mubr.f32.mxu0 %v2912
        %2999 = vmatmul.mubr.f32.gmra.mrb[0].mxu0 %v2637
        %v3000 = vpop.f32.mrb[0].mxu0
        %v3001 = vadd.f32 %v2898, %v3000
        %v3002 = vpop.f32.mrb[0].mxu0
        %v3003 = vadd.f32 %v2900, %v3002
        %3004 = vmatprep.mubr.f32.mxu0 %v2914
        %3005 = vmatmul.mubr.f32.gmra.mrb[0].mxu0 %v2639
        %v3006 = vpop.f32.mrb[0].mxu0
        %v3007 = vadd.f32 %v2904, %v3006
        %v3008 = vpop.f32.mrb[0].mxu0
        %v3009 = vadd.f32 %v2906, %v3008
        %3010 = vdwg.mxu0
        %s3011 = scalar_lea.vmem %s3, 1024
        %v3012 = vld [vmem:[%s3011] sm:$0xff]
        %v3013 = vld [vmem:[%s3011 + $0x8] sm:$0xff]
        %v3014 = vld [vmem:[%s3011 + $0x10] sm:$0xff]
        %v3015 = vld [vmem:[%s3011 + $0x18] sm:$0xff]
        %v3016 = vld [vmem:[%s3011 + $0x20] sm:$0xff]
        %v3017 = vld [vmem:[%s3011 + $0x28] sm:$0xff]
        %v3018 = vld [vmem:[%s3011 + $0x30] sm:$0xff]
        %v3019 = vld [vmem:[%s3011 + $0x38] sm:$0xff]
        %v3020 = vld [vmem:[%s3011 + $0x40] sm:$0xff]
        %v3021 = vld [vmem:[%s3011 + $0x48] sm:$0xff]
        %v3022 = vld [vmem:[%s3011 + $0x50] sm:$0xff]
        %v3023 = vld [vmem:[%s3011 + $0x58] sm:$0xff]
        %v3024 = vld [vmem:[%s3011 + $0x60] sm:$0xff]
        %v3025 = vld [vmem:[%s3011 + $0x68] sm:$0xff]
        %v3026 = vld [vmem:[%s3011 + $0x70] sm:$0xff]
        %v3027 = vld [vmem:[%s3011 + $0x78] sm:$0xff]
        %v3028 = vld [vmem:[%s3011 + $0x80] sm:$0xff]
        %v3029 = vld [vmem:[%s3011 + $0x88] sm:$0xff]
        %v3030 = vld [vmem:[%s3011 + $0x90] sm:$0xff]
        %v3031 = vld [vmem:[%s3011 + $0x98] sm:$0xff]
        %v3032 = vld [vmem:[%s3011 + $0xa0] sm:$0xff]
        %v3033 = vld [vmem:[%s3011 + $0xa8] sm:$0xff]
        %v3034 = vld [vmem:[%s3011 + $0xb0] sm:$0xff]
        %v3035 = vld [vmem:[%s3011 + $0xb8] sm:$0xff]
        %v3036 = vld [vmem:[%s3011 + $0xc0] sm:$0xff]
        %v3037 = vld [vmem:[%s3011 + $0xc8] sm:$0xff]
        %v3038 = vld [vmem:[%s3011 + $0xd0] sm:$0xff]
        %v3039 = vld [vmem:[%s3011 + $0xd8] sm:$0xff]
        %v3040 = vld [vmem:[%s3011 + $0xe0] sm:$0xff]
        %v3041 = vld [vmem:[%s3011 + $0xe8] sm:$0xff]
        %v3042 = vld [vmem:[%s3011 + $0xf0] sm:$0xff]
        %v3043 = vld [vmem:[%s3011 + $0xf8] sm:$0xff]
        %v3044 = vld [vmem:[%s3011 + $0x100] sm:$0xff]
        %v3045 = vld [vmem:[%s3011 + $0x108] sm:$0xff]
        %v3046 = vld [vmem:[%s3011 + $0x110] sm:$0xff]
        %v3047 = vld [vmem:[%s3011 + $0x118] sm:$0xff]
        %v3048 = vld [vmem:[%s3011 + $0x120] sm:$0xff]
        %v3049 = vld [vmem:[%s3011 + $0x128] sm:$0xff]
        %v3050 = vld [vmem:[%s3011 + $0x130] sm:$0xff]
        %v3051 = vld [vmem:[%s3011 + $0x138] sm:$0xff]
        %v3052 = vld [vmem:[%s3011 + $0x140] sm:$0xff]
        %v3053 = vld [vmem:[%s3011 + $0x148] sm:$0xff]
        %v3054 = vld [vmem:[%s3011 + $0x150] sm:$0xff]
        %v3055 = vld [vmem:[%s3011 + $0x158] sm:$0xff]
        %v3056 = vld [vmem:[%s3011 + $0x160] sm:$0xff]
        %v3057 = vld [vmem:[%s3011 + $0x168] sm:$0xff]
        %v3058 = vld [vmem:[%s3011 + $0x170] sm:$0xff]
        %v3059 = vld [vmem:[%s3011 + $0x178] sm:$0xff]
        %v3060 = vld [vmem:[%s3011 + $0x180] sm:$0xff]
        %v3061 = vld [vmem:[%s3011 + $0x188] sm:$0xff]
        %v3062 = vld [vmem:[%s3011 + $0x190] sm:$0xff]
        %v3063 = vld [vmem:[%s3011 + $0x198] sm:$0xff]
        %v3064 = vld [vmem:[%s3011 + $0x1a0] sm:$0xff]
        %v3065 = vld [vmem:[%s3011 + $0x1a8] sm:$0xff]
        %v3066 = vld [vmem:[%s3011 + $0x1b0] sm:$0xff]
        %v3067 = vld [vmem:[%s3011 + $0x1b8] sm:$0xff]
        %v3068 = vld [vmem:[%s3011 + $0x1c0] sm:$0xff]
        %v3069 = vld [vmem:[%s3011 + $0x1c8] sm:$0xff]
        %v3070 = vld [vmem:[%s3011 + $0x1d0] sm:$0xff]
        %v3071 = vld [vmem:[%s3011 + $0x1d8] sm:$0xff]
        %v3072 = vld [vmem:[%s3011 + $0x1e0] sm:$0xff]
        %v3073 = vld [vmem:[%s3011 + $0x1e8] sm:$0xff]
        %v3074 = vld [vmem:[%s3011 + $0x1f0] sm:$0x3]
        %v3075 = vld [vmem:[%s3011 + $0x1f8] sm:$0x3]
        %v3076 = vrot.slane %v2633, 2
        %v3077 = vrot.slane %v2635, 2
        %v3078 = vsel %vm883, %v3076, %v3077
        %v3079 = vrot.slane %v2634, 2
        %v3080 = vrot.slane %v2636, 2
        %v3081 = vsel %vm883, %v3079, %v3080
        %v3082 = vrot.slane %v2637, 2
        %v3083 = vsel %vm883, %v3077, %v3082
        %v3084 = vrot.slane %v2638, 2
        %v3085 = vsel %vm883, %v3080, %v3084
        %v3086 = vrot.slane %v2639, 2
        %v3087 = vsel %vm883, %v3082, %v3086
        %v3088 = vrot.slane %v2640, 2
        %v3089 = vsel %vm883, %v3084, %v3088
        %v3090 = vrot.slane %v2641, 2
        %v3091 = vsel %vm883, %v3086, %v3090
        %v3092 = vrot.slane %v2642, 2
        %v3093 = vsel %vm883, %v3088, %v3092
        %v3098 = vsel %vm2804, %v3081, 0
        %v3100 = vsel %vm2804, %v3085, 0
        %v3102 = vsel %vm2804, %v3089, 0
        %v3104 = vsel %vm2804, %v3093, 0
        %v3107 = vsel %vm1675, %v3074, 0
        %v3110 = vsel %vm1675, %v3075, 0
        %3112 = vmatprep.subr.mxu0 %v3013
        %3113 = vmatpush1.msra.mxu0 %v3012
        %3114 = vmatprep.subr.mxu0 %v3015
        %3115 = vmatpush1.msra.mxu0 %v3014
        %3116 = vmatprep.subr.mxu0 %v3017
        %3117 = vmatpush1.msra.mxu0 %v3016
        %3118 = vmatprep.subr.mxu0 %v3019
        %3119 = vmatpush1.msra.mxu0 %v3018
        %3120 = vmatprep.subr.mxu0 %v3021
        %3121 = vmatpush1.msra.mxu0 %v3020
        %3122 = vmatprep.subr.mxu0 %v3023
        %3123 = vmatpush1.msra.mxu0 %v3022
        %3124 = vmatprep.subr.mxu0 %v3025
        %3125 = vmatpush1.msra.mxu0 %v3024
        %3126 = vmatprep.subr.mxu0 %v3027
        %3127 = vmatpush1.msra.mxu0 %v3026
        %3128 = vmatprep.subr.mxu0 %v3029
        %3129 = vmatpush1.msra.mxu0 %v3028
        %3130 = vmatprep.subr.mxu0 %v3031
        %3131 = vmatpush1.msra.mxu0 %v3030
        %3132 = vmatprep.subr.mxu0 %v3033
        %3133 = vmatpush1.msra.mxu0 %v3032
        %3134 = vmatprep.subr.mxu0 %v3035
        %3135 = vmatpush1.msra.mxu0 %v3034
        %3136 = vmatprep.subr.mxu0 %v3037
        %3137 = vmatpush1.msra.mxu0 %v3036
        %3138 = vmatprep.subr.mxu0 %v3039
        %3139 = vmatpush1.msra.mxu0 %v3038
        %3140 = vmatprep.subr.mxu0 %v3041
        %3141 = vmatpush1.msra.mxu0 %v3040
        %3142 = vmatprep.subr.mxu0 %v3043
        %3143 = vmatpush1.msra.mxu0 %v3042
        %3144 = vmatprep.subr.mxu0 %v3045
        %3145 = vmatpush1.msra.mxu0 %v3044
        %3146 = vmatprep.subr.mxu0 %v3047
        %3147 = vmatpush1.msra.mxu0 %v3046
        %3148 = vmatprep.subr.mxu0 %v3049
        %3149 = vmatpush1.msra.mxu0 %v3048
        %3150 = vmatprep.subr.mxu0 %v3051
        %3151 = vmatpush1.msra.mxu0 %v3050
        %3152 = vmatprep.subr.mxu0 %v3053
        %3153 = vmatpush1.msra.mxu0 %v3052
        %3154 = vmatprep.subr.mxu0 %v3055
        %3155 = vmatpush1.msra.mxu0 %v3054
        %3156 = vmatprep.subr.mxu0 %v3057
        %3157 = vmatpush1.msra.mxu0 %v3056
        %3158 = vmatprep.subr.mxu0 %v3059
        %3159 = vmatpush1.msra.mxu0 %v3058
        %3160 = vmatprep.subr.mxu0 %v3061
        %3161 = vmatpush1.msra.mxu0 %v3060
        %3162 = vmatprep.subr.mxu0 %v3063
        %3163 = vmatpush1.msra.mxu0 %v3062
        %3164 = vmatprep.subr.mxu0 %v3065
        %3165 = vmatpush1.msra.mxu0 %v3064
        %3166 = vmatprep.subr.mxu0 %v3067
        %3167 = vmatpush1.msra.mxu0 %v3066
        %3168 = vmatprep.subr.mxu0 %v3069
        %3169 = vmatpush1.msra.mxu0 %v3068
        %3170 = vmatprep.subr.mxu0 %v3071
        %3171 = vmatpush1.msra.mxu0 %v3070
        %3172 = vmatprep.subr.mxu0 %v3073
        %3173 = vmatpush1.msra.mxu0 %v3072
        %3174 = vmatprep.subr.mxu0 %v3110
        %3175 = vmatpush1.msra.mxu0 %v3107
        %3176 = vmatprep.mubr.f32.mxu0 %v3098
        %3177 = vmatmul.mubr.f32.gmra.mrb[0].mxu0 %v3078
        %v3178 = vpop.f32.mrb[0].mxu0
        %v3179 = vadd.f32 0.0, %v3178
        %v3180 = vpop.f32.mrb[0].mxu0
        %v3181 = vadd.f32 0.0, %v3180
        %3182 = vmatprep.mubr.f32.mxu0 %v3100
        %3183 = vmatmul.mubr.f32.gmra.mrb[0].mxu0 %v3083
        %v3184 = vpop.f32.mrb[0].mxu0
        %v3185 = vadd.f32 0.0, %v3184
        %v3186 = vpop.f32.mrb[0].mxu0
        %v3187 = vadd.f32 0.0, %v3186
        %3188 = vmatprep.mubr.f32.mxu0 %v3102
        %3189 = vmatmul.mubr.f32.gmra.mrb[0].mxu0 %v3087
        %v3190 = vpop.f32.mrb[0].mxu0
        %v3191 = vadd.f32 0.0, %v3190
        %v3192 = vpop.f32.mrb[0].mxu0
        %v3193 = vadd.f32 0.0, %v3192
        %3194 = vmatprep.mubr.f32.mxu0 %v3104
        %3195 = vmatmul.mubr.f32.gmra.mrb[0].mxu0 %v3091
        %v3196 = vpop.f32.mrb[0].mxu0
        %v3197 = vadd.f32 0.0, %v3196
        %v3198 = vpop.f32.mrb[0].mxu0
        %v3199 = vadd.f32 0.0, %v3198
        %3200 = vdwg.mxu0
        %v3201 = vadd.f32 %v2989, %v3179
        %v3202 = vadd.f32 %v2991, %v3181
        %v3203 = vadd.f32 %v2995, %v3185
        %v3204 = vadd.f32 %v2997, %v3187
        %v3205 = vadd.f32 %v3001, %v3191
        %v3206 = vadd.f32 %v3003, %v3193
        %v3207 = vadd.f32 %v3007, %v3197
        %v3208 = vadd.f32 %v3009, %v3199
        %3217 = vrot.lane.b32.xlu0 %v3201, 127
        %v3218 = vpop.permute.xlu0 %3217
        %3219 = vrot.lane.b32.xlu0 %v3202, 127
        %v3220 = vpop.permute.xlu0 %3219
        %3221 = vrot.lane.b32.xlu0 %v3203, 127
        %v3222 = vpop.permute.xlu0 %3221
        %3223 = vrot.lane.b32.xlu0 %v3204, 127
        %v3224 = vpop.permute.xlu0 %3223
        %3225 = vrot.lane.b32.xlu0 %v3205, 127
        %v3226 = vpop.permute.xlu0 %3225
        %3227 = vrot.lane.b32.xlu0 %v3206, 127
        %v3228 = vpop.permute.xlu0 %3227
        %3229 = vrot.lane.b32.xlu0 %v3207, 127
        %v3230 = vpop.permute.xlu0 %3229
        %3231 = vrot.lane.b32.xlu0 %v3208, 127
        %v3232 = vpop.permute.xlu0 %3231
        %v3233 = vsel %vm1150, %v3218, %v3220
        %v3234 = vsel %vm1150, %v3222, %v3224
        %v3235 = vsel %vm1150, %v3226, %v3228
        %v3236 = vsel %vm1150, %v3230, %v3232
        %v3245 = vmax.f32 %v3201, %v3233
        %v3246 = vmax.f32 %v3202, %v3220
        %v3247 = vmax.f32 %v3203, %v3234
        %v3248 = vmax.f32 %v3204, %v3224
        %v3249 = vmax.f32 %v3205, %v3235
        %v3250 = vmax.f32 %v3206, %v3228
        %v3251 = vmax.f32 %v3207, %v3236
        %v3252 = vmax.f32 %v3208, %v3232
        %3253 = vrot.lane.b32.xlu0 %v3201, 126
        %v3254 = vpop.permute.xlu0 %3253
        %3255 = vrot.lane.b32.xlu0 %v3202, 126
        %v3256 = vpop.permute.xlu0 %3255
        %3257 = vrot.lane.b32.xlu0 %v3203, 126
        %v3258 = vpop.permute.xlu0 %3257
        %3259 = vrot.lane.b32.xlu0 %v3204, 126
        %v3260 = vpop.permute.xlu0 %3259
        %3261 = vrot.lane.b32.xlu0 %v3205, 126
        %v3262 = vpop.permute.xlu0 %3261
        %3263 = vrot.lane.b32.xlu0 %v3206, 126
        %v3264 = vpop.permute.xlu0 %3263
        %3265 = vrot.lane.b32.xlu0 %v3207, 126
        %v3266 = vpop.permute.xlu0 %3265
        %3267 = vrot.lane.b32.xlu0 %v3208, 126
        %v3268 = vpop.permute.xlu0 %3267
        %v3269 = vsel %vm1221, %v3254, %v3256
        %v3270 = vsel %vm1221, %v3258, %v3260
        %v3271 = vsel %vm1221, %v3262, %v3264
        %v3272 = vsel %vm1221, %v3266, %v3268
        %v3281 = vmax.f32 %v3245, %v3269
        %v3282 = vmax.f32 %v3246, %v3256
        %v3283 = vmax.f32 %v3247, %v3270
        %v3284 = vmax.f32 %v3248, %v3260
        %v3285 = vmax.f32 %v3249, %v3271
        %v3286 = vmax.f32 %v3250, %v3264
        %v3287 = vmax.f32 %v3251, %v3272
        %v3288 = vmax.f32 %v3252, %v3268
        %v3297 = vrot.slane %v3281, 1
        %v3298 = vrot.slane %v3283, 1
        %v3299 = vsel %vm461, %v3297, %v3298
        %v3300 = vrot.slane %v3282, 1
        %v3301 = vrot.slane %v3284, 1
        %v3302 = vsel %vm461, %v3300, %v3301
        %v3303 = vrot.slane %v3285, 1
        %v3304 = vsel %vm461, %v3298, %v3303
        %v3305 = vrot.slane %v3286, 1
        %v3306 = vsel %vm461, %v3301, %v3305
        %v3307 = vrot.slane %v3287, 1
        %v3308 = vsel %vm461, %v3303, %v3307
        %v3309 = vrot.slane %v3288, 1
        %v3310 = vsel %vm461, %v3305, %v3309
        %v3319 = vmax.f32 %v3281, %v3299
        %v3320 = vmax.f32 %v3282, %v3302
        %v3321 = vmax.f32 %v3283, %v3304
        %v3322 = vmax.f32 %v3284, %v3306
        %v3323 = vmax.f32 %v3285, %v3308
        %v3324 = vmax.f32 %v3286, %v3310
        %v3325 = vmax.f32 %v3287, %v3307
        %v3326 = vmax.f32 %v3288, %v3309
        %v3327 = vrot.slane %v3281, 2
        %v3328 = vrot.slane %v3283, 2
        %v3329 = vsel %vm883, %v3327, %v3328
        %v3330 = vrot.slane %v3282, 2
        %v3331 = vrot.slane %v3284, 2
        %v3332 = vsel %vm883, %v3330, %v3331
        %v3333 = vrot.slane %v3285, 2
        %v3334 = vsel %vm883, %v3328, %v3333
        %v3335 = vrot.slane %v3286, 2
        %v3336 = vsel %vm883, %v3331, %v3335
        %v3337 = vrot.slane %v3287, 2
        %v3338 = vsel %vm883, %v3333, %v3337
        %v3339 = vrot.slane %v3288, 2
        %v3340 = vsel %vm883, %v3335, %v3339
        %v3349 = vmax.f32 %v3319, %v3329
        %v3350 = vmax.f32 %v3320, %v3332
        %v3351 = vmax.f32 %v3321, %v3334
        %v3352 = vmax.f32 %v3322, %v3336
        %v3353 = vmax.f32 %v3323, %v3338
        %v3354 = vmax.f32 %v3324, %v3340
        %v3355 = vmax.f32 %v3325, %v3337
        %v3356 = vmax.f32 %v3326, %v3339
        %v3357 = vld [vmem:[%s7] ss:$2 sm:$0x3]
        %v3359 = vlaneseq
        %v3360 = vshrl.u32 %v3359, 7
        %v3361 = vsub.s32 0, %v3360
        %v3362 = vrot.slane %v3357, %v3361
        %v3363 = vlaneseq
        %v3364 = vshrl.u32 %v3363, 7
        %v3365 = vsub.s32 1, %v3364
        %v3366 = vrot.slane %v3357, %v3365
        %v3369 = vmul.f32 %v3349, %v3362
        %v3370 = vmul.f32 %v3350, %v3366
        %v3371 = vmul.f32 %v3351, %v3362
        %v3372 = vmul.f32 %v3352, %v3366
        %v3373 = vmul.f32 %v3353, %v3362
        %v3374 = vmul.f32 %v3354, %v3366
        %v3375 = vmul.f32 %v3355, %v3362
        %v3376 = vmul.f32 %v3356, %v3366
        %s3377 = scalar_lea.vmem %s7, 1
        %v3378 = vld [vmem:[%s3377] ss:$2 sm:$0x3]
        %v3380 = vlaneseq
        %v3381 = vshrl.u32 %v3380, 7
        %v3382 = vsub.s32 0, %v3381
        %v3383 = vrot.slane %v3378, %v3382
        %v3384 = vlaneseq
        %v3385 = vshrl.u32 %v3384, 7
        %v3386 = vsub.s32 1, %v3385
        %v3387 = vrot.slane %v3378, %v3386
        %v3390 = vadd.f32 %v3369, %v3383
        %v3391 = vadd.f32 %v3370, %v3387
        %v3392 = vadd.f32 %v3371, %v3383
        %v3393 = vadd.f32 %v3372, %v3387
        %v3394 = vadd.f32 %v3373, %v3383
        %v3395 = vadd.f32 %v3374, %v3387
        %v3396 = vadd.f32 %v3375, %v3383
        %v3397 = vadd.f32 %v3376, %v3387
        %v3398 = vmax.f32 %v3390, 0.0
        %v3399 = vmax.f32 %v3391, 0.0
        %v3400 = vmax.f32 %v3392, 0.0
        %v3401 = vmax.f32 %v3393, 0.0
        %v3402 = vmax.f32 %v3394, 0.0
        %v3403 = vmax.f32 %v3395, 0.0
        %v3404 = vmax.f32 %v3396, 0.0
        %v3405 = vmax.f32 %v3397, 0.0
        %v3406 = vld [vmem:[%s4] sm:$0xff]
        %v3407 = vld [vmem:[%s4 + $0x8] sm:$0xff]
        %v3408 = vld [vmem:[%s4 + $0x10] sm:$0xff]
        %v3409 = vld [vmem:[%s4 + $0x18] sm:$0xff]
        %v3410 = vld [vmem:[%s4 + $0x20] sm:$0xff]
        %v3411 = vld [vmem:[%s4 + $0x28] sm:$0xff]
        %v3412 = vld [vmem:[%s4 + $0x30] sm:$0xff]
        %v3413 = vld [vmem:[%s4 + $0x38] sm:$0xff]
        %v3414 = vld [vmem:[%s4 + $0x40] sm:$0xff]
        %v3415 = vld [vmem:[%s4 + $0x48] sm:$0xff]
        %v3416 = vld [vmem:[%s4 + $0x50] sm:$0xff]
        %v3417 = vld [vmem:[%s4 + $0x58] sm:$0xff]
        %v3418 = vld [vmem:[%s4 + $0x60] sm:$0xff]
        %v3419 = vld [vmem:[%s4 + $0x68] sm:$0xff]
        %v3420 = vld [vmem:[%s4 + $0x70] sm:$0xff]
        %v3421 = vld [vmem:[%s4 + $0x78] sm:$0xff]
        %v3422 = vld [vmem:[%s4 + $0x80] sm:$0xff]
        %v3423 = vld [vmem:[%s4 + $0x88] sm:$0xff]
        %v3424 = vld [vmem:[%s4 + $0x90] sm:$0xff]
        %v3425 = vld [vmem:[%s4 + $0x98] sm:$0xff]
        %v3426 = vld [vmem:[%s4 + $0xa0] sm:$0xff]
        %v3427 = vld [vmem:[%s4 + $0xa8] sm:$0xff]
        %v3428 = vld [vmem:[%s4 + $0xb0] sm:$0xff]
        %v3429 = vld [vmem:[%s4 + $0xb8] sm:$0xff]
        %v3430 = vld [vmem:[%s4 + $0xc0] sm:$0xff]
        %v3431 = vld [vmem:[%s4 + $0xc8] sm:$0xff]
        %v3432 = vld [vmem:[%s4 + $0xd0] sm:$0xff]
        %v3433 = vld [vmem:[%s4 + $0xd8] sm:$0xff]
        %v3434 = vld [vmem:[%s4 + $0xe0] sm:$0x3]
        %s3435 = scalar_lea.vmem %s4, 232
        %v3436 = vld [vmem:[%s3435] sm:$0xff]
        %v3437 = vld [vmem:[%s3435 + $0x8] sm:$0xff]
        %v3438 = vld [vmem:[%s3435 + $0x10] sm:$0xff]
        %v3439 = vld [vmem:[%s3435 + $0x18] sm:$0xff]
        %v3440 = vld [vmem:[%s3435 + $0x20] sm:$0xff]
        %v3441 = vld [vmem:[%s3435 + $0x28] sm:$0xff]
        %v3442 = vld [vmem:[%s3435 + $0x30] sm:$0xff]
        %v3443 = vld [vmem:[%s3435 + $0x38] sm:$0xff]
        %v3444 = vld [vmem:[%s3435 + $0x40] sm:$0xff]
        %v3445 = vld [vmem:[%s3435 + $0x48] sm:$0xff]
        %v3446 = vld [vmem:[%s3435 + $0x50] sm:$0xff]
        %v3447 = vld [vmem:[%s3435 + $0x58] sm:$0xff]
        %v3448 = vld [vmem:[%s3435 + $0x60] sm:$0xff]
        %v3449 = vld [vmem:[%s3435 + $0x68] sm:$0xff]
        %v3450 = vld [vmem:[%s3435 + $0x70] sm:$0xff]
        %v3451 = vld [vmem:[%s3435 + $0x78] sm:$0xff]
        %v3452 = vld [vmem:[%s3435 + $0x80] sm:$0xff]
        %v3453 = vld [vmem:[%s3435 + $0x88] sm:$0xff]
        %v3454 = vld [vmem:[%s3435 + $0x90] sm:$0xff]
        %v3455 = vld [vmem:[%s3435 + $0x98] sm:$0xff]
        %v3456 = vld [vmem:[%s3435 + $0xa0] sm:$0xff]
        %v3457 = vld [vmem:[%s3435 + $0xa8] sm:$0xff]
        %v3458 = vld [vmem:[%s3435 + $0xb0] sm:$0xff]
        %v3459 = vld [vmem:[%s3435 + $0xb8] sm:$0xff]
        %v3460 = vld [vmem:[%s3435 + $0xc0] sm:$0xff]
        %v3461 = vld [vmem:[%s3435 + $0xc8] sm:$0xff]
        %v3462 = vld [vmem:[%s3435 + $0xd0] sm:$0xff]
        %v3463 = vld [vmem:[%s3435 + $0xd8] sm:$0xff]
        %v3464 = vld [vmem:[%s3435 + $0xe0] sm:$0x3]
        %v3473 = vrot.slane %v3398, 1
        %v3474 = vrot.slane %v3400, 1
        %v3475 = vsel %vm461, %v3473, %v3474
        %v3476 = vrot.slane %v3399, 1
        %v3477 = vrot.slane %v3401, 1
        %v3478 = vsel %vm461, %v3476, %v3477
        %v3479 = vrot.slane %v3402, 1
        %v3480 = vsel %vm461, %v3474, %v3479
        %v3481 = vrot.slane %v3403, 1
        %v3482 = vsel %vm461, %v3477, %v3481
        %v3483 = vrot.slane %v3404, 1
        %v3484 = vsel %vm461, %v3479, %v3483
        %v3485 = vrot.slane %v3405, 1
        %v3486 = vsel %vm461, %v3481, %v3485
        %vm3491 = vcmask 801792
        %v3492 = vsel %vm3491, %v3478, 0
        %v3494 = vsel %vm3491, %v3482, 0
        %v3496 = vsel %vm3491, %v3486, 0
        %v3498 = vsel %vm3491, %v3485, 0
        %v3501 = vsel %vm1675, %v3464, 0
        %3503 = vmatprep.subr.mxu0 0.0
        %3504 = vmatpush1.msra.mxu0 %v3436
        %3505 = vmatprep.subr.mxu0 0.0
        %3506 = vmatpush1.msra.mxu0 %v3437
        %3507 = vmatprep.subr.mxu0 0.0
        %3508 = vmatpush1.msra.mxu0 %v3438
        %3509 = vmatprep.subr.mxu0 0.0
        %3510 = vmatpush1.msra.mxu0 %v3439
        %3511 = vmatprep.subr.mxu0 0.0
        %3512 = vmatpush1.msra.mxu0 %v3440
        %3513 = vmatprep.subr.mxu0 0.0
        %3514 = vmatpush1.msra.mxu0 %v3441
        %3515 = vmatprep.subr.mxu0 0.0
        %3516 = vmatpush1.msra.mxu0 %v3442
        %3517 = vmatprep.subr.mxu0 0.0
        %3518 = vmatpush1.msra.mxu0 %v3443
        %3519 = vmatprep.subr.mxu0 0.0
        %3520 = vmatpush1.msra.mxu0 %v3444
        %3521 = vmatprep.subr.mxu0 0.0
        %3522 = vmatpush1.msra.mxu0 %v3445
        %3523 = vmatprep.subr.mxu0 0.0
        %3524 = vmatpush1.msra.mxu0 %v3446
        %3525 = vmatprep.subr.mxu0 0.0
        %3526 = vmatpush1.msra.mxu0 %v3447
        %3527 = vmatprep.subr.mxu0 0.0
        %3528 = vmatpush1.msra.mxu0 %v3448
        %3529 = vmatprep.subr.mxu0 0.0
        %3530 = vmatpush1.msra.mxu0 %v3449
        %3531 = vmatprep.subr.mxu0 0.0
        %3532 = vmatpush1.msra.mxu0 %v3450
        %3533 = vmatprep.subr.mxu0 0.0
        %3534 = vmatpush1.msra.mxu0 %v3451
        %3535 = vmatprep.subr.mxu0 0.0
        %3536 = vmatpush1.msra.mxu0 %v3452
        %3537 = vmatprep.subr.mxu0 0.0
        %3538 = vmatpush1.msra.mxu0 %v3453
        %3539 = vmatprep.subr.mxu0 0.0
        %3540 = vmatpush1.msra.mxu0 %v3454
        %3541 = vmatprep.subr.mxu0 0.0
        %3542 = vmatpush1.msra.mxu0 %v3455
        %3543 = vmatprep.subr.mxu0 0.0
        %3544 = vmatpush1.msra.mxu0 %v3456
        %3545 = vmatprep.subr.mxu0 0.0
        %3546 = vmatpush1.msra.mxu0 %v3457
        %3547 = vmatprep.subr.mxu0 0.0
        %3548 = vmatpush1.msra.mxu0 %v3458
        %3549 = vmatprep.subr.mxu0 0.0
        %3550 = vmatpush1.msra.mxu0 %v3459
        %3551 = vmatprep.subr.mxu0 0.0
        %3552 = vmatpush1.msra.mxu0 %v3460
        %3553 = vmatprep.subr.mxu0 0.0
        %3554 = vmatpush1.msra.mxu0 %v3461
        %3555 = vmatprep.subr.mxu0 0.0
        %3556 = vmatpush1.msra.mxu0 %v3462
        %3557 = vmatprep.subr.mxu0 0.0
        %3558 = vmatpush1.msra.mxu0 %v3463
        %3559 = vmatprep.subr.mxu0 0.0
        %3560 = vmatpush1.msra.mxu0 %v3501
        %3561 = vmatprep.subr.mxu0 0.0
        %3562 = vmatpush1.msra.mxu0 0.0
        %3563 = vmatprep.subr.mxu0 0.0
        %3564 = vmatpush1.msra.mxu0 0.0
        %3565 = vmatprep.subr.mxu0 0.0
        %3566 = vmatpush1.msra.mxu0 0.0
        %3567 = vmatprep.mubr.f32.mxu0 %v3492
        %3568 = vmatmul.mubr.f32.gmra.mrb[0].mxu0 %v3475
        %v3569 = vpop.f32.mrb[0].mxu0
        %v3570 = vadd.f32 0.0, %v3569
        %v3571 = vpop.f32.mrb[0].mxu0
        %3572 = vmatprep.mubr.f32.mxu0 %v3494
        %3573 = vmatmul.mubr.f32.gmra.mrb[0].mxu0 %v3480
        %v3574 = vpop.f32.mrb[0].mxu0
        %v3575 = vadd.f32 0.0, %v3574
        %v3576 = vpop.f32.mrb[0].mxu0
        %3577 = vmatprep.mubr.f32.mxu0 %v3496
        %3578 = vmatmul.mubr.f32.gmra.mrb[0].mxu0 %v3484
        %v3579 = vpop.f32.mrb[0].mxu0
        %v3580 = vadd.f32 0.0, %v3579
        %v3581 = vpop.f32.mrb[0].mxu0
        %3582 = vmatprep.mubr.f32.mxu0 %v3498
        %3583 = vmatmul.mubr.f32.gmra.mrb[0].mxu0 %v3483
        %v3584 = vpop.f32.mrb[0].mxu0
        %v3585 = vadd.f32 0.0, %v3584
        %v3586 = vpop.f32.mrb[0].mxu0
        %3587 = vdwg.mxu0
        %v3588 = vsel %vm3491, %v3399, 0
        %v3590 = vsel %vm3491, %v3401, 0
        %v3592 = vsel %vm3491, %v3403, 0
        %v3594 = vsel %vm3491, %v3405, 0
        %v3597 = vsel %vm1675, %v3434, 0
        %3599 = vmatprep.subr.mxu0 0.0
        %3600 = vmatpush1.msra.mxu0 %v3406
        %3601 = vmatprep.subr.mxu0 0.0
        %3602 = vmatpush1.msra.mxu0 %v3407
        %3603 = vmatprep.subr.mxu0 0.0
        %3604 = vmatpush1.msra.mxu0 %v3408
        %3605 = vmatprep.subr.mxu0 0.0
        %3606 = vmatpush1.msra.mxu0 %v3409
        %3607 = vmatprep.subr.mxu0 0.0
        %3608 = vmatpush1.msra.mxu0 %v3410
        %3609 = vmatprep.subr.mxu0 0.0
        %3610 = vmatpush1.msra.mxu0 %v3411
        %3611 = vmatprep.subr.mxu0 0.0
        %3612 = vmatpush1.msra.mxu0 %v3412
        %3613 = vmatprep.subr.mxu0 0.0
        %3614 = vmatpush1.msra.mxu0 %v3413
        %3615 = vmatprep.subr.mxu0 0.0
        %3616 = vmatpush1.msra.mxu0 %v3414
        %3617 = vmatprep.subr.mxu0 0.0
        %3618 = vmatpush1.msra.mxu0 %v3415
        %3619 = vmatprep.subr.mxu0 0.0
        %3620 = vmatpush1.msra.mxu0 %v3416
        %3621 = vmatprep.subr.mxu0 0.0
        %3622 = vmatpush1.msra.mxu0 %v3417
        %3623 = vmatprep.subr.mxu0 0.0
        %3624 = vmatpush1.msra.mxu0 %v3418
        %3625 = vmatprep.subr.mxu0 0.0
        %3626 = vmatpush1.msra.mxu0 %v3419
        %3627 = vmatprep.subr.mxu0 0.0
        %3628 = vmatpush1.msra.mxu0 %v3420
        %3629 = vmatprep.subr.mxu0 0.0
        %3630 = vmatpush1.msra.mxu0 %v3421
        %3631 = vmatprep.subr.mxu0 0.0
        %3632 = vmatpush1.msra.mxu0 %v3422
        %3633 = vmatprep.subr.mxu0 0.0
        %3634 = vmatpush1.msra.mxu0 %v3423
        %3635 = vmatprep.subr.mxu0 0.0
        %3636 = vmatpush1.msra.mxu0 %v3424
        %3637 = vmatprep.subr.mxu0 0.0
        %3638 = vmatpush1.msra.mxu0 %v3425
        %3639 = vmatprep.subr.mxu0 0.0
        %3640 = vmatpush1.msra.mxu0 %v3426
        %3641 = vmatprep.subr.mxu0 0.0
        %3642 = vmatpush1.msra.mxu0 %v3427
        %3643 = vmatprep.subr.mxu0 0.0
        %3644 = vmatpush1.msra.mxu0 %v3428
        %3645 = vmatprep.subr.mxu0 0.0
        %3646 = vmatpush1.msra.mxu0 %v3429
        %3647 = vmatprep.subr.mxu0 0.0
        %3648 = vmatpush1.msra.mxu0 %v3430
        %3649 = vmatprep.subr.mxu0 0.0
        %3650 = vmatpush1.msra.mxu0 %v3431
        %3651 = vmatprep.subr.mxu0 0.0
        %3652 = vmatpush1.msra.mxu0 %v3432
        %3653 = vmatprep.subr.mxu0 0.0
        %3654 = vmatpush1.msra.mxu0 %v3433
        %3655 = vmatprep.subr.mxu0 0.0
        %3656 = vmatpush1.msra.mxu0 %v3597
        %3657 = vmatprep.subr.mxu0 0.0
        %3658 = vmatpush1.msra.mxu0 0.0
        %3659 = vmatprep.subr.mxu0 0.0
        %3660 = vmatpush1.msra.mxu0 0.0
        %3661 = vmatprep.subr.mxu0 0.0
        %3662 = vmatpush1.msra.mxu0 0.0
        %3663 = vmatprep.mubr.f32.mxu0 %v3588
        %3664 = vmatmul.mubr.f32.gmra.mrb[0].mxu0 %v3398
        %v3665 = vpop.f32.mrb[0].mxu0
        %v3666 = vadd.f32 %v3570, %v3665
        %v3667 = vpop.f32.mrb[0].mxu0
        %3668 = vmatprep.mubr.f32.mxu0 %v3590
        %3669 = vmatmul.mubr.f32.gmra.mrb[0].mxu0 %v3400
        %v3670 = vpop.f32.mrb[0].mxu0
        %v3671 = vadd.f32 %v3575, %v3670
        %v3672 = vpop.f32.mrb[0].mxu0
        %3673 = vmatprep.mubr.f32.mxu0 %v3592
        %3674 = vmatmul.mubr.f32.gmra.mrb[0].mxu0 %v3402
        %v3675 = vpop.f32.mrb[0].mxu0
        %v3676 = vadd.f32 %v3580, %v3675
        %v3677 = vpop.f32.mrb[0].mxu0
        %3678 = vmatprep.mubr.f32.mxu0 %v3594
        %3679 = vmatmul.mubr.f32.gmra.mrb[0].mxu0 %v3404
        %v3680 = vpop.f32.mrb[0].mxu0
        %v3681 = vadd.f32 %v3585, %v3680
        %v3682 = vpop.f32.mrb[0].mxu0
        %3683 = vdwg.mxu0
        %s3684 = scalar_lea.vmem %s4, 464
        %v3685 = vld [vmem:[%s3684] sm:$0xff]
        %v3686 = vld [vmem:[%s3684 + $0x8] sm:$0xff]
        %v3687 = vld [vmem:[%s3684 + $0x10] sm:$0xff]
        %v3688 = vld [vmem:[%s3684 + $0x18] sm:$0xff]
        %v3689 = vld [vmem:[%s3684 + $0x20] sm:$0xff]
        %v3690 = vld [vmem:[%s3684 + $0x28] sm:$0xff]
        %v3691 = vld [vmem:[%s3684 + $0x30] sm:$0xff]
        %v3692 = vld [vmem:[%s3684 + $0x38] sm:$0xff]
        %v3693 = vld [vmem:[%s3684 + $0x40] sm:$0xff]
        %v3694 = vld [vmem:[%s3684 + $0x48] sm:$0xff]
        %v3695 = vld [vmem:[%s3684 + $0x50] sm:$0xff]
        %v3696 = vld [vmem:[%s3684 + $0x58] sm:$0xff]
        %v3697 = vld [vmem:[%s3684 + $0x60] sm:$0xff]
        %v3698 = vld [vmem:[%s3684 + $0x68] sm:$0xff]
        %v3699 = vld [vmem:[%s3684 + $0x70] sm:$0xff]
        %v3700 = vld [vmem:[%s3684 + $0x78] sm:$0xff]
        %v3701 = vld [vmem:[%s3684 + $0x80] sm:$0xff]
        %v3702 = vld [vmem:[%s3684 + $0x88] sm:$0xff]
        %v3703 = vld [vmem:[%s3684 + $0x90] sm:$0xff]
        %v3704 = vld [vmem:[%s3684 + $0x98] sm:$0xff]
        %v3705 = vld [vmem:[%s3684 + $0xa0] sm:$0xff]
        %v3706 = vld [vmem:[%s3684 + $0xa8] sm:$0xff]
        %v3707 = vld [vmem:[%s3684 + $0xb0] sm:$0xff]
        %v3708 = vld [vmem:[%s3684 + $0xb8] sm:$0xff]
        %v3709 = vld [vmem:[%s3684 + $0xc0] sm:$0xff]
        %v3710 = vld [vmem:[%s3684 + $0xc8] sm:$0xff]
        %v3711 = vld [vmem:[%s3684 + $0xd0] sm:$0xff]
        %v3712 = vld [vmem:[%s3684 + $0xd8] sm:$0xff]
        %v3713 = vld [vmem:[%s3684 + $0xe0] sm:$0x3]
        %v3714 = vrot.slane %v3398, 2
        %v3715 = vrot.slane %v3400, 2
        %v3716 = vsel %vm883, %v3714, %v3715
        %v3717 = vrot.slane %v3399, 2
        %v3718 = vrot.slane %v3401, 2
        %v3719 = vsel %vm883, %v3717, %v3718
        %v3720 = vrot.slane %v3402, 2
        %v3721 = vsel %vm883, %v3715, %v3720
        %v3722 = vrot.slane %v3403, 2
        %v3723 = vsel %vm883, %v3718, %v3722
        %v3724 = vrot.slane %v3404, 2
        %v3725 = vsel %vm883, %v3720, %v3724
        %v3726 = vrot.slane %v3405, 2
        %v3727 = vsel %vm883, %v3722, %v3726
        %v3732 = vsel %vm3491, %v3719, 0
        %v3734 = vsel %vm3491, %v3723, 0
        %v3736 = vsel %vm3491, %v3727, 0
        %v3738 = vsel %vm3491, %v3726, 0
        %v3741 = vsel %vm1675, %v3713, 0
        %3743 = vmatprep.subr.mxu0 0.0
        %3744 = vmatpush1.msra.mxu0 %v3685
        %3745 = vmatprep.subr.mxu0 0.0
        %3746 = vmatpush1.msra.mxu0 %v3686
        %3747 = vmatprep.subr.mxu0 0.0
        %3748 = vmatpush1.msra.mxu0 %v3687
        %3749 = vmatprep.subr.mxu0 0.0
        %3750 = vmatpush1.msra.mxu0 %v3688
        %3751 = vmatprep.subr.mxu0 0.0
        %3752 = vmatpush1.msra.mxu0 %v3689
        %3753 = vmatprep.subr.mxu0 0.0
        %3754 = vmatpush1.msra.mxu0 %v3690
        %3755 = vmatprep.subr.mxu0 0.0
        %3756 = vmatpush1.msra.mxu0 %v3691
        %3757 = vmatprep.subr.mxu0 0.0
        %3758 = vmatpush1.msra.mxu0 %v3692
        %3759 = vmatprep.subr.mxu0 0.0
        %3760 = vmatpush1.msra.mxu0 %v3693
        %3761 = vmatprep.subr.mxu0 0.0
        %3762 = vmatpush1.msra.mxu0 %v3694
        %3763 = vmatprep.subr.mxu0 0.0
        %3764 = vmatpush1.msra.mxu0 %v3695
        %3765 = vmatprep.subr.mxu0 0.0
        %3766 = vmatpush1.msra.mxu0 %v3696
        %3767 = vmatprep.subr.mxu0 0.0
        %3768 = vmatpush1.msra.mxu0 %v3697
        %3769 = vmatprep.subr.mxu0 0.0
        %3770 = vmatpush1.msra.mxu0 %v3698
        %3771 = vmatprep.subr.mxu0 0.0
        %3772 = vmatpush1.msra.mxu0 %v3699
        %3773 = vmatprep.subr.mxu0 0.0
        %3774 = vmatpush1.msra.mxu0 %v3700
        %3775 = vmatprep.subr.mxu0 0.0
        %3776 = vmatpush1.msra.mxu0 %v3701
        %3777 = vmatprep.subr.mxu0 0.0
        %3778 = vmatpush1.msra.mxu0 %v3702
        %3779 = vmatprep.subr.mxu0 0.0
        %3780 = vmatpush1.msra.mxu0 %v3703
        %3781 = vmatprep.subr.mxu0 0.0
        %3782 = vmatpush1.msra.mxu0 %v3704
        %3783 = vmatprep.subr.mxu0 0.0
        %3784 = vmatpush1.msra.mxu0 %v3705
        %3785 = vmatprep.subr.mxu0 0.0
        %3786 = vmatpush1.msra.mxu0 %v3706
        %3787 = vmatprep.subr.mxu0 0.0
        %3788 = vmatpush1.msra.mxu0 %v3707
        %3789 = vmatprep.subr.mxu0 0.0
        %3790 = vmatpush1.msra.mxu0 %v3708
        %3791 = vmatprep.subr.mxu0 0.0
        %3792 = vmatpush1.msra.mxu0 %v3709
        %3793 = vmatprep.subr.mxu0 0.0
        %3794 = vmatpush1.msra.mxu0 %v3710
        %3795 = vmatprep.subr.mxu0 0.0
        %3796 = vmatpush1.msra.mxu0 %v3711
        %3797 = vmatprep.subr.mxu0 0.0
        %3798 = vmatpush1.msra.mxu0 %v3712
        %3799 = vmatprep.subr.mxu0 0.0
        %3800 = vmatpush1.msra.mxu0 %v3741
        %3801 = vmatprep.subr.mxu0 0.0
        %3802 = vmatpush1.msra.mxu0 0.0
        %3803 = vmatprep.subr.mxu0 0.0
        %3804 = vmatpush1.msra.mxu0 0.0
        %3805 = vmatprep.subr.mxu0 0.0
        %3806 = vmatpush1.msra.mxu0 0.0
        %3807 = vmatprep.mubr.f32.mxu0 %v3732
        %3808 = vmatmul.mubr.f32.gmra.mrb[0].mxu0 %v3716
        %v3809 = vpop.f32.mrb[0].mxu0
        %v3810 = vadd.f32 0.0, %v3809
        %v3811 = vpop.f32.mrb[0].mxu0
        %3812 = vmatprep.mubr.f32.mxu0 %v3734
        %3813 = vmatmul.mubr.f32.gmra.mrb[0].mxu0 %v3721
        %v3814 = vpop.f32.mrb[0].mxu0
        %v3815 = vadd.f32 0.0, %v3814
        %v3816 = vpop.f32.mrb[0].mxu0
        %3817 = vmatprep.mubr.f32.mxu0 %v3736
        %3818 = vmatmul.mubr.f32.gmra.mrb[0].mxu0 %v3725
        %v3819 = vpop.f32.mrb[0].mxu0
        %v3820 = vadd.f32 0.0, %v3819
        %v3821 = vpop.f32.mrb[0].mxu0
        %3822 = vmatprep.mubr.f32.mxu0 %v3738
        %3823 = vmatmul.mubr.f32.gmra.mrb[0].mxu0 %v3724
        %v3824 = vpop.f32.mrb[0].mxu0
        %v3825 = vadd.f32 0.0, %v3824
        %v3826 = vpop.f32.mrb[0].mxu0
        %3827 = vdwg.mxu0
        %v3828 = vadd.f32 %v3666, %v3810
        %v3829 = vadd.f32 %v3671, %v3815
        %v3830 = vadd.f32 %v3676, %v3820
        %v3831 = vadd.f32 %v3681, %v3825
        %3836 = vrot.lane.b32.xlu0 %v3828, 127
        %v3837 = vpop.permute.xlu0 %3836
        %3838 = vrot.lane.b32.xlu0 %v3829, 127
        %v3839 = vpop.permute.xlu0 %3838
        %3840 = vrot.lane.b32.xlu0 %v3830, 127
        %v3841 = vpop.permute.xlu0 %3840
        %3842 = vrot.lane.b32.xlu0 %v3831, 127
        %v3843 = vpop.permute.xlu0 %3842
        %v3848 = vmax.f32 %v3828, %v3837
        %v3849 = vmax.f32 %v3829, %v3839
        %v3850 = vmax.f32 %v3830, %v3841
        %v3851 = vmax.f32 %v3831, %v3843
        %3852 = vrot.lane.b32.xlu0 %v3828, 126
        %v3853 = vpop.permute.xlu0 %3852
        %3854 = vrot.lane.b32.xlu0 %v3829, 126
        %v3855 = vpop.permute.xlu0 %3854
        %3856 = vrot.lane.b32.xlu0 %v3830, 126
        %v3857 = vpop.permute.xlu0 %3856
        %3858 = vrot.lane.b32.xlu0 %v3831, 126
        %v3859 = vpop.permute.xlu0 %3858
        %v3864 = vmax.f32 %v3848, %v3853
        %v3865 = vmax.f32 %v3849, %v3855
        %v3866 = vmax.f32 %v3850, %v3857
        %v3867 = vmax.f32 %v3851, %v3859
        %v3872 = vrot.slane %v3864, 1
        %v3873 = vrot.slane %v3865, 1
        %v3874 = vsel %vm461, %v3872, %v3873
        %v3875 = vrot.slane %v3866, 1
        %v3876 = vsel %vm461, %v3873, %v3875
        %v3877 = vrot.slane %v3867, 1
        %v3878 = vsel %vm461, %v3875, %v3877
        %v3883 = vmax.f32 %v3864, %v3874
        %v3884 = vmax.f32 %v3865, %v3876
        %v3885 = vmax.f32 %v3866, %v3878
        %v3886 = vmax.f32 %v3867, %v3877
        %v3887 = vrot.slane %v3864, 2
        %v3888 = vrot.slane %v3865, 2
        %v3889 = vsel %vm883, %v3887, %v3888
        %v3890 = vrot.slane %v3866, 2
        %v3891 = vsel %vm883, %v3888, %v3890
        %v3892 = vrot.slane %v3867, 2
        %v3893 = vsel %vm883, %v3890, %v3892
        %v3898 = vmax.f32 %v3883, %v3889
        %v3899 = vmax.f32 %v3884, %v3891
        %v3900 = vmax.f32 %v3885, %v3893
        %v3901 = vmax.f32 %v3886, %v3892
        %v3902 = vld [vmem:[%s8] sm:$0x1]
        %v3903 = vlaneseq
        %v3904 = vshrl.u32 %v3903, 7
        %v3905 = vsub.s32 0, %v3904
        %v3906 = vrot.slane %v3902, %v3905
        %v3907 = vmul.f32 %v3898, %v3906
        %v3908 = vmul.f32 %v3899, %v3906
        %v3909 = vmul.f32 %v3900, %v3906
        %v3910 = vmul.f32 %v3901, %v3906
        %v3911 = vld [vmem:[%s8 + $0x1] sm:$0x1]
        %v3912 = vlaneseq
        %v3913 = vshrl.u32 %v3912, 7
        %v3914 = vsub.s32 0, %v3913
        %v3915 = vrot.slane %v3911, %v3914
        %v3916 = vadd.f32 %v3907, %v3915
        %v3917 = vadd.f32 %v3908, %v3915
        %v3918 = vadd.f32 %v3909, %v3915
        %v3919 = vadd.f32 %v3910, %v3915
        %v3920 = vmax.f32 %v3916, 0.0
        %v3921 = vmax.f32 %v3917, 0.0
        %v3922 = vmax.f32 %v3918, 0.0
        %v3923 = vmax.f32 %v3919, 0.0
        %vm3924 = vcmask 253952
        %3925 = vst.msk [vmem:[%s411] sm:$0x1] %vm3924, %v3920
        %v3928 = vunpack.c.l.s4 1983009808
        %v3929 = vunpack.c.0.s8 %v3928
        %v3930 = vlaneseq
        %v3931 = vshrl.u32 %v3930, 7
        %v3932 = vsub.s32 %v3929, %v3931
        %v3933 = vrot.slane %v3920, %v3932
        %v3934 = vrot.slane %v3933, 7
        %v3935 = vrot.slane %v3934, 2
        %3936 = vrot.lane.b32.xlu0 %v3935, 32
        %v3937 = vpop.permute.xlu0 %3936
        %vm3939 = vcmask 516352
        %3940 = vst.msk [vmem:[%s411] sm:$0x1] %vm3939, %v3937
        %v3941 = vcombine.high %v3933, %v3933
        %3942 = vrot.lane.b32.xlu0 %v3941, 64
        %v3943 = vpop.permute.xlu0 %3942
        %vm3945 = vcmask 778752
        %3946 = vst.msk [vmem:[%s411] sm:$0x1] %vm3945, %v3943
        %v3947 = vrot.slane %v3941, 7
        %v3948 = vrot.slane %v3947, 2
        %3949 = vrot.lane.b32.xlu0 %v3948, 96
        %v3950 = vpop.permute.xlu0 %3949
        %vm3952 = vcmask 1041152
        %3953 = vst.msk [vmem:[%s411] sm:$0x1] %vm3952, %v3950
        %v3954 = vcombine.high %v3920, %v3920
        %v3956 = vunpack.c.l.s4 1983009808
        %v3957 = vunpack.c.0.s8 %v3956
        %v3958 = vlaneseq
        %v3959 = vshrl.u32 %v3958, 7
        %v3960 = vsub.s32 %v3957, %v3959
        %v3961 = vrot.slane %v3954, %v3960
        %3963 = vst.msk [vmem:[%s411 + $0x2] sm:$0x1] %vm3924, %v3961
        %v3964 = vrot.slane %v3961, 7
        %v3965 = vrot.slane %v3964, 2
        %3966 = vrot.lane.b32.xlu0 %v3965, 32
        %v3967 = vpop.permute.xlu0 %3966
        %3969 = vst.msk [vmem:[%s411 + $0x2] sm:$0x1] %vm3939, %v3967
        %v3970 = vcombine.high %v3961, %v3961
        %3971 = vrot.lane.b32.xlu0 %v3970, 64
        %v3972 = vpop.permute.xlu0 %3971
        %3974 = vst.msk [vmem:[%s411 + $0x2] sm:$0x1] %vm3945, %v3972
        %v3975 = vrot.slane %v3970, 7
        %v3976 = vrot.slane %v3975, 2
        %3977 = vrot.lane.b32.xlu0 %v3976, 96
        %v3978 = vpop.permute.xlu0 %3977
        %3980 = vst.msk [vmem:[%s411 + $0x2] sm:$0x1] %vm3952, %v3978
        %3981 = vst.msk [vmem:[%s411 + $0x4] sm:$0x1] %vm3924, %v3921
        %v3984 = vunpack.c.l.s4 1983009808
        %v3985 = vunpack.c.0.s8 %v3984
        %v3986 = vlaneseq
        %v3987 = vshrl.u32 %v3986, 7
        %v3988 = vsub.s32 %v3985, %v3987
        %v3989 = vrot.slane %v3921, %v3988
        %v3990 = vrot.slane %v3989, 7
        %v3991 = vrot.slane %v3990, 2
        %3992 = vrot.lane.b32.xlu0 %v3991, 32
        %v3993 = vpop.permute.xlu0 %3992
        %3995 = vst.msk [vmem:[%s411 + $0x4] sm:$0x1] %vm3939, %v3993
        %v3996 = vcombine.high %v3989, %v3989
        %3997 = vrot.lane.b32.xlu0 %v3996, 64
        %v3998 = vpop.permute.xlu0 %3997
        %4000 = vst.msk [vmem:[%s411 + $0x4] sm:$0x1] %vm3945, %v3998
        %v4001 = vrot.slane %v3996, 7
        %v4002 = vrot.slane %v4001, 2
        %4003 = vrot.lane.b32.xlu0 %v4002, 96
        %v4004 = vpop.permute.xlu0 %4003
        %4006 = vst.msk [vmem:[%s411 + $0x4] sm:$0x1] %vm3952, %v4004
        %v4007 = vcombine.high %v3921, %v3921
        %v4009 = vunpack.c.l.s4 1983009808
        %v4010 = vunpack.c.0.s8 %v4009
        %v4011 = vlaneseq
        %v4012 = vshrl.u32 %v4011, 7
        %v4013 = vsub.s32 %v4010, %v4012
        %v4014 = vrot.slane %v4007, %v4013
        %4016 = vst.msk [vmem:[%s411 + $0x6] sm:$0x1] %vm3924, %v4014
        %v4017 = vrot.slane %v4014, 7
        %v4018 = vrot.slane %v4017, 2
        %4019 = vrot.lane.b32.xlu0 %v4018, 32
        %v4020 = vpop.permute.xlu0 %4019
        %4022 = vst.msk [vmem:[%s411 + $0x6] sm:$0x1] %vm3939, %v4020
        %v4023 = vcombine.high %v4014, %v4014
        %4024 = vrot.lane.b32.xlu0 %v4023, 64
        %v4025 = vpop.permute.xlu0 %4024
        %4027 = vst.msk [vmem:[%s411 + $0x6] sm:$0x1] %vm3945, %v4025
        %v4028 = vrot.slane %v4023, 7
        %v4029 = vrot.slane %v4028, 2
        %4030 = vrot.lane.b32.xlu0 %v4029, 96
        %v4031 = vpop.permute.xlu0 %4030
        %4033 = vst.msk [vmem:[%s411 + $0x6] sm:$0x1] %vm3952, %v4031
        %4034 = vst.msk [vmem:[%s411 + $0x8] sm:$0x1] %vm3924, %v3922
        %v4037 = vunpack.c.l.s4 1983009808
        %v4038 = vunpack.c.0.s8 %v4037
        %v4039 = vlaneseq
        %v4040 = vshrl.u32 %v4039, 7
        %v4041 = vsub.s32 %v4038, %v4040
        %v4042 = vrot.slane %v3922, %v4041
        %v4043 = vrot.slane %v4042, 7
        %v4044 = vrot.slane %v4043, 2
        %4045 = vrot.lane.b32.xlu0 %v4044, 32
        %v4046 = vpop.permute.xlu0 %4045
        %4048 = vst.msk [vmem:[%s411 + $0x8] sm:$0x1] %vm3939, %v4046
        %v4049 = vcombine.high %v4042, %v4042
        %4050 = vrot.lane.b32.xlu0 %v4049, 64
        %v4051 = vpop.permute.xlu0 %4050
        %4053 = vst.msk [vmem:[%s411 + $0x8] sm:$0x1] %vm3945, %v4051
        %v4054 = vrot.slane %v4049, 7
        %v4055 = vrot.slane %v4054, 2
        %4056 = vrot.lane.b32.xlu0 %v4055, 96
        %v4057 = vpop.permute.xlu0 %4056
        %4059 = vst.msk [vmem:[%s411 + $0x8] sm:$0x1] %vm3952, %v4057
        %v4060 = vcombine.high %v3922, %v3922
        %v4062 = vunpack.c.l.s4 1983009808
        %v4063 = vunpack.c.0.s8 %v4062
        %v4064 = vlaneseq
        %v4065 = vshrl.u32 %v4064, 7
        %v4066 = vsub.s32 %v4063, %v4065
        %v4067 = vrot.slane %v4060, %v4066
        %4069 = vst.msk [vmem:[%s411 + $0xa] sm:$0x1] %vm3924, %v4067
        %v4070 = vrot.slane %v4067, 7
        %v4071 = vrot.slane %v4070, 2
        %4072 = vrot.lane.b32.xlu0 %v4071, 32
        %v4073 = vpop.permute.xlu0 %4072
        %4075 = vst.msk [vmem:[%s411 + $0xa] sm:$0x1] %vm3939, %v4073
        %v4076 = vcombine.high %v4067, %v4067
        %4077 = vrot.lane.b32.xlu0 %v4076, 64
        %v4078 = vpop.permute.xlu0 %4077
        %4080 = vst.msk [vmem:[%s411 + $0xa] sm:$0x1] %vm3945, %v4078
        %v4081 = vrot.slane %v4076, 7
        %v4082 = vrot.slane %v4081, 2
        %4083 = vrot.lane.b32.xlu0 %v4082, 96
        %v4084 = vpop.permute.xlu0 %4083
        %4086 = vst.msk [vmem:[%s411 + $0xa] sm:$0x1] %vm3952, %v4084
        %4087 = vst.msk [vmem:[%s411 + $0xc] sm:$0x1] %vm3924, %v3923
        %v4090 = vunpack.c.l.s4 1983009808
        %v4091 = vunpack.c.0.s8 %v4090
        %v4092 = vlaneseq
        %v4093 = vshrl.u32 %v4092, 7
        %v4094 = vsub.s32 %v4091, %v4093
        %v4095 = vrot.slane %v3923, %v4094
        %v4096 = vrot.slane %v4095, 7
        %v4097 = vrot.slane %v4096, 2
        %4098 = vrot.lane.b32.xlu0 %v4097, 32
        %v4099 = vpop.permute.xlu0 %4098
        %4101 = vst.msk [vmem:[%s411 + $0xc] sm:$0x1] %vm3939, %v4099
        %s4102 = scalar_lea.vmem %s374, 48 [#allocation2]
        %v4103 = vld [vmem:[%s4102] sm:$0xff]
        %v4104 = vld [vmem:[%s4102 + $0x8] sm:$0xff]
        %v4105 = vld [vmem:[%s4102 + $0x10] sm:$0xff]
        %v4106 = vld [vmem:[%s4102 + $0x18] sm:$0xff]
        %v4107 = vld [vmem:[%s4102 + $0x20] sm:$0xff]
        %v4108 = vld [vmem:[%s4102 + $0x28] sm:$0x3]
        %v4109 = vld [vmem:[%s1] sm:$0xff]
        %v4110 = vld [vmem:[%s1 + $0x8] sm:$0xff]
        %v4111 = vld [vmem:[%s1 + $0x10] sm:$0xff]
        %v4112 = vld [vmem:[%s1 + $0x18] sm:$0xff]
        %v4113 = vld [vmem:[%s1 + $0x20] sm:$0xff]
        %v4114 = vld [vmem:[%s1 + $0x28] sm:$0xff]
        %v4115 = vld [vmem:[%s1 + $0x30] sm:$0xff]
        %v4116 = vld [vmem:[%s1 + $0x38] sm:$0xff]
        %v4117 = vld [vmem:[%s1 + $0x40] sm:$0xff]
        %v4118 = vld [vmem:[%s1 + $0x48] sm:$0xff]
        %v4119 = vld [vmem:[%s1 + $0x50] sm:$0xff]
        %v4120 = vld [vmem:[%s1 + $0x58] sm:$0xff]
        %v4121 = vld [vmem:[%s1 + $0x60] sm:$0xff]
        %v4122 = vld [vmem:[%s1 + $0x68] sm:$0xff]
        %v4123 = vld [vmem:[%s1 + $0x70] sm:$0xff]
        %v4124 = vld [vmem:[%s1 + $0x78] sm:$0xff]
        %v4125 = vld [vmem:[%s1 + $0x80] sm:$0xff]
        %v4126 = vld [vmem:[%s1 + $0x88] sm:$0xff]
        %v4127 = vld [vmem:[%s436] sm:$0xff]
        %v4128 = vld [vmem:[%s436 + $0x8] sm:$0xff]
        %v4129 = vld [vmem:[%s436 + $0x10] sm:$0xff]
        %v4130 = vld [vmem:[%s436 + $0x18] sm:$0xff]
        %v4131 = vld [vmem:[%s436 + $0x20] sm:$0xff]
        %v4132 = vld [vmem:[%s436 + $0x28] sm:$0xff]
        %v4133 = vld [vmem:[%s436 + $0x30] sm:$0xff]
        %v4134 = vld [vmem:[%s436 + $0x38] sm:$0xff]
        %v4135 = vld [vmem:[%s436 + $0x40] sm:$0xff]
        %v4136 = vld [vmem:[%s436 + $0x48] sm:$0xff]
        %v4137 = vld [vmem:[%s436 + $0x50] sm:$0xff]
        %v4138 = vld [vmem:[%s436 + $0x58] sm:$0xff]
        %v4139 = vld [vmem:[%s436 + $0x60] sm:$0xff]
        %v4140 = vld [vmem:[%s436 + $0x68] sm:$0xff]
        %v4141 = vld [vmem:[%s436 + $0x70] sm:$0xff]
        %v4142 = vld [vmem:[%s436 + $0x78] sm:$0xff]
        %v4143 = vld [vmem:[%s436 + $0x80] sm:$0xff]
        %v4144 = vld [vmem:[%s436 + $0x88] sm:$0xff]
        %v4151 = vrot.slane %v4103, 1
        %v4152 = vrot.slane %v4104, 1
        %v4153 = vsel %vm461, %v4151, %v4152
        %v4154 = vrot.slane %v4105, 1
        %v4155 = vsel %vm461, %v4152, %v4154
        %v4156 = vrot.slane %v4106, 1
        %v4157 = vsel %vm461, %v4154, %v4156
        %v4158 = vrot.slane %v4107, 1
        %v4159 = vsel %vm461, %v4156, %v4158
        %v4160 = vrot.slane %v4108, 1
        %v4161 = vsel %vm461, %v4158, %v4160
        %v4162 = vsel %vm473, %v4153, 0
        %v4164 = vsel %vm473, %v4155, 0
        %v4166 = vsel %vm473, %v4157, 0
        %v4168 = vsel %vm473, %v4159, 0
        %v4170 = vsel %vm473, %v4161, 0
        %4172 = vmatprep.subr.mxu0 %v4128
        %4173 = vmatpush1.msra.mxu0 %v4127
        %4174 = vmatprep.subr.mxu0 %v4131
        %4175 = vmatpush1.msra.mxu0 %v4130
        %4176 = vmatprep.subr.mxu0 %v4134
        %4177 = vmatpush1.msra.mxu0 %v4133
        %4178 = vmatprep.subr.mxu0 %v4137
        %4179 = vmatpush1.msra.mxu0 %v4136
        %4180 = vmatprep.subr.mxu0 %v4140
        %4181 = vmatpush1.msra.mxu0 %v4139
        %4182 = vmatprep.subr.mxu0 %v4143
        %4183 = vmatpush1.msra.mxu0 %v4142
        %4184 = vmatprep.subr.mxu0 0.0
        %4185 = vmatpush1.msra.mxu0 0.0
        %4186 = vmatprep.subr.mxu0 0.0
        %4187 = vmatpush1.msra.mxu0 0.0
        %4188 = vmatprep.subr.mxu0 0.0
        %4189 = vmatpush1.msra.mxu0 0.0
        %4190 = vmatprep.subr.mxu0 0.0
        %4191 = vmatpush1.msra.mxu0 0.0
        %4192 = vmatprep.subr.mxu0 0.0
        %4193 = vmatpush1.msra.mxu0 0.0
        %4194 = vmatprep.subr.mxu0 0.0
        %4195 = vmatpush1.msra.mxu0 0.0
        %4196 = vmatprep.subr.mxu0 0.0
        %4197 = vmatpush1.msra.mxu0 0.0
        %4198 = vmatprep.subr.mxu0 0.0
        %4199 = vmatpush1.msra.mxu0 0.0
        %4200 = vmatprep.subr.mxu0 0.0
        %4201 = vmatpush1.msra.mxu0 0.0
        %4202 = vmatprep.subr.mxu0 0.0
        %4203 = vmatpush1.msra.mxu0 0.0
        %4204 = vmatprep.subr.mxu0 0.0
        %4205 = vmatpush1.msra.mxu0 0.0
        %4206 = vmatprep.subr.mxu0 0.0
        %4207 = vmatpush1.msra.mxu0 0.0
        %4208 = vmatprep.subr.mxu0 0.0
        %4209 = vmatpush1.msra.mxu0 0.0
        %4210 = vmatprep.subr.mxu0 0.0
        %4211 = vmatpush1.msra.mxu0 0.0
        %4212 = vmatprep.subr.mxu0 0.0
        %4213 = vmatpush1.msra.mxu0 0.0
        %4214 = vmatprep.subr.mxu0 0.0
        %4215 = vmatpush1.msra.mxu0 0.0
        %4216 = vmatprep.subr.mxu0 0.0
        %4217 = vmatpush1.msra.mxu0 0.0
        %4218 = vmatprep.subr.mxu0 0.0
        %4219 = vmatpush1.msra.mxu0 0.0
        %4220 = vmatprep.subr.mxu0 0.0
        %4221 = vmatpush1.msra.mxu0 0.0
        %4222 = vmatprep.subr.mxu0 0.0
        %4223 = vmatpush1.msra.mxu0 0.0
        %4224 = vmatprep.subr.mxu0 0.0
        %4225 = vmatpush1.msra.mxu0 0.0
        %4226 = vmatprep.subr.mxu0 0.0
        %4227 = vmatpush1.msra.mxu0 0.0
        %4228 = vmatprep.subr.mxu0 0.0
        %4229 = vmatpush1.msra.mxu0 0.0
        %4230 = vmatprep.subr.mxu0 0.0
        %4231 = vmatpush1.msra.mxu0 0.0
        %4232 = vmatprep.subr.mxu0 0.0
        %4233 = vmatpush1.msra.mxu0 0.0
        %4234 = vmatprep.subr.mxu0 0.0
        %4235 = vmatpush1.msra.mxu0 0.0
        %4236 = vmatprep.mubr.f32.mxu0 0.0
        %4237 = vmatmul.mubr.f32.gmra.mrb[0].mxu0 %v4162
        %v4238 = vpop.f32.mrb[0].mxu0
        %v4239 = vadd.f32 0.0, %v4238
        %v4240 = vpop.f32.mrb[0].mxu0
        %v4241 = vadd.f32 0.0, %v4240
        %4242 = vmatprep.mubr.f32.mxu0 0.0
        %4243 = vmatmul.mubr.f32.gmra.mrb[0].mxu0 %v4164
        %v4244 = vpop.f32.mrb[0].mxu0
        %v4245 = vadd.f32 0.0, %v4244
        %v4246 = vpop.f32.mrb[0].mxu0
        %v4247 = vadd.f32 0.0, %v4246
        %4248 = vmatprep.mubr.f32.mxu0 0.0
        %4249 = vmatmul.mubr.f32.gmra.mrb[0].mxu0 %v4166
        %v4250 = vpop.f32.mrb[0].mxu0
        %v4251 = vadd.f32 0.0, %v4250
        %v4252 = vpop.f32.mrb[0].mxu0
        %v4253 = vadd.f32 0.0, %v4252
        %4254 = vmatprep.mubr.f32.mxu0 0.0
        %4255 = vmatmul.mubr.f32.gmra.mrb[0].mxu0 %v4168
        %v4256 = vpop.f32.mrb[0].mxu0
        %v4257 = vadd.f32 0.0, %v4256
        %v4258 = vpop.f32.mrb[0].mxu0
        %v4259 = vadd.f32 0.0, %v4258
        %4260 = vmatprep.mubr.f32.mxu0 0.0
        %4261 = vmatmul.mubr.f32.gmra.mrb[0].mxu0 %v4170
        %v4262 = vpop.f32.mrb[0].mxu0
        %v4263 = vadd.f32 0.0, %v4262
        %v4264 = vpop.f32.mrb[0].mxu0
        %v4265 = vadd.f32 0.0, %v4264
        %4266 = vdwg.mxu0
        %4267 = vmatprep.subr.mxu0 0.0
        %4268 = vmatpush1.msra.mxu0 %v4129
        %4269 = vmatprep.subr.mxu0 0.0
        %4270 = vmatpush1.msra.mxu0 %v4132
        %4271 = vmatprep.subr.mxu0 0.0
        %4272 = vmatpush1.msra.mxu0 %v4135
        %4273 = vmatprep.subr.mxu0 0.0
        %4274 = vmatpush1.msra.mxu0 %v4138
        %4275 = vmatprep.subr.mxu0 0.0
        %4276 = vmatpush1.msra.mxu0 %v4141
        %4277 = vmatprep.subr.mxu0 0.0
        %4278 = vmatpush1.msra.mxu0 %v4144
        %4279 = vmatprep.subr.mxu0 0.0
        %4280 = vmatpush1.msra.mxu0 0.0
        %4281 = vmatprep.subr.mxu0 0.0
        %4282 = vmatpush1.msra.mxu0 0.0
        %4283 = vmatprep.subr.mxu0 0.0
        %4284 = vmatpush1.msra.mxu0 0.0
        %4285 = vmatprep.subr.mxu0 0.0
        %4286 = vmatpush1.msra.mxu0 0.0
        %4287 = vmatprep.subr.mxu0 0.0
        %4288 = vmatpush1.msra.mxu0 0.0
        %4289 = vmatprep.subr.mxu0 0.0
        %4290 = vmatpush1.msra.mxu0 0.0
        %4291 = vmatprep.subr.mxu0 0.0
        %4292 = vmatpush1.msra.mxu0 0.0
        %4293 = vmatprep.subr.mxu0 0.0
        %4294 = vmatpush1.msra.mxu0 0.0
        %4295 = vmatprep.subr.mxu0 0.0
        %4296 = vmatpush1.msra.mxu0 0.0
        %4297 = vmatprep.subr.mxu0 0.0
        %4298 = vmatpush1.msra.mxu0 0.0
        %4299 = vmatprep.subr.mxu0 0.0
        %4300 = vmatpush1.msra.mxu0 0.0
        %4301 = vmatprep.subr.mxu0 0.0
        %4302 = vmatpush1.msra.mxu0 0.0
        %4303 = vmatprep.subr.mxu0 0.0
        %4304 = vmatpush1.msra.mxu0 0.0
        %4305 = vmatprep.subr.mxu0 0.0
        %4306 = vmatpush1.msra.mxu0 0.0
        %4307 = vmatprep.subr.mxu0 0.0
        %4308 = vmatpush1.msra.mxu0 0.0
        %4309 = vmatprep.subr.mxu0 0.0
        %4310 = vmatpush1.msra.mxu0 0.0
        %4311 = vmatprep.subr.mxu0 0.0
        %4312 = vmatpush1.msra.mxu0 0.0
        %4313 = vmatprep.subr.mxu0 0.0
        %4314 = vmatpush1.msra.mxu0 0.0
        %4315 = vmatprep.subr.mxu0 0.0
        %4316 = vmatpush1.msra.mxu0 0.0
        %4317 = vmatprep.subr.mxu0 0.0
        %4318 = vmatpush1.msra.mxu0 0.0
        %4319 = vmatprep.subr.mxu0 0.0
        %4320 = vmatpush1.msra.mxu0 0.0
        %4321 = vmatprep.subr.mxu0 0.0
        %4322 = vmatpush1.msra.mxu0 0.0
        %4323 = vmatprep.subr.mxu0 0.0
        %4324 = vmatpush1.msra.mxu0 0.0
        %4325 = vmatprep.subr.mxu0 0.0
        %4326 = vmatpush1.msra.mxu0 0.0
        %4327 = vmatprep.subr.mxu0 0.0
        %4328 = vmatpush1.msra.mxu0 0.0
        %4329 = vmatprep.subr.mxu0 0.0
        %4330 = vmatpush1.msra.mxu0 0.0
        %4331 = vmatprep.mubr.f32.mxu0 0.0
        %4332 = vmatmul.mubr.f32.gmra.mrb[0].mxu0 %v4162
        %v4333 = vpop.f32.mrb[0].mxu0
        %v4334 = vadd.f32 0.0, %v4333
        %v4335 = vpop.f32.mrb[0].mxu0
        %4336 = vmatprep.mubr.f32.mxu0 0.0
        %4337 = vmatmul.mubr.f32.gmra.mrb[0].mxu0 %v4164
        %v4338 = vpop.f32.mrb[0].mxu0
        %v4339 = vadd.f32 0.0, %v4338
        %v4340 = vpop.f32.mrb[0].mxu0
        %4341 = vmatprep.mubr.f32.mxu0 0.0
        %4342 = vmatmul.mubr.f32.gmra.mrb[0].mxu0 %v4166
        %v4343 = vpop.f32.mrb[0].mxu0
        %v4344 = vadd.f32 0.0, %v4343
        %v4345 = vpop.f32.mrb[0].mxu0
        %4346 = vmatprep.mubr.f32.mxu0 0.0
        %4347 = vmatmul.mubr.f32.gmra.mrb[0].mxu0 %v4168
        %v4348 = vpop.f32.mrb[0].mxu0
        %v4349 = vadd.f32 0.0, %v4348
        %v4350 = vpop.f32.mrb[0].mxu0
        %4351 = vmatprep.mubr.f32.mxu0 0.0
        %4352 = vmatmul.mubr.f32.gmra.mrb[0].mxu0 %v4170
        %v4353 = vpop.f32.mrb[0].mxu0
        %v4354 = vadd.f32 0.0, %v4353
        %v4355 = vpop.f32.mrb[0].mxu0
        %4356 = vdwg.mxu0
        %v4357 = vsel %vm473, %v4103, 0
        %v4359 = vsel %vm473, %v4104, 0
        %v4361 = vsel %vm473, %v4105, 0
        %v4363 = vsel %vm473, %v4106, 0
        %v4365 = vsel %vm473, %v4107, 0
        %4367 = vmatprep.subr.mxu0 %v4110
        %4368 = vmatpush1.msra.mxu0 %v4109
        %4369 = vmatprep.subr.mxu0 %v4113
        %4370 = vmatpush1.msra.mxu0 %v4112
        %4371 = vmatprep.subr.mxu0 %v4116
        %4372 = vmatpush1.msra.mxu0 %v4115
        %4373 = vmatprep.subr.mxu0 %v4119
        %4374 = vmatpush1.msra.mxu0 %v4118
        %4375 = vmatprep.subr.mxu0 %v4122
        %4376 = vmatpush1.msra.mxu0 %v4121
        %4377 = vmatprep.subr.mxu0 %v4125
        %4378 = vmatpush1.msra.mxu0 %v4124
        %4379 = vmatprep.subr.mxu0 0.0
        %4380 = vmatpush1.msra.mxu0 0.0
        %4381 = vmatprep.subr.mxu0 0.0
        %4382 = vmatpush1.msra.mxu0 0.0
        %4383 = vmatprep.subr.mxu0 0.0
        %4384 = vmatpush1.msra.mxu0 0.0
        %4385 = vmatprep.subr.mxu0 0.0
        %4386 = vmatpush1.msra.mxu0 0.0
        %4387 = vmatprep.subr.mxu0 0.0
        %4388 = vmatpush1.msra.mxu0 0.0
        %4389 = vmatprep.subr.mxu0 0.0
        %4390 = vmatpush1.msra.mxu0 0.0
        %4391 = vmatprep.subr.mxu0 0.0
        %4392 = vmatpush1.msra.mxu0 0.0
        %4393 = vmatprep.subr.mxu0 0.0
        %4394 = vmatpush1.msra.mxu0 0.0
        %4395 = vmatprep.subr.mxu0 0.0
        %4396 = vmatpush1.msra.mxu0 0.0
        %4397 = vmatprep.subr.mxu0 0.0
        %4398 = vmatpush1.msra.mxu0 0.0
        %4399 = vmatprep.subr.mxu0 0.0
        %4400 = vmatpush1.msra.mxu0 0.0
        %4401 = vmatprep.subr.mxu0 0.0
        %4402 = vmatpush1.msra.mxu0 0.0
        %4403 = vmatprep.subr.mxu0 0.0
        %4404 = vmatpush1.msra.mxu0 0.0
        %4405 = vmatprep.subr.mxu0 0.0
        %4406 = vmatpush1.msra.mxu0 0.0
        %4407 = vmatprep.subr.mxu0 0.0
        %4408 = vmatpush1.msra.mxu0 0.0
        %4409 = vmatprep.subr.mxu0 0.0
        %4410 = vmatpush1.msra.mxu0 0.0
        %4411 = vmatprep.subr.mxu0 0.0
        %4412 = vmatpush1.msra.mxu0 0.0
        %4413 = vmatprep.subr.mxu0 0.0
        %4414 = vmatpush1.msra.mxu0 0.0
        %4415 = vmatprep.subr.mxu0 0.0
        %4416 = vmatpush1.msra.mxu0 0.0
        %4417 = vmatprep.subr.mxu0 0.0
        %4418 = vmatpush1.msra.mxu0 0.0
        %4419 = vmatprep.subr.mxu0 0.0
        %4420 = vmatpush1.msra.mxu0 0.0
        %4421 = vmatprep.subr.mxu0 0.0
        %4422 = vmatpush1.msra.mxu0 0.0
        %4423 = vmatprep.subr.mxu0 0.0
        %4424 = vmatpush1.msra.mxu0 0.0
        %4425 = vmatprep.subr.mxu0 0.0
        %4426 = vmatpush1.msra.mxu0 0.0
        %4427 = vmatprep.subr.mxu0 0.0
        %4428 = vmatpush1.msra.mxu0 0.0
        %4429 = vmatprep.subr.mxu0 0.0
        %4430 = vmatpush1.msra.mxu0 0.0
        %4431 = vmatprep.mubr.f32.mxu0 0.0
        %4432 = vmatmul.mubr.f32.gmra.mrb[0].mxu0 %v4357
        %v4433 = vpop.f32.mrb[0].mxu0
        %v4434 = vadd.f32 %v4239, %v4433
        %v4435 = vpop.f32.mrb[0].mxu0
        %v4436 = vadd.f32 %v4241, %v4435
        %4437 = vmatprep.mubr.f32.mxu0 0.0
        %4438 = vmatmul.mubr.f32.gmra.mrb[0].mxu0 %v4359
        %v4439 = vpop.f32.mrb[0].mxu0
        %v4440 = vadd.f32 %v4245, %v4439
        %v4441 = vpop.f32.mrb[0].mxu0
        %v4442 = vadd.f32 %v4247, %v4441
        %4443 = vmatprep.mubr.f32.mxu0 0.0
        %4444 = vmatmul.mubr.f32.gmra.mrb[0].mxu0 %v4361
        %v4445 = vpop.f32.mrb[0].mxu0
        %v4446 = vadd.f32 %v4251, %v4445
        %v4447 = vpop.f32.mrb[0].mxu0
        %v4448 = vadd.f32 %v4253, %v4447
        %4449 = vmatprep.mubr.f32.mxu0 0.0
        %4450 = vmatmul.mubr.f32.gmra.mrb[0].mxu0 %v4363
        %v4451 = vpop.f32.mrb[0].mxu0
        %v4452 = vadd.f32 %v4257, %v4451
        %v4453 = vpop.f32.mrb[0].mxu0
        %v4454 = vadd.f32 %v4259, %v4453
        %4455 = vmatprep.mubr.f32.mxu0 0.0
        %4456 = vmatmul.mubr.f32.gmra.mrb[0].mxu0 %v4365
        %v4457 = vpop.f32.mrb[0].mxu0
        %v4458 = vadd.f32 %v4263, %v4457
        %v4459 = vpop.f32.mrb[0].mxu0
        %v4460 = vadd.f32 %v4265, %v4459
        %4461 = vdwg.mxu0
        %4462 = vmatprep.subr.mxu0 0.0
        %4463 = vmatpush1.msra.mxu0 %v4111
        %4464 = vmatprep.subr.mxu0 0.0
        %4465 = vmatpush1.msra.mxu0 %v4114
        %4466 = vmatprep.subr.mxu0 0.0
        %4467 = vmatpush1.msra.mxu0 %v4117
        %4468 = vmatprep.subr.mxu0 0.0
        %4469 = vmatpush1.msra.mxu0 %v4120
        %4470 = vmatprep.subr.mxu0 0.0
        %4471 = vmatpush1.msra.mxu0 %v4123
        %4472 = vmatprep.subr.mxu0 0.0
        %4473 = vmatpush1.msra.mxu0 %v4126
        %4474 = vmatprep.subr.mxu0 0.0
        %4475 = vmatpush1.msra.mxu0 0.0
        %4476 = vmatprep.subr.mxu0 0.0
        %4477 = vmatpush1.msra.mxu0 0.0
        %4478 = vmatprep.subr.mxu0 0.0
        %4479 = vmatpush1.msra.mxu0 0.0
        %4480 = vmatprep.subr.mxu0 0.0
        %4481 = vmatpush1.msra.mxu0 0.0
        %4482 = vmatprep.subr.mxu0 0.0
        %4483 = vmatpush1.msra.mxu0 0.0
        %4484 = vmatprep.subr.mxu0 0.0
        %4485 = vmatpush1.msra.mxu0 0.0
        %4486 = vmatprep.subr.mxu0 0.0
        %4487 = vmatpush1.msra.mxu0 0.0
        %4488 = vmatprep.subr.mxu0 0.0
        %4489 = vmatpush1.msra.mxu0 0.0
        %4490 = vmatprep.subr.mxu0 0.0
        %4491 = vmatpush1.msra.mxu0 0.0
        %4492 = vmatprep.subr.mxu0 0.0
        %4493 = vmatpush1.msra.mxu0 0.0
        %4494 = vmatprep.subr.mxu0 0.0
        %4495 = vmatpush1.msra.mxu0 0.0
        %4496 = vmatprep.subr.mxu0 0.0
        %4497 = vmatpush1.msra.mxu0 0.0
        %4498 = vmatprep.subr.mxu0 0.0
        %4499 = vmatpush1.msra.mxu0 0.0
        %4500 = vmatprep.subr.mxu0 0.0
        %4501 = vmatpush1.msra.mxu0 0.0
        %4502 = vmatprep.subr.mxu0 0.0
        %4503 = vmatpush1.msra.mxu0 0.0
        %4504 = vmatprep.subr.mxu0 0.0
        %4505 = vmatpush1.msra.mxu0 0.0
        %4506 = vmatprep.subr.mxu0 0.0
        %4507 = vmatpush1.msra.mxu0 0.0
        %4508 = vmatprep.subr.mxu0 0.0
        %4509 = vmatpush1.msra.mxu0 0.0
        %4510 = vmatprep.subr.mxu0 0.0
        %4511 = vmatpush1.msra.mxu0 0.0
        %4512 = vmatprep.subr.mxu0 0.0
        %4513 = vmatpush1.msra.mxu0 0.0
        %4514 = vmatprep.subr.mxu0 0.0
        %4515 = vmatpush1.msra.mxu0 0.0
        %4516 = vmatprep.subr.mxu0 0.0
        %4517 = vmatpush1.msra.mxu0 0.0
        %4518 = vmatprep.subr.mxu0 0.0
        %4519 = vmatpush1.msra.mxu0 0.0
        %4520 = vmatprep.subr.mxu0 0.0
        %4521 = vmatpush1.msra.mxu0 0.0
        %4522 = vmatprep.subr.mxu0 0.0
        %4523 = vmatpush1.msra.mxu0 0.0
        %4524 = vmatprep.subr.mxu0 0.0
        %4525 = vmatpush1.msra.mxu0 0.0
        %4526 = vmatprep.mubr.f32.mxu0 0.0
        %4527 = vmatmul.mubr.f32.gmra.mrb[0].mxu0 %v4357
        %v4528 = vpop.f32.mrb[0].mxu0
        %v4529 = vadd.f32 %v4334, %v4528
        %v4530 = vpop.f32.mrb[0].mxu0
        %4531 = vmatprep.mubr.f32.mxu0 0.0
        %4532 = vmatmul.mubr.f32.gmra.mrb[0].mxu0 %v4359
        %v4533 = vpop.f32.mrb[0].mxu0
        %v4534 = vadd.f32 %v4339, %v4533
        %v4535 = vpop.f32.mrb[0].mxu0
        %4536 = vmatprep.mubr.f32.mxu0 0.0
        %4537 = vmatmul.mubr.f32.gmra.mrb[0].mxu0 %v4361
        %v4538 = vpop.f32.mrb[0].mxu0
        %v4539 = vadd.f32 %v4344, %v4538
        %v4540 = vpop.f32.mrb[0].mxu0
        %4541 = vmatprep.mubr.f32.mxu0 0.0
        %4542 = vmatmul.mubr.f32.gmra.mrb[0].mxu0 %v4363
        %v4543 = vpop.f32.mrb[0].mxu0
        %v4544 = vadd.f32 %v4349, %v4543
        %v4545 = vpop.f32.mrb[0].mxu0
        %4546 = vmatprep.mubr.f32.mxu0 0.0
        %4547 = vmatmul.mubr.f32.gmra.mrb[0].mxu0 %v4365
        %v4548 = vpop.f32.mrb[0].mxu0
        %v4549 = vadd.f32 %v4354, %v4548
        %v4550 = vpop.f32.mrb[0].mxu0
        %4551 = vdwg.mxu0
        %v4552 = vld [vmem:[%s864] sm:$0xff]
        %v4553 = vld [vmem:[%s864 + $0x8] sm:$0xff]
        %v4554 = vld [vmem:[%s864 + $0x10] sm:$0xff]
        %v4555 = vld [vmem:[%s864 + $0x18] sm:$0xff]
        %v4556 = vld [vmem:[%s864 + $0x20] sm:$0xff]
        %v4557 = vld [vmem:[%s864 + $0x28] sm:$0xff]
        %v4558 = vld [vmem:[%s864 + $0x30] sm:$0xff]
        %v4559 = vld [vmem:[%s864 + $0x38] sm:$0xff]
        %v4560 = vld [vmem:[%s864 + $0x40] sm:$0xff]
        %v4561 = vld [vmem:[%s864 + $0x48] sm:$0xff]
        %v4562 = vld [vmem:[%s864 + $0x50] sm:$0xff]
        %v4563 = vld [vmem:[%s864 + $0x58] sm:$0xff]
        %v4564 = vld [vmem:[%s864 + $0x60] sm:$0xff]
        %v4565 = vld [vmem:[%s864 + $0x68] sm:$0xff]
        %v4566 = vld [vmem:[%s864 + $0x70] sm:$0xff]
        %v4567 = vld [vmem:[%s864 + $0x78] sm:$0xff]
        %v4568 = vld [vmem:[%s864 + $0x80] sm:$0xff]
        %v4569 = vld [vmem:[%s864 + $0x88] sm:$0xff]
        %v4570 = vrot.slane %v4103, 2
        %v4571 = vrot.slane %v4104, 2
        %v4572 = vsel %vm883, %v4570, %v4571
        %v4573 = vrot.slane %v4105, 2
        %v4574 = vsel %vm883, %v4571, %v4573
        %v4575 = vrot.slane %v4106, 2
        %v4576 = vsel %vm883, %v4573, %v4575
        %v4577 = vrot.slane %v4107, 2
        %v4578 = vsel %vm883, %v4575, %v4577
        %v4579 = vrot.slane %v4108, 2
        %v4580 = vsel %vm883, %v4577, %v4579
        %v4581 = vsel %vm473, %v4572, 0
        %v4583 = vsel %vm473, %v4574, 0
        %v4585 = vsel %vm473, %v4576, 0
        %v4587 = vsel %vm473, %v4578, 0
        %v4589 = vsel %vm473, %v4580, 0
        %4591 = vmatprep.subr.mxu0 %v4553
        %4592 = vmatpush1.msra.mxu0 %v4552
        %4593 = vmatprep.subr.mxu0 %v4556
        %4594 = vmatpush1.msra.mxu0 %v4555
        %4595 = vmatprep.subr.mxu0 %v4559
        %4596 = vmatpush1.msra.mxu0 %v4558
        %4597 = vmatprep.subr.mxu0 %v4562
        %4598 = vmatpush1.msra.mxu0 %v4561
        %4599 = vmatprep.subr.mxu0 %v4565
        %4600 = vmatpush1.msra.mxu0 %v4564
        %4601 = vmatprep.subr.mxu0 %v4568
        %4602 = vmatpush1.msra.mxu0 %v4567
        %4603 = vmatprep.subr.mxu0 0.0
        %4604 = vmatpush1.msra.mxu0 0.0
        %4605 = vmatprep.subr.mxu0 0.0
        %4606 = vmatpush1.msra.mxu0 0.0
        %4607 = vmatprep.subr.mxu0 0.0
        %4608 = vmatpush1.msra.mxu0 0.0
        %4609 = vmatprep.subr.mxu0 0.0
        %4610 = vmatpush1.msra.mxu0 0.0
        %4611 = vmatprep.subr.mxu0 0.0
        %4612 = vmatpush1.msra.mxu0 0.0
        %4613 = vmatprep.subr.mxu0 0.0
        %4614 = vmatpush1.msra.mxu0 0.0
        %4615 = vmatprep.subr.mxu0 0.0
        %4616 = vmatpush1.msra.mxu0 0.0
        %4617 = vmatprep.subr.mxu0 0.0
        %4618 = vmatpush1.msra.mxu0 0.0
        %4619 = vmatprep.subr.mxu0 0.0
        %4620 = vmatpush1.msra.mxu0 0.0
        %4621 = vmatprep.subr.mxu0 0.0
        %4622 = vmatpush1.msra.mxu0 0.0
        %4623 = vmatprep.subr.mxu0 0.0
        %4624 = vmatpush1.msra.mxu0 0.0
        %4625 = vmatprep.subr.mxu0 0.0
        %4626 = vmatpush1.msra.mxu0 0.0
        %4627 = vmatprep.subr.mxu0 0.0
        %4628 = vmatpush1.msra.mxu0 0.0
        %4629 = vmatprep.subr.mxu0 0.0
        %4630 = vmatpush1.msra.mxu0 0.0
        %4631 = vmatprep.subr.mxu0 0.0
        %4632 = vmatpush1.msra.mxu0 0.0
        %4633 = vmatprep.subr.mxu0 0.0
        %4634 = vmatpush1.msra.mxu0 0.0
        %4635 = vmatprep.subr.mxu0 0.0
        %4636 = vmatpush1.msra.mxu0 0.0
        %4637 = vmatprep.subr.mxu0 0.0
        %4638 = vmatpush1.msra.mxu0 0.0
        %4639 = vmatprep.subr.mxu0 0.0
        %4640 = vmatpush1.msra.mxu0 0.0
        %4641 = vmatprep.subr.mxu0 0.0
        %4642 = vmatpush1.msra.mxu0 0.0
        %4643 = vmatprep.subr.mxu0 0.0
        %4644 = vmatpush1.msra.mxu0 0.0
        %4645 = vmatprep.subr.mxu0 0.0
        %4646 = vmatpush1.msra.mxu0 0.0
        %4647 = vmatprep.subr.mxu0 0.0
        %4648 = vmatpush1.msra.mxu0 0.0
        %4649 = vmatprep.subr.mxu0 0.0
        %4650 = vmatpush1.msra.mxu0 0.0
        %4651 = vmatprep.subr.mxu0 0.0
        %4652 = vmatpush1.msra.mxu0 0.0
        %4653 = vmatprep.subr.mxu0 0.0
        %4654 = vmatpush1.msra.mxu0 0.0
        %4655 = vmatprep.mubr.f32.mxu0 0.0
        %4656 = vmatmul.mubr.f32.gmra.mrb[0].mxu0 %v4581
        %v4657 = vpop.f32.mrb[0].mxu0
        %v4658 = vadd.f32 0.0, %v4657
        %v4659 = vpop.f32.mrb[0].mxu0
        %v4660 = vadd.f32 0.0, %v4659
        %4661 = vmatprep.mubr.f32.mxu0 0.0
        %4662 = vmatmul.mubr.f32.gmra.mrb[0].mxu0 %v4583
        %v4663 = vpop.f32.mrb[0].mxu0
        %v4664 = vadd.f32 0.0, %v4663
        %v4665 = vpop.f32.mrb[0].mxu0
        %v4666 = vadd.f32 0.0, %v4665
        %4667 = vmatprep.mubr.f32.mxu0 0.0
        %4668 = vmatmul.mubr.f32.gmra.mrb[0].mxu0 %v4585
        %v4669 = vpop.f32.mrb[0].mxu0
        %v4670 = vadd.f32 0.0, %v4669
        %v4671 = vpop.f32.mrb[0].mxu0
        %v4672 = vadd.f32 0.0, %v4671
        %4673 = vmatprep.mubr.f32.mxu0 0.0
        %4674 = vmatmul.mubr.f32.gmra.mrb[0].mxu0 %v4587
        %v4675 = vpop.f32.mrb[0].mxu0
        %v4676 = vadd.f32 0.0, %v4675
        %v4677 = vpop.f32.mrb[0].mxu0
        %v4678 = vadd.f32 0.0, %v4677
        %4679 = vmatprep.mubr.f32.mxu0 0.0
        %4680 = vmatmul.mubr.f32.gmra.mrb[0].mxu0 %v4589
        %v4681 = vpop.f32.mrb[0].mxu0
        %v4682 = vadd.f32 0.0, %v4681
        %v4683 = vpop.f32.mrb[0].mxu0
        %v4684 = vadd.f32 0.0, %v4683
        %4685 = vdwg.mxu0
        %4686 = vmatprep.subr.mxu0 0.0
        %4687 = vmatpush1.msra.mxu0 %v4554
        %4688 = vmatprep.subr.mxu0 0.0
        %4689 = vmatpush1.msra.mxu0 %v4557
        %4690 = vmatprep.subr.mxu0 0.0
        %4691 = vmatpush1.msra.mxu0 %v4560
        %4692 = vmatprep.subr.mxu0 0.0
        %4693 = vmatpush1.msra.mxu0 %v4563
        %4694 = vmatprep.subr.mxu0 0.0
        %4695 = vmatpush1.msra.mxu0 %v4566
        %4696 = vmatprep.subr.mxu0 0.0
        %4697 = vmatpush1.msra.mxu0 %v4569
        %4698 = vmatprep.subr.mxu0 0.0
        %4699 = vmatpush1.msra.mxu0 0.0
        %4700 = vmatprep.subr.mxu0 0.0
        %4701 = vmatpush1.msra.mxu0 0.0
        %4702 = vmatprep.subr.mxu0 0.0
        %4703 = vmatpush1.msra.mxu0 0.0
        %4704 = vmatprep.subr.mxu0 0.0
        %4705 = vmatpush1.msra.mxu0 0.0
        %4706 = vmatprep.subr.mxu0 0.0
        %4707 = vmatpush1.msra.mxu0 0.0
        %4708 = vmatprep.subr.mxu0 0.0
        %4709 = vmatpush1.msra.mxu0 0.0
        %4710 = vmatprep.subr.mxu0 0.0
        %4711 = vmatpush1.msra.mxu0 0.0
        %4712 = vmatprep.subr.mxu0 0.0
        %4713 = vmatpush1.msra.mxu0 0.0
        %4714 = vmatprep.subr.mxu0 0.0
        %4715 = vmatpush1.msra.mxu0 0.0
        %4716 = vmatprep.subr.mxu0 0.0
        %4717 = vmatpush1.msra.mxu0 0.0
        %4718 = vmatprep.subr.mxu0 0.0
        %4719 = vmatpush1.msra.mxu0 0.0
        %4720 = vmatprep.subr.mxu0 0.0
        %4721 = vmatpush1.msra.mxu0 0.0
        %4722 = vmatprep.subr.mxu0 0.0
        %4723 = vmatpush1.msra.mxu0 0.0
        %4724 = vmatprep.subr.mxu0 0.0
        %4725 = vmatpush1.msra.mxu0 0.0
        %4726 = vmatprep.subr.mxu0 0.0
        %4727 = vmatpush1.msra.mxu0 0.0
        %4728 = vmatprep.subr.mxu0 0.0
        %4729 = vmatpush1.msra.mxu0 0.0
        %4730 = vmatprep.subr.mxu0 0.0
        %4731 = vmatpush1.msra.mxu0 0.0
        %4732 = vmatprep.subr.mxu0 0.0
        %4733 = vmatpush1.msra.mxu0 0.0
        %4734 = vmatprep.subr.mxu0 0.0
        %4735 = vmatpush1.msra.mxu0 0.0
        %4736 = vmatprep.subr.mxu0 0.0
        %4737 = vmatpush1.msra.mxu0 0.0
        %4738 = vmatprep.subr.mxu0 0.0
        %4739 = vmatpush1.msra.mxu0 0.0
        %4740 = vmatprep.subr.mxu0 0.0
        %4741 = vmatpush1.msra.mxu0 0.0
        %4742 = vmatprep.subr.mxu0 0.0
        %4743 = vmatpush1.msra.mxu0 0.0
        %4744 = vmatprep.subr.mxu0 0.0
        %4745 = vmatpush1.msra.mxu0 0.0
        %4746 = vmatprep.subr.mxu0 0.0
        %4747 = vmatpush1.msra.mxu0 0.0
        %4748 = vmatprep.subr.mxu0 0.0
        %4749 = vmatpush1.msra.mxu0 0.0
        %4750 = vmatprep.mubr.f32.mxu0 0.0
        %4751 = vmatmul.mubr.f32.gmra.mrb[0].mxu0 %v4581
        %v4752 = vpop.f32.mrb[0].mxu0
        %v4753 = vadd.f32 0.0, %v4752
        %v4754 = vpop.f32.mrb[0].mxu0
        %4755 = vmatprep.mubr.f32.mxu0 0.0
        %4756 = vmatmul.mubr.f32.gmra.mrb[0].mxu0 %v4583
        %v4757 = vpop.f32.mrb[0].mxu0
        %v4758 = vadd.f32 0.0, %v4757
        %v4759 = vpop.f32.mrb[0].mxu0
        %4760 = vmatprep.mubr.f32.mxu0 0.0
        %4761 = vmatmul.mubr.f32.gmra.mrb[0].mxu0 %v4585
        %v4762 = vpop.f32.mrb[0].mxu0
        %v4763 = vadd.f32 0.0, %v4762
        %v4764 = vpop.f32.mrb[0].mxu0
        %4765 = vmatprep.mubr.f32.mxu0 0.0
        %4766 = vmatmul.mubr.f32.gmra.mrb[0].mxu0 %v4587
        %v4767 = vpop.f32.mrb[0].mxu0
        %v4768 = vadd.f32 0.0, %v4767
        %v4769 = vpop.f32.mrb[0].mxu0
        %4770 = vmatprep.mubr.f32.mxu0 0.0
        %4771 = vmatmul.mubr.f32.gmra.mrb[0].mxu0 %v4589
        %v4772 = vpop.f32.mrb[0].mxu0
        %v4773 = vadd.f32 0.0, %v4772
        %v4774 = vpop.f32.mrb[0].mxu0
        %4775 = vdwg.mxu0
        %v4776 = vadd.f32 %v4434, %v4658
        %v4777 = vadd.f32 %v4436, %v4660
        %v4778 = vadd.f32 %v4529, %v4753
        %v4779 = vadd.f32 %v4440, %v4664
        %v4780 = vadd.f32 %v4442, %v4666
        %v4781 = vadd.f32 %v4534, %v4758
        %v4782 = vadd.f32 %v4446, %v4670
        %v4783 = vadd.f32 %v4448, %v4672
        %v4784 = vadd.f32 %v4539, %v4763
        %v4785 = vadd.f32 %v4452, %v4676
        %v4786 = vadd.f32 %v4454, %v4678
        %v4787 = vadd.f32 %v4544, %v4768
        %v4788 = vadd.f32 %v4458, %v4682
        %v4789 = vadd.f32 %v4460, %v4684
        %v4790 = vadd.f32 %v4549, %v4773
        %4806 = vrot.lane.b32.xlu0 %v4776, 127
        %v4807 = vpop.permute.xlu0 %4806
        %4808 = vrot.lane.b32.xlu0 %v4777, 127
        %v4809 = vpop.permute.xlu0 %4808
        %4810 = vrot.lane.b32.xlu0 %v4778, 127
        %v4811 = vpop.permute.xlu0 %4810
        %4812 = vrot.lane.b32.xlu0 %v4779, 127
        %v4813 = vpop.permute.xlu0 %4812
        %4814 = vrot.lane.b32.xlu0 %v4780, 127
        %v4815 = vpop.permute.xlu0 %4814
        %4816 = vrot.lane.b32.xlu0 %v4781, 127
        %v4817 = vpop.permute.xlu0 %4816
        %4818 = vrot.lane.b32.xlu0 %v4782, 127
        %v4819 = vpop.permute.xlu0 %4818
        %4820 = vrot.lane.b32.xlu0 %v4783, 127
        %v4821 = vpop.permute.xlu0 %4820
        %4822 = vrot.lane.b32.xlu0 %v4784, 127
        %v4823 = vpop.permute.xlu0 %4822
        %4824 = vrot.lane.b32.xlu0 %v4785, 127
        %v4825 = vpop.permute.xlu0 %4824
        %4826 = vrot.lane.b32.xlu0 %v4786, 127
        %v4827 = vpop.permute.xlu0 %4826
        %4828 = vrot.lane.b32.xlu0 %v4787, 127
        %v4829 = vpop.permute.xlu0 %4828
        %4830 = vrot.lane.b32.xlu0 %v4788, 127
        %v4831 = vpop.permute.xlu0 %4830
        %4832 = vrot.lane.b32.xlu0 %v4789, 127
        %v4833 = vpop.permute.xlu0 %4832
        %4834 = vrot.lane.b32.xlu0 %v4790, 127
        %v4835 = vpop.permute.xlu0 %4834
        %v4836 = vsel %vm1150, %v4807, %v4809
        %v4837 = vsel %vm1150, %v4809, %v4811
        %v4838 = vsel %vm1150, %v4813, %v4815
        %v4839 = vsel %vm1150, %v4815, %v4817
        %v4840 = vsel %vm1150, %v4819, %v4821
        %v4841 = vsel %vm1150, %v4821, %v4823
        %v4842 = vsel %vm1150, %v4825, %v4827
        %v4843 = vsel %vm1150, %v4827, %v4829
        %v4844 = vsel %vm1150, %v4831, %v4833
        %v4845 = vsel %vm1150, %v4833, %v4835
        %v4861 = vmax.f32 %v4776, %v4836
        %v4862 = vmax.f32 %v4777, %v4837
        %v4863 = vmax.f32 %v4778, %v4811
        %v4864 = vmax.f32 %v4779, %v4838
        %v4865 = vmax.f32 %v4780, %v4839
        %v4866 = vmax.f32 %v4781, %v4817
        %v4867 = vmax.f32 %v4782, %v4840
        %v4868 = vmax.f32 %v4783, %v4841
        %v4869 = vmax.f32 %v4784, %v4823
        %v4870 = vmax.f32 %v4785, %v4842
        %v4871 = vmax.f32 %v4786, %v4843
        %v4872 = vmax.f32 %v4787, %v4829
        %v4873 = vmax.f32 %v4788, %v4844
        %v4874 = vmax.f32 %v4789, %v4845
        %v4875 = vmax.f32 %v4790, %v4835
        %4876 = vrot.lane.b32.xlu0 %v4776, 126
        %v4877 = vpop.permute.xlu0 %4876
        %4878 = vrot.lane.b32.xlu0 %v4777, 126
        %v4879 = vpop.permute.xlu0 %4878
        %4880 = vrot.lane.b32.xlu0 %v4778, 126
        %v4881 = vpop.permute.xlu0 %4880
        %4882 = vrot.lane.b32.xlu0 %v4779, 126
        %v4883 = vpop.permute.xlu0 %4882
        %4884 = vrot.lane.b32.xlu0 %v4780, 126
        %v4885 = vpop.permute.xlu0 %4884
        %4886 = vrot.lane.b32.xlu0 %v4781, 126
        %v4887 = vpop.permute.xlu0 %4886
        %4888 = vrot.lane.b32.xlu0 %v4782, 126
        %v4889 = vpop.permute.xlu0 %4888
        %4890 = vrot.lane.b32.xlu0 %v4783, 126
        %v4891 = vpop.permute.xlu0 %4890
        %4892 = vrot.lane.b32.xlu0 %v4784, 126
        %v4893 = vpop.permute.xlu0 %4892
        %4894 = vrot.lane.b32.xlu0 %v4785, 126
        %v4895 = vpop.permute.xlu0 %4894
        %4896 = vrot.lane.b32.xlu0 %v4786, 126
        %v4897 = vpop.permute.xlu0 %4896
        %4898 = vrot.lane.b32.xlu0 %v4787, 126
        %v4899 = vpop.permute.xlu0 %4898
        %4900 = vrot.lane.b32.xlu0 %v4788, 126
        %v4901 = vpop.permute.xlu0 %4900
        %4902 = vrot.lane.b32.xlu0 %v4789, 126
        %v4903 = vpop.permute.xlu0 %4902
        %4904 = vrot.lane.b32.xlu0 %v4790, 126
        %v4905 = vpop.permute.xlu0 %4904
        %v4906 = vsel %vm1221, %v4877, %v4879
        %v4907 = vsel %vm1221, %v4879, %v4881
        %v4908 = vsel %vm1221, %v4883, %v4885
        %v4909 = vsel %vm1221, %v4885, %v4887
        %v4910 = vsel %vm1221, %v4889, %v4891
        %v4911 = vsel %vm1221, %v4891, %v4893
        %v4912 = vsel %vm1221, %v4895, %v4897
        %v4913 = vsel %vm1221, %v4897, %v4899
        %v4914 = vsel %vm1221, %v4901, %v4903
        %v4915 = vsel %vm1221, %v4903, %v4905
        %v4931 = vmax.f32 %v4861, %v4906
        %v4932 = vmax.f32 %v4862, %v4907
        %v4933 = vmax.f32 %v4863, %v4881
        %v4934 = vmax.f32 %v4864, %v4908
        %v4935 = vmax.f32 %v4865, %v4909
        %v4936 = vmax.f32 %v4866, %v4887
        %v4937 = vmax.f32 %v4867, %v4910
        %v4938 = vmax.f32 %v4868, %v4911
        %v4939 = vmax.f32 %v4869, %v4893
        %v4940 = vmax.f32 %v4870, %v4912
        %v4941 = vmax.f32 %v4871, %v4913
        %v4942 = vmax.f32 %v4872, %v4899
        %v4943 = vmax.f32 %v4873, %v4914
        %v4944 = vmax.f32 %v4874, %v4915
        %v4945 = vmax.f32 %v4875, %v4905
        %v4961 = vrot.slane %v4931, 1
        %v4962 = vrot.slane %v4934, 1
        %v4963 = vsel %vm461, %v4961, %v4962
        %v4964 = vrot.slane %v4932, 1
        %v4965 = vrot.slane %v4935, 1
        %v4966 = vsel %vm461, %v4964, %v4965
        %v4967 = vrot.slane %v4933, 1
        %v4968 = vrot.slane %v4936, 1
        %v4969 = vsel %vm461, %v4967, %v4968
        %v4970 = vrot.slane %v4937, 1
        %v4971 = vsel %vm461, %v4962, %v4970
        %v4972 = vrot.slane %v4938, 1
        %v4973 = vsel %vm461, %v4965, %v4972
        %v4974 = vrot.slane %v4939, 1
        %v4975 = vsel %vm461, %v4968, %v4974
        %v4976 = vrot.slane %v4940, 1
        %v4977 = vsel %vm461, %v4970, %v4976
        %v4978 = vrot.slane %v4941, 1
        %v4979 = vsel %vm461, %v4972, %v4978
        %v4980 = vrot.slane %v4942, 1
        %v4981 = vsel %vm461, %v4974, %v4980
        %v4982 = vrot.slane %v4943, 1
        %v4983 = vsel %vm461, %v4976, %v4982
        %v4984 = vrot.slane %v4944, 1
        %v4985 = vsel %vm461, %v4978, %v4984
        %v4986 = vrot.slane %v4945, 1
        %v4987 = vsel %vm461, %v4980, %v4986
        %v5003 = vmax.f32 %v4931, %v4963
        %v5004 = vmax.f32 %v4932, %v4966
        %v5005 = vmax.f32 %v4933, %v4969
        %v5006 = vmax.f32 %v4934, %v4971
        %v5007 = vmax.f32 %v4935, %v4973
        %v5008 = vmax.f32 %v4936, %v4975
        %v5009 = vmax.f32 %v4937, %v4977
        %v5010 = vmax.f32 %v4938, %v4979
        %v5011 = vmax.f32 %v4939, %v4981
        %v5012 = vmax.f32 %v4940, %v4983
        %v5013 = vmax.f32 %v4941, %v4985
        %v5014 = vmax.f32 %v4942, %v4987
        %v5015 = vmax.f32 %v4943, %v4982
        %v5016 = vmax.f32 %v4944, %v4984
        %v5017 = vmax.f32 %v4945, %v4986
        %v5018 = vrot.slane %v4931, 2
        %v5019 = vrot.slane %v4934, 2
        %v5020 = vsel %vm883, %v5018, %v5019
        %v5021 = vrot.slane %v4932, 2
        %v5022 = vrot.slane %v4935, 2
        %v5023 = vsel %vm883, %v5021, %v5022
        %v5024 = vrot.slane %v4933, 2
        %v5025 = vrot.slane %v4936, 2
        %v5026 = vsel %vm883, %v5024, %v5025
        %v5027 = vrot.slane %v4937, 2
        %v5028 = vsel %vm883, %v5019, %v5027
        %v5029 = vrot.slane %v4938, 2
        %v5030 = vsel %vm883, %v5022, %v5029
        %v5031 = vrot.slane %v4939, 2
        %v5032 = vsel %vm883, %v5025, %v5031
        %v5033 = vrot.slane %v4940, 2
        %v5034 = vsel %vm883, %v5027, %v5033
        %v5035 = vrot.slane %v4941, 2
        %v5036 = vsel %vm883, %v5029, %v5035
        %v5037 = vrot.slane %v4942, 2
        %v5038 = vsel %vm883, %v5031, %v5037
        %v5039 = vrot.slane %v4943, 2
        %v5040 = vsel %vm883, %v5033, %v5039
        %v5041 = vrot.slane %v4944, 2
        %v5042 = vsel %vm883, %v5035, %v5041
        %v5043 = vrot.slane %v4945, 2
        %v5044 = vsel %vm883, %v5037, %v5043
        %v5060 = vmax.f32 %v5003, %v5020
        %v5061 = vmax.f32 %v5004, %v5023
        %v5062 = vmax.f32 %v5005, %v5026
        %v5063 = vmax.f32 %v5006, %v5028
        %v5064 = vmax.f32 %v5007, %v5030
        %v5065 = vmax.f32 %v5008, %v5032
        %v5066 = vmax.f32 %v5009, %v5034
        %v5067 = vmax.f32 %v5010, %v5036
        %v5068 = vmax.f32 %v5011, %v5038
        %v5069 = vmax.f32 %v5012, %v5040
        %v5070 = vmax.f32 %v5013, %v5042
        %v5071 = vmax.f32 %v5014, %v5044
        %v5072 = vmax.f32 %v5015, %v5039
        %v5073 = vmax.f32 %v5016, %v5041
        %v5074 = vmax.f32 %v5017, %v5043
        %v5075 = vld [vmem:[%s5] ss:$2 sm:$0x7]
        %v5077 = vlaneseq
        %v5078 = vshrl.u32 %v5077, 7
        %v5079 = vsub.s32 0, %v5078
        %v5080 = vrot.slane %v5075, %v5079
        %v5081 = vlaneseq
        %v5082 = vshrl.u32 %v5081, 7
        %v5083 = vsub.s32 1, %v5082
        %v5084 = vrot.slane %v5075, %v5083
        %v5085 = vlaneseq
        %v5086 = vshrl.u32 %v5085, 7
        %v5087 = vsub.s32 2, %v5086
        %v5088 = vrot.slane %v5075, %v5087
        %v5092 = vmul.f32 %v5060, %v5080
        %v5093 = vmul.f32 %v5061, %v5084
        %v5094 = vmul.f32 %v5062, %v5088
        %v5095 = vmul.f32 %v5063, %v5080
        %v5096 = vmul.f32 %v5064, %v5084
        %v5097 = vmul.f32 %v5065, %v5088
        %v5098 = vmul.f32 %v5066, %v5080
        %v5099 = vmul.f32 %v5067, %v5084
        %v5100 = vmul.f32 %v5068, %v5088
        %v5101 = vmul.f32 %v5069, %v5080
        %v5102 = vmul.f32 %v5070, %v5084
        %v5103 = vmul.f32 %v5071, %v5088
        %v5104 = vmul.f32 %v5072, %v5080
        %v5105 = vmul.f32 %v5073, %v5084
        %v5106 = vmul.f32 %v5074, %v5088
        %v5107 = vld [vmem:[%s1423] ss:$2 sm:$0x7]
        %v5109 = vlaneseq
        %v5110 = vshrl.u32 %v5109, 7
        %v5111 = vsub.s32 0, %v5110
        %v5112 = vrot.slane %v5107, %v5111
        %v5113 = vlaneseq
        %v5114 = vshrl.u32 %v5113, 7
        %v5115 = vsub.s32 1, %v5114
        %v5116 = vrot.slane %v5107, %v5115
        %v5117 = vlaneseq
        %v5118 = vshrl.u32 %v5117, 7
        %v5119 = vsub.s32 2, %v5118
        %v5120 = vrot.slane %v5107, %v5119
        %v5124 = vadd.f32 %v5092, %v5112
        %v5125 = vadd.f32 %v5093, %v5116
        %v5126 = vadd.f32 %v5094, %v5120
        %v5127 = vadd.f32 %v5095, %v5112
        %v5128 = vadd.f32 %v5096, %v5116
        %v5129 = vadd.f32 %v5097, %v5120
        %v5130 = vadd.f32 %v5098, %v5112
        %v5131 = vadd.f32 %v5099, %v5116
        %v5132 = vadd.f32 %v5100, %v5120
        %v5133 = vadd.f32 %v5101, %v5112
        %v5134 = vadd.f32 %v5102, %v5116
        %v5135 = vadd.f32 %v5103, %v5120
        %v5136 = vadd.f32 %v5104, %v5112
        %v5137 = vadd.f32 %v5105, %v5116
        %v5138 = vadd.f32 %v5106, %v5120
        %v5139 = vmax.f32 %v5124, 0.0
        %v5140 = vmax.f32 %v5125, 0.0
        %v5141 = vmax.f32 %v5126, 0.0
        %v5142 = vmax.f32 %v5127, 0.0
        %v5143 = vmax.f32 %v5128, 0.0
        %v5144 = vmax.f32 %v5129, 0.0
        %v5145 = vmax.f32 %v5130, 0.0
        %v5146 = vmax.f32 %v5131, 0.0
        %v5147 = vmax.f32 %v5132, 0.0
        %v5148 = vmax.f32 %v5133, 0.0
        %v5149 = vmax.f32 %v5134, 0.0
        %v5150 = vmax.f32 %v5135, 0.0
        %v5151 = vmax.f32 %v5136, 0.0
        %v5152 = vmax.f32 %v5137, 0.0
        %v5153 = vmax.f32 %v5138, 0.0
        %v5154 = vld [vmem:[%s2] sm:$0xff]
        %v5155 = vld [vmem:[%s2 + $0x8] sm:$0xff]
        %v5156 = vld [vmem:[%s2 + $0x10] sm:$0xff]
        %v5157 = vld [vmem:[%s2 + $0x18] sm:$0xff]
        %v5158 = vld [vmem:[%s2 + $0x20] sm:$0xff]
        %v5159 = vld [vmem:[%s2 + $0x28] sm:$0xff]
        %v5160 = vld [vmem:[%s2 + $0x30] sm:$0xff]
        %v5161 = vld [vmem:[%s2 + $0x38] sm:$0xff]
        %v5162 = vld [vmem:[%s2 + $0x40] sm:$0xff]
        %v5163 = vld [vmem:[%s2 + $0x48] sm:$0xff]
        %v5164 = vld [vmem:[%s2 + $0x50] sm:$0xff]
        %v5165 = vld [vmem:[%s2 + $0x58] sm:$0xff]
        %v5166 = vld [vmem:[%s2 + $0x60] sm:$0xff]
        %v5167 = vld [vmem:[%s2 + $0x68] sm:$0xff]
        %v5168 = vld [vmem:[%s2 + $0x70] sm:$0xff]
        %v5169 = vld [vmem:[%s2 + $0x78] sm:$0xff]
        %v5170 = vld [vmem:[%s2 + $0x80] sm:$0xff]
        %v5171 = vld [vmem:[%s2 + $0x88] sm:$0xff]
        %v5172 = vld [vmem:[%s2 + $0x90] sm:$0xff]
        %v5173 = vld [vmem:[%s2 + $0x98] sm:$0xff]
        %v5174 = vld [vmem:[%s2 + $0xa0] sm:$0xff]
        %v5175 = vld [vmem:[%s2 + $0xa8] sm:$0xff]
        %v5176 = vld [vmem:[%s2 + $0xb0] sm:$0xff]
        %v5177 = vld [vmem:[%s2 + $0xb8] sm:$0xff]
        %v5178 = vld [vmem:[%s2 + $0xc0] sm:$0xff]
        %v5179 = vld [vmem:[%s2 + $0xc8] sm:$0xff]
        %v5180 = vld [vmem:[%s2 + $0xd0] sm:$0xff]
        %v5181 = vld [vmem:[%s2 + $0xd8] sm:$0xff]
        %v5182 = vld [vmem:[%s2 + $0xe0] sm:$0xff]
        %v5183 = vld [vmem:[%s2 + $0xe8] sm:$0xff]
        %v5184 = vld [vmem:[%s2 + $0xf0] sm:$0xff]
        %v5185 = vld [vmem:[%s2 + $0xf8] sm:$0xff]
        %v5186 = vld [vmem:[%s2 + $0x100] sm:$0xff]
        %v5187 = vld [vmem:[%s2 + $0x108] sm:$0xff]
        %v5188 = vld [vmem:[%s2 + $0x110] sm:$0xff]
        %v5189 = vld [vmem:[%s2 + $0x118] sm:$0xff]
        %v5190 = vld [vmem:[%s2 + $0x120] sm:$0xff]
        %v5191 = vld [vmem:[%s2 + $0x128] sm:$0xff]
        %v5192 = vld [vmem:[%s2 + $0x130] sm:$0xff]
        %v5193 = vld [vmem:[%s2 + $0x138] sm:$0xff]
        %v5194 = vld [vmem:[%s2 + $0x140] sm:$0xff]
        %v5195 = vld [vmem:[%s2 + $0x148] sm:$0xff]
        %v5196 = vld [vmem:[%s2 + $0x150] sm:$0xff]
        %v5197 = vld [vmem:[%s2 + $0x158] sm:$0xff]
        %v5198 = vld [vmem:[%s2 + $0x160] sm:$0xff]
        %v5199 = vld [vmem:[%s2 + $0x168] sm:$0xff]
        %v5200 = vld [vmem:[%s2 + $0x170] sm:$0xff]
        %v5201 = vld [vmem:[%s2 + $0x178] sm:$0xff]
        %v5202 = vld [vmem:[%s2 + $0x180] sm:$0xff]
        %v5203 = vld [vmem:[%s2 + $0x188] sm:$0xff]
        %v5204 = vld [vmem:[%s2 + $0x190] sm:$0xff]
        %v5205 = vld [vmem:[%s2 + $0x198] sm:$0xff]
        %v5206 = vld [vmem:[%s2 + $0x1a0] sm:$0xff]
        %v5207 = vld [vmem:[%s2 + $0x1a8] sm:$0xff]
        %v5208 = vld [vmem:[%s2 + $0x1b0] sm:$0xff]
        %v5209 = vld [vmem:[%s2 + $0x1b8] sm:$0xff]
        %v5210 = vld [vmem:[%s2 + $0x1c0] sm:$0xff]
        %v5211 = vld [vmem:[%s2 + $0x1c8] sm:$0xff]
        %v5212 = vld [vmem:[%s2 + $0x1d0] sm:$0xff]
        %v5213 = vld [vmem:[%s2 + $0x1d8] sm:$0xff]
        %v5214 = vld [vmem:[%s2 + $0x1e0] sm:$0xff]
        %v5215 = vld [vmem:[%s2 + $0x1e8] sm:$0xff]
        %v5216 = vld [vmem:[%s2 + $0x1f0] sm:$0xff]
        %v5217 = vld [vmem:[%s2 + $0x1f8] sm:$0xff]
        %v5218 = vld [vmem:[%s2 + $0x200] sm:$0xff]
        %v5219 = vld [vmem:[%s2 + $0x208] sm:$0xff]
        %v5220 = vld [vmem:[%s2 + $0x210] sm:$0xff]
        %v5221 = vld [vmem:[%s2 + $0x218] sm:$0xff]
        %v5222 = vld [vmem:[%s2 + $0x220] sm:$0x3]
        %v5223 = vld [vmem:[%s2 + $0x228] sm:$0x3]
        %v5224 = vld [vmem:[%s1541] sm:$0xff]
        %v5225 = vld [vmem:[%s1541 + $0x8] sm:$0xff]
        %v5226 = vld [vmem:[%s1541 + $0x10] sm:$0xff]
        %v5227 = vld [vmem:[%s1541 + $0x18] sm:$0xff]
        %v5228 = vld [vmem:[%s1541 + $0x20] sm:$0xff]
        %v5229 = vld [vmem:[%s1541 + $0x28] sm:$0xff]
        %v5230 = vld [vmem:[%s1541 + $0x30] sm:$0xff]
        %v5231 = vld [vmem:[%s1541 + $0x38] sm:$0xff]
        %v5232 = vld [vmem:[%s1541 + $0x40] sm:$0xff]
        %v5233 = vld [vmem:[%s1541 + $0x48] sm:$0xff]
        %v5234 = vld [vmem:[%s1541 + $0x50] sm:$0xff]
        %v5235 = vld [vmem:[%s1541 + $0x58] sm:$0xff]
        %v5236 = vld [vmem:[%s1541 + $0x60] sm:$0xff]
        %v5237 = vld [vmem:[%s1541 + $0x68] sm:$0xff]
        %v5238 = vld [vmem:[%s1541 + $0x70] sm:$0xff]
        %v5239 = vld [vmem:[%s1541 + $0x78] sm:$0xff]
        %v5240 = vld [vmem:[%s1541 + $0x80] sm:$0xff]
        %v5241 = vld [vmem:[%s1541 + $0x88] sm:$0xff]
        %v5242 = vld [vmem:[%s1541 + $0x90] sm:$0xff]
        %v5243 = vld [vmem:[%s1541 + $0x98] sm:$0xff]
        %v5244 = vld [vmem:[%s1541 + $0xa0] sm:$0xff]
        %v5245 = vld [vmem:[%s1541 + $0xa8] sm:$0xff]
        %v5246 = vld [vmem:[%s1541 + $0xb0] sm:$0xff]
        %v5247 = vld [vmem:[%s1541 + $0xb8] sm:$0xff]
        %v5248 = vld [vmem:[%s1541 + $0xc0] sm:$0xff]
        %v5249 = vld [vmem:[%s1541 + $0xc8] sm:$0xff]
        %v5250 = vld [vmem:[%s1541 + $0xd0] sm:$0xff]
        %v5251 = vld [vmem:[%s1541 + $0xd8] sm:$0xff]
        %v5252 = vld [vmem:[%s1541 + $0xe0] sm:$0xff]
        %v5253 = vld [vmem:[%s1541 + $0xe8] sm:$0xff]
        %v5254 = vld [vmem:[%s1541 + $0xf0] sm:$0xff]
        %v5255 = vld [vmem:[%s1541 + $0xf8] sm:$0xff]
        %v5256 = vld [vmem:[%s1541 + $0x100] sm:$0xff]
        %v5257 = vld [vmem:[%s1541 + $0x108] sm:$0xff]
        %v5258 = vld [vmem:[%s1541 + $0x110] sm:$0xff]
        %v5259 = vld [vmem:[%s1541 + $0x118] sm:$0xff]
        %v5260 = vld [vmem:[%s1541 + $0x120] sm:$0xff]
        %v5261 = vld [vmem:[%s1541 + $0x128] sm:$0xff]
        %v5262 = vld [vmem:[%s1541 + $0x130] sm:$0xff]
        %v5263 = vld [vmem:[%s1541 + $0x138] sm:$0xff]
        %v5264 = vld [vmem:[%s1541 + $0x140] sm:$0xff]
        %v5265 = vld [vmem:[%s1541 + $0x148] sm:$0xff]
        %v5266 = vld [vmem:[%s1541 + $0x150] sm:$0xff]
        %v5267 = vld [vmem:[%s1541 + $0x158] sm:$0xff]
        %v5268 = vld [vmem:[%s1541 + $0x160] sm:$0xff]
        %v5269 = vld [vmem:[%s1541 + $0x168] sm:$0xff]
        %v5270 = vld [vmem:[%s1541 + $0x170] sm:$0xff]
        %v5271 = vld [vmem:[%s1541 + $0x178] sm:$0xff]
        %v5272 = vld [vmem:[%s1541 + $0x180] sm:$0xff]
        %v5273 = vld [vmem:[%s1541 + $0x188] sm:$0xff]
        %v5274 = vld [vmem:[%s1541 + $0x190] sm:$0xff]
        %v5275 = vld [vmem:[%s1541 + $0x198] sm:$0xff]
        %v5276 = vld [vmem:[%s1541 + $0x1a0] sm:$0xff]
        %v5277 = vld [vmem:[%s1541 + $0x1a8] sm:$0xff]
        %v5278 = vld [vmem:[%s1541 + $0x1b0] sm:$0xff]
        %v5279 = vld [vmem:[%s1541 + $0x1b8] sm:$0xff]
        %v5280 = vld [vmem:[%s1541 + $0x1c0] sm:$0xff]
        %v5281 = vld [vmem:[%s1541 + $0x1c8] sm:$0xff]
        %v5282 = vld [vmem:[%s1541 + $0x1d0] sm:$0xff]
        %v5283 = vld [vmem:[%s1541 + $0x1d8] sm:$0xff]
        %v5284 = vld [vmem:[%s1541 + $0x1e0] sm:$0xff]
        %v5285 = vld [vmem:[%s1541 + $0x1e8] sm:$0xff]
        %v5286 = vld [vmem:[%s1541 + $0x1f0] sm:$0xff]
        %v5287 = vld [vmem:[%s1541 + $0x1f8] sm:$0xff]
        %v5288 = vld [vmem:[%s1541 + $0x200] sm:$0xff]
        %v5289 = vld [vmem:[%s1541 + $0x208] sm:$0xff]
        %v5290 = vld [vmem:[%s1541 + $0x210] sm:$0xff]
        %v5291 = vld [vmem:[%s1541 + $0x218] sm:$0xff]
        %v5292 = vld [vmem:[%s1541 + $0x220] sm:$0x3]
        %v5293 = vld [vmem:[%s1541 + $0x228] sm:$0x3]
        %v5309 = vrot.slane %v5139, 1
        %v5310 = vrot.slane %v5142, 1
        %v5311 = vsel %vm461, %v5309, %v5310
        %v5312 = vrot.slane %v5140, 1
        %v5313 = vrot.slane %v5143, 1
        %v5314 = vsel %vm461, %v5312, %v5313
        %v5315 = vrot.slane %v5141, 1
        %v5316 = vrot.slane %v5144, 1
        %v5317 = vsel %vm461, %v5315, %v5316
        %v5318 = vrot.slane %v5145, 1
        %v5319 = vsel %vm461, %v5310, %v5318
        %v5320 = vrot.slane %v5146, 1
        %v5321 = vsel %vm461, %v5313, %v5320
        %v5322 = vrot.slane %v5147, 1
        %v5323 = vsel %vm461, %v5316, %v5322
        %v5324 = vrot.slane %v5148, 1
        %v5325 = vsel %vm461, %v5318, %v5324
        %v5326 = vrot.slane %v5149, 1
        %v5327 = vsel %vm461, %v5320, %v5326
        %v5328 = vrot.slane %v5150, 1
        %v5329 = vsel %vm461, %v5322, %v5328
        %v5330 = vrot.slane %v5151, 1
        %v5331 = vsel %vm461, %v5324, %v5330
        %v5332 = vrot.slane %v5152, 1
        %v5333 = vsel %vm461, %v5326, %v5332
        %v5334 = vrot.slane %v5153, 1
        %v5335 = vsel %vm461, %v5328, %v5334
        %v5346 = vsel %vm1664, %v5317, 0
        %v5348 = vsel %vm1664, %v5323, 0
        %v5350 = vsel %vm1664, %v5329, 0
        %v5352 = vsel %vm1664, %v5335, 0
        %v5354 = vsel %vm1664, %v5334, 0
        %v5357 = vsel %vm1675, %v5292, 0
        %v5360 = vsel %vm1675, %v5293, 0
        %5362 = vmatprep.subr.mxu0 %v5225
        %5363 = vmatpush1.msra.mxu0 %v5224
        %5364 = vmatprep.subr.mxu0 %v5227
        %5365 = vmatpush1.msra.mxu0 %v5226
        %5366 = vmatprep.subr.mxu0 %v5229
        %5367 = vmatpush1.msra.mxu0 %v5228
        %5368 = vmatprep.subr.mxu0 %v5231
        %5369 = vmatpush1.msra.mxu0 %v5230
        %5370 = vmatprep.subr.mxu0 %v5233
        %5371 = vmatpush1.msra.mxu0 %v5232
        %5372 = vmatprep.subr.mxu0 %v5235
        %5373 = vmatpush1.msra.mxu0 %v5234
        %5374 = vmatprep.subr.mxu0 %v5237
        %5375 = vmatpush1.msra.mxu0 %v5236
        %5376 = vmatprep.subr.mxu0 %v5239
        %5377 = vmatpush1.msra.mxu0 %v5238
        %5378 = vmatprep.subr.mxu0 %v5241
        %5379 = vmatpush1.msra.mxu0 %v5240
        %5380 = vmatprep.subr.mxu0 %v5243
        %5381 = vmatpush1.msra.mxu0 %v5242
        %5382 = vmatprep.subr.mxu0 %v5245
        %5383 = vmatpush1.msra.mxu0 %v5244
        %5384 = vmatprep.subr.mxu0 %v5247
        %5385 = vmatpush1.msra.mxu0 %v5246
        %5386 = vmatprep.subr.mxu0 %v5249
        %5387 = vmatpush1.msra.mxu0 %v5248
        %5388 = vmatprep.subr.mxu0 %v5251
        %5389 = vmatpush1.msra.mxu0 %v5250
        %5390 = vmatprep.subr.mxu0 %v5253
        %5391 = vmatpush1.msra.mxu0 %v5252
        %5392 = vmatprep.subr.mxu0 %v5255
        %5393 = vmatpush1.msra.mxu0 %v5254
        %5394 = vmatprep.subr.mxu0 %v5257
        %5395 = vmatpush1.msra.mxu0 %v5256
        %5396 = vmatprep.subr.mxu0 %v5259
        %5397 = vmatpush1.msra.mxu0 %v5258
        %5398 = vmatprep.subr.mxu0 %v5261
        %5399 = vmatpush1.msra.mxu0 %v5260
        %5400 = vmatprep.subr.mxu0 %v5263
        %5401 = vmatpush1.msra.mxu0 %v5262
        %5402 = vmatprep.subr.mxu0 %v5265
        %5403 = vmatpush1.msra.mxu0 %v5264
        %5404 = vmatprep.subr.mxu0 %v5267
        %5405 = vmatpush1.msra.mxu0 %v5266
        %5406 = vmatprep.subr.mxu0 %v5269
        %5407 = vmatpush1.msra.mxu0 %v5268
        %5408 = vmatprep.subr.mxu0 %v5271
        %5409 = vmatpush1.msra.mxu0 %v5270
        %5410 = vmatprep.subr.mxu0 %v5273
        %5411 = vmatpush1.msra.mxu0 %v5272
        %5412 = vmatprep.subr.mxu0 %v5275
        %5413 = vmatpush1.msra.mxu0 %v5274
        %5414 = vmatprep.subr.mxu0 %v5277
        %5415 = vmatpush1.msra.mxu0 %v5276
        %5416 = vmatprep.subr.mxu0 %v5279
        %5417 = vmatpush1.msra.mxu0 %v5278
        %5418 = vmatprep.subr.mxu0 %v5281
        %5419 = vmatpush1.msra.mxu0 %v5280
        %5420 = vmatprep.subr.mxu0 %v5283
        %5421 = vmatpush1.msra.mxu0 %v5282
        %5422 = vmatprep.subr.mxu0 %v5285
        %5423 = vmatpush1.msra.mxu0 %v5284
        %5424 = vmatprep.subr.mxu0 %v5287
        %5425 = vmatpush1.msra.mxu0 %v5286
        %5426 = vmatprep.mubr.f32.mxu0 %v5314
        %5427 = vmatmul.mubr.f32.gmra.mrb[0].mxu0 %v5311
        %v5428 = vpop.f32.mrb[0].mxu0
        %v5429 = vadd.f32 0.0, %v5428
        %v5430 = vpop.f32.mrb[0].mxu0
        %v5431 = vadd.f32 0.0, %v5430
        %5432 = vmatprep.mubr.f32.mxu0 %v5321
        %5433 = vmatmul.mubr.f32.gmra.mrb[0].mxu0 %v5319
        %v5434 = vpop.f32.mrb[0].mxu0
        %v5435 = vadd.f32 0.0, %v5434
        %v5436 = vpop.f32.mrb[0].mxu0
        %v5437 = vadd.f32 0.0, %v5436
        %5438 = vmatprep.mubr.f32.mxu0 %v5327
        %5439 = vmatmul.mubr.f32.gmra.mrb[0].mxu0 %v5325
        %v5440 = vpop.f32.mrb[0].mxu0
        %v5441 = vadd.f32 0.0, %v5440
        %v5442 = vpop.f32.mrb[0].mxu0
        %v5443 = vadd.f32 0.0, %v5442
        %5444 = vmatprep.mubr.f32.mxu0 %v5333
        %5445 = vmatmul.mubr.f32.gmra.mrb[0].mxu0 %v5331
        %v5446 = vpop.f32.mrb[0].mxu0
        %v5447 = vadd.f32 0.0, %v5446
        %v5448 = vpop.f32.mrb[0].mxu0
        %v5449 = vadd.f32 0.0, %v5448
        %5450 = vmatprep.mubr.f32.mxu0 %v5332
        %5451 = vmatmul.mubr.f32.gmra.mrb[0].mxu0 %v5330
        %v5452 = vpop.f32.mrb[0].mxu0
        %v5453 = vadd.f32 0.0, %v5452
        %v5454 = vpop.f32.mrb[0].mxu0
        %v5455 = vadd.f32 0.0, %v5454
        %5456 = vdwg.mxu0
        %5457 = vmatprep.subr.mxu0 %v5289
        %5458 = vmatpush1.msra.mxu0 %v5288
        %5459 = vmatprep.subr.mxu0 %v5291
        %5460 = vmatpush1.msra.mxu0 %v5290
        %5461 = vmatprep.subr.mxu0 %v5360
        %5462 = vmatpush1.msra.mxu0 %v5357
        %5463 = vmatprep.subr.mxu0 0.0
        %5464 = vmatpush1.msra.mxu0 0.0
        %5465 = vmatprep.subr.mxu0 0.0
        %5466 = vmatpush1.msra.mxu0 0.0
        %5467 = vmatprep.subr.mxu0 0.0
        %5468 = vmatpush1.msra.mxu0 0.0
        %5469 = vmatprep.subr.mxu0 0.0
        %5470 = vmatpush1.msra.mxu0 0.0
        %5471 = vmatprep.subr.mxu0 0.0
        %5472 = vmatpush1.msra.mxu0 0.0
        %5473 = vmatprep.subr.mxu0 0.0
        %5474 = vmatpush1.msra.mxu0 0.0
        %5475 = vmatprep.subr.mxu0 0.0
        %5476 = vmatpush1.msra.mxu0 0.0
        %5477 = vmatprep.subr.mxu0 0.0
        %5478 = vmatpush1.msra.mxu0 0.0
        %5479 = vmatprep.subr.mxu0 0.0
        %5480 = vmatpush1.msra.mxu0 0.0
        %5481 = vmatprep.subr.mxu0 0.0
        %5482 = vmatpush1.msra.mxu0 0.0
        %5483 = vmatprep.subr.mxu0 0.0
        %5484 = vmatpush1.msra.mxu0 0.0
        %5485 = vmatprep.subr.mxu0 0.0
        %5486 = vmatpush1.msra.mxu0 0.0
        %5487 = vmatprep.subr.mxu0 0.0
        %5488 = vmatpush1.msra.mxu0 0.0
        %5489 = vmatprep.subr.mxu0 0.0
        %5490 = vmatpush1.msra.mxu0 0.0
        %5491 = vmatprep.subr.mxu0 0.0
        %5492 = vmatpush1.msra.mxu0 0.0
        %5493 = vmatprep.subr.mxu0 0.0
        %5494 = vmatpush1.msra.mxu0 0.0
        %5495 = vmatprep.subr.mxu0 0.0
        %5496 = vmatpush1.msra.mxu0 0.0
        %5497 = vmatprep.subr.mxu0 0.0
        %5498 = vmatpush1.msra.mxu0 0.0
        %5499 = vmatprep.subr.mxu0 0.0
        %5500 = vmatpush1.msra.mxu0 0.0
        %5501 = vmatprep.subr.mxu0 0.0
        %5502 = vmatpush1.msra.mxu0 0.0
        %5503 = vmatprep.subr.mxu0 0.0
        %5504 = vmatpush1.msra.mxu0 0.0
        %5505 = vmatprep.subr.mxu0 0.0
        %5506 = vmatpush1.msra.mxu0 0.0
        %5507 = vmatprep.subr.mxu0 0.0
        %5508 = vmatpush1.msra.mxu0 0.0
        %5509 = vmatprep.subr.mxu0 0.0
        %5510 = vmatpush1.msra.mxu0 0.0
        %5511 = vmatprep.subr.mxu0 0.0
        %5512 = vmatpush1.msra.mxu0 0.0
        %5513 = vmatprep.subr.mxu0 0.0
        %5514 = vmatpush1.msra.mxu0 0.0
        %5515 = vmatprep.subr.mxu0 0.0
        %5516 = vmatpush1.msra.mxu0 0.0
        %5517 = vmatprep.subr.mxu0 0.0
        %5518 = vmatpush1.msra.mxu0 0.0
        %5519 = vmatprep.subr.mxu0 0.0
        %5520 = vmatpush1.msra.mxu0 0.0
        %5521 = vmatprep.mubr.f32.mxu0 0.0
        %5522 = vmatmul.mubr.f32.gmra.mrb[0].mxu0 %v5346
        %v5523 = vpop.f32.mrb[0].mxu0
        %v5524 = vadd.f32 %v5429, %v5523
        %v5525 = vpop.f32.mrb[0].mxu0
        %v5526 = vadd.f32 %v5431, %v5525
        %5527 = vmatprep.mubr.f32.mxu0 0.0
        %5528 = vmatmul.mubr.f32.gmra.mrb[0].mxu0 %v5348
        %v5529 = vpop.f32.mrb[0].mxu0
        %v5530 = vadd.f32 %v5435, %v5529
        %v5531 = vpop.f32.mrb[0].mxu0
        %v5532 = vadd.f32 %v5437, %v5531
        %5533 = vmatprep.mubr.f32.mxu0 0.0
        %5534 = vmatmul.mubr.f32.gmra.mrb[0].mxu0 %v5350
        %v5535 = vpop.f32.mrb[0].mxu0
        %v5536 = vadd.f32 %v5441, %v5535
        %v5537 = vpop.f32.mrb[0].mxu0
        %v5538 = vadd.f32 %v5443, %v5537
        %5539 = vmatprep.mubr.f32.mxu0 0.0
        %5540 = vmatmul.mubr.f32.gmra.mrb[0].mxu0 %v5352
        %v5541 = vpop.f32.mrb[0].mxu0
        %v5542 = vadd.f32 %v5447, %v5541
        %v5543 = vpop.f32.mrb[0].mxu0
        %v5544 = vadd.f32 %v5449, %v5543
        %5545 = vmatprep.mubr.f32.mxu0 0.0
        %5546 = vmatmul.mubr.f32.gmra.mrb[0].mxu0 %v5354
        %v5547 = vpop.f32.mrb[0].mxu0
        %v5548 = vadd.f32 %v5453, %v5547
        %v5549 = vpop.f32.mrb[0].mxu0
        %v5550 = vadd.f32 %v5455, %v5549
        %5551 = vdwg.mxu0
        %v5552 = vsel %vm1664, %v5141, 0
        %v5554 = vsel %vm1664, %v5144, 0
        %v5556 = vsel %vm1664, %v5147, 0
        %v5558 = vsel %vm1664, %v5150, 0
        %v5560 = vsel %vm1664, %v5153, 0
        %v5563 = vsel %vm1675, %v5222, 0
        %v5566 = vsel %vm1675, %v5223, 0
        %5568 = vmatprep.subr.mxu0 %v5155
        %5569 = vmatpush1.msra.mxu0 %v5154
        %5570 = vmatprep.subr.mxu0 %v5157
        %5571 = vmatpush1.msra.mxu0 %v5156
        %5572 = vmatprep.subr.mxu0 %v5159
        %5573 = vmatpush1.msra.mxu0 %v5158
        %5574 = vmatprep.subr.mxu0 %v5161
        %5575 = vmatpush1.msra.mxu0 %v5160
        %5576 = vmatprep.subr.mxu0 %v5163
        %5577 = vmatpush1.msra.mxu0 %v5162
        %5578 = vmatprep.subr.mxu0 %v5165
        %5579 = vmatpush1.msra.mxu0 %v5164
        %5580 = vmatprep.subr.mxu0 %v5167
        %5581 = vmatpush1.msra.mxu0 %v5166
        %5582 = vmatprep.subr.mxu0 %v5169
        %5583 = vmatpush1.msra.mxu0 %v5168
        %5584 = vmatprep.subr.mxu0 %v5171
        %5585 = vmatpush1.msra.mxu0 %v5170
        %5586 = vmatprep.subr.mxu0 %v5173
        %5587 = vmatpush1.msra.mxu0 %v5172
        %5588 = vmatprep.subr.mxu0 %v5175
        %5589 = vmatpush1.msra.mxu0 %v5174
        %5590 = vmatprep.subr.mxu0 %v5177
        %5591 = vmatpush1.msra.mxu0 %v5176
        %5592 = vmatprep.subr.mxu0 %v5179
        %5593 = vmatpush1.msra.mxu0 %v5178
        %5594 = vmatprep.subr.mxu0 %v5181
        %5595 = vmatpush1.msra.mxu0 %v5180
        %5596 = vmatprep.subr.mxu0 %v5183
        %5597 = vmatpush1.msra.mxu0 %v5182
        %5598 = vmatprep.subr.mxu0 %v5185
        %5599 = vmatpush1.msra.mxu0 %v5184
        %5600 = vmatprep.subr.mxu0 %v5187
        %5601 = vmatpush1.msra.mxu0 %v5186
        %5602 = vmatprep.subr.mxu0 %v5189
        %5603 = vmatpush1.msra.mxu0 %v5188
        %5604 = vmatprep.subr.mxu0 %v5191
        %5605 = vmatpush1.msra.mxu0 %v5190
        %5606 = vmatprep.subr.mxu0 %v5193
        %5607 = vmatpush1.msra.mxu0 %v5192
        %5608 = vmatprep.subr.mxu0 %v5195
        %5609 = vmatpush1.msra.mxu0 %v5194
        %5610 = vmatprep.subr.mxu0 %v5197
        %5611 = vmatpush1.msra.mxu0 %v5196
        %5612 = vmatprep.subr.mxu0 %v5199
        %5613 = vmatpush1.msra.mxu0 %v5198
        %5614 = vmatprep.subr.mxu0 %v5201
        %5615 = vmatpush1.msra.mxu0 %v5200
        %5616 = vmatprep.subr.mxu0 %v5203
        %5617 = vmatpush1.msra.mxu0 %v5202
        %5618 = vmatprep.subr.mxu0 %v5205
        %5619 = vmatpush1.msra.mxu0 %v5204
        %5620 = vmatprep.subr.mxu0 %v5207
        %5621 = vmatpush1.msra.mxu0 %v5206
        %5622 = vmatprep.subr.mxu0 %v5209
        %5623 = vmatpush1.msra.mxu0 %v5208
        %5624 = vmatprep.subr.mxu0 %v5211
        %5625 = vmatpush1.msra.mxu0 %v5210
        %5626 = vmatprep.subr.mxu0 %v5213
        %5627 = vmatpush1.msra.mxu0 %v5212
        %5628 = vmatprep.subr.mxu0 %v5215
        %5629 = vmatpush1.msra.mxu0 %v5214
        %5630 = vmatprep.subr.mxu0 %v5217
        %5631 = vmatpush1.msra.mxu0 %v5216
        %5632 = vmatprep.mubr.f32.mxu0 %v5140
        %5633 = vmatmul.mubr.f32.gmra.mrb[0].mxu0 %v5139
        %v5634 = vpop.f32.mrb[0].mxu0
        %v5635 = vadd.f32 %v5524, %v5634
        %v5636 = vpop.f32.mrb[0].mxu0
        %v5637 = vadd.f32 %v5526, %v5636
        %5638 = vmatprep.mubr.f32.mxu0 %v5143
        %5639 = vmatmul.mubr.f32.gmra.mrb[0].mxu0 %v5142
        %v5640 = vpop.f32.mrb[0].mxu0
        %v5641 = vadd.f32 %v5530, %v5640
        %v5642 = vpop.f32.mrb[0].mxu0
        %v5643 = vadd.f32 %v5532, %v5642
        %5644 = vmatprep.mubr.f32.mxu0 %v5146
        %5645 = vmatmul.mubr.f32.gmra.mrb[0].mxu0 %v5145
        %v5646 = vpop.f32.mrb[0].mxu0
        %v5647 = vadd.f32 %v5536, %v5646
        %v5648 = vpop.f32.mrb[0].mxu0
        %v5649 = vadd.f32 %v5538, %v5648
        %5650 = vmatprep.mubr.f32.mxu0 %v5149
        %5651 = vmatmul.mubr.f32.gmra.mrb[0].mxu0 %v5148
        %v5652 = vpop.f32.mrb[0].mxu0
        %v5653 = vadd.f32 %v5542, %v5652
        %v5654 = vpop.f32.mrb[0].mxu0
        %v5655 = vadd.f32 %v5544, %v5654
        %5656 = vmatprep.mubr.f32.mxu0 %v5152
        %5657 = vmatmul.mubr.f32.gmra.mrb[0].mxu0 %v5151
        %v5658 = vpop.f32.mrb[0].mxu0
        %v5659 = vadd.f32 %v5548, %v5658
        %v5660 = vpop.f32.mrb[0].mxu0
        %v5661 = vadd.f32 %v5550, %v5660
        %5662 = vdwg.mxu0
        %5663 = vmatprep.subr.mxu0 %v5219
        %5664 = vmatpush1.msra.mxu0 %v5218
        %5665 = vmatprep.subr.mxu0 %v5221
        %5666 = vmatpush1.msra.mxu0 %v5220
        %5667 = vmatprep.subr.mxu0 %v5566
        %5668 = vmatpush1.msra.mxu0 %v5563
        %5669 = vmatprep.subr.mxu0 0.0
        %5670 = vmatpush1.msra.mxu0 0.0
        %5671 = vmatprep.subr.mxu0 0.0
        %5672 = vmatpush1.msra.mxu0 0.0
        %5673 = vmatprep.subr.mxu0 0.0
        %5674 = vmatpush1.msra.mxu0 0.0
        %5675 = vmatprep.subr.mxu0 0.0
        %5676 = vmatpush1.msra.mxu0 0.0
        %5677 = vmatprep.subr.mxu0 0.0
        %5678 = vmatpush1.msra.mxu0 0.0
        %5679 = vmatprep.subr.mxu0 0.0
        %5680 = vmatpush1.msra.mxu0 0.0
        %5681 = vmatprep.subr.mxu0 0.0
        %5682 = vmatpush1.msra.mxu0 0.0
        %5683 = vmatprep.subr.mxu0 0.0
        %5684 = vmatpush1.msra.mxu0 0.0
        %5685 = vmatprep.subr.mxu0 0.0
        %5686 = vmatpush1.msra.mxu0 0.0
        %5687 = vmatprep.subr.mxu0 0.0
        %5688 = vmatpush1.msra.mxu0 0.0
        %5689 = vmatprep.subr.mxu0 0.0
        %5690 = vmatpush1.msra.mxu0 0.0
        %5691 = vmatprep.subr.mxu0 0.0
        %5692 = vmatpush1.msra.mxu0 0.0
        %5693 = vmatprep.subr.mxu0 0.0
        %5694 = vmatpush1.msra.mxu0 0.0
        %5695 = vmatprep.subr.mxu0 0.0
        %5696 = vmatpush1.msra.mxu0 0.0
        %5697 = vmatprep.subr.mxu0 0.0
        %5698 = vmatpush1.msra.mxu0 0.0
        %5699 = vmatprep.subr.mxu0 0.0
        %5700 = vmatpush1.msra.mxu0 0.0
        %5701 = vmatprep.subr.mxu0 0.0
        %5702 = vmatpush1.msra.mxu0 0.0
        %5703 = vmatprep.subr.mxu0 0.0
        %5704 = vmatpush1.msra.mxu0 0.0
        %5705 = vmatprep.subr.mxu0 0.0
        %5706 = vmatpush1.msra.mxu0 0.0
        %5707 = vmatprep.subr.mxu0 0.0
        %5708 = vmatpush1.msra.mxu0 0.0
        %5709 = vmatprep.subr.mxu0 0.0
        %5710 = vmatpush1.msra.mxu0 0.0
        %5711 = vmatprep.subr.mxu0 0.0
        %5712 = vmatpush1.msra.mxu0 0.0
        %5713 = vmatprep.subr.mxu0 0.0
        %5714 = vmatpush1.msra.mxu0 0.0
        %5715 = vmatprep.subr.mxu0 0.0
        %5716 = vmatpush1.msra.mxu0 0.0
        %5717 = vmatprep.subr.mxu0 0.0
        %5718 = vmatpush1.msra.mxu0 0.0
        %5719 = vmatprep.subr.mxu0 0.0
        %5720 = vmatpush1.msra.mxu0 0.0
        %5721 = vmatprep.subr.mxu0 0.0
        %5722 = vmatpush1.msra.mxu0 0.0
        %5723 = vmatprep.subr.mxu0 0.0
        %5724 = vmatpush1.msra.mxu0 0.0
        %5725 = vmatprep.subr.mxu0 0.0
        %5726 = vmatpush1.msra.mxu0 0.0
        %5727 = vmatprep.mubr.f32.mxu0 0.0
        %5728 = vmatmul.mubr.f32.gmra.mrb[0].mxu0 %v5552
        %v5729 = vpop.f32.mrb[0].mxu0
        %v5730 = vadd.f32 %v5635, %v5729
        %v5731 = vpop.f32.mrb[0].mxu0
        %v5732 = vadd.f32 %v5637, %v5731
        %5733 = vmatprep.mubr.f32.mxu0 0.0
        %5734 = vmatmul.mubr.f32.gmra.mrb[0].mxu0 %v5554
        %v5735 = vpop.f32.mrb[0].mxu0
        %v5736 = vadd.f32 %v5641, %v5735
        %v5737 = vpop.f32.mrb[0].mxu0
        %v5738 = vadd.f32 %v5643, %v5737
        %5739 = vmatprep.mubr.f32.mxu0 0.0
        %5740 = vmatmul.mubr.f32.gmra.mrb[0].mxu0 %v5556
        %v5741 = vpop.f32.mrb[0].mxu0
        %v5742 = vadd.f32 %v5647, %v5741
        %v5743 = vpop.f32.mrb[0].mxu0
        %v5744 = vadd.f32 %v5649, %v5743
        %5745 = vmatprep.mubr.f32.mxu0 0.0
        %5746 = vmatmul.mubr.f32.gmra.mrb[0].mxu0 %v5558
        %v5747 = vpop.f32.mrb[0].mxu0
        %v5748 = vadd.f32 %v5653, %v5747
        %v5749 = vpop.f32.mrb[0].mxu0
        %v5750 = vadd.f32 %v5655, %v5749
        %5751 = vmatprep.mubr.f32.mxu0 0.0
        %5752 = vmatmul.mubr.f32.gmra.mrb[0].mxu0 %v5560
        %v5753 = vpop.f32.mrb[0].mxu0
        %v5754 = vadd.f32 %v5659, %v5753
        %v5755 = vpop.f32.mrb[0].mxu0
        %v5756 = vadd.f32 %v5661, %v5755
        %5757 = vdwg.mxu0
        %v5758 = vld [vmem:[%s2078] sm:$0xff]
        %v5759 = vld [vmem:[%s2078 + $0x8] sm:$0xff]
        %v5760 = vld [vmem:[%s2078 + $0x10] sm:$0xff]
        %v5761 = vld [vmem:[%s2078 + $0x18] sm:$0xff]
        %v5762 = vld [vmem:[%s2078 + $0x20] sm:$0xff]
        %v5763 = vld [vmem:[%s2078 + $0x28] sm:$0xff]
        %v5764 = vld [vmem:[%s2078 + $0x30] sm:$0xff]
        %v5765 = vld [vmem:[%s2078 + $0x38] sm:$0xff]
        %v5766 = vld [vmem:[%s2078 + $0x40] sm:$0xff]
        %v5767 = vld [vmem:[%s2078 + $0x48] sm:$0xff]
        %v5768 = vld [vmem:[%s2078 + $0x50] sm:$0xff]
        %v5769 = vld [vmem:[%s2078 + $0x58] sm:$0xff]
        %v5770 = vld [vmem:[%s2078 + $0x60] sm:$0xff]
        %v5771 = vld [vmem:[%s2078 + $0x68] sm:$0xff]
        %v5772 = vld [vmem:[%s2078 + $0x70] sm:$0xff]
        %v5773 = vld [vmem:[%s2078 + $0x78] sm:$0xff]
        %v5774 = vld [vmem:[%s2078 + $0x80] sm:$0xff]
        %v5775 = vld [vmem:[%s2078 + $0x88] sm:$0xff]
        %v5776 = vld [vmem:[%s2078 + $0x90] sm:$0xff]
        %v5777 = vld [vmem:[%s2078 + $0x98] sm:$0xff]
        %v5778 = vld [vmem:[%s2078 + $0xa0] sm:$0xff]
        %v5779 = vld [vmem:[%s2078 + $0xa8] sm:$0xff]
        %v5780 = vld [vmem:[%s2078 + $0xb0] sm:$0xff]
        %v5781 = vld [vmem:[%s2078 + $0xb8] sm:$0xff]
        %v5782 = vld [vmem:[%s2078 + $0xc0] sm:$0xff]
        %v5783 = vld [vmem:[%s2078 + $0xc8] sm:$0xff]
        %v5784 = vld [vmem:[%s2078 + $0xd0] sm:$0xff]
        %v5785 = vld [vmem:[%s2078 + $0xd8] sm:$0xff]
        %v5786 = vld [vmem:[%s2078 + $0xe0] sm:$0xff]
        %v5787 = vld [vmem:[%s2078 + $0xe8] sm:$0xff]
        %v5788 = vld [vmem:[%s2078 + $0xf0] sm:$0xff]
        %v5789 = vld [vmem:[%s2078 + $0xf8] sm:$0xff]
        %v5790 = vld [vmem:[%s2078 + $0x100] sm:$0xff]
        %v5791 = vld [vmem:[%s2078 + $0x108] sm:$0xff]
        %v5792 = vld [vmem:[%s2078 + $0x110] sm:$0xff]
        %v5793 = vld [vmem:[%s2078 + $0x118] sm:$0xff]
        %v5794 = vld [vmem:[%s2078 + $0x120] sm:$0xff]
        %v5795 = vld [vmem:[%s2078 + $0x128] sm:$0xff]
        %v5796 = vld [vmem:[%s2078 + $0x130] sm:$0xff]
        %v5797 = vld [vmem:[%s2078 + $0x138] sm:$0xff]
        %v5798 = vld [vmem:[%s2078 + $0x140] sm:$0xff]
        %v5799 = vld [vmem:[%s2078 + $0x148] sm:$0xff]
        %v5800 = vld [vmem:[%s2078 + $0x150] sm:$0xff]
        %v5801 = vld [vmem:[%s2078 + $0x158] sm:$0xff]
        %v5802 = vld [vmem:[%s2078 + $0x160] sm:$0xff]
        %v5803 = vld [vmem:[%s2078 + $0x168] sm:$0xff]
        %v5804 = vld [vmem:[%s2078 + $0x170] sm:$0xff]
        %v5805 = vld [vmem:[%s2078 + $0x178] sm:$0xff]
        %v5806 = vld [vmem:[%s2078 + $0x180] sm:$0xff]
        %v5807 = vld [vmem:[%s2078 + $0x188] sm:$0xff]
        %v5808 = vld [vmem:[%s2078 + $0x190] sm:$0xff]
        %v5809 = vld [vmem:[%s2078 + $0x198] sm:$0xff]
        %v5810 = vld [vmem:[%s2078 + $0x1a0] sm:$0xff]
        %v5811 = vld [vmem:[%s2078 + $0x1a8] sm:$0xff]
        %v5812 = vld [vmem:[%s2078 + $0x1b0] sm:$0xff]
        %v5813 = vld [vmem:[%s2078 + $0x1b8] sm:$0xff]
        %v5814 = vld [vmem:[%s2078 + $0x1c0] sm:$0xff]
        %v5815 = vld [vmem:[%s2078 + $0x1c8] sm:$0xff]
        %v5816 = vld [vmem:[%s2078 + $0x1d0] sm:$0xff]
        %v5817 = vld [vmem:[%s2078 + $0x1d8] sm:$0xff]
        %v5818 = vld [vmem:[%s2078 + $0x1e0] sm:$0xff]
        %v5819 = vld [vmem:[%s2078 + $0x1e8] sm:$0xff]
        %v5820 = vld [vmem:[%s2078 + $0x1f0] sm:$0xff]
        %v5821 = vld [vmem:[%s2078 + $0x1f8] sm:$0xff]
        %v5822 = vld [vmem:[%s2078 + $0x200] sm:$0xff]
        %v5823 = vld [vmem:[%s2078 + $0x208] sm:$0xff]
        %v5824 = vld [vmem:[%s2078 + $0x210] sm:$0xff]
        %v5825 = vld [vmem:[%s2078 + $0x218] sm:$0xff]
        %v5826 = vld [vmem:[%s2078 + $0x220] sm:$0x3]
        %v5827 = vld [vmem:[%s2078 + $0x228] sm:$0x3]
        %v5828 = vrot.slane %v5139, 2
        %v5829 = vrot.slane %v5142, 2
        %v5830 = vsel %vm883, %v5828, %v5829
        %v5831 = vrot.slane %v5140, 2
        %v5832 = vrot.slane %v5143, 2
        %v5833 = vsel %vm883, %v5831, %v5832
        %v5834 = vrot.slane %v5141, 2
        %v5835 = vrot.slane %v5144, 2
        %v5836 = vsel %vm883, %v5834, %v5835
        %v5837 = vrot.slane %v5145, 2
        %v5838 = vsel %vm883, %v5829, %v5837
        %v5839 = vrot.slane %v5146, 2
        %v5840 = vsel %vm883, %v5832, %v5839
        %v5841 = vrot.slane %v5147, 2
        %v5842 = vsel %vm883, %v5835, %v5841
        %v5843 = vrot.slane %v5148, 2
        %v5844 = vsel %vm883, %v5837, %v5843
        %v5845 = vrot.slane %v5149, 2
        %v5846 = vsel %vm883, %v5839, %v5845
        %v5847 = vrot.slane %v5150, 2
        %v5848 = vsel %vm883, %v5841, %v5847
        %v5849 = vrot.slane %v5151, 2
        %v5850 = vsel %vm883, %v5843, %v5849
        %v5851 = vrot.slane %v5152, 2
        %v5852 = vsel %vm883, %v5845, %v5851
        %v5853 = vrot.slane %v5153, 2
        %v5854 = vsel %vm883, %v5847, %v5853
        %v5865 = vsel %vm1664, %v5836, 0
        %v5867 = vsel %vm1664, %v5842, 0
        %v5869 = vsel %vm1664, %v5848, 0
        %v5871 = vsel %vm1664, %v5854, 0
        %v5873 = vsel %vm1664, %v5853, 0
        %v5876 = vsel %vm1675, %v5826, 0
        %v5879 = vsel %vm1675, %v5827, 0
        %5881 = vmatprep.subr.mxu0 %v5759
        %5882 = vmatpush1.msra.mxu0 %v5758
        %5883 = vmatprep.subr.mxu0 %v5761
        %5884 = vmatpush1.msra.mxu0 %v5760
        %5885 = vmatprep.subr.mxu0 %v5763
        %5886 = vmatpush1.msra.mxu0 %v5762
        %5887 = vmatprep.subr.mxu0 %v5765
        %5888 = vmatpush1.msra.mxu0 %v5764
        %5889 = vmatprep.subr.mxu0 %v5767
        %5890 = vmatpush1.msra.mxu0 %v5766
        %5891 = vmatprep.subr.mxu0 %v5769
        %5892 = vmatpush1.msra.mxu0 %v5768
        %5893 = vmatprep.subr.mxu0 %v5771
        %5894 = vmatpush1.msra.mxu0 %v5770
        %5895 = vmatprep.subr.mxu0 %v5773
        %5896 = vmatpush1.msra.mxu0 %v5772
        %5897 = vmatprep.subr.mxu0 %v5775
        %5898 = vmatpush1.msra.mxu0 %v5774
        %5899 = vmatprep.subr.mxu0 %v5777
        %5900 = vmatpush1.msra.mxu0 %v5776
        %5901 = vmatprep.subr.mxu0 %v5779
        %5902 = vmatpush1.msra.mxu0 %v5778
        %5903 = vmatprep.subr.mxu0 %v5781
        %5904 = vmatpush1.msra.mxu0 %v5780
        %5905 = vmatprep.subr.mxu0 %v5783
        %5906 = vmatpush1.msra.mxu0 %v5782
        %5907 = vmatprep.subr.mxu0 %v5785
        %5908 = vmatpush1.msra.mxu0 %v5784
        %5909 = vmatprep.subr.mxu0 %v5787
        %5910 = vmatpush1.msra.mxu0 %v5786
        %5911 = vmatprep.subr.mxu0 %v5789
        %5912 = vmatpush1.msra.mxu0 %v5788
        %5913 = vmatprep.subr.mxu0 %v5791
        %5914 = vmatpush1.msra.mxu0 %v5790
        %5915 = vmatprep.subr.mxu0 %v5793
        %5916 = vmatpush1.msra.mxu0 %v5792
        %5917 = vmatprep.subr.mxu0 %v5795
        %5918 = vmatpush1.msra.mxu0 %v5794
        %5919 = vmatprep.subr.mxu0 %v5797
        %5920 = vmatpush1.msra.mxu0 %v5796
        %5921 = vmatprep.subr.mxu0 %v5799
        %5922 = vmatpush1.msra.mxu0 %v5798
        %5923 = vmatprep.subr.mxu0 %v5801
        %5924 = vmatpush1.msra.mxu0 %v5800
        %5925 = vmatprep.subr.mxu0 %v5803
        %5926 = vmatpush1.msra.mxu0 %v5802
        %5927 = vmatprep.subr.mxu0 %v5805
        %5928 = vmatpush1.msra.mxu0 %v5804
        %5929 = vmatprep.subr.mxu0 %v5807
        %5930 = vmatpush1.msra.mxu0 %v5806
        %5931 = vmatprep.subr.mxu0 %v5809
        %5932 = vmatpush1.msra.mxu0 %v5808
        %5933 = vmatprep.subr.mxu0 %v5811
        %5934 = vmatpush1.msra.mxu0 %v5810
        %5935 = vmatprep.subr.mxu0 %v5813
        %5936 = vmatpush1.msra.mxu0 %v5812
        %5937 = vmatprep.subr.mxu0 %v5815
        %5938 = vmatpush1.msra.mxu0 %v5814
        %5939 = vmatprep.subr.mxu0 %v5817
        %5940 = vmatpush1.msra.mxu0 %v5816
        %5941 = vmatprep.subr.mxu0 %v5819
        %5942 = vmatpush1.msra.mxu0 %v5818
        %5943 = vmatprep.subr.mxu0 %v5821
        %5944 = vmatpush1.msra.mxu0 %v5820
        %5945 = vmatprep.mubr.f32.mxu0 %v5833
        %5946 = vmatmul.mubr.f32.gmra.mrb[0].mxu0 %v5830
        %v5947 = vpop.f32.mrb[0].mxu0
        %v5948 = vadd.f32 0.0, %v5947
        %v5949 = vpop.f32.mrb[0].mxu0
        %v5950 = vadd.f32 0.0, %v5949
        %5951 = vmatprep.mubr.f32.mxu0 %v5840
        %5952 = vmatmul.mubr.f32.gmra.mrb[0].mxu0 %v5838
        %v5953 = vpop.f32.mrb[0].mxu0
        %v5954 = vadd.f32 0.0, %v5953
        %v5955 = vpop.f32.mrb[0].mxu0
        %v5956 = vadd.f32 0.0, %v5955
        %5957 = vmatprep.mubr.f32.mxu0 %v5846
        %5958 = vmatmul.mubr.f32.gmra.mrb[0].mxu0 %v5844
        %v5959 = vpop.f32.mrb[0].mxu0
        %v5960 = vadd.f32 0.0, %v5959
        %v5961 = vpop.f32.mrb[0].mxu0
        %v5962 = vadd.f32 0.0, %v5961
        %5963 = vmatprep.mubr.f32.mxu0 %v5852
        %5964 = vmatmul.mubr.f32.gmra.mrb[0].mxu0 %v5850
        %v5965 = vpop.f32.mrb[0].mxu0
        %v5966 = vadd.f32 0.0, %v5965
        %v5967 = vpop.f32.mrb[0].mxu0
        %v5968 = vadd.f32 0.0, %v5967
        %5969 = vmatprep.mubr.f32.mxu0 %v5851
        %5970 = vmatmul.mubr.f32.gmra.mrb[0].mxu0 %v5849
        %v5971 = vpop.f32.mrb[0].mxu0
        %v5972 = vadd.f32 0.0, %v5971
        %v5973 = vpop.f32.mrb[0].mxu0
        %v5974 = vadd.f32 0.0, %v5973
        %5975 = vdwg.mxu0
        %5976 = vmatprep.subr.mxu0 %v5823
        %5977 = vmatpush1.msra.mxu0 %v5822
        %5978 = vmatprep.subr.mxu0 %v5825
        %5979 = vmatpush1.msra.mxu0 %v5824
        %5980 = vmatprep.subr.mxu0 %v5879
        %5981 = vmatpush1.msra.mxu0 %v5876
        %5982 = vmatprep.subr.mxu0 0.0
        %5983 = vmatpush1.msra.mxu0 0.0
        %5984 = vmatprep.subr.mxu0 0.0
        %5985 = vmatpush1.msra.mxu0 0.0
        %5986 = vmatprep.subr.mxu0 0.0
        %5987 = vmatpush1.msra.mxu0 0.0
        %5988 = vmatprep.subr.mxu0 0.0
        %5989 = vmatpush1.msra.mxu0 0.0
        %5990 = vmatprep.subr.mxu0 0.0
        %5991 = vmatpush1.msra.mxu0 0.0
        %5992 = vmatprep.subr.mxu0 0.0
        %5993 = vmatpush1.msra.mxu0 0.0
        %5994 = vmatprep.subr.mxu0 0.0
        %5995 = vmatpush1.msra.mxu0 0.0
        %5996 = vmatprep.subr.mxu0 0.0
        %5997 = vmatpush1.msra.mxu0 0.0
        %5998 = vmatprep.subr.mxu0 0.0
        %5999 = vmatpush1.msra.mxu0 0.0
        %6000 = vmatprep.subr.mxu0 0.0
        %6001 = vmatpush1.msra.mxu0 0.0
        %6002 = vmatprep.subr.mxu0 0.0
        %6003 = vmatpush1.msra.mxu0 0.0
        %6004 = vmatprep.subr.mxu0 0.0
        %6005 = vmatpush1.msra.mxu0 0.0
        %6006 = vmatprep.subr.mxu0 0.0
        %6007 = vmatpush1.msra.mxu0 0.0
        %6008 = vmatprep.subr.mxu0 0.0
        %6009 = vmatpush1.msra.mxu0 0.0
        %6010 = vmatprep.subr.mxu0 0.0
        %6011 = vmatpush1.msra.mxu0 0.0
        %6012 = vmatprep.subr.mxu0 0.0
        %6013 = vmatpush1.msra.mxu0 0.0
        %6014 = vmatprep.subr.mxu0 0.0
        %6015 = vmatpush1.msra.mxu0 0.0
        %6016 = vmatprep.subr.mxu0 0.0
        %6017 = vmatpush1.msra.mxu0 0.0
        %6018 = vmatprep.subr.mxu0 0.0
        %6019 = vmatpush1.msra.mxu0 0.0
        %6020 = vmatprep.subr.mxu0 0.0
        %6021 = vmatpush1.msra.mxu0 0.0
        %6022 = vmatprep.subr.mxu0 0.0
        %6023 = vmatpush1.msra.mxu0 0.0
        %6024 = vmatprep.subr.mxu0 0.0
        %6025 = vmatpush1.msra.mxu0 0.0
        %6026 = vmatprep.subr.mxu0 0.0
        %6027 = vmatpush1.msra.mxu0 0.0
        %6028 = vmatprep.subr.mxu0 0.0
        %6029 = vmatpush1.msra.mxu0 0.0
        %6030 = vmatprep.subr.mxu0 0.0
        %6031 = vmatpush1.msra.mxu0 0.0
        %6032 = vmatprep.subr.mxu0 0.0
        %6033 = vmatpush1.msra.mxu0 0.0
        %6034 = vmatprep.subr.mxu0 0.0
        %6035 = vmatpush1.msra.mxu0 0.0
        %6036 = vmatprep.subr.mxu0 0.0
        %6037 = vmatpush1.msra.mxu0 0.0
        %6038 = vmatprep.subr.mxu0 0.0
        %6039 = vmatpush1.msra.mxu0 0.0
        %6040 = vmatprep.mubr.f32.mxu0 0.0
        %6041 = vmatmul.mubr.f32.gmra.mrb[0].mxu0 %v5865
        %v6042 = vpop.f32.mrb[0].mxu0
        %v6043 = vadd.f32 %v5948, %v6042
        %v6044 = vpop.f32.mrb[0].mxu0
        %v6045 = vadd.f32 %v5950, %v6044
        %6046 = vmatprep.mubr.f32.mxu0 0.0
        %6047 = vmatmul.mubr.f32.gmra.mrb[0].mxu0 %v5867
        %v6048 = vpop.f32.mrb[0].mxu0
        %v6049 = vadd.f32 %v5954, %v6048
        %v6050 = vpop.f32.mrb[0].mxu0
        %v6051 = vadd.f32 %v5956, %v6050
        %6052 = vmatprep.mubr.f32.mxu0 0.0
        %6053 = vmatmul.mubr.f32.gmra.mrb[0].mxu0 %v5869
        %v6054 = vpop.f32.mrb[0].mxu0
        %v6055 = vadd.f32 %v5960, %v6054
        %v6056 = vpop.f32.mrb[0].mxu0
        %v6057 = vadd.f32 %v5962, %v6056
        %6058 = vmatprep.mubr.f32.mxu0 0.0
        %6059 = vmatmul.mubr.f32.gmra.mrb[0].mxu0 %v5871
        %v6060 = vpop.f32.mrb[0].mxu0
        %v6061 = vadd.f32 %v5966, %v6060
        %v6062 = vpop.f32.mrb[0].mxu0
        %v6063 = vadd.f32 %v5968, %v6062
        %6064 = vmatprep.mubr.f32.mxu0 0.0
        %6065 = vmatmul.mubr.f32.gmra.mrb[0].mxu0 %v5873
        %v6066 = vpop.f32.mrb[0].mxu0
        %v6067 = vadd.f32 %v5972, %v6066
        %v6068 = vpop.f32.mrb[0].mxu0
        %v6069 = vadd.f32 %v5974, %v6068
        %6070 = vdwg.mxu0
        %v6071 = vadd.f32 %v5730, %v6043
        %v6072 = vadd.f32 %v5732, %v6045
        %v6073 = vadd.f32 %v5736, %v6049
        %v6074 = vadd.f32 %v5738, %v6051
        %v6075 = vadd.f32 %v5742, %v6055
        %v6076 = vadd.f32 %v5744, %v6057
        %v6077 = vadd.f32 %v5748, %v6061
        %v6078 = vadd.f32 %v5750, %v6063
        %v6079 = vadd.f32 %v5754, %v6067
        %v6080 = vadd.f32 %v5756, %v6069
        %6091 = vrot.lane.b32.xlu0 %v6071, 127
        %v6092 = vpop.permute.xlu0 %6091
        %6093 = vrot.lane.b32.xlu0 %v6072, 127
        %v6094 = vpop.permute.xlu0 %6093
        %6095 = vrot.lane.b32.xlu0 %v6073, 127
        %v6096 = vpop.permute.xlu0 %6095
        %6097 = vrot.lane.b32.xlu0 %v6074, 127
        %v6098 = vpop.permute.xlu0 %6097
        %6099 = vrot.lane.b32.xlu0 %v6075, 127
        %v6100 = vpop.permute.xlu0 %6099
        %6101 = vrot.lane.b32.xlu0 %v6076, 127
        %v6102 = vpop.permute.xlu0 %6101
        %6103 = vrot.lane.b32.xlu0 %v6077, 127
        %v6104 = vpop.permute.xlu0 %6103
        %6105 = vrot.lane.b32.xlu0 %v6078, 127
        %v6106 = vpop.permute.xlu0 %6105
        %6107 = vrot.lane.b32.xlu0 %v6079, 127
        %v6108 = vpop.permute.xlu0 %6107
        %6109 = vrot.lane.b32.xlu0 %v6080, 127
        %v6110 = vpop.permute.xlu0 %6109
        %v6111 = vsel %vm1150, %v6092, %v6094
        %v6112 = vsel %vm1150, %v6096, %v6098
        %v6113 = vsel %vm1150, %v6100, %v6102
        %v6114 = vsel %vm1150, %v6104, %v6106
        %v6115 = vsel %vm1150, %v6108, %v6110
        %v6126 = vmax.f32 %v6071, %v6111
        %v6127 = vmax.f32 %v6072, %v6094
        %v6128 = vmax.f32 %v6073, %v6112
        %v6129 = vmax.f32 %v6074, %v6098
        %v6130 = vmax.f32 %v6075, %v6113
        %v6131 = vmax.f32 %v6076, %v6102
        %v6132 = vmax.f32 %v6077, %v6114
        %v6133 = vmax.f32 %v6078, %v6106
        %v6134 = vmax.f32 %v6079, %v6115
        %v6135 = vmax.f32 %v6080, %v6110
        %6136 = vrot.lane.b32.xlu0 %v6071, 126
        %v6137 = vpop.permute.xlu0 %6136
        %6138 = vrot.lane.b32.xlu0 %v6072, 126
        %v6139 = vpop.permute.xlu0 %6138
        %6140 = vrot.lane.b32.xlu0 %v6073, 126
        %v6141 = vpop.permute.xlu0 %6140
        %6142 = vrot.lane.b32.xlu0 %v6074, 126
        %v6143 = vpop.permute.xlu0 %6142
        %6144 = vrot.lane.b32.xlu0 %v6075, 126
        %v6145 = vpop.permute.xlu0 %6144
        %6146 = vrot.lane.b32.xlu0 %v6076, 126
        %v6147 = vpop.permute.xlu0 %6146
        %6148 = vrot.lane.b32.xlu0 %v6077, 126
        %v6149 = vpop.permute.xlu0 %6148
        %6150 = vrot.lane.b32.xlu0 %v6078, 126
        %v6151 = vpop.permute.xlu0 %6150
        %6152 = vrot.lane.b32.xlu0 %v6079, 126
        %v6153 = vpop.permute.xlu0 %6152
        %6154 = vrot.lane.b32.xlu0 %v6080, 126
        %v6155 = vpop.permute.xlu0 %6154
        %v6156 = vsel %vm1221, %v6137, %v6139
        %v6157 = vsel %vm1221, %v6141, %v6143
        %v6158 = vsel %vm1221, %v6145, %v6147
        %v6159 = vsel %vm1221, %v6149, %v6151
        %v6160 = vsel %vm1221, %v6153, %v6155
        %v6171 = vmax.f32 %v6126, %v6156
        %v6172 = vmax.f32 %v6127, %v6139
        %v6173 = vmax.f32 %v6128, %v6157
        %v6174 = vmax.f32 %v6129, %v6143
        %v6175 = vmax.f32 %v6130, %v6158
        %v6176 = vmax.f32 %v6131, %v6147
        %v6177 = vmax.f32 %v6132, %v6159
        %v6178 = vmax.f32 %v6133, %v6151
        %v6179 = vmax.f32 %v6134, %v6160
        %v6180 = vmax.f32 %v6135, %v6155
        %v6191 = vrot.slane %v6171, 1
        %v6192 = vrot.slane %v6173, 1
        %v6193 = vsel %vm461, %v6191, %v6192
        %v6194 = vrot.slane %v6172, 1
        %v6195 = vrot.slane %v6174, 1
        %v6196 = vsel %vm461, %v6194, %v6195
        %v6197 = vrot.slane %v6175, 1
        %v6198 = vsel %vm461, %v6192, %v6197
        %v6199 = vrot.slane %v6176, 1
        %v6200 = vsel %vm461, %v6195, %v6199
        %v6201 = vrot.slane %v6177, 1
        %v6202 = vsel %vm461, %v6197, %v6201
        %v6203 = vrot.slane %v6178, 1
        %v6204 = vsel %vm461, %v6199, %v6203
        %v6205 = vrot.slane %v6179, 1
        %v6206 = vsel %vm461, %v6201, %v6205
        %v6207 = vrot.slane %v6180, 1
        %v6208 = vsel %vm461, %v6203, %v6207
        %v6219 = vmax.f32 %v6171, %v6193
        %v6220 = vmax.f32 %v6172, %v6196
        %v6221 = vmax.f32 %v6173, %v6198
        %v6222 = vmax.f32 %v6174, %v6200
        %v6223 = vmax.f32 %v6175, %v6202
        %v6224 = vmax.f32 %v6176, %v6204
        %v6225 = vmax.f32 %v6177, %v6206
        %v6226 = vmax.f32 %v6178, %v6208
        %v6227 = vmax.f32 %v6179, %v6205
        %v6228 = vmax.f32 %v6180, %v6207
        %v6229 = vrot.slane %v6171, 2
        %v6230 = vrot.slane %v6173, 2
        %v6231 = vsel %vm883, %v6229, %v6230
        %v6232 = vrot.slane %v6172, 2
        %v6233 = vrot.slane %v6174, 2
        %v6234 = vsel %vm883, %v6232, %v6233
        %v6235 = vrot.slane %v6175, 2
        %v6236 = vsel %vm883, %v6230, %v6235
        %v6237 = vrot.slane %v6176, 2
        %v6238 = vsel %vm883, %v6233, %v6237
        %v6239 = vrot.slane %v6177, 2
        %v6240 = vsel %vm883, %v6235, %v6239
        %v6241 = vrot.slane %v6178, 2
        %v6242 = vsel %vm883, %v6237, %v6241
        %v6243 = vrot.slane %v6179, 2
        %v6244 = vsel %vm883, %v6239, %v6243
        %v6245 = vrot.slane %v6180, 2
        %v6246 = vsel %vm883, %v6241, %v6245
        %v6257 = vmax.f32 %v6219, %v6231
        %v6258 = vmax.f32 %v6220, %v6234
        %v6259 = vmax.f32 %v6221, %v6236
        %v6260 = vmax.f32 %v6222, %v6238
        %v6261 = vmax.f32 %v6223, %v6240
        %v6262 = vmax.f32 %v6224, %v6242
        %v6263 = vmax.f32 %v6225, %v6244
        %v6264 = vmax.f32 %v6226, %v6246
        %v6265 = vmax.f32 %v6227, %v6243
        %v6266 = vmax.f32 %v6228, %v6245
        %v6267 = vld [vmem:[%s6] ss:$2 sm:$0x3]
        %v6269 = vlaneseq
        %v6270 = vshrl.u32 %v6269, 7
        %v6271 = vsub.s32 0, %v6270
        %v6272 = vrot.slane %v6267, %v6271
        %v6273 = vlaneseq
        %v6274 = vshrl.u32 %v6273, 7
        %v6275 = vsub.s32 1, %v6274
        %v6276 = vrot.slane %v6267, %v6275
        %v6279 = vmul.f32 %v6257, %v6272
        %v6280 = vmul.f32 %v6258, %v6276
        %v6281 = vmul.f32 %v6259, %v6272
        %v6282 = vmul.f32 %v6260, %v6276
        %v6283 = vmul.f32 %v6261, %v6272
        %v6284 = vmul.f32 %v6262, %v6276
        %v6285 = vmul.f32 %v6263, %v6272
        %v6286 = vmul.f32 %v6264, %v6276
        %v6287 = vmul.f32 %v6265, %v6272
        %v6288 = vmul.f32 %v6266, %v6276
        %v6289 = vld [vmem:[%s2610] ss:$2 sm:$0x3]
        %v6291 = vlaneseq
        %v6292 = vshrl.u32 %v6291, 7
        %v6293 = vsub.s32 0, %v6292
        %v6294 = vrot.slane %v6289, %v6293
        %v6295 = vlaneseq
        %v6296 = vshrl.u32 %v6295, 7
        %v6297 = vsub.s32 1, %v6296
        %v6298 = vrot.slane %v6289, %v6297
        %v6301 = vadd.f32 %v6279, %v6294
        %v6302 = vadd.f32 %v6280, %v6298
        %v6303 = vadd.f32 %v6281, %v6294
        %v6304 = vadd.f32 %v6282, %v6298
        %v6305 = vadd.f32 %v6283, %v6294
        %v6306 = vadd.f32 %v6284, %v6298
        %v6307 = vadd.f32 %v6285, %v6294
        %v6308 = vadd.f32 %v6286, %v6298
        %v6309 = vadd.f32 %v6287, %v6294
        %v6310 = vadd.f32 %v6288, %v6298
        %v6311 = vmax.f32 %v6301, 0.0
        %v6312 = vmax.f32 %v6302, 0.0
        %v6313 = vmax.f32 %v6303, 0.0
        %v6314 = vmax.f32 %v6304, 0.0
        %v6315 = vmax.f32 %v6305, 0.0
        %v6316 = vmax.f32 %v6306, 0.0
        %v6317 = vmax.f32 %v6307, 0.0
        %v6318 = vmax.f32 %v6308, 0.0
        %v6319 = vmax.f32 %v6309, 0.0
        %v6320 = vmax.f32 %v6310, 0.0
        %v6321 = vld [vmem:[%s3] sm:$0xff]
        %v6322 = vld [vmem:[%s3 + $0x8] sm:$0xff]
        %v6323 = vld [vmem:[%s3 + $0x10] sm:$0xff]
        %v6324 = vld [vmem:[%s3 + $0x18] sm:$0xff]
        %v6325 = vld [vmem:[%s3 + $0x20] sm:$0xff]
        %v6326 = vld [vmem:[%s3 + $0x28] sm:$0xff]
        %v6327 = vld [vmem:[%s3 + $0x30] sm:$0xff]
        %v6328 = vld [vmem:[%s3 + $0x38] sm:$0xff]
        %v6329 = vld [vmem:[%s3 + $0x40] sm:$0xff]
        %v6330 = vld [vmem:[%s3 + $0x48] sm:$0xff]
        %v6331 = vld [vmem:[%s3 + $0x50] sm:$0xff]
        %v6332 = vld [vmem:[%s3 + $0x58] sm:$0xff]
        %v6333 = vld [vmem:[%s3 + $0x60] sm:$0xff]
        %v6334 = vld [vmem:[%s3 + $0x68] sm:$0xff]
        %v6335 = vld [vmem:[%s3 + $0x70] sm:$0xff]
        %v6336 = vld [vmem:[%s3 + $0x78] sm:$0xff]
        %v6337 = vld [vmem:[%s3 + $0x80] sm:$0xff]
        %v6338 = vld [vmem:[%s3 + $0x88] sm:$0xff]
        %v6339 = vld [vmem:[%s3 + $0x90] sm:$0xff]
        %v6340 = vld [vmem:[%s3 + $0x98] sm:$0xff]
        %v6341 = vld [vmem:[%s3 + $0xa0] sm:$0xff]
        %v6342 = vld [vmem:[%s3 + $0xa8] sm:$0xff]
        %v6343 = vld [vmem:[%s3 + $0xb0] sm:$0xff]
        %v6344 = vld [vmem:[%s3 + $0xb8] sm:$0xff]
        %v6345 = vld [vmem:[%s3 + $0xc0] sm:$0xff]
        %v6346 = vld [vmem:[%s3 + $0xc8] sm:$0xff]
        %v6347 = vld [vmem:[%s3 + $0xd0] sm:$0xff]
        %v6348 = vld [vmem:[%s3 + $0xd8] sm:$0xff]
        %v6349 = vld [vmem:[%s3 + $0xe0] sm:$0xff]
        %v6350 = vld [vmem:[%s3 + $0xe8] sm:$0xff]
        %v6351 = vld [vmem:[%s3 + $0xf0] sm:$0xff]
        %v6352 = vld [vmem:[%s3 + $0xf8] sm:$0xff]
        %v6353 = vld [vmem:[%s3 + $0x100] sm:$0xff]
        %v6354 = vld [vmem:[%s3 + $0x108] sm:$0xff]
        %v6355 = vld [vmem:[%s3 + $0x110] sm:$0xff]
        %v6356 = vld [vmem:[%s3 + $0x118] sm:$0xff]
        %v6357 = vld [vmem:[%s3 + $0x120] sm:$0xff]
        %v6358 = vld [vmem:[%s3 + $0x128] sm:$0xff]
        %v6359 = vld [vmem:[%s3 + $0x130] sm:$0xff]
        %v6360 = vld [vmem:[%s3 + $0x138] sm:$0xff]
        %v6361 = vld [vmem:[%s3 + $0x140] sm:$0xff]
        %v6362 = vld [vmem:[%s3 + $0x148] sm:$0xff]
        %v6363 = vld [vmem:[%s3 + $0x150] sm:$0xff]
        %v6364 = vld [vmem:[%s3 + $0x158] sm:$0xff]
        %v6365 = vld [vmem:[%s3 + $0x160] sm:$0xff]
        %v6366 = vld [vmem:[%s3 + $0x168] sm:$0xff]
        %v6367 = vld [vmem:[%s3 + $0x170] sm:$0xff]
        %v6368 = vld [vmem:[%s3 + $0x178] sm:$0xff]
        %v6369 = vld [vmem:[%s3 + $0x180] sm:$0xff]
        %v6370 = vld [vmem:[%s3 + $0x188] sm:$0xff]
        %v6371 = vld [vmem:[%s3 + $0x190] sm:$0xff]
        %v6372 = vld [vmem:[%s3 + $0x198] sm:$0xff]
        %v6373 = vld [vmem:[%s3 + $0x1a0] sm:$0xff]
        %v6374 = vld [vmem:[%s3 + $0x1a8] sm:$0xff]
        %v6375 = vld [vmem:[%s3 + $0x1b0] sm:$0xff]
        %v6376 = vld [vmem:[%s3 + $0x1b8] sm:$0xff]
        %v6377 = vld [vmem:[%s3 + $0x1c0] sm:$0xff]
        %v6378 = vld [vmem:[%s3 + $0x1c8] sm:$0xff]
        %v6379 = vld [vmem:[%s3 + $0x1d0] sm:$0xff]
        %v6380 = vld [vmem:[%s3 + $0x1d8] sm:$0xff]
        %v6381 = vld [vmem:[%s3 + $0x1e0] sm:$0xff]
        %v6382 = vld [vmem:[%s3 + $0x1e8] sm:$0xff]
        %v6383 = vld [vmem:[%s3 + $0x1f0] sm:$0x3]
        %v6384 = vld [vmem:[%s3 + $0x1f8] sm:$0x3]
        %v6385 = vld [vmem:[%s2707] sm:$0xff]
        %v6386 = vld [vmem:[%s2707 + $0x8] sm:$0xff]
        %v6387 = vld [vmem:[%s2707 + $0x10] sm:$0xff]
        %v6388 = vld [vmem:[%s2707 + $0x18] sm:$0xff]
        %v6389 = vld [vmem:[%s2707 + $0x20] sm:$0xff]
        %v6390 = vld [vmem:[%s2707 + $0x28] sm:$0xff]
        %v6391 = vld [vmem:[%s2707 + $0x30] sm:$0xff]
        %v6392 = vld [vmem:[%s2707 + $0x38] sm:$0xff]
        %v6393 = vld [vmem:[%s2707 + $0x40] sm:$0xff]
        %v6394 = vld [vmem:[%s2707 + $0x48] sm:$0xff]
        %v6395 = vld [vmem:[%s2707 + $0x50] sm:$0xff]
        %v6396 = vld [vmem:[%s2707 + $0x58] sm:$0xff]
        %v6397 = vld [vmem:[%s2707 + $0x60] sm:$0xff]
        %v6398 = vld [vmem:[%s2707 + $0x68] sm:$0xff]
        %v6399 = vld [vmem:[%s2707 + $0x70] sm:$0xff]
        %v6400 = vld [vmem:[%s2707 + $0x78] sm:$0xff]
        %v6401 = vld [vmem:[%s2707 + $0x80] sm:$0xff]
        %v6402 = vld [vmem:[%s2707 + $0x88] sm:$0xff]
        %v6403 = vld [vmem:[%s2707 + $0x90] sm:$0xff]
        %v6404 = vld [vmem:[%s2707 + $0x98] sm:$0xff]
        %v6405 = vld [vmem:[%s2707 + $0xa0] sm:$0xff]
        %v6406 = vld [vmem:[%s2707 + $0xa8] sm:$0xff]
        %v6407 = vld [vmem:[%s2707 + $0xb0] sm:$0xff]
        %v6408 = vld [vmem:[%s2707 + $0xb8] sm:$0xff]
        %v6409 = vld [vmem:[%s2707 + $0xc0] sm:$0xff]
        %v6410 = vld [vmem:[%s2707 + $0xc8] sm:$0xff]
        %v6411 = vld [vmem:[%s2707 + $0xd0] sm:$0xff]
        %v6412 = vld [vmem:[%s2707 + $0xd8] sm:$0xff]
        %v6413 = vld [vmem:[%s2707 + $0xe0] sm:$0xff]
        %v6414 = vld [vmem:[%s2707 + $0xe8] sm:$0xff]
        %v6415 = vld [vmem:[%s2707 + $0xf0] sm:$0xff]
        %v6416 = vld [vmem:[%s2707 + $0xf8] sm:$0xff]
        %v6417 = vld [vmem:[%s2707 + $0x100] sm:$0xff]
        %v6418 = vld [vmem:[%s2707 + $0x108] sm:$0xff]
        %v6419 = vld [vmem:[%s2707 + $0x110] sm:$0xff]
        %v6420 = vld [vmem:[%s2707 + $0x118] sm:$0xff]
        %v6421 = vld [vmem:[%s2707 + $0x120] sm:$0xff]
        %v6422 = vld [vmem:[%s2707 + $0x128] sm:$0xff]
        %v6423 = vld [vmem:[%s2707 + $0x130] sm:$0xff]
        %v6424 = vld [vmem:[%s2707 + $0x138] sm:$0xff]
        %v6425 = vld [vmem:[%s2707 + $0x140] sm:$0xff]
        %v6426 = vld [vmem:[%s2707 + $0x148] sm:$0xff]
        %v6427 = vld [vmem:[%s2707 + $0x150] sm:$0xff]
        %v6428 = vld [vmem:[%s2707 + $0x158] sm:$0xff]
        %v6429 = vld [vmem:[%s2707 + $0x160] sm:$0xff]
        %v6430 = vld [vmem:[%s2707 + $0x168] sm:$0xff]
        %v6431 = vld [vmem:[%s2707 + $0x170] sm:$0xff]
        %v6432 = vld [vmem:[%s2707 + $0x178] sm:$0xff]
        %v6433 = vld [vmem:[%s2707 + $0x180] sm:$0xff]
        %v6434 = vld [vmem:[%s2707 + $0x188] sm:$0xff]
        %v6435 = vld [vmem:[%s2707 + $0x190] sm:$0xff]
        %v6436 = vld [vmem:[%s2707 + $0x198] sm:$0xff]
        %v6437 = vld [vmem:[%s2707 + $0x1a0] sm:$0xff]
        %v6438 = vld [vmem:[%s2707 + $0x1a8] sm:$0xff]
        %v6439 = vld [vmem:[%s2707 + $0x1b0] sm:$0xff]
        %v6440 = vld [vmem:[%s2707 + $0x1b8] sm:$0xff]
        %v6441 = vld [vmem:[%s2707 + $0x1c0] sm:$0xff]
        %v6442 = vld [vmem:[%s2707 + $0x1c8] sm:$0xff]
        %v6443 = vld [vmem:[%s2707 + $0x1d0] sm:$0xff]
        %v6444 = vld [vmem:[%s2707 + $0x1d8] sm:$0xff]
        %v6445 = vld [vmem:[%s2707 + $0x1e0] sm:$0xff]
        %v6446 = vld [vmem:[%s2707 + $0x1e8] sm:$0xff]
        %v6447 = vld [vmem:[%s2707 + $0x1f0] sm:$0x3]
        %v6448 = vld [vmem:[%s2707 + $0x1f8] sm:$0x3]
        %v6459 = vrot.slane %v6311, 1
        %v6460 = vrot.slane %v6313, 1
        %v6461 = vsel %vm461, %v6459, %v6460
        %v6462 = vrot.slane %v6312, 1
        %v6463 = vrot.slane %v6314, 1
        %v6464 = vsel %vm461, %v6462, %v6463
        %v6465 = vrot.slane %v6315, 1
        %v6466 = vsel %vm461, %v6460, %v6465
        %v6467 = vrot.slane %v6316, 1
        %v6468 = vsel %vm461, %v6463, %v6467
        %v6469 = vrot.slane %v6317, 1
        %v6470 = vsel %vm461, %v6465, %v6469
        %v6471 = vrot.slane %v6318, 1
        %v6472 = vsel %vm461, %v6467, %v6471
        %v6473 = vrot.slane %v6319, 1
        %v6474 = vsel %vm461, %v6469, %v6473
        %v6475 = vrot.slane %v6320, 1
        %v6476 = vsel %vm461, %v6471, %v6475
        %v6481 = vsel %vm2804, %v6464, 0
        %v6483 = vsel %vm2804, %v6468, 0
        %v6485 = vsel %vm2804, %v6472, 0
        %v6487 = vsel %vm2804, %v6476, 0
        %v6490 = vsel %vm1675, %v6447, 0
        %v6493 = vsel %vm1675, %v6448, 0
        %6495 = vmatprep.subr.mxu0 %v6386
        %6496 = vmatpush1.msra.mxu0 %v6385
        %6497 = vmatprep.subr.mxu0 %v6388
        %6498 = vmatpush1.msra.mxu0 %v6387
        %6499 = vmatprep.subr.mxu0 %v6390
        %6500 = vmatpush1.msra.mxu0 %v6389
        %6501 = vmatprep.subr.mxu0 %v6392
        %6502 = vmatpush1.msra.mxu0 %v6391
        %6503 = vmatprep.subr.mxu0 %v6394
        %6504 = vmatpush1.msra.mxu0 %v6393
        %6505 = vmatprep.subr.mxu0 %v6396
        %6506 = vmatpush1.msra.mxu0 %v6395
        %6507 = vmatprep.subr.mxu0 %v6398
        %6508 = vmatpush1.msra.mxu0 %v6397
        %6509 = vmatprep.subr.mxu0 %v6400
        %6510 = vmatpush1.msra.mxu0 %v6399
        %6511 = vmatprep.subr.mxu0 %v6402
        %6512 = vmatpush1.msra.mxu0 %v6401
        %6513 = vmatprep.subr.mxu0 %v6404
        %6514 = vmatpush1.msra.mxu0 %v6403
        %6515 = vmatprep.subr.mxu0 %v6406
        %6516 = vmatpush1.msra.mxu0 %v6405
        %6517 = vmatprep.subr.mxu0 %v6408
        %6518 = vmatpush1.msra.mxu0 %v6407
        %6519 = vmatprep.subr.mxu0 %v6410
        %6520 = vmatpush1.msra.mxu0 %v6409
        %6521 = vmatprep.subr.mxu0 %v6412
        %6522 = vmatpush1.msra.mxu0 %v6411
        %6523 = vmatprep.subr.mxu0 %v6414
        %6524 = vmatpush1.msra.mxu0 %v6413
        %6525 = vmatprep.subr.mxu0 %v6416
        %6526 = vmatpush1.msra.mxu0 %v6415
        %6527 = vmatprep.subr.mxu0 %v6418
        %6528 = vmatpush1.msra.mxu0 %v6417
        %6529 = vmatprep.subr.mxu0 %v6420
        %6530 = vmatpush1.msra.mxu0 %v6419
        %6531 = vmatprep.subr.mxu0 %v6422
        %6532 = vmatpush1.msra.mxu0 %v6421
        %6533 = vmatprep.subr.mxu0 %v6424
        %6534 = vmatpush1.msra.mxu0 %v6423
        %6535 = vmatprep.subr.mxu0 %v6426
        %6536 = vmatpush1.msra.mxu0 %v6425
        %6537 = vmatprep.subr.mxu0 %v6428
        %6538 = vmatpush1.msra.mxu0 %v6427
        %6539 = vmatprep.subr.mxu0 %v6430
        %6540 = vmatpush1.msra.mxu0 %v6429
        %6541 = vmatprep.subr.mxu0 %v6432
        %6542 = vmatpush1.msra.mxu0 %v6431
        %6543 = vmatprep.subr.mxu0 %v6434
        %6544 = vmatpush1.msra.mxu0 %v6433
        %6545 = vmatprep.subr.mxu0 %v6436
        %6546 = vmatpush1.msra.mxu0 %v6435
        %6547 = vmatprep.subr.mxu0 %v6438
        %6548 = vmatpush1.msra.mxu0 %v6437
        %6549 = vmatprep.subr.mxu0 %v6440
        %6550 = vmatpush1.msra.mxu0 %v6439
        %6551 = vmatprep.subr.mxu0 %v6442
        %6552 = vmatpush1.msra.mxu0 %v6441
        %6553 = vmatprep.subr.mxu0 %v6444
        %6554 = vmatpush1.msra.mxu0 %v6443
        %6555 = vmatprep.subr.mxu0 %v6446
        %6556 = vmatpush1.msra.mxu0 %v6445
        %6557 = vmatprep.subr.mxu0 %v6493
        %6558 = vmatpush1.msra.mxu0 %v6490
        %6559 = vmatprep.mubr.f32.mxu0 %v6481
        %6560 = vmatmul.mubr.f32.gmra.mrb[0].mxu0 %v6461
        %v6561 = vpop.f32.mrb[0].mxu0
        %v6562 = vadd.f32 0.0, %v6561
        %v6563 = vpop.f32.mrb[0].mxu0
        %v6564 = vadd.f32 0.0, %v6563
        %6565 = vmatprep.mubr.f32.mxu0 %v6483
        %6566 = vmatmul.mubr.f32.gmra.mrb[0].mxu0 %v6466
        %v6567 = vpop.f32.mrb[0].mxu0
        %v6568 = vadd.f32 0.0, %v6567
        %v6569 = vpop.f32.mrb[0].mxu0
        %v6570 = vadd.f32 0.0, %v6569
        %6571 = vmatprep.mubr.f32.mxu0 %v6485
        %6572 = vmatmul.mubr.f32.gmra.mrb[0].mxu0 %v6470
        %v6573 = vpop.f32.mrb[0].mxu0
        %v6574 = vadd.f32 0.0, %v6573
        %v6575 = vpop.f32.mrb[0].mxu0
        %v6576 = vadd.f32 0.0, %v6575
        %6577 = vmatprep.mubr.f32.mxu0 %v6487
        %6578 = vmatmul.mubr.f32.gmra.mrb[0].mxu0 %v6474
        %v6579 = vpop.f32.mrb[0].mxu0
        %v6580 = vadd.f32 0.0, %v6579
        %v6581 = vpop.f32.mrb[0].mxu0
        %v6582 = vadd.f32 0.0, %v6581
        %6583 = vdwg.mxu0
        %v6584 = vsel %vm2804, %v6312, 0
        %v6586 = vsel %vm2804, %v6314, 0
        %v6588 = vsel %vm2804, %v6316, 0
        %v6590 = vsel %vm2804, %v6318, 0
        %v6593 = vsel %vm1675, %v6383, 0
        %v6596 = vsel %vm1675, %v6384, 0
        %6598 = vmatprep.subr.mxu0 %v6322
        %6599 = vmatpush1.msra.mxu0 %v6321
        %6600 = vmatprep.subr.mxu0 %v6324
        %6601 = vmatpush1.msra.mxu0 %v6323
        %6602 = vmatprep.subr.mxu0 %v6326
        %6603 = vmatpush1.msra.mxu0 %v6325
        %6604 = vmatprep.subr.mxu0 %v6328
        %6605 = vmatpush1.msra.mxu0 %v6327
        %6606 = vmatprep.subr.mxu0 %v6330
        %6607 = vmatpush1.msra.mxu0 %v6329
        %6608 = vmatprep.subr.mxu0 %v6332
        %6609 = vmatpush1.msra.mxu0 %v6331
        %6610 = vmatprep.subr.mxu0 %v6334
        %6611 = vmatpush1.msra.mxu0 %v6333
        %6612 = vmatprep.subr.mxu0 %v6336
        %6613 = vmatpush1.msra.mxu0 %v6335
        %6614 = vmatprep.subr.mxu0 %v6338
        %6615 = vmatpush1.msra.mxu0 %v6337
        %6616 = vmatprep.subr.mxu0 %v6340
        %6617 = vmatpush1.msra.mxu0 %v6339
        %6618 = vmatprep.subr.mxu0 %v6342
        %6619 = vmatpush1.msra.mxu0 %v6341
        %6620 = vmatprep.subr.mxu0 %v6344
        %6621 = vmatpush1.msra.mxu0 %v6343
        %6622 = vmatprep.subr.mxu0 %v6346
        %6623 = vmatpush1.msra.mxu0 %v6345
        %6624 = vmatprep.subr.mxu0 %v6348
        %6625 = vmatpush1.msra.mxu0 %v6347
        %6626 = vmatprep.subr.mxu0 %v6350
        %6627 = vmatpush1.msra.mxu0 %v6349
        %6628 = vmatprep.subr.mxu0 %v6352
        %6629 = vmatpush1.msra.mxu0 %v6351
        %6630 = vmatprep.subr.mxu0 %v6354
        %6631 = vmatpush1.msra.mxu0 %v6353
        %6632 = vmatprep.subr.mxu0 %v6356
        %6633 = vmatpush1.msra.mxu0 %v6355
        %6634 = vmatprep.subr.mxu0 %v6358
        %6635 = vmatpush1.msra.mxu0 %v6357
        %6636 = vmatprep.subr.mxu0 %v6360
        %6637 = vmatpush1.msra.mxu0 %v6359
        %6638 = vmatprep.subr.mxu0 %v6362
        %6639 = vmatpush1.msra.mxu0 %v6361
        %6640 = vmatprep.subr.mxu0 %v6364
        %6641 = vmatpush1.msra.mxu0 %v6363
        %6642 = vmatprep.subr.mxu0 %v6366
        %6643 = vmatpush1.msra.mxu0 %v6365
        %6644 = vmatprep.subr.mxu0 %v6368
        %6645 = vmatpush1.msra.mxu0 %v6367
        %6646 = vmatprep.subr.mxu0 %v6370
        %6647 = vmatpush1.msra.mxu0 %v6369
        %6648 = vmatprep.subr.mxu0 %v6372
        %6649 = vmatpush1.msra.mxu0 %v6371
        %6650 = vmatprep.subr.mxu0 %v6374
        %6651 = vmatpush1.msra.mxu0 %v6373
        %6652 = vmatprep.subr.mxu0 %v6376
        %6653 = vmatpush1.msra.mxu0 %v6375
        %6654 = vmatprep.subr.mxu0 %v6378
        %6655 = vmatpush1.msra.mxu0 %v6377
        %6656 = vmatprep.subr.mxu0 %v6380
        %6657 = vmatpush1.msra.mxu0 %v6379
        %6658 = vmatprep.subr.mxu0 %v6382
        %6659 = vmatpush1.msra.mxu0 %v6381
        %6660 = vmatprep.subr.mxu0 %v6596
        %6661 = vmatpush1.msra.mxu0 %v6593
        %6662 = vmatprep.mubr.f32.mxu0 %v6584
        %6663 = vmatmul.mubr.f32.gmra.mrb[0].mxu0 %v6311
        %v6664 = vpop.f32.mrb[0].mxu0
        %v6665 = vadd.f32 %v6562, %v6664
        %v6666 = vpop.f32.mrb[0].mxu0
        %v6667 = vadd.f32 %v6564, %v6666
        %6668 = vmatprep.mubr.f32.mxu0 %v6586
        %6669 = vmatmul.mubr.f32.gmra.mrb[0].mxu0 %v6313
        %v6670 = vpop.f32.mrb[0].mxu0
        %v6671 = vadd.f32 %v6568, %v6670
        %v6672 = vpop.f32.mrb[0].mxu0
        %v6673 = vadd.f32 %v6570, %v6672
        %6674 = vmatprep.mubr.f32.mxu0 %v6588
        %6675 = vmatmul.mubr.f32.gmra.mrb[0].mxu0 %v6315
        %v6676 = vpop.f32.mrb[0].mxu0
        %v6677 = vadd.f32 %v6574, %v6676
        %v6678 = vpop.f32.mrb[0].mxu0
        %v6679 = vadd.f32 %v6576, %v6678
        %6680 = vmatprep.mubr.f32.mxu0 %v6590
        %6681 = vmatmul.mubr.f32.gmra.mrb[0].mxu0 %v6317
        %v6682 = vpop.f32.mrb[0].mxu0
        %v6683 = vadd.f32 %v6580, %v6682
        %v6684 = vpop.f32.mrb[0].mxu0
        %v6685 = vadd.f32 %v6582, %v6684
        %6686 = vdwg.mxu0
        %v6687 = vld [vmem:[%s3011] sm:$0xff]
        %v6688 = vld [vmem:[%s3011 + $0x8] sm:$0xff]
        %v6689 = vld [vmem:[%s3011 + $0x10] sm:$0xff]
        %v6690 = vld [vmem:[%s3011 + $0x18] sm:$0xff]
        %v6691 = vld [vmem:[%s3011 + $0x20] sm:$0xff]
        %v6692 = vld [vmem:[%s3011 + $0x28] sm:$0xff]
        %v6693 = vld [vmem:[%s3011 + $0x30] sm:$0xff]
        %v6694 = vld [vmem:[%s3011 + $0x38] sm:$0xff]
        %v6695 = vld [vmem:[%s3011 + $0x40] sm:$0xff]
        %v6696 = vld [vmem:[%s3011 + $0x48] sm:$0xff]
        %v6697 = vld [vmem:[%s3011 + $0x50] sm:$0xff]
        %v6698 = vld [vmem:[%s3011 + $0x58] sm:$0xff]
        %v6699 = vld [vmem:[%s3011 + $0x60] sm:$0xff]
        %v6700 = vld [vmem:[%s3011 + $0x68] sm:$0xff]
        %v6701 = vld [vmem:[%s3011 + $0x70] sm:$0xff]
        %v6702 = vld [vmem:[%s3011 + $0x78] sm:$0xff]
        %v6703 = vld [vmem:[%s3011 + $0x80] sm:$0xff]
        %v6704 = vld [vmem:[%s3011 + $0x88] sm:$0xff]
        %v6705 = vld [vmem:[%s3011 + $0x90] sm:$0xff]
        %v6706 = vld [vmem:[%s3011 + $0x98] sm:$0xff]
        %v6707 = vld [vmem:[%s3011 + $0xa0] sm:$0xff]
        %v6708 = vld [vmem:[%s3011 + $0xa8] sm:$0xff]
        %v6709 = vld [vmem:[%s3011 + $0xb0] sm:$0xff]
        %v6710 = vld [vmem:[%s3011 + $0xb8] sm:$0xff]
        %v6711 = vld [vmem:[%s3011 + $0xc0] sm:$0xff]
        %v6712 = vld [vmem:[%s3011 + $0xc8] sm:$0xff]
        %v6713 = vld [vmem:[%s3011 + $0xd0] sm:$0xff]
        %v6714 = vld [vmem:[%s3011 + $0xd8] sm:$0xff]
        %v6715 = vld [vmem:[%s3011 + $0xe0] sm:$0xff]
        %v6716 = vld [vmem:[%s3011 + $0xe8] sm:$0xff]
        %v6717 = vld [vmem:[%s3011 + $0xf0] sm:$0xff]
        %v6718 = vld [vmem:[%s3011 + $0xf8] sm:$0xff]
        %v6719 = vld [vmem:[%s3011 + $0x100] sm:$0xff]
        %v6720 = vld [vmem:[%s3011 + $0x108] sm:$0xff]
        %v6721 = vld [vmem:[%s3011 + $0x110] sm:$0xff]
        %v6722 = vld [vmem:[%s3011 + $0x118] sm:$0xff]
        %v6723 = vld [vmem:[%s3011 + $0x120] sm:$0xff]
        %v6724 = vld [vmem:[%s3011 + $0x128] sm:$0xff]
        %v6725 = vld [vmem:[%s3011 + $0x130] sm:$0xff]
        %v6726 = vld [vmem:[%s3011 + $0x138] sm:$0xff]
        %v6727 = vld [vmem:[%s3011 + $0x140] sm:$0xff]
        %v6728 = vld [vmem:[%s3011 + $0x148] sm:$0xff]
        %v6729 = vld [vmem:[%s3011 + $0x150] sm:$0xff]
        %v6730 = vld [vmem:[%s3011 + $0x158] sm:$0xff]
        %v6731 = vld [vmem:[%s3011 + $0x160] sm:$0xff]
        %v6732 = vld [vmem:[%s3011 + $0x168] sm:$0xff]
        %v6733 = vld [vmem:[%s3011 + $0x170] sm:$0xff]
        %v6734 = vld [vmem:[%s3011 + $0x178] sm:$0xff]
        %v6735 = vld [vmem:[%s3011 + $0x180] sm:$0xff]
        %v6736 = vld [vmem:[%s3011 + $0x188] sm:$0xff]
        %v6737 = vld [vmem:[%s3011 + $0x190] sm:$0xff]
        %v6738 = vld [vmem:[%s3011 + $0x198] sm:$0xff]
        %v6739 = vld [vmem:[%s3011 + $0x1a0] sm:$0xff]
        %v6740 = vld [vmem:[%s3011 + $0x1a8] sm:$0xff]
        %v6741 = vld [vmem:[%s3011 + $0x1b0] sm:$0xff]
        %v6742 = vld [vmem:[%s3011 + $0x1b8] sm:$0xff]
        %v6743 = vld [vmem:[%s3011 + $0x1c0] sm:$0xff]
        %v6744 = vld [vmem:[%s3011 + $0x1c8] sm:$0xff]
        %v6745 = vld [vmem:[%s3011 + $0x1d0] sm:$0xff]
        %v6746 = vld [vmem:[%s3011 + $0x1d8] sm:$0xff]
        %v6747 = vld [vmem:[%s3011 + $0x1e0] sm:$0xff]
        %v6748 = vld [vmem:[%s3011 + $0x1e8] sm:$0xff]
        %v6749 = vld [vmem:[%s3011 + $0x1f0] sm:$0x3]
        %v6750 = vld [vmem:[%s3011 + $0x1f8] sm:$0x3]
        %v6751 = vrot.slane %v6311, 2
        %v6752 = vrot.slane %v6313, 2
        %v6753 = vsel %vm883, %v6751, %v6752
        %v6754 = vrot.slane %v6312, 2
        %v6755 = vrot.slane %v6314, 2
        %v6756 = vsel %vm883, %v6754, %v6755
        %v6757 = vrot.slane %v6315, 2
        %v6758 = vsel %vm883, %v6752, %v6757
        %v6759 = vrot.slane %v6316, 2
        %v6760 = vsel %vm883, %v6755, %v6759
        %v6761 = vrot.slane %v6317, 2
        %v6762 = vsel %vm883, %v6757, %v6761
        %v6763 = vrot.slane %v6318, 2
        %v6764 = vsel %vm883, %v6759, %v6763
        %v6765 = vrot.slane %v6319, 2
        %v6766 = vsel %vm883, %v6761, %v6765
        %v6767 = vrot.slane %v6320, 2
        %v6768 = vsel %vm883, %v6763, %v6767
        %v6773 = vsel %vm2804, %v6756, 0
        %v6775 = vsel %vm2804, %v6760, 0
        %v6777 = vsel %vm2804, %v6764, 0
        %v6779 = vsel %vm2804, %v6768, 0
        %v6782 = vsel %vm1675, %v6749, 0
        %v6785 = vsel %vm1675, %v6750, 0
        %6787 = vmatprep.subr.mxu0 %v6688
        %6788 = vmatpush1.msra.mxu0 %v6687
        %6789 = vmatprep.subr.mxu0 %v6690
        %6790 = vmatpush1.msra.mxu0 %v6689
        %6791 = vmatprep.subr.mxu0 %v6692
        %6792 = vmatpush1.msra.mxu0 %v6691
        %6793 = vmatprep.subr.mxu0 %v6694
        %6794 = vmatpush1.msra.mxu0 %v6693
        %6795 = vmatprep.subr.mxu0 %v6696
        %6796 = vmatpush1.msra.mxu0 %v6695
        %6797 = vmatprep.subr.mxu0 %v6698
        %6798 = vmatpush1.msra.mxu0 %v6697
        %6799 = vmatprep.subr.mxu0 %v6700
        %6800 = vmatpush1.msra.mxu0 %v6699
        %6801 = vmatprep.subr.mxu0 %v6702
        %6802 = vmatpush1.msra.mxu0 %v6701
        %6803 = vmatprep.subr.mxu0 %v6704
        %6804 = vmatpush1.msra.mxu0 %v6703
        %6805 = vmatprep.subr.mxu0 %v6706
        %6806 = vmatpush1.msra.mxu0 %v6705
        %6807 = vmatprep.subr.mxu0 %v6708
        %6808 = vmatpush1.msra.mxu0 %v6707
        %6809 = vmatprep.subr.mxu0 %v6710
        %6810 = vmatpush1.msra.mxu0 %v6709
        %6811 = vmatprep.subr.mxu0 %v6712
        %6812 = vmatpush1.msra.mxu0 %v6711
        %6813 = vmatprep.subr.mxu0 %v6714
        %6814 = vmatpush1.msra.mxu0 %v6713
        %6815 = vmatprep.subr.mxu0 %v6716
        %6816 = vmatpush1.msra.mxu0 %v6715
        %6817 = vmatprep.subr.mxu0 %v6718
        %6818 = vmatpush1.msra.mxu0 %v6717
        %6819 = vmatprep.subr.mxu0 %v6720
        %6820 = vmatpush1.msra.mxu0 %v6719
        %6821 = vmatprep.subr.mxu0 %v6722
        %6822 = vmatpush1.msra.mxu0 %v6721
        %6823 = vmatprep.subr.mxu0 %v6724
        %6824 = vmatpush1.msra.mxu0 %v6723
        %6825 = vmatprep.subr.mxu0 %v6726
        %6826 = vmatpush1.msra.mxu0 %v6725
        %6827 = vmatprep.subr.mxu0 %v6728
        %6828 = vmatpush1.msra.mxu0 %v6727
        %6829 = vmatprep.subr.mxu0 %v6730
        %6830 = vmatpush1.msra.mxu0 %v6729
        %6831 = vmatprep.subr.mxu0 %v6732
        %6832 = vmatpush1.msra.mxu0 %v6731
        %6833 = vmatprep.subr.mxu0 %v6734
        %6834 = vmatpush1.msra.mxu0 %v6733
        %6835 = vmatprep.subr.mxu0 %v6736
        %6836 = vmatpush1.msra.mxu0 %v6735
        %6837 = vmatprep.subr.mxu0 %v6738
        %6838 = vmatpush1.msra.mxu0 %v6737
        %6839 = vmatprep.subr.mxu0 %v6740
        %6840 = vmatpush1.msra.mxu0 %v6739
        %6841 = vmatprep.subr.mxu0 %v6742
        %6842 = vmatpush1.msra.mxu0 %v6741
        %6843 = vmatprep.subr.mxu0 %v6744
        %6844 = vmatpush1.msra.mxu0 %v6743
        %6845 = vmatprep.subr.mxu0 %v6746
        %6846 = vmatpush1.msra.mxu0 %v6745
        %6847 = vmatprep.subr.mxu0 %v6748
        %6848 = vmatpush1.msra.mxu0 %v6747
        %6849 = vmatprep.subr.mxu0 %v6785
        %6850 = vmatpush1.msra.mxu0 %v6782
        %6851 = vmatprep.mubr.f32.mxu0 %v6773
        %6852 = vmatmul.mubr.f32.gmra.mrb[0].mxu0 %v6753
        %v6853 = vpop.f32.mrb[0].mxu0
        %v6854 = vadd.f32 0.0, %v6853
        %v6855 = vpop.f32.mrb[0].mxu0
        %v6856 = vadd.f32 0.0, %v6855
        %6857 = vmatprep.mubr.f32.mxu0 %v6775
        %6858 = vmatmul.mubr.f32.gmra.mrb[0].mxu0 %v6758
        %v6859 = vpop.f32.mrb[0].mxu0
        %v6860 = vadd.f32 0.0, %v6859
        %v6861 = vpop.f32.mrb[0].mxu0
        %v6862 = vadd.f32 0.0, %v6861
        %6863 = vmatprep.mubr.f32.mxu0 %v6777
        %6864 = vmatmul.mubr.f32.gmra.mrb[0].mxu0 %v6762
        %v6865 = vpop.f32.mrb[0].mxu0
        %v6866 = vadd.f32 0.0, %v6865
        %v6867 = vpop.f32.mrb[0].mxu0
        %v6868 = vadd.f32 0.0, %v6867
        %6869 = vmatprep.mubr.f32.mxu0 %v6779
        %6870 = vmatmul.mubr.f32.gmra.mrb[0].mxu0 %v6766
        %v6871 = vpop.f32.mrb[0].mxu0
        %v6872 = vadd.f32 0.0, %v6871
        %v6873 = vpop.f32.mrb[0].mxu0
        %v6874 = vadd.f32 0.0, %v6873
        %6875 = vdwg.mxu0
        %v6876 = vadd.f32 %v6665, %v6854
        %v6877 = vadd.f32 %v6667, %v6856
        %v6878 = vadd.f32 %v6671, %v6860
        %v6879 = vadd.f32 %v6673, %v6862
        %v6880 = vadd.f32 %v6677, %v6866
        %v6881 = vadd.f32 %v6679, %v6868
        %v6882 = vadd.f32 %v6683, %v6872
        %v6883 = vadd.f32 %v6685, %v6874
        %6892 = vrot.lane.b32.xlu0 %v6876, 127
        %v6893 = vpop.permute.xlu0 %6892
        %6894 = vrot.lane.b32.xlu0 %v6877, 127
        %v6895 = vpop.permute.xlu0 %6894
        %6896 = vrot.lane.b32.xlu0 %v6878, 127
        %v6897 = vpop.permute.xlu0 %6896
        %6898 = vrot.lane.b32.xlu0 %v6879, 127
        %v6899 = vpop.permute.xlu0 %6898
        %6900 = vrot.lane.b32.xlu0 %v6880, 127
        %v6901 = vpop.permute.xlu0 %6900
        %6902 = vrot.lane.b32.xlu0 %v6881, 127
        %v6903 = vpop.permute.xlu0 %6902
        %6904 = vrot.lane.b32.xlu0 %v6882, 127
        %v6905 = vpop.permute.xlu0 %6904
        %6906 = vrot.lane.b32.xlu0 %v6883, 127
        %v6907 = vpop.permute.xlu0 %6906
        %v6908 = vsel %vm1150, %v6893, %v6895
        %v6909 = vsel %vm1150, %v6897, %v6899
        %v6910 = vsel %vm1150, %v6901, %v6903
        %v6911 = vsel %vm1150, %v6905, %v6907
        %v6920 = vmax.f32 %v6876, %v6908
        %v6921 = vmax.f32 %v6877, %v6895
        %v6922 = vmax.f32 %v6878, %v6909
        %v6923 = vmax.f32 %v6879, %v6899
        %v6924 = vmax.f32 %v6880, %v6910
        %v6925 = vmax.f32 %v6881, %v6903
        %v6926 = vmax.f32 %v6882, %v6911
        %v6927 = vmax.f32 %v6883, %v6907
        %6928 = vrot.lane.b32.xlu0 %v6876, 126
        %v6929 = vpop.permute.xlu0 %6928
        %6930 = vrot.lane.b32.xlu0 %v6877, 126
        %v6931 = vpop.permute.xlu0 %6930
        %6932 = vrot.lane.b32.xlu0 %v6878, 126
        %v6933 = vpop.permute.xlu0 %6932
        %6934 = vrot.lane.b32.xlu0 %v6879, 126
        %v6935 = vpop.permute.xlu0 %6934
        %6936 = vrot.lane.b32.xlu0 %v6880, 126
        %v6937 = vpop.permute.xlu0 %6936
        %6938 = vrot.lane.b32.xlu0 %v6881, 126
        %v6939 = vpop.permute.xlu0 %6938
        %6940 = vrot.lane.b32.xlu0 %v6882, 126
        %v6941 = vpop.permute.xlu0 %6940
        %6942 = vrot.lane.b32.xlu0 %v6883, 126
        %v6943 = vpop.permute.xlu0 %6942
        %v6944 = vsel %vm1221, %v6929, %v6931
        %v6945 = vsel %vm1221, %v6933, %v6935
        %v6946 = vsel %vm1221, %v6937, %v6939
        %v6947 = vsel %vm1221, %v6941, %v6943
        %v6956 = vmax.f32 %v6920, %v6944
        %v6957 = vmax.f32 %v6921, %v6931
        %v6958 = vmax.f32 %v6922, %v6945
        %v6959 = vmax.f32 %v6923, %v6935
        %v6960 = vmax.f32 %v6924, %v6946
        %v6961 = vmax.f32 %v6925, %v6939
        %v6962 = vmax.f32 %v6926, %v6947
        %v6963 = vmax.f32 %v6927, %v6943
        %v6972 = vrot.slane %v6956, 1
        %v6973 = vrot.slane %v6958, 1
        %v6974 = vsel %vm461, %v6972, %v6973
        %v6975 = vrot.slane %v6957, 1
        %v6976 = vrot.slane %v6959, 1
        %v6977 = vsel %vm461, %v6975, %v6976
        %v6978 = vrot.slane %v6960, 1
        %v6979 = vsel %vm461, %v6973, %v6978
        %v6980 = vrot.slane %v6961, 1
        %v6981 = vsel %vm461, %v6976, %v6980
        %v6982 = vrot.slane %v6962, 1
        %v6983 = vsel %vm461, %v6978, %v6982
        %v6984 = vrot.slane %v6963, 1
        %v6985 = vsel %vm461, %v6980, %v6984
        %v6994 = vmax.f32 %v6956, %v6974
        %v6995 = vmax.f32 %v6957, %v6977
        %v6996 = vmax.f32 %v6958, %v6979
        %v6997 = vmax.f32 %v6959, %v6981
        %v6998 = vmax.f32 %v6960, %v6983
        %v6999 = vmax.f32 %v6961, %v6985
        %v7000 = vmax.f32 %v6962, %v6982
        %v7001 = vmax.f32 %v6963, %v6984
        %v7002 = vrot.slane %v6956, 2
        %v7003 = vrot.slane %v6958, 2
        %v7004 = vsel %vm883, %v7002, %v7003
        %v7005 = vrot.slane %v6957, 2
        %v7006 = vrot.slane %v6959, 2
        %v7007 = vsel %vm883, %v7005, %v7006
        %v7008 = vrot.slane %v6960, 2
        %v7009 = vsel %vm883, %v7003, %v7008
        %v7010 = vrot.slane %v6961, 2
        %v7011 = vsel %vm883, %v7006, %v7010
        %v7012 = vrot.slane %v6962, 2
        %v7013 = vsel %vm883, %v7008, %v7012
        %v7014 = vrot.slane %v6963, 2
        %v7015 = vsel %vm883, %v7010, %v7014
        %v7024 = vmax.f32 %v6994, %v7004
        %v7025 = vmax.f32 %v6995, %v7007
        %v7026 = vmax.f32 %v6996, %v7009
        %v7027 = vmax.f32 %v6997, %v7011
        %v7028 = vmax.f32 %v6998, %v7013
        %v7029 = vmax.f32 %v6999, %v7015
        %v7030 = vmax.f32 %v7000, %v7012
        %v7031 = vmax.f32 %v7001, %v7014
        %v7032 = vld [vmem:[%s7] ss:$2 sm:$0x3]
        %v7034 = vlaneseq
        %v7035 = vshrl.u32 %v7034, 7
        %v7036 = vsub.s32 0, %v7035
        %v7037 = vrot.slane %v7032, %v7036
        %v7038 = vlaneseq
        %v7039 = vshrl.u32 %v7038, 7
        %v7040 = vsub.s32 1, %v7039
        %v7041 = vrot.slane %v7032, %v7040
        %v7044 = vmul.f32 %v7024, %v7037
        %v7045 = vmul.f32 %v7025, %v7041
        %v7046 = vmul.f32 %v7026, %v7037
        %v7047 = vmul.f32 %v7027, %v7041
        %v7048 = vmul.f32 %v7028, %v7037
        %v7049 = vmul.f32 %v7029, %v7041
        %v7050 = vmul.f32 %v7030, %v7037
        %v7051 = vmul.f32 %v7031, %v7041
        %v7052 = vld [vmem:[%s3377] ss:$2 sm:$0x3]
        %v7054 = vlaneseq
        %v7055 = vshrl.u32 %v7054, 7
        %v7056 = vsub.s32 0, %v7055
        %v7057 = vrot.slane %v7052, %v7056
        %v7058 = vlaneseq
        %v7059 = vshrl.u32 %v7058, 7
        %v7060 = vsub.s32 1, %v7059
        %v7061 = vrot.slane %v7052, %v7060
        %v7064 = vadd.f32 %v7044, %v7057
        %v7065 = vadd.f32 %v7045, %v7061
        %v7066 = vadd.f32 %v7046, %v7057
        %v7067 = vadd.f32 %v7047, %v7061
        %v7068 = vadd.f32 %v7048, %v7057
        %v7069 = vadd.f32 %v7049, %v7061
        %v7070 = vadd.f32 %v7050, %v7057
        %v7071 = vadd.f32 %v7051, %v7061
        %v7072 = vmax.f32 %v7064, 0.0
        %v7073 = vmax.f32 %v7065, 0.0
        %v7074 = vmax.f32 %v7066, 0.0
        %v7075 = vmax.f32 %v7067, 0.0
        %v7076 = vmax.f32 %v7068, 0.0
        %v7077 = vmax.f32 %v7069, 0.0
        %v7078 = vmax.f32 %v7070, 0.0
        %v7079 = vmax.f32 %v7071, 0.0
        %v7080 = vld [vmem:[%s4] sm:$0xff]
        %v7081 = vld [vmem:[%s4 + $0x8] sm:$0xff]
        %v7082 = vld [vmem:[%s4 + $0x10] sm:$0xff]
        %v7083 = vld [vmem:[%s4 + $0x18] sm:$0xff]
        %v7084 = vld [vmem:[%s4 + $0x20] sm:$0xff]
        %v7085 = vld [vmem:[%s4 + $0x28] sm:$0xff]
        %v7086 = vld [vmem:[%s4 + $0x30] sm:$0xff]
        %v7087 = vld [vmem:[%s4 + $0x38] sm:$0xff]
        %v7088 = vld [vmem:[%s4 + $0x40] sm:$0xff]
        %v7089 = vld [vmem:[%s4 + $0x48] sm:$0xff]
        %v7090 = vld [vmem:[%s4 + $0x50] sm:$0xff]
        %v7091 = vld [vmem:[%s4 + $0x58] sm:$0xff]
        %v7092 = vld [vmem:[%s4 + $0x60] sm:$0xff]
        %v7093 = vld [vmem:[%s4 + $0x68] sm:$0xff]
        %v7094 = vld [vmem:[%s4 + $0x70] sm:$0xff]
        %v7095 = vld [vmem:[%s4 + $0x78] sm:$0xff]
        %v7096 = vld [vmem:[%s4 + $0x80] sm:$0xff]
        %v7097 = vld [vmem:[%s4 + $0x88] sm:$0xff]
        %v7098 = vld [vmem:[%s4 + $0x90] sm:$0xff]
        %v7099 = vld [vmem:[%s4 + $0x98] sm:$0xff]
        %v7100 = vld [vmem:[%s4 + $0xa0] sm:$0xff]
        %v7101 = vld [vmem:[%s4 + $0xa8] sm:$0xff]
        %v7102 = vld [vmem:[%s4 + $0xb0] sm:$0xff]
        %v7103 = vld [vmem:[%s4 + $0xb8] sm:$0xff]
        %v7104 = vld [vmem:[%s4 + $0xc0] sm:$0xff]
        %v7105 = vld [vmem:[%s4 + $0xc8] sm:$0xff]
        %v7106 = vld [vmem:[%s4 + $0xd0] sm:$0xff]
        %v7107 = vld [vmem:[%s4 + $0xd8] sm:$0xff]
        %v7108 = vld [vmem:[%s4 + $0xe0] sm:$0x3]
        %v7109 = vld [vmem:[%s3435] sm:$0xff]
        %v7110 = vld [vmem:[%s3435 + $0x8] sm:$0xff]
        %v7111 = vld [vmem:[%s3435 + $0x10] sm:$0xff]
        %v7112 = vld [vmem:[%s3435 + $0x18] sm:$0xff]
        %v7113 = vld [vmem:[%s3435 + $0x20] sm:$0xff]
        %v7114 = vld [vmem:[%s3435 + $0x28] sm:$0xff]
        %v7115 = vld [vmem:[%s3435 + $0x30] sm:$0xff]
        %v7116 = vld [vmem:[%s3435 + $0x38] sm:$0xff]
        %v7117 = vld [vmem:[%s3435 + $0x40] sm:$0xff]
        %v7118 = vld [vmem:[%s3435 + $0x48] sm:$0xff]
        %v7119 = vld [vmem:[%s3435 + $0x50] sm:$0xff]
        %v7120 = vld [vmem:[%s3435 + $0x58] sm:$0xff]
        %v7121 = vld [vmem:[%s3435 + $0x60] sm:$0xff]
        %v7122 = vld [vmem:[%s3435 + $0x68] sm:$0xff]
        %v7123 = vld [vmem:[%s3435 + $0x70] sm:$0xff]
        %v7124 = vld [vmem:[%s3435 + $0x78] sm:$0xff]
        %v7125 = vld [vmem:[%s3435 + $0x80] sm:$0xff]
        %v7126 = vld [vmem:[%s3435 + $0x88] sm:$0xff]
        %v7127 = vld [vmem:[%s3435 + $0x90] sm:$0xff]
        %v7128 = vld [vmem:[%s3435 + $0x98] sm:$0xff]
        %v7129 = vld [vmem:[%s3435 + $0xa0] sm:$0xff]
        %v7130 = vld [vmem:[%s3435 + $0xa8] sm:$0xff]
        %v7131 = vld [vmem:[%s3435 + $0xb0] sm:$0xff]
        %v7132 = vld [vmem:[%s3435 + $0xb8] sm:$0xff]
        %v7133 = vld [vmem:[%s3435 + $0xc0] sm:$0xff]
        %v7134 = vld [vmem:[%s3435 + $0xc8] sm:$0xff]
        %v7135 = vld [vmem:[%s3435 + $0xd0] sm:$0xff]
        %v7136 = vld [vmem:[%s3435 + $0xd8] sm:$0xff]
        %v7137 = vld [vmem:[%s3435 + $0xe0] sm:$0x3]
        %v7146 = vrot.slane %v7072, 1
        %v7147 = vrot.slane %v7074, 1
        %v7148 = vsel %vm461, %v7146, %v7147
        %v7149 = vrot.slane %v7073, 1
        %v7150 = vrot.slane %v7075, 1
        %v7151 = vsel %vm461, %v7149, %v7150
        %v7152 = vrot.slane %v7076, 1
        %v7153 = vsel %vm461, %v7147, %v7152
        %v7154 = vrot.slane %v7077, 1
        %v7155 = vsel %vm461, %v7150, %v7154
        %v7156 = vrot.slane %v7078, 1
        %v7157 = vsel %vm461, %v7152, %v7156
        %v7158 = vrot.slane %v7079, 1
        %v7159 = vsel %vm461, %v7154, %v7158
        %v7164 = vsel %vm3491, %v7151, 0
        %v7166 = vsel %vm3491, %v7155, 0
        %v7168 = vsel %vm3491, %v7159, 0
        %v7170 = vsel %vm3491, %v7158, 0
        %v7173 = vsel %vm1675, %v7137, 0
        %7175 = vmatprep.subr.mxu0 0.0
        %7176 = vmatpush1.msra.mxu0 %v7109
        %7177 = vmatprep.subr.mxu0 0.0
        %7178 = vmatpush1.msra.mxu0 %v7110
        %7179 = vmatprep.subr.mxu0 0.0
        %7180 = vmatpush1.msra.mxu0 %v7111
        %7181 = vmatprep.subr.mxu0 0.0
        %7182 = vmatpush1.msra.mxu0 %v7112
        %7183 = vmatprep.subr.mxu0 0.0
        %7184 = vmatpush1.msra.mxu0 %v7113
        %7185 = vmatprep.subr.mxu0 0.0
        %7186 = vmatpush1.msra.mxu0 %v7114
        %7187 = vmatprep.subr.mxu0 0.0
        %7188 = vmatpush1.msra.mxu0 %v7115
        %7189 = vmatprep.subr.mxu0 0.0
        %7190 = vmatpush1.msra.mxu0 %v7116
        %7191 = vmatprep.subr.mxu0 0.0
        %7192 = vmatpush1.msra.mxu0 %v7117
        %7193 = vmatprep.subr.mxu0 0.0
        %7194 = vmatpush1.msra.mxu0 %v7118
        %7195 = vmatprep.subr.mxu0 0.0
        %7196 = vmatpush1.msra.mxu0 %v7119
        %7197 = vmatprep.subr.mxu0 0.0
        %7198 = vmatpush1.msra.mxu0 %v7120
        %7199 = vmatprep.subr.mxu0 0.0
        %7200 = vmatpush1.msra.mxu0 %v7121
        %7201 = vmatprep.subr.mxu0 0.0
        %7202 = vmatpush1.msra.mxu0 %v7122
        %7203 = vmatprep.subr.mxu0 0.0
        %7204 = vmatpush1.msra.mxu0 %v7123
        %7205 = vmatprep.subr.mxu0 0.0
        %7206 = vmatpush1.msra.mxu0 %v7124
        %7207 = vmatprep.subr.mxu0 0.0
        %7208 = vmatpush1.msra.mxu0 %v7125
        %7209 = vmatprep.subr.mxu0 0.0
        %7210 = vmatpush1.msra.mxu0 %v7126
        %7211 = vmatprep.subr.mxu0 0.0
        %7212 = vmatpush1.msra.mxu0 %v7127
        %7213 = vmatprep.subr.mxu0 0.0
        %7214 = vmatpush1.msra.mxu0 %v7128
        %7215 = vmatprep.subr.mxu0 0.0
        %7216 = vmatpush1.msra.mxu0 %v7129
        %7217 = vmatprep.subr.mxu0 0.0
        %7218 = vmatpush1.msra.mxu0 %v7130
        %7219 = vmatprep.subr.mxu0 0.0
        %7220 = vmatpush1.msra.mxu0 %v7131
        %7221 = vmatprep.subr.mxu0 0.0
        %7222 = vmatpush1.msra.mxu0 %v7132
        %7223 = vmatprep.subr.mxu0 0.0
        %7224 = vmatpush1.msra.mxu0 %v7133
        %7225 = vmatprep.subr.mxu0 0.0
        %7226 = vmatpush1.msra.mxu0 %v7134
        %7227 = vmatprep.subr.mxu0 0.0
        %7228 = vmatpush1.msra.mxu0 %v7135
        %7229 = vmatprep.subr.mxu0 0.0
        %7230 = vmatpush1.msra.mxu0 %v7136
        %7231 = vmatprep.subr.mxu0 0.0
        %7232 = vmatpush1.msra.mxu0 %v7173
        %7233 = vmatprep.subr.mxu0 0.0
        %7234 = vmatpush1.msra.mxu0 0.0
        %7235 = vmatprep.subr.mxu0 0.0
        %7236 = vmatpush1.msra.mxu0 0.0
        %7237 = vmatprep.subr.mxu0 0.0
        %7238 = vmatpush1.msra.mxu0 0.0
        %7239 = vmatprep.mubr.f32.mxu0 %v7164
        %7240 = vmatmul.mubr.f32.gmra.mrb[0].mxu0 %v7148
        %v7241 = vpop.f32.mrb[0].mxu0
        %v7242 = vadd.f32 0.0, %v7241
        %v7243 = vpop.f32.mrb[0].mxu0
        %7244 = vmatprep.mubr.f32.mxu0 %v7166
        %7245 = vmatmul.mubr.f32.gmra.mrb[0].mxu0 %v7153
        %v7246 = vpop.f32.mrb[0].mxu0
        %v7247 = vadd.f32 0.0, %v7246
        %v7248 = vpop.f32.mrb[0].mxu0
        %7249 = vmatprep.mubr.f32.mxu0 %v7168
        %7250 = vmatmul.mubr.f32.gmra.mrb[0].mxu0 %v7157
        %v7251 = vpop.f32.mrb[0].mxu0
        %v7252 = vadd.f32 0.0, %v7251
        %v7253 = vpop.f32.mrb[0].mxu0
        %7254 = vmatprep.mubr.f32.mxu0 %v7170
        %7255 = vmatmul.mubr.f32.gmra.mrb[0].mxu0 %v7156
        %v7256 = vpop.f32.mrb[0].mxu0
        %v7257 = vadd.f32 0.0, %v7256
        %v7258 = vpop.f32.mrb[0].mxu0
        %7259 = vdwg.mxu0
        %v7260 = vsel %vm3491, %v7073, 0
        %v7262 = vsel %vm3491, %v7075, 0
        %v7264 = vsel %vm3491, %v7077, 0
        %v7266 = vsel %vm3491, %v7079, 0
        %v7269 = vsel %vm1675, %v7108, 0
        %7271 = vmatprep.subr.mxu0 0.0
        %7272 = vmatpush1.msra.mxu0 %v7080
        %7273 = vmatprep.subr.mxu0 0.0
        %7274 = vmatpush1.msra.mxu0 %v7081
        %7275 = vmatprep.subr.mxu0 0.0
        %7276 = vmatpush1.msra.mxu0 %v7082
        %7277 = vmatprep.subr.mxu0 0.0
        %7278 = vmatpush1.msra.mxu0 %v7083
        %7279 = vmatprep.subr.mxu0 0.0
        %7280 = vmatpush1.msra.mxu0 %v7084
        %7281 = vmatprep.subr.mxu0 0.0
        %7282 = vmatpush1.msra.mxu0 %v7085
        %7283 = vmatprep.subr.mxu0 0.0
        %7284 = vmatpush1.msra.mxu0 %v7086
        %7285 = vmatprep.subr.mxu0 0.0
        %7286 = vmatpush1.msra.mxu0 %v7087
        %7287 = vmatprep.subr.mxu0 0.0
        %7288 = vmatpush1.msra.mxu0 %v7088
        %7289 = vmatprep.subr.mxu0 0.0
        %7290 = vmatpush1.msra.mxu0 %v7089
        %7291 = vmatprep.subr.mxu0 0.0
        %7292 = vmatpush1.msra.mxu0 %v7090
        %7293 = vmatprep.subr.mxu0 0.0
        %7294 = vmatpush1.msra.mxu0 %v7091
        %7295 = vmatprep.subr.mxu0 0.0
        %7296 = vmatpush1.msra.mxu0 %v7092
        %7297 = vmatprep.subr.mxu0 0.0
        %7298 = vmatpush1.msra.mxu0 %v7093
        %7299 = vmatprep.subr.mxu0 0.0
        %7300 = vmatpush1.msra.mxu0 %v7094
        %7301 = vmatprep.subr.mxu0 0.0
        %7302 = vmatpush1.msra.mxu0 %v7095
        %7303 = vmatprep.subr.mxu0 0.0
        %7304 = vmatpush1.msra.mxu0 %v7096
        %7305 = vmatprep.subr.mxu0 0.0
        %7306 = vmatpush1.msra.mxu0 %v7097
        %7307 = vmatprep.subr.mxu0 0.0
        %7308 = vmatpush1.msra.mxu0 %v7098
        %7309 = vmatprep.subr.mxu0 0.0
        %7310 = vmatpush1.msra.mxu0 %v7099
        %7311 = vmatprep.subr.mxu0 0.0
        %7312 = vmatpush1.msra.mxu0 %v7100
        %7313 = vmatprep.subr.mxu0 0.0
        %7314 = vmatpush1.msra.mxu0 %v7101
        %7315 = vmatprep.subr.mxu0 0.0
        %7316 = vmatpush1.msra.mxu0 %v7102
        %7317 = vmatprep.subr.mxu0 0.0
        %7318 = vmatpush1.msra.mxu0 %v7103
        %7319 = vmatprep.subr.mxu0 0.0
        %7320 = vmatpush1.msra.mxu0 %v7104
        %7321 = vmatprep.subr.mxu0 0.0
        %7322 = vmatpush1.msra.mxu0 %v7105
        %7323 = vmatprep.subr.mxu0 0.0
        %7324 = vmatpush1.msra.mxu0 %v7106
        %7325 = vmatprep.subr.mxu0 0.0
        %7326 = vmatpush1.msra.mxu0 %v7107
        %7327 = vmatprep.subr.mxu0 0.0
        %7328 = vmatpush1.msra.mxu0 %v7269
        %7329 = vmatprep.subr.mxu0 0.0
        %7330 = vmatpush1.msra.mxu0 0.0
        %7331 = vmatprep.subr.mxu0 0.0
        %7332 = vmatpush1.msra.mxu0 0.0
        %7333 = vmatprep.subr.mxu0 0.0
        %7334 = vmatpush1.msra.mxu0 0.0
        %7335 = vmatprep.mubr.f32.mxu0 %v7260
        %7336 = vmatmul.mubr.f32.gmra.mrb[0].mxu0 %v7072
        %v7337 = vpop.f32.mrb[0].mxu0
        %v7338 = vadd.f32 %v7242, %v7337
        %v7339 = vpop.f32.mrb[0].mxu0
        %7340 = vmatprep.mubr.f32.mxu0 %v7262
        %7341 = vmatmul.mubr.f32.gmra.mrb[0].mxu0 %v7074
        %v7342 = vpop.f32.mrb[0].mxu0
        %v7343 = vadd.f32 %v7247, %v7342
        %v7344 = vpop.f32.mrb[0].mxu0
        %7345 = vmatprep.mubr.f32.mxu0 %v7264
        %7346 = vmatmul.mubr.f32.gmra.mrb[0].mxu0 %v7076
        %v7347 = vpop.f32.mrb[0].mxu0
        %v7348 = vadd.f32 %v7252, %v7347
        %v7349 = vpop.f32.mrb[0].mxu0
        %7350 = vmatprep.mubr.f32.mxu0 %v7266
        %7351 = vmatmul.mubr.f32.gmra.mrb[0].mxu0 %v7078
        %v7352 = vpop.f32.mrb[0].mxu0
        %v7353 = vadd.f32 %v7257, %v7352
        %v7354 = vpop.f32.mrb[0].mxu0
        %7355 = vdwg.mxu0
        %v7356 = vld [vmem:[%s3684] sm:$0xff]
        %v7357 = vld [vmem:[%s3684 + $0x8] sm:$0xff]
        %v7358 = vld [vmem:[%s3684 + $0x10] sm:$0xff]
        %v7359 = vld [vmem:[%s3684 + $0x18] sm:$0xff]
        %v7360 = vld [vmem:[%s3684 + $0x20] sm:$0xff]
        %v7361 = vld [vmem:[%s3684 + $0x28] sm:$0xff]
        %v7362 = vld [vmem:[%s3684 + $0x30] sm:$0xff]
        %v7363 = vld [vmem:[%s3684 + $0x38] sm:$0xff]
        %v7364 = vld [vmem:[%s3684 + $0x40] sm:$0xff]
        %v7365 = vld [vmem:[%s3684 + $0x48] sm:$0xff]
        %v7366 = vld [vmem:[%s3684 + $0x50] sm:$0xff]
        %v7367 = vld [vmem:[%s3684 + $0x58] sm:$0xff]
        %v7368 = vld [vmem:[%s3684 + $0x60] sm:$0xff]
        %v7369 = vld [vmem:[%s3684 + $0x68] sm:$0xff]
        %v7370 = vld [vmem:[%s3684 + $0x70] sm:$0xff]
        %v7371 = vld [vmem:[%s3684 + $0x78] sm:$0xff]
        %v7372 = vld [vmem:[%s3684 + $0x80] sm:$0xff]
        %v7373 = vld [vmem:[%s3684 + $0x88] sm:$0xff]
        %v7374 = vld [vmem:[%s3684 + $0x90] sm:$0xff]
        %v7375 = vld [vmem:[%s3684 + $0x98] sm:$0xff]
        %v7376 = vld [vmem:[%s3684 + $0xa0] sm:$0xff]
        %v7377 = vld [vmem:[%s3684 + $0xa8] sm:$0xff]
        %v7378 = vld [vmem:[%s3684 + $0xb0] sm:$0xff]
        %v7379 = vld [vmem:[%s3684 + $0xb8] sm:$0xff]
        %v7380 = vld [vmem:[%s3684 + $0xc0] sm:$0xff]
        %v7381 = vld [vmem:[%s3684 + $0xc8] sm:$0xff]
        %v7382 = vld [vmem:[%s3684 + $0xd0] sm:$0xff]
        %v7383 = vld [vmem:[%s3684 + $0xd8] sm:$0xff]
        %v7384 = vld [vmem:[%s3684 + $0xe0] sm:$0x3]
        %v7385 = vrot.slane %v7072, 2
        %v7386 = vrot.slane %v7074, 2
        %v7387 = vsel %vm883, %v7385, %v7386
        %v7388 = vrot.slane %v7073, 2
        %v7389 = vrot.slane %v7075, 2
        %v7390 = vsel %vm883, %v7388, %v7389
        %v7391 = vrot.slane %v7076, 2
        %v7392 = vsel %vm883, %v7386, %v7391
        %v7393 = vrot.slane %v7077, 2
        %v7394 = vsel %vm883, %v7389, %v7393
        %v7395 = vrot.slane %v7078, 2
        %v7396 = vsel %vm883, %v7391, %v7395
        %v7397 = vrot.slane %v7079, 2
        %v7398 = vsel %vm883, %v7393, %v7397
        %v7403 = vsel %vm3491, %v7390, 0
        %v7405 = vsel %vm3491, %v7394, 0
        %v7407 = vsel %vm3491, %v7398, 0
        %v7409 = vsel %vm3491, %v7397, 0
        %v7412 = vsel %vm1675, %v7384, 0
        %7414 = vmatprep.subr.mxu0 0.0
        %7415 = vmatpush1.msra.mxu0 %v7356
        %7416 = vmatprep.subr.mxu0 0.0
        %7417 = vmatpush1.msra.mxu0 %v7357
        %7418 = vmatprep.subr.mxu0 0.0
        %7419 = vmatpush1.msra.mxu0 %v7358
        %7420 = vmatprep.subr.mxu0 0.0
        %7421 = vmatpush1.msra.mxu0 %v7359
        %7422 = vmatprep.subr.mxu0 0.0
        %7423 = vmatpush1.msra.mxu0 %v7360
        %7424 = vmatprep.subr.mxu0 0.0
        %7425 = vmatpush1.msra.mxu0 %v7361
        %7426 = vmatprep.subr.mxu0 0.0
        %7427 = vmatpush1.msra.mxu0 %v7362
        %7428 = vmatprep.subr.mxu0 0.0
        %7429 = vmatpush1.msra.mxu0 %v7363
        %7430 = vmatprep.subr.mxu0 0.0
        %7431 = vmatpush1.msra.mxu0 %v7364
        %7432 = vmatprep.subr.mxu0 0.0
        %7433 = vmatpush1.msra.mxu0 %v7365
        %7434 = vmatprep.subr.mxu0 0.0
        %7435 = vmatpush1.msra.mxu0 %v7366
        %7436 = vmatprep.subr.mxu0 0.0
        %7437 = vmatpush1.msra.mxu0 %v7367
        %7438 = vmatprep.subr.mxu0 0.0
        %7439 = vmatpush1.msra.mxu0 %v7368
        %7440 = vmatprep.subr.mxu0 0.0
        %7441 = vmatpush1.msra.mxu0 %v7369
        %7442 = vmatprep.subr.mxu0 0.0
        %7443 = vmatpush1.msra.mxu0 %v7370
        %7444 = vmatprep.subr.mxu0 0.0
        %7445 = vmatpush1.msra.mxu0 %v7371
        %7446 = vmatprep.subr.mxu0 0.0
        %7447 = vmatpush1.msra.mxu0 %v7372
        %7448 = vmatprep.subr.mxu0 0.0
        %7449 = vmatpush1.msra.mxu0 %v7373
        %7450 = vmatprep.subr.mxu0 0.0
        %7451 = vmatpush1.msra.mxu0 %v7374
        %7452 = vmatprep.subr.mxu0 0.0
        %7453 = vmatpush1.msra.mxu0 %v7375
        %7454 = vmatprep.subr.mxu0 0.0
        %7455 = vmatpush1.msra.mxu0 %v7376
        %7456 = vmatprep.subr.mxu0 0.0
        %7457 = vmatpush1.msra.mxu0 %v7377
        %7458 = vmatprep.subr.mxu0 0.0
        %7459 = vmatpush1.msra.mxu0 %v7378
        %7460 = vmatprep.subr.mxu0 0.0
        %7461 = vmatpush1.msra.mxu0 %v7379
        %7462 = vmatprep.subr.mxu0 0.0
        %7463 = vmatpush1.msra.mxu0 %v7380
        %7464 = vmatprep.subr.mxu0 0.0
        %7465 = vmatpush1.msra.mxu0 %v7381
        %7466 = vmatprep.subr.mxu0 0.0
        %7467 = vmatpush1.msra.mxu0 %v7382
        %7468 = vmatprep.subr.mxu0 0.0
        %7469 = vmatpush1.msra.mxu0 %v7383
        %7470 = vmatprep.subr.mxu0 0.0
        %7471 = vmatpush1.msra.mxu0 %v7412
        %7472 = vmatprep.subr.mxu0 0.0
        %7473 = vmatpush1.msra.mxu0 0.0
        %7474 = vmatprep.subr.mxu0 0.0
        %7475 = vmatpush1.msra.mxu0 0.0
        %7476 = vmatprep.subr.mxu0 0.0
        %7477 = vmatpush1.msra.mxu0 0.0
        %7478 = vmatprep.mubr.f32.mxu0 %v7403
        %7479 = vmatmul.mubr.f32.gmra.mrb[0].mxu0 %v7387
        %v7480 = vpop.f32.mrb[0].mxu0
        %v7481 = vadd.f32 0.0, %v7480
        %v7482 = vpop.f32.mrb[0].mxu0
        %7483 = vmatprep.mubr.f32.mxu0 %v7405
        %7484 = vmatmul.mubr.f32.gmra.mrb[0].mxu0 %v7392
        %v7485 = vpop.f32.mrb[0].mxu0
        %v7486 = vadd.f32 0.0, %v7485
        %v7487 = vpop.f32.mrb[0].mxu0
        %7488 = vmatprep.mubr.f32.mxu0 %v7407
        %7489 = vmatmul.mubr.f32.gmra.mrb[0].mxu0 %v7396
        %v7490 = vpop.f32.mrb[0].mxu0
        %v7491 = vadd.f32 0.0, %v7490
        %v7492 = vpop.f32.mrb[0].mxu0
        %7493 = vmatprep.mubr.f32.mxu0 %v7409
        %7494 = vmatmul.mubr.f32.gmra.mrb[0].mxu0 %v7395
        %v7495 = vpop.f32.mrb[0].mxu0
        %v7496 = vadd.f32 0.0, %v7495
        %v7497 = vpop.f32.mrb[0].mxu0
        %7498 = vdwg.mxu0
        %v7499 = vadd.f32 %v7338, %v7481
        %v7500 = vadd.f32 %v7343, %v7486
        %v7501 = vadd.f32 %v7348, %v7491
        %v7502 = vadd.f32 %v7353, %v7496
        %7507 = vrot.lane.b32.xlu0 %v7499, 127
        %v7508 = vpop.permute.xlu0 %7507
        %7509 = vrot.lane.b32.xlu0 %v7500, 127
        %v7510 = vpop.permute.xlu0 %7509
        %7511 = vrot.lane.b32.xlu0 %v7501, 127
        %v7512 = vpop.permute.xlu0 %7511
        %7513 = vrot.lane.b32.xlu0 %v7502, 127
        %v7514 = vpop.permute.xlu0 %7513
        %v7519 = vmax.f32 %v7499, %v7508
        %v7520 = vmax.f32 %v7500, %v7510
        %v7521 = vmax.f32 %v7501, %v7512
        %v7522 = vmax.f32 %v7502, %v7514
        %7523 = vrot.lane.b32.xlu0 %v7499, 126
        %v7524 = vpop.permute.xlu0 %7523
        %7525 = vrot.lane.b32.xlu0 %v7500, 126
        %v7526 = vpop.permute.xlu0 %7525
        %7527 = vrot.lane.b32.xlu0 %v7501, 126
        %v7528 = vpop.permute.xlu0 %7527
        %7529 = vrot.lane.b32.xlu0 %v7502, 126
        %v7530 = vpop.permute.xlu0 %7529
        %v7535 = vmax.f32 %v7519, %v7524
        %v7536 = vmax.f32 %v7520, %v7526
        %v7537 = vmax.f32 %v7521, %v7528
        %v7538 = vmax.f32 %v7522, %v7530
        %v7543 = vrot.slane %v7535, 1
        %v7544 = vrot.slane %v7536, 1
        %v7545 = vsel %vm461, %v7543, %v7544
        %v7546 = vrot.slane %v7537, 1
        %v7547 = vsel %vm461, %v7544, %v7546
        %v7548 = vrot.slane %v7538, 1
        %v7549 = vsel %vm461, %v7546, %v7548
        %v7554 = vmax.f32 %v7535, %v7545
        %v7555 = vmax.f32 %v7536, %v7547
        %v7556 = vmax.f32 %v7537, %v7549
        %v7557 = vmax.f32 %v7538, %v7548
        %v7558 = vrot.slane %v7535, 2
        %v7559 = vrot.slane %v7536, 2
        %v7560 = vsel %vm883, %v7558, %v7559
        %v7561 = vrot.slane %v7537, 2
        %v7562 = vsel %vm883, %v7559, %v7561
        %v7563 = vrot.slane %v7538, 2
        %v7564 = vsel %vm883, %v7561, %v7563
        %v7569 = vmax.f32 %v7554, %v7560
        %v7570 = vmax.f32 %v7555, %v7562
        %v7571 = vmax.f32 %v7556, %v7564
        %v7572 = vmax.f32 %v7557, %v7563
        %v7573 = vld [vmem:[%s8] sm:$0x1]
        %v7574 = vlaneseq
        %v7575 = vshrl.u32 %v7574, 7
        %v7576 = vsub.s32 0, %v7575
        %v7577 = vrot.slane %v7573, %v7576
        %v7578 = vmul.f32 %v7569, %v7577
        %v7579 = vmul.f32 %v7570, %v7577
        %v7580 = vmul.f32 %v7571, %v7577
        %v7581 = vmul.f32 %v7572, %v7577
        %v7582 = vld [vmem:[%s8 + $0x1] sm:$0x1]
        %v7583 = vlaneseq
        %v7584 = vshrl.u32 %v7583, 7
        %v7585 = vsub.s32 0, %v7584
        %v7586 = vrot.slane %v7582, %v7585
        %v7587 = vadd.f32 %v7578, %v7586
        %v7588 = vadd.f32 %v7579, %v7586
        %v7589 = vadd.f32 %v7580, %v7586
        %v7590 = vadd.f32 %v7581, %v7586
        %v7591 = vmax.f32 %v7587, 0.0
        %v7592 = vmax.f32 %v7588, 0.0
        %v7593 = vmax.f32 %v7589, 0.0
        %v7594 = vmax.f32 %v7590, 0.0
        %7595 = vst.msk [vmem:[%s411 + $0x1] sm:$0x1] %vm3924, %v7591
        %v7598 = vunpack.c.l.s4 1983009808
        %v7599 = vunpack.c.0.s8 %v7598
        %v7600 = vlaneseq
        %v7601 = vshrl.u32 %v7600, 7
        %v7602 = vsub.s32 %v7599, %v7601
        %v7603 = vrot.slane %v7591, %v7602
        %v7604 = vrot.slane %v7603, 7
        %v7605 = vrot.slane %v7604, 2
        %7606 = vrot.lane.b32.xlu0 %v7605, 32
        %v7607 = vpop.permute.xlu0 %7606
        %7609 = vst.msk [vmem:[%s411 + $0x1] sm:$0x1] %vm3939, %v7607
        %v7610 = vcombine.high %v7603, %v7603
        %7611 = vrot.lane.b32.xlu0 %v7610, 64
        %v7612 = vpop.permute.xlu0 %7611
        %7614 = vst.msk [vmem:[%s411 + $0x1] sm:$0x1] %vm3945, %v7612
        %v7615 = vrot.slane %v7610, 7
        %v7616 = vrot.slane %v7615, 2
        %7617 = vrot.lane.b32.xlu0 %v7616, 96
        %v7618 = vpop.permute.xlu0 %7617
        %7620 = vst.msk [vmem:[%s411 + $0x1] sm:$0x1] %vm3952, %v7618
        %v7621 = vcombine.high %v7591, %v7591
        %v7623 = vunpack.c.l.s4 1983009808
        %v7624 = vunpack.c.0.s8 %v7623
        %v7625 = vlaneseq
        %v7626 = vshrl.u32 %v7625, 7
        %v7627 = vsub.s32 %v7624, %v7626
        %v7628 = vrot.slane %v7621, %v7627
        %7630 = vst.msk [vmem:[%s411 + $0x3] sm:$0x1] %vm3924, %v7628
        %v7631 = vrot.slane %v7628, 7
        %v7632 = vrot.slane %v7631, 2
        %7633 = vrot.lane.b32.xlu0 %v7632, 32
        %v7634 = vpop.permute.xlu0 %7633
        %7636 = vst.msk [vmem:[%s411 + $0x3] sm:$0x1] %vm3939, %v7634
        %v7637 = vcombine.high %v7628, %v7628
        %7638 = vrot.lane.b32.xlu0 %v7637, 64
        %v7639 = vpop.permute.xlu0 %7638
        %7641 = vst.msk [vmem:[%s411 + $0x3] sm:$0x1] %vm3945, %v7639
        %v7642 = vrot.slane %v7637, 7
        %v7643 = vrot.slane %v7642, 2
        %7644 = vrot.lane.b32.xlu0 %v7643, 96
        %v7645 = vpop.permute.xlu0 %7644
        %7647 = vst.msk [vmem:[%s411 + $0x3] sm:$0x1] %vm3952, %v7645
        %7648 = vst.msk [vmem:[%s411 + $0x5] sm:$0x1] %vm3924, %v7592
        %v7651 = vunpack.c.l.s4 1983009808
        %v7652 = vunpack.c.0.s8 %v7651
        %v7653 = vlaneseq
        %v7654 = vshrl.u32 %v7653, 7
        %v7655 = vsub.s32 %v7652, %v7654
        %v7656 = vrot.slane %v7592, %v7655
        %v7657 = vrot.slane %v7656, 7
        %v7658 = vrot.slane %v7657, 2
        %7659 = vrot.lane.b32.xlu0 %v7658, 32
        %v7660 = vpop.permute.xlu0 %7659
        %7662 = vst.msk [vmem:[%s411 + $0x5] sm:$0x1] %vm3939, %v7660
        %v7663 = vcombine.high %v7656, %v7656
        %7664 = vrot.lane.b32.xlu0 %v7663, 64
        %v7665 = vpop.permute.xlu0 %7664
        %7667 = vst.msk [vmem:[%s411 + $0x5] sm:$0x1] %vm3945, %v7665
        %v7668 = vrot.slane %v7663, 7
        %v7669 = vrot.slane %v7668, 2
        %7670 = vrot.lane.b32.xlu0 %v7669, 96
        %v7671 = vpop.permute.xlu0 %7670
        %7673 = vst.msk [vmem:[%s411 + $0x5] sm:$0x1] %vm3952, %v7671
        %v7674 = vcombine.high %v7592, %v7592
        %v7676 = vunpack.c.l.s4 1983009808
        %v7677 = vunpack.c.0.s8 %v7676
        %v7678 = vlaneseq
        %v7679 = vshrl.u32 %v7678, 7
        %v7680 = vsub.s32 %v7677, %v7679
        %v7681 = vrot.slane %v7674, %v7680
        %7683 = vst.msk [vmem:[%s411 + $0x7] sm:$0x1] %vm3924, %v7681
        %v7684 = vrot.slane %v7681, 7
        %v7685 = vrot.slane %v7684, 2
        %7686 = vrot.lane.b32.xlu0 %v7685, 32
        %v7687 = vpop.permute.xlu0 %7686
        %7689 = vst.msk [vmem:[%s411 + $0x7] sm:$0x1] %vm3939, %v7687
        %v7690 = vcombine.high %v7681, %v7681
        %7691 = vrot.lane.b32.xlu0 %v7690, 64
        %v7692 = vpop.permute.xlu0 %7691
        %7694 = vst.msk [vmem:[%s411 + $0x7] sm:$0x1] %vm3945, %v7692
        %v7695 = vrot.slane %v7690, 7
        %v7696 = vrot.slane %v7695, 2
        %7697 = vrot.lane.b32.xlu0 %v7696, 96
        %v7698 = vpop.permute.xlu0 %7697
        %7700 = vst.msk [vmem:[%s411 + $0x7] sm:$0x1] %vm3952, %v7698
        %7701 = vst.msk [vmem:[%s411 + $0x9] sm:$0x1] %vm3924, %v7593
        %v7704 = vunpack.c.l.s4 1983009808
        %v7705 = vunpack.c.0.s8 %v7704
        %v7706 = vlaneseq
        %v7707 = vshrl.u32 %v7706, 7
        %v7708 = vsub.s32 %v7705, %v7707
        %v7709 = vrot.slane %v7593, %v7708
        %v7710 = vrot.slane %v7709, 7
        %v7711 = vrot.slane %v7710, 2
        %7712 = vrot.lane.b32.xlu0 %v7711, 32
        %v7713 = vpop.permute.xlu0 %7712
        %7715 = vst.msk [vmem:[%s411 + $0x9] sm:$0x1] %vm3939, %v7713
        %v7716 = vcombine.high %v7709, %v7709
        %7717 = vrot.lane.b32.xlu0 %v7716, 64
        %v7718 = vpop.permute.xlu0 %7717
        %7720 = vst.msk [vmem:[%s411 + $0x9] sm:$0x1] %vm3945, %v7718
        %v7721 = vrot.slane %v7716, 7
        %v7722 = vrot.slane %v7721, 2
        %7723 = vrot.lane.b32.xlu0 %v7722, 96
        %v7724 = vpop.permute.xlu0 %7723
        %7726 = vst.msk [vmem:[%s411 + $0x9] sm:$0x1] %vm3952, %v7724
        %v7727 = vcombine.high %v7593, %v7593
        %v7729 = vunpack.c.l.s4 1983009808
        %v7730 = vunpack.c.0.s8 %v7729
        %v7731 = vlaneseq
        %v7732 = vshrl.u32 %v7731, 7
        %v7733 = vsub.s32 %v7730, %v7732
        %v7734 = vrot.slane %v7727, %v7733
        %7736 = vst.msk [vmem:[%s411 + $0xb] sm:$0x1] %vm3924, %v7734
        %v7737 = vrot.slane %v7734, 7
        %v7738 = vrot.slane %v7737, 2
        %7739 = vrot.lane.b32.xlu0 %v7738, 32
        %v7740 = vpop.permute.xlu0 %7739
        %7742 = vst.msk [vmem:[%s411 + $0xb] sm:$0x1] %vm3939, %v7740
        %v7743 = vcombine.high %v7734, %v7734
        %7744 = vrot.lane.b32.xlu0 %v7743, 64
        %v7745 = vpop.permute.xlu0 %7744
        %7747 = vst.msk [vmem:[%s411 + $0xb] sm:$0x1] %vm3945, %v7745
        %v7748 = vrot.slane %v7743, 7
        %v7749 = vrot.slane %v7748, 2
        %7750 = vrot.lane.b32.xlu0 %v7749, 96
        %v7751 = vpop.permute.xlu0 %7750
        %7753 = vst.msk [vmem:[%s411 + $0xb] sm:$0x1] %vm3952, %v7751
        %7754 = vst.msk [vmem:[%s411 + $0xd] sm:$0x1] %vm3924, %v7594
        %v7757 = vunpack.c.l.s4 1983009808
        %v7758 = vunpack.c.0.s8 %v7757
        %v7759 = vlaneseq
        %v7760 = vshrl.u32 %v7759, 7
        %v7761 = vsub.s32 %v7758, %v7760
        %v7762 = vrot.slane %v7594, %v7761
        %v7763 = vrot.slane %v7762, 7
        %v7764 = vrot.slane %v7763, 2
        %7765 = vrot.lane.b32.xlu0 %v7764, 32
        %v7766 = vpop.permute.xlu0 %7765
        %7768 = vst.msk [vmem:[%s411 + $0xd] sm:$0x1] %vm3939, %v7766
        %p7769 = scmp.lt.s32.totalorder %s20, 3
        %s7770 = scalar_select %p7769, %s20, 3
        %s7771 = smul.addr %s7770, 7
        %s7772 = smul.addr %s7771, 2
        %s7773 = scalar_lea.vmem %s9, %s7772
        // Predicated region
        $region95: #{conv_rnn_forward.2} parent=89 // pred_check
          %p7774 = pneg %p232
        $region96: #{conv_rnn_forward.2} parent=89 // pred_check_branch
          %7776 = sbr.rel (%p7774) target = $region98
        $region97: #{conv_rnn_forward.2} parent=89 // pred_region
          _
        $region98: #{conv_rnn_forward.2} parent=89 // pred_fallthru
          _
      $region90: #{conv_rnn_forward.2} parent=5 // pred_fallthru
        _
      %p7777 = scmp.le.s32.totalorder 2, %s15
      // Predicated region
      $region99: #{conv_rnn_forward.2} parent=5 // pred_check
        %p7778 = pneg %p7777
      $region100: #{conv_rnn_forward.2} parent=5 // pred_check_branch
        %7780 = sbr.rel (%p7778) target = $region102
      $region101: #{conv_rnn_forward.2} parent=5 // pred_region
        %s7781 = ssub.s32 %s15, 2
        // Predicated region
        $region103: #{conv_rnn_forward.2} parent=101 // pred_check
          %p7782 = pneg %p238
        $region104: #{conv_rnn_forward.2} parent=101 // pred_check_branch
          %7784 = sbr.rel (%p7782) target = $region106
        $region105: #{conv_rnn_forward.2} parent=101 // pred_region
          %p7785 = scmp.lt.s32.totalorder %s21, 3
          %s7786 = scalar_select %p7785, %s21, 3
          %s7787 = smul.addr %s7786, 7
          %s7788 = smul.addr %s7787, 2
          %s7789 = scalar_lea.vmem %s9, %s7788
        $region106: #{conv_rnn_forward.2} parent=101 // pred_fallthru
          _
      $region102: #{conv_rnn_forward.2} parent=5 // pred_fallthru
        _
    $region6: #{conv_rnn_forward.2} parent=1 // loop_footer
      %s19 = sadd.s32 1, %s15
    $region7: #{conv_rnn_forward.2} parent=1 // loop_footer_branch
      %14 = sbr.rel target = $region3
    $region8: #{conv_rnn_forward.2} parent=1 // loop_exit
      _

</llo_original>
